<compile_context>
chip_gen: v7x
topology: tpu7x:2x2x1
jax: 0.10.0
libtpu: 0.0.40
codegen_flags: <defaults>
</compile_context>

<pallas_src>
import functools
from typing import NamedTuple

import jax
import jax.numpy as jnp
from jax.experimental import pallas as pl
from jax.experimental.pallas import tpu as pltpu


# ---- network constants fixed by the PyTorch module ------------------------ #
_K1, _K2, _K3 = 8, 4, 3          # conv kernel sizes
_S1, _S2, _S3 = 4, 2, 1          # conv strides
_C1, _C2, _C3 = 32, 64, 64       # conv output channels
_FC1 = 512                       # hidden width of the first Linear


def _round_up(n, m):
    return ((n + m - 1) // m) * m


class _Geom(NamedTuple):
    Hp: int; Wp: int; Hb: int; Wb: int
    oh1: int; ow1: int; oh2: int; ow2: int; oh3: int; ow3: int
    lanes: int   # number of "real" lanes = B * Hb * Wb
    wd0: int     # lane width of the space-to-depth'd input
    wd1: int     # lane width of the conv1 output
    wd2: int     # lane width of the conv2 output
    wd3: int     # lane width of the conv3 output


def _geometry(B, H, W):
    oh1, ow1 = (H - _K1) // _S1 + 1, (W - _K1) // _S1 + 1
    oh2, ow2 = (oh1 - _K2) // _S2 + 1, (ow1 - _K2) // _S2 + 1
    oh3, ow3 = (oh2 - _K3) // _S3 + 1, (ow2 - _K3) // _S3 + 1
    assert oh3 >= 1 and ow3 >= 1, "input too small for the DQN conv stack"
    Hp, Wp = _round_up(H, _S1), _round_up(W, _S1)
    Hb, Wb = Hp // _S1, Wp // _S1
    lanes = B * Hb * Wb
    # Lane widths per stage: each conv reads its input at static lane shifts
    # (max shift noted below), so each stage keeps that much extra slack.
    wd3 = _round_up(lanes, 128)                              # conv3 output
    wd2 = _round_up(wd3 + 2 * (_K3 - 1) * (Wb + 1), 128)     # conv3 shift <= 2(K3-1)(Wb+1)
    wd1 = _round_up(wd2 + (_K2 - 1) * (Wb + 1), 128)         # conv2 shift <= (K2-1)(Wb+1)
    wd0 = _round_up(wd1 + (_K1 // _S1 - 1) * (Wb + 1), 128)  # conv1 shift <= (K1/S1-1)(Wb+1)
    return _Geom(Hp, Wp, Hb, Wb, oh1, ow1, oh2, ow2, oh3, ow3,
                 lanes, wd0, wd1, wd2, wd3)


# ------------------------------ parameters --------------------------------- #

def init_dqn_params(key, input_shape, n_actions):
    """Deterministic synthetic parameters with PyTorch-native shapes."""
    c_in, H, W = input_shape
    g = _geometry(1, H, W)
    conv_out_size = _C3 * g.oh3 * g.ow3
    ks = jax.random.split(key, 10)

    def conv_w(k, oc, ic, kh, kw):
        fan_in = ic * kh * kw
        return jax.random.normal(k, (oc, ic, kh, kw), jnp.float32) / jnp.sqrt(fan_in)

    def lin_w(k, out_f, in_f):
        return jax.random.normal(k, (out_f, in_f), jnp.float32) / jnp.sqrt(in_f)

    return {
        "c1_w": conv_w(ks[0], _C1, c_in, _K1, _K1),
        "c1_b": jax.random.normal(ks[1], (_C1,), jnp.float32) * 0.01,
        "c2_w": conv_w(ks[2], _C2, _C1, _K2, _K2),
        "c2_b": jax.random.normal(ks[3], (_C2,), jnp.float32) * 0.01,
        "c3_w": conv_w(ks[4], _C3, _C2, _K3, _K3),
        "c3_b": jax.random.normal(ks[5], (_C3,), jnp.float32) * 0.01,
        "fc1_w": lin_w(ks[6], _FC1, conv_out_size),
        "fc1_b": jax.random.normal(ks[7], (_FC1,), jnp.float32) * 0.01,
        "fc2_w": lin_w(ks[8], n_actions, _FC1),
        "fc2_b": jax.random.normal(ks[9], (n_actions,), jnp.float32) * 0.01,
    }


def prepare_params(params, input_shape, n_actions):
    """One-time (hoisted) weight re-layout for the fused kernel.

    * conv weights -> per-tap [OC, IC] matmul blocks, bf16
    * fc1 weight   -> per-conv3-position [512, 64] blocks whose columns are
                      permuted to the kernel's channel order, bf16
    * fc2 weight / bias padded to 8 rows so the output tile is (8, 128)
    * biases stay f32 (the epilogue runs in f32 on every TPU generation)
    """
    c_in, H, W = input_shape
    g = _geometry(1, H, W)
    bf16 = jnp.bfloat16

    # conv1: 8x8 stride-4 == 2x2 stride-1 conv on the space-to-depth'd input.
    # rows of the s2d input are ordered (c, ri, rj) with kh = 4a+ri, kw = 4b+rj.
    w1 = params["c1_w"].reshape(_C1, c_in, _K1 // _S1, _S1, _K1 // _S1, _S1)
    w1 = w1.transpose(2, 4, 0, 1, 3, 5)                    # (a, b, oc, c, ri, rj)
    w1 = w1.reshape((_K1 // _S1) ** 2, _C1, c_in * _S1 * _S1).astype(bf16)

    w2 = params["c2_w"].transpose(2, 3, 0, 1).reshape(_K2 * _K2, _C2, _C1).astype(bf16)
    w3 = params["c3_w"].transpose(2, 3, 0, 1).reshape(_K3 * _K3, _C3, _C2).astype(bf16)

    # fc1: PyTorch flattens NCHW, i.e. column = c*(oh3*ow3) + p*ow3 + q.
    wf1 = params["fc1_w"].reshape(_FC1, _C3, g.oh3, g.ow3)
    wf1 = wf1.transpose(2, 3, 0, 1).reshape(g.oh3 * g.ow3, _FC1, _C3).astype(bf16)

    na_pad = _round_up(n_actions, 8)
    wf2 = jnp.zeros((na_pad, _FC1), jnp.float32).at[:n_actions].set(params["fc2_w"])
    bf2 = jnp.zeros((na_pad, 1), jnp.float32).at[:n_actions, 0].set(params["fc2_b"])

    return {
        "w1": w1, "b1": params["c1_b"].reshape(_C1, 1).astype(jnp.float32),
        "w2": w2, "b2": params["c2_b"].reshape(_C2, 1).astype(jnp.float32),
        "w3": w3, "b3": params["c3_b"].reshape(_C3, 1).astype(jnp.float32),
        "wf1": wf1, "bf1": params["fc1_b"].reshape(_FC1, 1).astype(jnp.float32),
        "wf2": wf2.astype(bf16), "bf2": bf2,
    }


# ------------------------------ fused kernel ------------------------------- #

def _make_dqn_kernel(g: _Geom, batch: int):
    """Fused conv1->conv2->conv3->fc1->fc2 kernel body.

    Activation layout everywhere: sublanes = channels,
    lanes = b*Hb*Wb + y*Wb + x on the conv1 space-to-depth block grid.
    Valid outputs of each layer live at statically known lanes; the remaining
    lanes carry don't-care values that are never read for valid outputs.
    """
    Wb, HbWb = g.Wb, g.Hb * g.Wb
    f32, bf16 = jnp.float32, jnp.bfloat16

    def kernel(a0_ref, w1_ref, b1_ref, w2_ref, b2_ref, w3_ref, b3_ref,
               wf1_ref, bf1_ref, wf2_ref, bf2_ref, o_ref):
        # ---- conv1 (8x8, stride 4) == 2x2 stride-1 conv on the s2d input ----
        acc = jnp.zeros((_C1, g.wd1), f32)
        for ta in range(_K1 // _S1):
            for tb in range(_K1 // _S1):
                s = ta * Wb + tb
                acc += jnp.dot(w1_ref[ta * (_K1 // _S1) + tb],
                               a0_ref[:, s:s + g.wd1],
                               preferred_element_type=f32)
        y1 = jnp.maximum(acc + b1_ref[...], 0.0).astype(bf16)       # [32, wd1]

        # ---- conv2 (4x4, stride 2); conv1 output grid has lane pitch 1 ------
        acc = jnp.zeros((_C2, g.wd2), f32)
        for i in range(_K2):
            for j in range(_K2):
                s = i * Wb + j
                acc += jnp.dot(w2_ref[i * _K2 + j], y1[:, s:s + g.wd2],
                               preferred_element_type=f32)
        y2 = jnp.maximum(acc + b2_ref[...], 0.0).astype(bf16)       # [64, wd2]

        # ---- conv3 (3x3, stride 1); conv2 output grid has lane pitch 2 ------
        acc = jnp.zeros((_C3, g.wd3), f32)
        for u in range(_K3):
            for v in range(_K3):
                s = _S2 * (u * Wb + v)
                acc += jnp.dot(w3_ref[u * _K3 + v], y2[:, s:s + g.wd3],
                               preferred_element_type=f32)
        y3 = jnp.maximum(acc + b3_ref[...], 0.0).astype(bf16)       # [64, wd3]

        # ---- fc1: gather the B valid feature columns of each conv3 position -
        acc = jnp.zeros((_FC1, batch), f32)
        for p in range(g.oh3):
            for q in range(g.ow3):
                off = _S2 * (p * Wb + q)
                cols = jnp.concatenate(
                    [y3[:, b * HbWb + off: b * HbWb + off + 1]
                     for b in range(batch)], axis=1)                # [64, B]
                acc += jnp.dot(wf1_ref[p * g.ow3 + q], cols,
                               preferred_element_type=f32)
        h = jnp.maximum(acc + bf1_ref[...], 0.0).astype(bf16)       # [512, B]

        # ---- fc2; pad lanes so the final store is a dense (8, 128) tile -----
        b_pad = o_ref.shape[1]
        if b_pad > batch:
            h = jnp.concatenate(
                [h, jnp.zeros((_FC1, b_pad - batch), bf16)], axis=1)
        o_ref[...] = (jnp.dot(wf2_ref[...], h, preferred_element_type=f32)
                      + bf2_ref[...])

    return kernel


# ------------------------------ forward pass ------------------------------- #

def _space_to_depth_input(x, g: _Geom):
    """NCHW input -> [C*S1*S1, B*Hb*Wb (+pad)] bf16, channels in sublanes."""
    B, C, H, W = x.shape
    x = jnp.pad(x, ((0, 0), (0, 0), (0, g.Hp - H), (0, g.Wp - W)))
    x = x.reshape(B, C, g.Hb, _S1, g.Wb, _S1)
    x = x.transpose(1, 3, 5, 0, 2, 4)                # (c, ri, rj, b, hb, wb)
    x = x.reshape(C * _S1 * _S1, B * g.Hb * g.Wb)
    x = jnp.pad(x, ((0, 0), (0, g.wd0 - B * g.Hb * g.Wb)))
    return x.astype(jnp.bfloat16)


def dqn_forward(prep, x, *, n_actions):
    """Forward pass.  x: [B, C, H, W] float32  ->  [B, n_actions] float32."""
    B, C, H, W = x.shape
    g = _geometry(B, H, W)
    a0 = _space_to_depth_input(x, g)          # only per-call glue: 1x input bytes

    na_pad = prep["wf2"].shape[0]
    b_pad = _round_up(B, 128)
    vspec = pl.BlockSpec(memory_space=pltpu.MemorySpace.VMEM)

    out = pl.pallas_call(
        _make_dqn_kernel(g, B),
        out_shape=jax.ShapeDtypeStruct((na_pad, b_pad), jnp.float32),
        in_specs=[vspec] * 11,
        out_specs=vspec,
    )(a0, prep["w1"], prep["b1"], prep["w2"], prep["b2"],
      prep["w3"], prep["b3"], prep["wf1"], prep["bf1"],
      prep["wf2"], prep["bf2"])

    return out[:n_actions, :B].T              # the single slice of the forward


# ------------------------------ f32 reference ------------------------------ #

def dqn_reference(params, x):
    """Pure-JAX (XLA) f32 reference with PyTorch semantics, for validation."""
    dn = ("NCHW", "OIHW", "NCHW")
    y = jax.lax.conv_general_dilated(x, params["c1_w"], (_S1, _S1), "VALID",
                                     dimension_numbers=dn)
    y = jax.nn.relu(y + params["c1_b"][None, :, None, None])
    y = jax.lax.conv_general_dilated(y, params["c2_w"], (_S2, _S2), "VALID",
                                     dimension_numbers=dn)
    y = jax.nn.relu(y + params["c2_b"][None, :, None, None])
    y = jax.lax.conv_general_dilated(y, params["c3_w"], (_S3, _S3), "VALID",
                                     dimension_numbers=dn)
    y = jax.nn.relu(y + params["c3_b"][None, :, None, None])
    y = y.reshape(x.shape[0], -1)             # PyTorch .view(B, -1) on NCHW
    h = jax.nn.relu(y @ params["fc1_w"].T + params["fc1_b"])
    return h @ params["fc2_w"].T + params["fc2_b"]


# --------------------------------- main ------------------------------------ #

if __name__ == "__main__":
    # 36x36 input -> conv spatial sizes 8 -> 3 -> 1, conv_out_size = 64.
    input_shape = (4, 36, 36)     # (C, H, W), PyTorch convention
    n_actions = 6
    batch = 2

    key = jax.random.PRNGKey(0)
    k_param, k_x = jax.random.split(key)
    params = init_dqn_params(k_param, input_shape, n_actions)
    prep = prepare_params(params, input_shape, n_actions)     # hoisted, once
    x = jax.random.normal(k_x, (batch,) + input_shape, jnp.float32)

    fwd = jax.jit(functools.partial(dqn_forward, n_actions=n_actions))
    q = jax.block_until_ready(fwd(prep, x))

    assert q.shape == (batch, n_actions), q.shape
    assert q.dtype == jnp.float32

    # Validate against the f32 XLA reference (kernel feeds the MXU bf16).
    q_ref = dqn_reference(params, x)
    assert jnp.allclose(q, q_ref, atol=1e-1, rtol=1e-1), (
        "max abs err = %f" % float(jnp.max(jnp.abs(q - q_ref))))

    print("KERNEL_OK")
</pallas_src>

<mosaic_0001>
module attributes {stable_mosaic.version = 11 : i64} {
  func.func @kernel(%arg0: memref<64x640xbf16, #tpu.memory_space<vmem>>, %arg1: memref<4x32x64xbf16, #tpu.memory_space<vmem>>, %arg2: memref<32x1xf32, #tpu.memory_space<vmem>>, %arg3: memref<16x64x32xbf16, #tpu.memory_space<vmem>>, %arg4: memref<64x1xf32, #tpu.memory_space<vmem>>, %arg5: memref<9x64x64xbf16, #tpu.memory_space<vmem>>, %arg6: memref<64x1xf32, #tpu.memory_space<vmem>>, %arg7: memref<1x512x64xbf16, #tpu.memory_space<vmem>>, %arg8: memref<512x1xf32, #tpu.memory_space<vmem>>, %arg9: memref<8x512xbf16, #tpu.memory_space<vmem>>, %arg10: memref<8x1xf32, #tpu.memory_space<vmem>>, %arg11: memref<8x128xf32, #tpu.memory_space<vmem>>) attributes {dimension_semantics = [], scalar_prefetch = 0 : i64, scratch_operands = 0 : i64, tpu.core_type = #tpu.core_type<tc>} {
    %cst = arith.constant 0.000000e+00 : f32
    %0 = vector.broadcast %cst : f32 to vector<32x512xf32>
    %c0 = arith.constant 0 : index
    %c0_0 = arith.constant 0 : index
    %c0_1 = arith.constant 0 : index
    %1 = vector.load %arg1[%c0, %c0_0, %c0_1] : memref<4x32x64xbf16, #tpu.memory_space<vmem>>, vector<1x32x64xbf16>
    %2 = vector.shape_cast %1 : vector<1x32x64xbf16> to vector<32x64xbf16>
    %c0_2 = arith.constant 0 : index
    %c0_3 = arith.constant 0 : index
    %3 = vector.load %arg0[%c0_2, %c0_3] : memref<64x640xbf16, #tpu.memory_space<vmem>>, vector<64x512xbf16>
    %cst_4 = arith.constant dense<0.000000e+00> : vector<32x512xf32>
    %4 = tpu.matmul %2, %3, %cst_4 {dimension_numbers = #tpu.dot_dimension_numbers<[1], [0], [0], [1], [0, 0, 1, 1], [], []>} : vector<32x64xbf16>, vector<64x512xbf16>, vector<32x512xf32> -> vector<32x512xf32>
    %5 = arith.addf %0, %4 : vector<32x512xf32>
    %c1 = arith.constant 1 : index
    %c0_5 = arith.constant 0 : index
    %c0_6 = arith.constant 0 : index
    %6 = vector.load %arg1[%c1, %c0_5, %c0_6] : memref<4x32x64xbf16, #tpu.memory_space<vmem>>, vector<1x32x64xbf16>
    %7 = vector.shape_cast %6 : vector<1x32x64xbf16> to vector<32x64xbf16>
    %c0_7 = arith.constant 0 : index
    %c1_8 = arith.constant 1 : index
    %8 = vector.load %arg0[%c0_7, %c1_8] : memref<64x640xbf16, #tpu.memory_space<vmem>>, vector<64x512xbf16>
    %cst_9 = arith.constant dense<0.000000e+00> : vector<32x512xf32>
    %9 = tpu.matmul %7, %8, %cst_9 {dimension_numbers = #tpu.dot_dimension_numbers<[1], [0], [0], [1], [0, 0, 1, 1], [], []>} : vector<32x64xbf16>, vector<64x512xbf16>, vector<32x512xf32> -> vector<32x512xf32>
    %10 = arith.addf %5, %9 : vector<32x512xf32>
    %c2 = arith.constant 2 : index
    %c0_10 = arith.constant 0 : index
    %c0_11 = arith.constant 0 : index
    %11 = vector.load %arg1[%c2, %c0_10, %c0_11] : memref<4x32x64xbf16, #tpu.memory_space<vmem>>, vector<1x32x64xbf16>
    %12 = vector.shape_cast %11 : vector<1x32x64xbf16> to vector<32x64xbf16>
    %c0_12 = arith.constant 0 : index
    %c9 = arith.constant 9 : index
    %13 = vector.load %arg0[%c0_12, %c9] : memref<64x640xbf16, #tpu.memory_space<vmem>>, vector<64x512xbf16>
    %cst_13 = arith.constant dense<0.000000e+00> : vector<32x512xf32>
    %14 = tpu.matmul %12, %13, %cst_13 {dimension_numbers = #tpu.dot_dimension_numbers<[1], [0], [0], [1], [0, 0, 1, 1], [], []>} : vector<32x64xbf16>, vector<64x512xbf16>, vector<32x512xf32> -> vector<32x512xf32>
    %15 = arith.addf %10, %14 : vector<32x512xf32>
    %c3 = arith.constant 3 : index
    %c0_14 = arith.constant 0 : index
    %c0_15 = arith.constant 0 : index
    %16 = vector.load %arg1[%c3, %c0_14, %c0_15] : memref<4x32x64xbf16, #tpu.memory_space<vmem>>, vector<1x32x64xbf16>
    %17 = vector.shape_cast %16 : vector<1x32x64xbf16> to vector<32x64xbf16>
    %c0_16 = arith.constant 0 : index
    %c10 = arith.constant 10 : index
    %18 = vector.load %arg0[%c0_16, %c10] : memref<64x640xbf16, #tpu.memory_space<vmem>>, vector<64x512xbf16>
    %cst_17 = arith.constant dense<0.000000e+00> : vector<32x512xf32>
    %19 = tpu.matmul %17, %18, %cst_17 {dimension_numbers = #tpu.dot_dimension_numbers<[1], [0], [0], [1], [0, 0, 1, 1], [], []>} : vector<32x64xbf16>, vector<64x512xbf16>, vector<32x512xf32> -> vector<32x512xf32>
    %20 = arith.addf %15, %19 : vector<32x512xf32>
    %c0_18 = arith.constant 0 : index
    %c0_19 = arith.constant 0 : index
    %21 = vector.load %arg2[%c0_18, %c0_19] : memref<32x1xf32, #tpu.memory_space<vmem>>, vector<32x1xf32>
    %22 = vector.broadcast %21 : vector<32x1xf32> to vector<32x512xf32>
    %23 = arith.addf %20, %22 : vector<32x512xf32>
    %cst_20 = arith.constant 0.000000e+00 : f32
    %24 = vector.broadcast %cst_20 : f32 to vector<32x512xf32>
    %25 = arith.maximumf %23, %24 : vector<32x512xf32>
    %26 = arith.truncf %25 : vector<32x512xf32> to vector<32x512xbf16>
    %cst_21 = arith.constant 0.000000e+00 : f32
    %27 = vector.broadcast %cst_21 : f32 to vector<64x384xf32>
    %c0_22 = arith.constant 0 : index
    %c0_23 = arith.constant 0 : index
    %c0_24 = arith.constant 0 : index
    %28 = vector.load %arg3[%c0_22, %c0_23, %c0_24] : memref<16x64x32xbf16, #tpu.memory_space<vmem>>, vector<1x64x32xbf16>
    %29 = vector.shape_cast %28 : vector<1x64x32xbf16> to vector<64x32xbf16>
    %30 = vector.extract_strided_slice %26 {offsets = [0, 0], sizes = [32, 384], strides = [1, 1]} : vector<32x512xbf16> to vector<32x384xbf16>
    %cst_25 = arith.constant dense<0.000000e+00> : vector<64x384xf32>
    %31 = tpu.matmul %29, %30, %cst_25 {dimension_numbers = #tpu.dot_dimension_numbers<[1], [0], [0], [1], [0, 0, 1, 1], [], []>} : vector<64x32xbf16>, vector<32x384xbf16>, vector<64x384xf32> -> vector<64x384xf32>
    %32 = arith.addf %27, %31 : vector<64x384xf32>
    %c1_26 = arith.constant 1 : index
    %c0_27 = arith.constant 0 : index
    %c0_28 = arith.constant 0 : index
    %33 = vector.load %arg3[%c1_26, %c0_27, %c0_28] : memref<16x64x32xbf16, #tpu.memory_space<vmem>>, vector<1x64x32xbf16>
    %34 = vector.shape_cast %33 : vector<1x64x32xbf16> to vector<64x32xbf16>
    %35 = vector.extract_strided_slice %26 {offsets = [0, 1], sizes = [32, 384], strides = [1, 1]} : vector<32x512xbf16> to vector<32x384xbf16>
    %cst_29 = arith.constant dense<0.000000e+00> : vector<64x384xf32>
    %36 = tpu.matmul %34, %35, %cst_29 {dimension_numbers = #tpu.dot_dimension_numbers<[1], [0], [0], [1], [0, 0, 1, 1], [], []>} : vector<64x32xbf16>, vector<32x384xbf16>, vector<64x384xf32> -> vector<64x384xf32>
    %37 = arith.addf %32, %36 : vector<64x384xf32>
    %c2_30 = arith.constant 2 : index
    %c0_31 = arith.constant 0 : index
    %c0_32 = arith.constant 0 : index
    %38 = vector.load %arg3[%c2_30, %c0_31, %c0_32] : memref<16x64x32xbf16, #tpu.memory_space<vmem>>, vector<1x64x32xbf16>
    %39 = vector.shape_cast %38 : vector<1x64x32xbf16> to vector<64x32xbf16>
    %40 = vector.extract_strided_slice %26 {offsets = [0, 2], sizes = [32, 384], strides = [1, 1]} : vector<32x512xbf16> to vector<32x384xbf16>
    %cst_33 = arith.constant dense<0.000000e+00> : vector<64x384xf32>
    %41 = tpu.matmul %39, %40, %cst_33 {dimension_numbers = #tpu.dot_dimension_numbers<[1], [0], [0], [1], [0, 0, 1, 1], [], []>} : vector<64x32xbf16>, vector<32x384xbf16>, vector<64x384xf32> -> vector<64x384xf32>
    %42 = arith.addf %37, %41 : vector<64x384xf32>
    %c3_34 = arith.constant 3 : index
    %c0_35 = arith.constant 0 : index
    %c0_36 = arith.constant 0 : index
    %43 = vector.load %arg3[%c3_34, %c0_35, %c0_36] : memref<16x64x32xbf16, #tpu.memory_space<vmem>>, vector<1x64x32xbf16>
    %44 = vector.shape_cast %43 : vector<1x64x32xbf16> to vector<64x32xbf16>
    %45 = vector.extract_strided_slice %26 {offsets = [0, 3], sizes = [32, 384], strides = [1, 1]} : vector<32x512xbf16> to vector<32x384xbf16>
    %cst_37 = arith.constant dense<0.000000e+00> : vector<64x384xf32>
    %46 = tpu.matmul %44, %45, %cst_37 {dimension_numbers = #tpu.dot_dimension_numbers<[1], [0], [0], [1], [0, 0, 1, 1], [], []>} : vector<64x32xbf16>, vector<32x384xbf16>, vector<64x384xf32> -> vector<64x384xf32>
    %47 = arith.addf %42, %46 : vector<64x384xf32>
    %c4 = arith.constant 4 : index
    %c0_38 = arith.constant 0 : index
    %c0_39 = arith.constant 0 : index
    %48 = vector.load %arg3[%c4, %c0_38, %c0_39] : memref<16x64x32xbf16, #tpu.memory_space<vmem>>, vector<1x64x32xbf16>
    %49 = vector.shape_cast %48 : vector<1x64x32xbf16> to vector<64x32xbf16>
    %50 = vector.extract_strided_slice %26 {offsets = [0, 9], sizes = [32, 384], strides = [1, 1]} : vector<32x512xbf16> to vector<32x384xbf16>
    %cst_40 = arith.constant dense<0.000000e+00> : vector<64x384xf32>
    %51 = tpu.matmul %49, %50, %cst_40 {dimension_numbers = #tpu.dot_dimension_numbers<[1], [0], [0], [1], [0, 0, 1, 1], [], []>} : vector<64x32xbf16>, vector<32x384xbf16>, vector<64x384xf32> -> vector<64x384xf32>
    %52 = arith.addf %47, %51 : vector<64x384xf32>
    %c5 = arith.constant 5 : index
    %c0_41 = arith.constant 0 : index
    %c0_42 = arith.constant 0 : index
    %53 = vector.load %arg3[%c5, %c0_41, %c0_42] : memref<16x64x32xbf16, #tpu.memory_space<vmem>>, vector<1x64x32xbf16>
    %54 = vector.shape_cast %53 : vector<1x64x32xbf16> to vector<64x32xbf16>
    %55 = vector.extract_strided_slice %26 {offsets = [0, 10], sizes = [32, 384], strides = [1, 1]} : vector<32x512xbf16> to vector<32x384xbf16>
    %cst_43 = arith.constant dense<0.000000e+00> : vector<64x384xf32>
    %56 = tpu.matmul %54, %55, %cst_43 {dimension_numbers = #tpu.dot_dimension_numbers<[1], [0], [0], [1], [0, 0, 1, 1], [], []>} : vector<64x32xbf16>, vector<32x384xbf16>, vector<64x384xf32> -> vector<64x384xf32>
    %57 = arith.addf %52, %56 : vector<64x384xf32>
    %c6 = arith.constant 6 : index
    %c0_44 = arith.constant 0 : index
    %c0_45 = arith.constant 0 : index
    %58 = vector.load %arg3[%c6, %c0_44, %c0_45] : memref<16x64x32xbf16, #tpu.memory_space<vmem>>, vector<1x64x32xbf16>
    %59 = vector.shape_cast %58 : vector<1x64x32xbf16> to vector<64x32xbf16>
    %60 = vector.extract_strided_slice %26 {offsets = [0, 11], sizes = [32, 384], strides = [1, 1]} : vector<32x512xbf16> to vector<32x384xbf16>
    %cst_46 = arith.constant dense<0.000000e+00> : vector<64x384xf32>
    %61 = tpu.matmul %59, %60, %cst_46 {dimension_numbers = #tpu.dot_dimension_numbers<[1], [0], [0], [1], [0, 0, 1, 1], [], []>} : vector<64x32xbf16>, vector<32x384xbf16>, vector<64x384xf32> -> vector<64x384xf32>
    %62 = arith.addf %57, %61 : vector<64x384xf32>
    %c7 = arith.constant 7 : index
    %c0_47 = arith.constant 0 : index
    %c0_48 = arith.constant 0 : index
    %63 = vector.load %arg3[%c7, %c0_47, %c0_48] : memref<16x64x32xbf16, #tpu.memory_space<vmem>>, vector<1x64x32xbf16>
    %64 = vector.shape_cast %63 : vector<1x64x32xbf16> to vector<64x32xbf16>
    %65 = vector.extract_strided_slice %26 {offsets = [0, 12], sizes = [32, 384], strides = [1, 1]} : vector<32x512xbf16> to vector<32x384xbf16>
    %cst_49 = arith.constant dense<0.000000e+00> : vector<64x384xf32>
    %66 = tpu.matmul %64, %65, %cst_49 {dimension_numbers = #tpu.dot_dimension_numbers<[1], [0], [0], [1], [0, 0, 1, 1], [], []>} : vector<64x32xbf16>, vector<32x384xbf16>, vector<64x384xf32> -> vector<64x384xf32>
    %67 = arith.addf %62, %66 : vector<64x384xf32>
    %c8 = arith.constant 8 : index
    %c0_50 = arith.constant 0 : index
    %c0_51 = arith.constant 0 : index
    %68 = vector.load %arg3[%c8, %c0_50, %c0_51] : memref<16x64x32xbf16, #tpu.memory_space<vmem>>, vector<1x64x32xbf16>
    %69 = vector.shape_cast %68 : vector<1x64x32xbf16> to vector<64x32xbf16>
    %70 = vector.extract_strided_slice %26 {offsets = [0, 18], sizes = [32, 384], strides = [1, 1]} : vector<32x512xbf16> to vector<32x384xbf16>
    %cst_52 = arith.constant dense<0.000000e+00> : vector<64x384xf32>
    %71 = tpu.matmul %69, %70, %cst_52 {dimension_numbers = #tpu.dot_dimension_numbers<[1], [0], [0], [1], [0, 0, 1, 1], [], []>} : vector<64x32xbf16>, vector<32x384xbf16>, vector<64x384xf32> -> vector<64x384xf32>
    %72 = arith.addf %67, %71 : vector<64x384xf32>
    %c9_53 = arith.constant 9 : index
    %c0_54 = arith.constant 0 : index
    %c0_55 = arith.constant 0 : index
    %73 = vector.load %arg3[%c9_53, %c0_54, %c0_55] : memref<16x64x32xbf16, #tpu.memory_space<vmem>>, vector<1x64x32xbf16>
    %74 = vector.shape_cast %73 : vector<1x64x32xbf16> to vector<64x32xbf16>
    %75 = vector.extract_strided_slice %26 {offsets = [0, 19], sizes = [32, 384], strides = [1, 1]} : vector<32x512xbf16> to vector<32x384xbf16>
    %cst_56 = arith.constant dense<0.000000e+00> : vector<64x384xf32>
    %76 = tpu.matmul %74, %75, %cst_56 {dimension_numbers = #tpu.dot_dimension_numbers<[1], [0], [0], [1], [0, 0, 1, 1], [], []>} : vector<64x32xbf16>, vector<32x384xbf16>, vector<64x384xf32> -> vector<64x384xf32>
    %77 = arith.addf %72, %76 : vector<64x384xf32>
    %c10_57 = arith.constant 10 : index
    %c0_58 = arith.constant 0 : index
    %c0_59 = arith.constant 0 : index
    %78 = vector.load %arg3[%c10_57, %c0_58, %c0_59] : memref<16x64x32xbf16, #tpu.memory_space<vmem>>, vector<1x64x32xbf16>
    %79 = vector.shape_cast %78 : vector<1x64x32xbf16> to vector<64x32xbf16>
    %80 = vector.extract_strided_slice %26 {offsets = [0, 20], sizes = [32, 384], strides = [1, 1]} : vector<32x512xbf16> to vector<32x384xbf16>
    %cst_60 = arith.constant dense<0.000000e+00> : vector<64x384xf32>
    %81 = tpu.matmul %79, %80, %cst_60 {dimension_numbers = #tpu.dot_dimension_numbers<[1], [0], [0], [1], [0, 0, 1, 1], [], []>} : vector<64x32xbf16>, vector<32x384xbf16>, vector<64x384xf32> -> vector<64x384xf32>
    %82 = arith.addf %77, %81 : vector<64x384xf32>
    %c11 = arith.constant 11 : index
    %c0_61 = arith.constant 0 : index
    %c0_62 = arith.constant 0 : index
    %83 = vector.load %arg3[%c11, %c0_61, %c0_62] : memref<16x64x32xbf16, #tpu.memory_space<vmem>>, vector<1x64x32xbf16>
    %84 = vector.shape_cast %83 : vector<1x64x32xbf16> to vector<64x32xbf16>
    %85 = vector.extract_strided_slice %26 {offsets = [0, 21], sizes = [32, 384], strides = [1, 1]} : vector<32x512xbf16> to vector<32x384xbf16>
    %cst_63 = arith.constant dense<0.000000e+00> : vector<64x384xf32>
    %86 = tpu.matmul %84, %85, %cst_63 {dimension_numbers = #tpu.dot_dimension_numbers<[1], [0], [0], [1], [0, 0, 1, 1], [], []>} : vector<64x32xbf16>, vector<32x384xbf16>, vector<64x384xf32> -> vector<64x384xf32>
    %87 = arith.addf %82, %86 : vector<64x384xf32>
    %c12 = arith.constant 12 : index
    %c0_64 = arith.constant 0 : index
    %c0_65 = arith.constant 0 : index
    %88 = vector.load %arg3[%c12, %c0_64, %c0_65] : memref<16x64x32xbf16, #tpu.memory_space<vmem>>, vector<1x64x32xbf16>
    %89 = vector.shape_cast %88 : vector<1x64x32xbf16> to vector<64x32xbf16>
    %90 = vector.extract_strided_slice %26 {offsets = [0, 27], sizes = [32, 384], strides = [1, 1]} : vector<32x512xbf16> to vector<32x384xbf16>
    %cst_66 = arith.constant dense<0.000000e+00> : vector<64x384xf32>
    %91 = tpu.matmul %89, %90, %cst_66 {dimension_numbers = #tpu.dot_dimension_numbers<[1], [0], [0], [1], [0, 0, 1, 1], [], []>} : vector<64x32xbf16>, vector<32x384xbf16>, vector<64x384xf32> -> vector<64x384xf32>
    %92 = arith.addf %87, %91 : vector<64x384xf32>
    %c13 = arith.constant 13 : index
    %c0_67 = arith.constant 0 : index
    %c0_68 = arith.constant 0 : index
    %93 = vector.load %arg3[%c13, %c0_67, %c0_68] : memref<16x64x32xbf16, #tpu.memory_space<vmem>>, vector<1x64x32xbf16>
    %94 = vector.shape_cast %93 : vector<1x64x32xbf16> to vector<64x32xbf16>
    %95 = vector.extract_strided_slice %26 {offsets = [0, 28], sizes = [32, 384], strides = [1, 1]} : vector<32x512xbf16> to vector<32x384xbf16>
    %cst_69 = arith.constant dense<0.000000e+00> : vector<64x384xf32>
    %96 = tpu.matmul %94, %95, %cst_69 {dimension_numbers = #tpu.dot_dimension_numbers<[1], [0], [0], [1], [0, 0, 1, 1], [], []>} : vector<64x32xbf16>, vector<32x384xbf16>, vector<64x384xf32> -> vector<64x384xf32>
    %97 = arith.addf %92, %96 : vector<64x384xf32>
    %c14 = arith.constant 14 : index
    %c0_70 = arith.constant 0 : index
    %c0_71 = arith.constant 0 : index
    %98 = vector.load %arg3[%c14, %c0_70, %c0_71] : memref<16x64x32xbf16, #tpu.memory_space<vmem>>, vector<1x64x32xbf16>
    %99 = vector.shape_cast %98 : vector<1x64x32xbf16> to vector<64x32xbf16>
    %100 = vector.extract_strided_slice %26 {offsets = [0, 29], sizes = [32, 384], strides = [1, 1]} : vector<32x512xbf16> to vector<32x384xbf16>
    %cst_72 = arith.constant dense<0.000000e+00> : vector<64x384xf32>
    %101 = tpu.matmul %99, %100, %cst_72 {dimension_numbers = #tpu.dot_dimension_numbers<[1], [0], [0], [1], [0, 0, 1, 1], [], []>} : vector<64x32xbf16>, vector<32x384xbf16>, vector<64x384xf32> -> vector<64x384xf32>
    %102 = arith.addf %97, %101 : vector<64x384xf32>
    %c15 = arith.constant 15 : index
    %c0_73 = arith.constant 0 : index
    %c0_74 = arith.constant 0 : index
    %103 = vector.load %arg3[%c15, %c0_73, %c0_74] : memref<16x64x32xbf16, #tpu.memory_space<vmem>>, vector<1x64x32xbf16>
    %104 = vector.shape_cast %103 : vector<1x64x32xbf16> to vector<64x32xbf16>
    %105 = vector.extract_strided_slice %26 {offsets = [0, 30], sizes = [32, 384], strides = [1, 1]} : vector<32x512xbf16> to vector<32x384xbf16>
    %cst_75 = arith.constant dense<0.000000e+00> : vector<64x384xf32>
    %106 = tpu.matmul %104, %105, %cst_75 {dimension_numbers = #tpu.dot_dimension_numbers<[1], [0], [0], [1], [0, 0, 1, 1], [], []>} : vector<64x32xbf16>, vector<32x384xbf16>, vector<64x384xf32> -> vector<64x384xf32>
    %107 = arith.addf %102, %106 : vector<64x384xf32>
    %c0_76 = arith.constant 0 : index
    %c0_77 = arith.constant 0 : index
    %108 = vector.load %arg4[%c0_76, %c0_77] : memref<64x1xf32, #tpu.memory_space<vmem>>, vector<64x1xf32>
    %109 = vector.broadcast %108 : vector<64x1xf32> to vector<64x384xf32>
    %110 = arith.addf %107, %109 : vector<64x384xf32>
    %cst_78 = arith.constant 0.000000e+00 : f32
    %111 = vector.broadcast %cst_78 : f32 to vector<64x384xf32>
    %112 = arith.maximumf %110, %111 : vector<64x384xf32>
    %113 = arith.truncf %112 : vector<64x384xf32> to vector<64x384xbf16>
    %cst_79 = arith.constant 0.000000e+00 : f32
    %114 = vector.broadcast %cst_79 : f32 to vector<64x256xf32>
    %c0_80 = arith.constant 0 : index
    %c0_81 = arith.constant 0 : index
    %c0_82 = arith.constant 0 : index
    %115 = vector.load %arg5[%c0_80, %c0_81, %c0_82] : memref<9x64x64xbf16, #tpu.memory_space<vmem>>, vector<1x64x64xbf16>
    %116 = vector.shape_cast %115 : vector<1x64x64xbf16> to vector<64x64xbf16>
    %117 = vector.extract_strided_slice %113 {offsets = [0, 0], sizes = [64, 256], strides = [1, 1]} : vector<64x384xbf16> to vector<64x256xbf16>
    %cst_83 = arith.constant dense<0.000000e+00> : vector<64x256xf32>
    %118 = tpu.matmul %116, %117, %cst_83 {dimension_numbers = #tpu.dot_dimension_numbers<[1], [0], [0], [1], [0, 0, 1, 1], [], []>} : vector<64x64xbf16>, vector<64x256xbf16>, vector<64x256xf32> -> vector<64x256xf32>
    %119 = arith.addf %114, %118 : vector<64x256xf32>
    %c1_84 = arith.constant 1 : index
    %c0_85 = arith.constant 0 : index
    %c0_86 = arith.constant 0 : index
    %120 = vector.load %arg5[%c1_84, %c0_85, %c0_86] : memref<9x64x64xbf16, #tpu.memory_space<vmem>>, vector<1x64x64xbf16>
    %121 = vector.shape_cast %120 : vector<1x64x64xbf16> to vector<64x64xbf16>
    %122 = vector.extract_strided_slice %113 {offsets = [0, 2], sizes = [64, 256], strides = [1, 1]} : vector<64x384xbf16> to vector<64x256xbf16>
    %cst_87 = arith.constant dense<0.000000e+00> : vector<64x256xf32>
    %123 = tpu.matmul %121, %122, %cst_87 {dimension_numbers = #tpu.dot_dimension_numbers<[1], [0], [0], [1], [0, 0, 1, 1], [], []>} : vector<64x64xbf16>, vector<64x256xbf16>, vector<64x256xf32> -> vector<64x256xf32>
    %124 = arith.addf %119, %123 : vector<64x256xf32>
    %c2_88 = arith.constant 2 : index
    %c0_89 = arith.constant 0 : index
    %c0_90 = arith.constant 0 : index
    %125 = vector.load %arg5[%c2_88, %c0_89, %c0_90] : memref<9x64x64xbf16, #tpu.memory_space<vmem>>, vector<1x64x64xbf16>
    %126 = vector.shape_cast %125 : vector<1x64x64xbf16> to vector<64x64xbf16>
    %127 = vector.extract_strided_slice %113 {offsets = [0, 4], sizes = [64, 256], strides = [1, 1]} : vector<64x384xbf16> to vector<64x256xbf16>
    %cst_91 = arith.constant dense<0.000000e+00> : vector<64x256xf32>
    %128 = tpu.matmul %126, %127, %cst_91 {dimension_numbers = #tpu.dot_dimension_numbers<[1], [0], [0], [1], [0, 0, 1, 1], [], []>} : vector<64x64xbf16>, vector<64x256xbf16>, vector<64x256xf32> -> vector<64x256xf32>
    %129 = arith.addf %124, %128 : vector<64x256xf32>
    %c3_92 = arith.constant 3 : index
    %c0_93 = arith.constant 0 : index
    %c0_94 = arith.constant 0 : index
    %130 = vector.load %arg5[%c3_92, %c0_93, %c0_94] : memref<9x64x64xbf16, #tpu.memory_space<vmem>>, vector<1x64x64xbf16>
    %131 = vector.shape_cast %130 : vector<1x64x64xbf16> to vector<64x64xbf16>
    %132 = vector.extract_strided_slice %113 {offsets = [0, 18], sizes = [64, 256], strides = [1, 1]} : vector<64x384xbf16> to vector<64x256xbf16>
    %cst_95 = arith.constant dense<0.000000e+00> : vector<64x256xf32>
    %133 = tpu.matmul %131, %132, %cst_95 {dimension_numbers = #tpu.dot_dimension_numbers<[1], [0], [0], [1], [0, 0, 1, 1], [], []>} : vector<64x64xbf16>, vector<64x256xbf16>, vector<64x256xf32> -> vector<64x256xf32>
    %134 = arith.addf %129, %133 : vector<64x256xf32>
    %c4_96 = arith.constant 4 : index
    %c0_97 = arith.constant 0 : index
    %c0_98 = arith.constant 0 : index
    %135 = vector.load %arg5[%c4_96, %c0_97, %c0_98] : memref<9x64x64xbf16, #tpu.memory_space<vmem>>, vector<1x64x64xbf16>
    %136 = vector.shape_cast %135 : vector<1x64x64xbf16> to vector<64x64xbf16>
    %137 = vector.extract_strided_slice %113 {offsets = [0, 20], sizes = [64, 256], strides = [1, 1]} : vector<64x384xbf16> to vector<64x256xbf16>
    %cst_99 = arith.constant dense<0.000000e+00> : vector<64x256xf32>
    %138 = tpu.matmul %136, %137, %cst_99 {dimension_numbers = #tpu.dot_dimension_numbers<[1], [0], [0], [1], [0, 0, 1, 1], [], []>} : vector<64x64xbf16>, vector<64x256xbf16>, vector<64x256xf32> -> vector<64x256xf32>
    %139 = arith.addf %134, %138 : vector<64x256xf32>
    %c5_100 = arith.constant 5 : index
    %c0_101 = arith.constant 0 : index
    %c0_102 = arith.constant 0 : index
    %140 = vector.load %arg5[%c5_100, %c0_101, %c0_102] : memref<9x64x64xbf16, #tpu.memory_space<vmem>>, vector<1x64x64xbf16>
    %141 = vector.shape_cast %140 : vector<1x64x64xbf16> to vector<64x64xbf16>
    %142 = vector.extract_strided_slice %113 {offsets = [0, 22], sizes = [64, 256], strides = [1, 1]} : vector<64x384xbf16> to vector<64x256xbf16>
    %cst_103 = arith.constant dense<0.000000e+00> : vector<64x256xf32>
    %143 = tpu.matmul %141, %142, %cst_103 {dimension_numbers = #tpu.dot_dimension_numbers<[1], [0], [0], [1], [0, 0, 1, 1], [], []>} : vector<64x64xbf16>, vector<64x256xbf16>, vector<64x256xf32> -> vector<64x256xf32>
    %144 = arith.addf %139, %143 : vector<64x256xf32>
    %c6_104 = arith.constant 6 : index
    %c0_105 = arith.constant 0 : index
    %c0_106 = arith.constant 0 : index
    %145 = vector.load %arg5[%c6_104, %c0_105, %c0_106] : memref<9x64x64xbf16, #tpu.memory_space<vmem>>, vector<1x64x64xbf16>
    %146 = vector.shape_cast %145 : vector<1x64x64xbf16> to vector<64x64xbf16>
    %147 = vector.extract_strided_slice %113 {offsets = [0, 36], sizes = [64, 256], strides = [1, 1]} : vector<64x384xbf16> to vector<64x256xbf16>
    %cst_107 = arith.constant dense<0.000000e+00> : vector<64x256xf32>
    %148 = tpu.matmul %146, %147, %cst_107 {dimension_numbers = #tpu.dot_dimension_numbers<[1], [0], [0], [1], [0, 0, 1, 1], [], []>} : vector<64x64xbf16>, vector<64x256xbf16>, vector<64x256xf32> -> vector<64x256xf32>
    %149 = arith.addf %144, %148 : vector<64x256xf32>
    %c7_108 = arith.constant 7 : index
    %c0_109 = arith.constant 0 : index
    %c0_110 = arith.constant 0 : index
    %150 = vector.load %arg5[%c7_108, %c0_109, %c0_110] : memref<9x64x64xbf16, #tpu.memory_space<vmem>>, vector<1x64x64xbf16>
    %151 = vector.shape_cast %150 : vector<1x64x64xbf16> to vector<64x64xbf16>
    %152 = vector.extract_strided_slice %113 {offsets = [0, 38], sizes = [64, 256], strides = [1, 1]} : vector<64x384xbf16> to vector<64x256xbf16>
    %cst_111 = arith.constant dense<0.000000e+00> : vector<64x256xf32>
    %153 = tpu.matmul %151, %152, %cst_111 {dimension_numbers = #tpu.dot_dimension_numbers<[1], [0], [0], [1], [0, 0, 1, 1], [], []>} : vector<64x64xbf16>, vector<64x256xbf16>, vector<64x256xf32> -> vector<64x256xf32>
    %154 = arith.addf %149, %153 : vector<64x256xf32>
    %c8_112 = arith.constant 8 : index
    %c0_113 = arith.constant 0 : index
    %c0_114 = arith.constant 0 : index
    %155 = vector.load %arg5[%c8_112, %c0_113, %c0_114] : memref<9x64x64xbf16, #tpu.memory_space<vmem>>, vector<1x64x64xbf16>
    %156 = vector.shape_cast %155 : vector<1x64x64xbf16> to vector<64x64xbf16>
    %157 = vector.extract_strided_slice %113 {offsets = [0, 40], sizes = [64, 256], strides = [1, 1]} : vector<64x384xbf16> to vector<64x256xbf16>
    %cst_115 = arith.constant dense<0.000000e+00> : vector<64x256xf32>
    %158 = tpu.matmul %156, %157, %cst_115 {dimension_numbers = #tpu.dot_dimension_numbers<[1], [0], [0], [1], [0, 0, 1, 1], [], []>} : vector<64x64xbf16>, vector<64x256xbf16>, vector<64x256xf32> -> vector<64x256xf32>
    %159 = arith.addf %154, %158 : vector<64x256xf32>
    %c0_116 = arith.constant 0 : index
    %c0_117 = arith.constant 0 : index
    %160 = vector.load %arg6[%c0_116, %c0_117] : memref<64x1xf32, #tpu.memory_space<vmem>>, vector<64x1xf32>
    %161 = vector.broadcast %160 : vector<64x1xf32> to vector<64x256xf32>
    %162 = arith.addf %159, %161 : vector<64x256xf32>
    %cst_118 = arith.constant 0.000000e+00 : f32
    %163 = vector.broadcast %cst_118 : f32 to vector<64x256xf32>
    %164 = arith.maximumf %162, %163 : vector<64x256xf32>
    %165 = arith.truncf %164 : vector<64x256xf32> to vector<64x256xbf16>
    %cst_119 = arith.constant 0.000000e+00 : f32
    %166 = vector.broadcast %cst_119 : f32 to vector<512x2xf32>
    %167 = vector.extract_strided_slice %165 {offsets = [0, 0], sizes = [64, 1], strides = [1, 1]} : vector<64x256xbf16> to vector<64x1xbf16>
    %168 = vector.extract_strided_slice %165 {offsets = [0, 81], sizes = [64, 1], strides = [1, 1]} : vector<64x256xbf16> to vector<64x1xbf16>
    %169 = tpu.concatenate %167, %168 in 1 : vector<64x1xbf16>, vector<64x1xbf16> -> vector<64x2xbf16>
    %c0_120 = arith.constant 0 : index
    %c0_121 = arith.constant 0 : index
    %c0_122 = arith.constant 0 : index
    %170 = vector.load %arg7[%c0_120, %c0_121, %c0_122] : memref<1x512x64xbf16, #tpu.memory_space<vmem>>, vector<1x512x64xbf16>
    %171 = vector.shape_cast %170 : vector<1x512x64xbf16> to vector<512x64xbf16>
    %cst_123 = arith.constant dense<0.000000e+00> : vector<512x2xf32>
    %172 = tpu.matmul %171, %169, %cst_123 {dimension_numbers = #tpu.dot_dimension_numbers<[1], [0], [0], [1], [0, 0, 1, 1], [], []>} : vector<512x64xbf16>, vector<64x2xbf16>, vector<512x2xf32> -> vector<512x2xf32>
    %173 = arith.addf %166, %172 : vector<512x2xf32>
    %c0_124 = arith.constant 0 : index
    %c0_125 = arith.constant 0 : index
    %174 = vector.load %arg8[%c0_124, %c0_125] : memref<512x1xf32, #tpu.memory_space<vmem>>, vector<512x1xf32>
    %175 = vector.broadcast %174 : vector<512x1xf32> to vector<512x2xf32>
    %176 = arith.addf %173, %175 : vector<512x2xf32>
    %cst_126 = arith.constant 0.000000e+00 : f32
    %177 = vector.broadcast %cst_126 : f32 to vector<512x2xf32>
    %178 = arith.maximumf %176, %177 : vector<512x2xf32>
    %179 = arith.truncf %178 : vector<512x2xf32> to vector<512x2xbf16>
    %cst_127 = arith.constant 0.000000e+00 : bf16
    %180 = vector.broadcast %cst_127 : bf16 to vector<512x126xbf16>
    %181 = tpu.concatenate %179, %180 in 1 : vector<512x2xbf16>, vector<512x126xbf16> -> vector<512x128xbf16>
    %c0_128 = arith.constant 0 : index
    %c0_129 = arith.constant 0 : index
    %182 = vector.load %arg9[%c0_128, %c0_129] : memref<8x512xbf16, #tpu.memory_space<vmem>>, vector<8x512xbf16>
    %cst_130 = arith.constant dense<0.000000e+00> : vector<8x128xf32>
    %183 = tpu.matmul %182, %181, %cst_130 {dimension_numbers = #tpu.dot_dimension_numbers<[1], [0], [0], [1], [0, 0, 1, 1], [], []>} : vector<8x512xbf16>, vector<512x128xbf16>, vector<8x128xf32> -> vector<8x128xf32>
    %c0_131 = arith.constant 0 : index
    %c0_132 = arith.constant 0 : index
    %184 = vector.load %arg10[%c0_131, %c0_132] : memref<8x1xf32, #tpu.memory_space<vmem>>, vector<8x1xf32>
    %185 = vector.broadcast %184 : vector<8x1xf32> to vector<8x128xf32>
    %186 = arith.addf %183, %185 : vector<8x128xf32>
    %c0_133 = arith.constant 0 : index
    %c0_134 = arith.constant 0 : index
    %187 = vector.load %arg11[%c0_133, %c0_134] : memref<8x128xf32, #tpu.memory_space<vmem>>, vector<8x128xf32>
    tpu.vector_store %arg11[%c0_133, %c0_134], %186 {strides = array<i32>} : memref<8x128xf32, #tpu.memory_space<vmem>>, vector<8x128xf32>,
    return
  }
}

</mosaic_0001>

<llo_original>
// kernel: dqn_forward.1
$region0: #{dqn_forward.1}
  #allocation0 [shape = 'u32[]', space=smem, size = 0x4, offset = 0x4, fixed_abs, tag = 'smem constant byte address 0x4 - core index']
  #allocation1 [shape = 'u32[144,128]{1,0:T(1,128)}', space=vmem, size = 0x12000, scoped, tag = 'internal scratch']
  %s0 = inlined_call_operand.vmem [shape: bf16[64,640], index: 0, kind: input, shape index: {}]
  %s1 = inlined_call_operand.vmem [shape: bf16[4,32,64], index: 1, kind: input, shape index: {}]
  %s2 = inlined_call_operand.vmem [shape: f32[32,1], index: 2, kind: input, shape index: {}]
  %s3 = inlined_call_operand.vmem [shape: bf16[16,64,32], index: 3, kind: input, shape index: {}]
  %s4 = inlined_call_operand.vmem [shape: f32[64,1], index: 4, kind: input, shape index: {}]
  %s5 = inlined_call_operand.vmem [shape: bf16[9,64,64], index: 5, kind: input, shape index: {}]
  %s6 = inlined_call_operand.vmem [shape: f32[64,1], index: 6, kind: input, shape index: {}]
  %s7 = inlined_call_operand.vmem [shape: bf16[1,512,64], index: 7, kind: input, shape index: {}]
  %s8 = inlined_call_operand.vmem [shape: f32[512,1], index: 8, kind: input, shape index: {}]
  %s9 = inlined_call_operand.vmem [shape: bf16[8,512], index: 9, kind: input, shape index: {}]
  %s10 = inlined_call_operand.vmem [shape: f32[8,1], index: 10, kind: input, shape index: {}]
  %s11 = inlined_call_operand.vmem [shape: f32[8,128], index: 11, kind: output, shape index: {}]
  %s12 = sld [smem:[#allocation0]]
  $region54: #{dqn_forward.1} parent=0
    _
  %s14 = ssub.s32 1, %s12
  %s15 = scalar_select 0, %s14, %s12
  // Predicated region
  $region2: #{dqn_forward.1} parent=0 // pred_check
    _
  $region3: #{dqn_forward.1} parent=0 // pred_check_branch
    %17 = sbr.rel (0) target = $region5
  $region4: #{dqn_forward.1} parent=0 // pred_region
    _
  $region5: #{dqn_forward.1} parent=0 // pred_fallthru
    _
  // Predicated region
  $region6: #{dqn_forward.1} parent=0 // pred_check
    _
  $region7: #{dqn_forward.1} parent=0 // pred_check_branch
    %19 = sbr.rel (0) target = $region9
  $region8: #{dqn_forward.1} parent=0 // pred_region
    _
  $region9: #{dqn_forward.1} parent=0 // pred_fallthru
    _
  // Predicated region
  $region10: #{dqn_forward.1} parent=0 // pred_check
    _
  $region11: #{dqn_forward.1} parent=0 // pred_check_branch
    %21 = sbr.rel (0) target = $region13
  $region12: #{dqn_forward.1} parent=0 // pred_region
    _
  $region13: #{dqn_forward.1} parent=0 // pred_fallthru
    _
  // Predicated region
  $region14: #{dqn_forward.1} parent=0 // pred_check
    _
  $region15: #{dqn_forward.1} parent=0 // pred_check_branch
    %23 = sbr.rel (0) target = $region17
  $region16: #{dqn_forward.1} parent=0 // pred_region
    _
  $region17: #{dqn_forward.1} parent=0 // pred_fallthru
    _
  // Predicated region
  $region18: #{dqn_forward.1} parent=0 // pred_check
    _
  $region19: #{dqn_forward.1} parent=0 // pred_check_branch
    %25 = sbr.rel (0) target = $region21
  $region20: #{dqn_forward.1} parent=0 // pred_region
    _
  $region21: #{dqn_forward.1} parent=0 // pred_fallthru
    _
  // Predicated region
  $region22: #{dqn_forward.1} parent=0 // pred_check
    _
  $region23: #{dqn_forward.1} parent=0 // pred_check_branch
    %27 = sbr.rel (0) target = $region25
  $region24: #{dqn_forward.1} parent=0 // pred_region
    _
  $region25: #{dqn_forward.1} parent=0 // pred_fallthru
    _
  // Predicated region
  $region26: #{dqn_forward.1} parent=0 // pred_check
    _
  $region27: #{dqn_forward.1} parent=0 // pred_check_branch
    %29 = sbr.rel (0) target = $region29
  $region28: #{dqn_forward.1} parent=0 // pred_region
    _
  $region29: #{dqn_forward.1} parent=0 // pred_fallthru
    _
  // Predicated region
  $region30: #{dqn_forward.1} parent=0 // pred_check
    _
  $region31: #{dqn_forward.1} parent=0 // pred_check_branch
    %31 = sbr.rel (0) target = $region33
  $region32: #{dqn_forward.1} parent=0 // pred_region
    _
  $region33: #{dqn_forward.1} parent=0 // pred_fallthru
    _
  // Predicated region
  $region34: #{dqn_forward.1} parent=0 // pred_check
    _
  $region35: #{dqn_forward.1} parent=0 // pred_check_branch
    %33 = sbr.rel (0) target = $region37
  $region36: #{dqn_forward.1} parent=0 // pred_region
    _
  $region37: #{dqn_forward.1} parent=0 // pred_fallthru
    _
  // Predicated region
  $region38: #{dqn_forward.1} parent=0 // pred_check
    _
  $region39: #{dqn_forward.1} parent=0 // pred_check_branch
    %35 = sbr.rel (0) target = $region41
  $region40: #{dqn_forward.1} parent=0 // pred_region
    _
  $region41: #{dqn_forward.1} parent=0 // pred_fallthru
    _
  // Predicated region
  $region42: #{dqn_forward.1} parent=0 // pred_check
    _
  $region43: #{dqn_forward.1} parent=0 // pred_check_branch
    %37 = sbr.rel (0) target = $region45
  $region44: #{dqn_forward.1} parent=0 // pred_region
    _
  $region45: #{dqn_forward.1} parent=0 // pred_fallthru
    _
  %v39 = vld [vmem:[%s1] sm:$0xf]
  %v40 = vld [vmem:[%s1 + $0x4] sm:$0xf]
  %v41 = vld [vmem:[%s1 + $0x8] sm:$0xf]
  %v42 = vld [vmem:[%s1 + $0xc] sm:$0xf]
  %v43 = vld [vmem:[%s0] sm:$0xff]
  %v44 = vld [vmem:[%s0 + $0x8] sm:$0xff]
  %v45 = vld [vmem:[%s0 + $0x14] sm:$0xff]
  %v46 = vld [vmem:[%s0 + $0x1c] sm:$0xff]
  %v47 = vld [vmem:[%s0 + $0x28] sm:$0xff]
  %v48 = vld [vmem:[%s0 + $0x30] sm:$0xff]
  %v49 = vld [vmem:[%s0 + $0x3c] sm:$0xff]
  %v50 = vld [vmem:[%s0 + $0x44] sm:$0xff]
  %v51 = vld [vmem:[%s0 + $0x50] sm:$0xff]
  %v52 = vld [vmem:[%s0 + $0x58] sm:$0xff]
  %v53 = vld [vmem:[%s0 + $0x64] sm:$0xff]
  %v54 = vld [vmem:[%s0 + $0x6c] sm:$0xff]
  %v55 = vld [vmem:[%s0 + $0x78] sm:$0xff]
  %v56 = vld [vmem:[%s0 + $0x80] sm:$0xff]
  %v57 = vld [vmem:[%s0 + $0x8c] sm:$0xff]
  %v58 = vld [vmem:[%s0 + $0x94] sm:$0xff]
  %s59 = scalar_lea.vmem %s1, 16
  %v60 = vld [vmem:[%s59] sm:$0xf]
  %v61 = vld [vmem:[%s59 + $0x4] sm:$0xf]
  %v62 = vld [vmem:[%s59 + $0x8] sm:$0xf]
  %v63 = vld [vmem:[%s59 + $0xc] sm:$0xf]
  %v64 = vld [vmem:[%s0] sm:$0xff]
  %v65 = vld [vmem:[%s0 + $0x8] sm:$0xff]
  %v66 = vld [vmem:[%s0 + $0x10] sm:$0xf]
  %v67 = vld [vmem:[%s0 + $0x14] sm:$0xff]
  %v68 = vld [vmem:[%s0 + $0x1c] sm:$0xff]
  %v69 = vld [vmem:[%s0 + $0x24] sm:$0xf]
  %v70 = vld [vmem:[%s0 + $0x28] sm:$0xff]
  %v71 = vld [vmem:[%s0 + $0x30] sm:$0xff]
  %v72 = vld [vmem:[%s0 + $0x38] sm:$0xf]
  %v73 = vld [vmem:[%s0 + $0x3c] sm:$0xff]
  %v74 = vld [vmem:[%s0 + $0x44] sm:$0xff]
  %v75 = vld [vmem:[%s0 + $0x4c] sm:$0xf]
  %v76 = vld [vmem:[%s0 + $0x50] sm:$0xff]
  %v77 = vld [vmem:[%s0 + $0x58] sm:$0xff]
  %v78 = vld [vmem:[%s0 + $0x60] sm:$0xf]
  %v79 = vld [vmem:[%s0 + $0x64] sm:$0xff]
  %v80 = vld [vmem:[%s0 + $0x6c] sm:$0xff]
  %v81 = vld [vmem:[%s0 + $0x74] sm:$0xf]
  %v82 = vld [vmem:[%s0 + $0x78] sm:$0xff]
  %v83 = vld [vmem:[%s0 + $0x80] sm:$0xff]
  %v84 = vld [vmem:[%s0 + $0x88] sm:$0xf]
  %v85 = vld [vmem:[%s0 + $0x8c] sm:$0xff]
  %v86 = vld [vmem:[%s0 + $0x94] sm:$0xff]
  %v87 = vld [vmem:[%s0 + $0x9c] sm:$0xf]
  %v92 = vunpack.c.l.b16 %v60
  %v93 = vunpack.c.l.b16 %v61
  %v94 = vunpack.c.l.b16 %v62
  %v95 = vunpack.c.l.b16 %v63
  %v96 = vpack.c.b16 %v93, %v92
  %v97 = vpack.c.b16 %v95, %v94
  %v122 = vunpack.c.l.b16 %v64
  %v123 = vunpack.c.h.b16 %v64
  %v124 = vunpack.c.l.b16 %v65
  %v125 = vunpack.c.h.b16 %v65
  %v126 = vunpack.c.l.b16 %v66
  %v127 = vunpack.c.l.b16 %v67
  %v128 = vunpack.c.h.b16 %v67
  %v129 = vunpack.c.l.b16 %v68
  %v130 = vunpack.c.h.b16 %v68
  %v131 = vunpack.c.l.b16 %v69
  %v132 = vunpack.c.l.b16 %v70
  %v133 = vunpack.c.h.b16 %v70
  %v134 = vunpack.c.l.b16 %v71
  %v135 = vunpack.c.h.b16 %v71
  %v136 = vunpack.c.l.b16 %v72
  %v137 = vunpack.c.l.b16 %v73
  %v138 = vunpack.c.h.b16 %v73
  %v139 = vunpack.c.l.b16 %v74
  %v140 = vunpack.c.h.b16 %v74
  %v141 = vunpack.c.l.b16 %v75
  %v142 = vunpack.c.l.b16 %v76
  %v143 = vunpack.c.h.b16 %v76
  %v144 = vunpack.c.l.b16 %v77
  %v145 = vunpack.c.h.b16 %v77
  %v146 = vunpack.c.l.b16 %v78
  %v147 = vunpack.c.l.b16 %v79
  %v148 = vunpack.c.h.b16 %v79
  %v149 = vunpack.c.l.b16 %v80
  %v150 = vunpack.c.h.b16 %v80
  %v151 = vunpack.c.l.b16 %v81
  %v152 = vunpack.c.l.b16 %v82
  %v153 = vunpack.c.h.b16 %v82
  %v154 = vunpack.c.l.b16 %v83
  %v155 = vunpack.c.h.b16 %v83
  %v156 = vunpack.c.l.b16 %v84
  %v157 = vunpack.c.l.b16 %v85
  %v158 = vunpack.c.h.b16 %v85
  %v159 = vunpack.c.l.b16 %v86
  %v160 = vunpack.c.h.b16 %v86
  %v161 = vunpack.c.l.b16 %v87
  %v162 = vpack.c.b16 %v127, %v122
  %v163 = vpack.c.b16 %v128, %v123
  %v164 = vpack.c.b16 %v129, %v124
  %v165 = vpack.c.b16 %v130, %v125
  %v166 = vpack.c.b16 %v131, %v126
  %v167 = vpack.c.b16 %v137, %v132
  %v168 = vpack.c.b16 %v138, %v133
  %v169 = vpack.c.b16 %v139, %v134
  %v170 = vpack.c.b16 %v140, %v135
  %v171 = vpack.c.b16 %v141, %v136
  %v172 = vpack.c.b16 %v147, %v142
  %v173 = vpack.c.b16 %v148, %v143
  %v174 = vpack.c.b16 %v149, %v144
  %v175 = vpack.c.b16 %v150, %v145
  %v176 = vpack.c.b16 %v151, %v146
  %v177 = vpack.c.b16 %v157, %v152
  %v178 = vpack.c.b16 %v158, %v153
  %v179 = vpack.c.b16 %v159, %v154
  %v180 = vpack.c.b16 %v160, %v155
  %v181 = vpack.c.b16 %v161, %v156
  %182 = vrot.lane.b32.xlu0 %v162, 127
  %v183 = vpop.permute.xlu0 %182
  %184 = vrot.lane.b32.xlu0 %v163, 127
  %v185 = vpop.permute.xlu0 %184
  %186 = vrot.lane.b32.xlu0 %v164, 127
  %v187 = vpop.permute.xlu0 %186
  %188 = vrot.lane.b32.xlu0 %v165, 127
  %v189 = vpop.permute.xlu0 %188
  %190 = vrot.lane.b32.xlu0 %v166, 127
  %v191 = vpop.permute.xlu0 %190
  %192 = vrot.lane.b32.xlu0 %v167, 127
  %v193 = vpop.permute.xlu0 %192
  %194 = vrot.lane.b32.xlu0 %v168, 127
  %v195 = vpop.permute.xlu0 %194
  %196 = vrot.lane.b32.xlu0 %v169, 127
  %v197 = vpop.permute.xlu0 %196
  %198 = vrot.lane.b32.xlu0 %v170, 127
  %v199 = vpop.permute.xlu0 %198
  %200 = vrot.lane.b32.xlu0 %v171, 127
  %v201 = vpop.permute.xlu0 %200
  %202 = vrot.lane.b32.xlu0 %v172, 127
  %v203 = vpop.permute.xlu0 %202
  %204 = vrot.lane.b32.xlu0 %v173, 127
  %v205 = vpop.permute.xlu0 %204
  %206 = vrot.lane.b32.xlu0 %v174, 127
  %v207 = vpop.permute.xlu0 %206
  %208 = vrot.lane.b32.xlu0 %v175, 127
  %v209 = vpop.permute.xlu0 %208
  %210 = vrot.lane.b32.xlu0 %v176, 127
  %v211 = vpop.permute.xlu0 %210
  %212 = vrot.lane.b32.xlu0 %v177, 127
  %v213 = vpop.permute.xlu0 %212
  %214 = vrot.lane.b32.xlu0 %v178, 127
  %v215 = vpop.permute.xlu0 %214
  %216 = vrot.lane.b32.xlu0 %v179, 127
  %v217 = vpop.permute.xlu0 %216
  %218 = vrot.lane.b32.xlu0 %v180, 127
  %v219 = vpop.permute.xlu0 %218
  %220 = vrot.lane.b32.xlu0 %v181, 127
  %v221 = vpop.permute.xlu0 %220
  %vm222 = vcmask 1039360
  %v223 = vsel %vm222, %v183, %v185
  %v224 = vsel %vm222, %v185, %v187
  %v225 = vsel %vm222, %v187, %v189
  %v226 = vsel %vm222, %v189, %v191
  %v227 = vsel %vm222, %v193, %v195
  %v228 = vsel %vm222, %v195, %v197
  %v229 = vsel %vm222, %v197, %v199
  %v230 = vsel %vm222, %v199, %v201
  %v231 = vsel %vm222, %v203, %v205
  %v232 = vsel %vm222, %v205, %v207
  %v233 = vsel %vm222, %v207, %v209
  %v234 = vsel %vm222, %v209, %v211
  %v235 = vsel %vm222, %v213, %v215
  %v236 = vsel %vm222, %v215, %v217
  %v237 = vsel %vm222, %v217, %v219
  %v238 = vsel %vm222, %v219, %v221
  %vm255 = vcmask 523264
  %v257 = vsel %vm255, %v96, 0
  %v260 = vsel %vm255, %v97, 0
  %262 = vmatprep.subr.bf16.mxu0 %v224
  %263 = vmatpush1.bf16.msra.mxu0 %v223
  %264 = vmatprep.subr.bf16.mxu0 %v228
  %265 = vmatpush1.bf16.msra.mxu0 %v227
  %266 = vmatprep.subr.bf16.mxu0 %v232
  %267 = vmatpush1.bf16.msra.mxu0 %v231
  %268 = vmatprep.subr.bf16.mxu0 %v236
  %269 = vmatpush1.bf16.msra.mxu0 %v235
  %270 = vmatprep.subr.bf16.mxu0 0
  %271 = vmatpush1.bf16.msra.mxu0 0
  %272 = vmatprep.subr.bf16.mxu0 0
  %273 = vmatpush1.bf16.msra.mxu0 0
  %274 = vmatprep.subr.bf16.mxu0 0
  %275 = vmatpush1.bf16.msra.mxu0 0
  %276 = vmatprep.subr.bf16.mxu0 0
  %277 = vmatpush1.bf16.msra.mxu0 0
  %278 = vmatprep.subr.bf16.mxu0 0
  %279 = vmatpush1.bf16.msra.mxu0 0
  %280 = vmatprep.subr.bf16.mxu0 0
  %281 = vmatpush1.bf16.msra.mxu0 0
  %282 = vmatprep.subr.bf16.mxu0 0
  %283 = vmatpush1.bf16.msra.mxu0 0
  %284 = vmatprep.subr.bf16.mxu0 0
  %285 = vmatpush1.bf16.msra.mxu0 0
  %286 = vmatprep.subr.bf16.mxu0 0
  %287 = vmatpush1.bf16.msra.mxu0 0
  %288 = vmatprep.subr.bf16.mxu0 0
  %289 = vmatpush1.bf16.msra.mxu0 0
  %290 = vmatprep.subr.bf16.mxu0 0
  %291 = vmatpush1.bf16.msra.mxu0 0
  %292 = vmatprep.subr.bf16.mxu0 0
  %293 = vmatpush1.bf16.msra.mxu0 0
  %294 = vmatprep.mubr.bf16.mxu0 0
  %295 = vmatmul.mubr.bf16.gmra.mrb[0].mxu0 %v257
  %v296 = vpop.f32.mrb[0].mxu0
  %v297 = vadd.f32 0.0, %v296
  %v298 = vpop.f32.mrb[0].mxu0
  %v299 = vadd.f32 0.0, %v298
  %v300 = vpop.f32.mrb[0].mxu0
  %v301 = vadd.f32 0.0, %v300
  %v302 = vpop.f32.mrb[0].mxu0
  %v303 = vadd.f32 0.0, %v302
  %304 = vmatprep.mubr.bf16.mxu0 0
  %305 = vmatmul.mubr.bf16.gmra.mrb[0].mxu0 %v260
  %v306 = vpop.f32.mrb[0].mxu0
  %v307 = vadd.f32 0.0, %v306
  %v308 = vpop.f32.mrb[0].mxu0
  %v309 = vadd.f32 0.0, %v308
  %v310 = vpop.f32.mrb[0].mxu0
  %v311 = vadd.f32 0.0, %v310
  %v312 = vpop.f32.mrb[0].mxu0
  %v313 = vadd.f32 0.0, %v312
  %314 = vdwg.mxu0
  %315 = vmatprep.subr.bf16.mxu0 %v226
  %316 = vmatpush1.bf16.msra.mxu0 %v225
  %317 = vmatprep.subr.bf16.mxu0 %v230
  %318 = vmatpush1.bf16.msra.mxu0 %v229
  %319 = vmatprep.subr.bf16.mxu0 %v234
  %320 = vmatpush1.bf16.msra.mxu0 %v233
  %321 = vmatprep.subr.bf16.mxu0 %v238
  %322 = vmatpush1.bf16.msra.mxu0 %v237
  %323 = vmatprep.subr.bf16.mxu0 0
  %324 = vmatpush1.bf16.msra.mxu0 0
  %325 = vmatprep.subr.bf16.mxu0 0
  %326 = vmatpush1.bf16.msra.mxu0 0
  %327 = vmatprep.subr.bf16.mxu0 0
  %328 = vmatpush1.bf16.msra.mxu0 0
  %329 = vmatprep.subr.bf16.mxu0 0
  %330 = vmatpush1.bf16.msra.mxu0 0
  %331 = vmatprep.subr.bf16.mxu0 0
  %332 = vmatpush1.bf16.msra.mxu0 0
  %333 = vmatprep.subr.bf16.mxu0 0
  %334 = vmatpush1.bf16.msra.mxu0 0
  %335 = vmatprep.subr.bf16.mxu0 0
  %336 = vmatpush1.bf16.msra.mxu0 0
  %337 = vmatprep.subr.bf16.mxu0 0
  %338 = vmatpush1.bf16.msra.mxu0 0
  %339 = vmatprep.subr.bf16.mxu0 0
  %340 = vmatpush1.bf16.msra.mxu0 0
  %341 = vmatprep.subr.bf16.mxu0 0
  %342 = vmatpush1.bf16.msra.mxu0 0
  %343 = vmatprep.subr.bf16.mxu0 0
  %344 = vmatpush1.bf16.msra.mxu0 0
  %345 = vmatprep.subr.bf16.mxu0 0
  %346 = vmatpush1.bf16.msra.mxu0 0
  %347 = vmatprep.mubr.bf16.mxu0 0
  %348 = vmatmul.mubr.bf16.gmra.mrb[0].mxu0 %v257
  %v349 = vpop.f32.mrb[0].mxu0
  %v350 = vadd.f32 0.0, %v349
  %v351 = vpop.f32.mrb[0].mxu0
  %v352 = vadd.f32 0.0, %v351
  %v353 = vpop.f32.mrb[0].mxu0
  %v354 = vadd.f32 0.0, %v353
  %v355 = vpop.f32.mrb[0].mxu0
  %v356 = vadd.f32 0.0, %v355
  %357 = vmatprep.mubr.bf16.mxu0 0
  %358 = vmatmul.mubr.bf16.gmra.mrb[0].mxu0 %v260
  %v359 = vpop.f32.mrb[0].mxu0
  %v360 = vadd.f32 0.0, %v359
  %v361 = vpop.f32.mrb[0].mxu0
  %v362 = vadd.f32 0.0, %v361
  %v363 = vpop.f32.mrb[0].mxu0
  %v364 = vadd.f32 0.0, %v363
  %v365 = vpop.f32.mrb[0].mxu0
  %v366 = vadd.f32 0.0, %v365
  %367 = vdwg.mxu0
  %v372 = vunpack.c.l.b16 %v39
  %v373 = vunpack.c.l.b16 %v40
  %v374 = vunpack.c.l.b16 %v41
  %v375 = vunpack.c.l.b16 %v42
  %v376 = vpack.c.b16 %v373, %v372
  %v377 = vpack.c.b16 %v375, %v374
  %v394 = vunpack.c.l.b16 %v43
  %v395 = vunpack.c.h.b16 %v43
  %v396 = vunpack.c.l.b16 %v44
  %v397 = vunpack.c.h.b16 %v44
  %v398 = vunpack.c.l.b16 %v45
  %v399 = vunpack.c.h.b16 %v45
  %v400 = vunpack.c.l.b16 %v46
  %v401 = vunpack.c.h.b16 %v46
  %v402 = vunpack.c.l.b16 %v47
  %v403 = vunpack.c.h.b16 %v47
  %v404 = vunpack.c.l.b16 %v48
  %v405 = vunpack.c.h.b16 %v48
  %v406 = vunpack.c.l.b16 %v49
  %v407 = vunpack.c.h.b16 %v49
  %v408 = vunpack.c.l.b16 %v50
  %v409 = vunpack.c.h.b16 %v50
  %v410 = vunpack.c.l.b16 %v51
  %v411 = vunpack.c.h.b16 %v51
  %v412 = vunpack.c.l.b16 %v52
  %v413 = vunpack.c.h.b16 %v52
  %v414 = vunpack.c.l.b16 %v53
  %v415 = vunpack.c.h.b16 %v53
  %v416 = vunpack.c.l.b16 %v54
  %v417 = vunpack.c.h.b16 %v54
  %v418 = vunpack.c.l.b16 %v55
  %v419 = vunpack.c.h.b16 %v55
  %v420 = vunpack.c.l.b16 %v56
  %v421 = vunpack.c.h.b16 %v56
  %v422 = vunpack.c.l.b16 %v57
  %v423 = vunpack.c.h.b16 %v57
  %v424 = vunpack.c.l.b16 %v58
  %v425 = vunpack.c.h.b16 %v58
  %v426 = vpack.c.b16 %v398, %v394
  %v427 = vpack.c.b16 %v399, %v395
  %v428 = vpack.c.b16 %v400, %v396
  %v429 = vpack.c.b16 %v401, %v397
  %v430 = vpack.c.b16 %v406, %v402
  %v431 = vpack.c.b16 %v407, %v403
  %v432 = vpack.c.b16 %v408, %v404
  %v433 = vpack.c.b16 %v409, %v405
  %v434 = vpack.c.b16 %v414, %v410
  %v435 = vpack.c.b16 %v415, %v411
  %v436 = vpack.c.b16 %v416, %v412
  %v437 = vpack.c.b16 %v417, %v413
  %v438 = vpack.c.b16 %v422, %v418
  %v439 = vpack.c.b16 %v423, %v419
  %v440 = vpack.c.b16 %v424, %v420
  %v441 = vpack.c.b16 %v425, %v421
  %v459 = vsel %vm255, %v376, 0
  %v462 = vsel %vm255, %v377, 0
  %464 = vmatprep.subr.bf16.mxu0 %v427
  %465 = vmatpush1.bf16.msra.mxu0 %v426
  %466 = vmatprep.subr.bf16.mxu0 %v431
  %467 = vmatpush1.bf16.msra.mxu0 %v430
  %468 = vmatprep.subr.bf16.mxu0 %v435
  %469 = vmatpush1.bf16.msra.mxu0 %v434
  %470 = vmatprep.subr.bf16.mxu0 %v439
  %471 = vmatpush1.bf16.msra.mxu0 %v438
  %472 = vmatprep.subr.bf16.mxu0 0
  %473 = vmatpush1.bf16.msra.mxu0 0
  %474 = vmatprep.subr.bf16.mxu0 0
  %475 = vmatpush1.bf16.msra.mxu0 0
  %476 = vmatprep.subr.bf16.mxu0 0
  %477 = vmatpush1.bf16.msra.mxu0 0
  %478 = vmatprep.subr.bf16.mxu0 0
  %479 = vmatpush1.bf16.msra.mxu0 0
  %480 = vmatprep.subr.bf16.mxu0 0
  %481 = vmatpush1.bf16.msra.mxu0 0
  %482 = vmatprep.subr.bf16.mxu0 0
  %483 = vmatpush1.bf16.msra.mxu0 0
  %484 = vmatprep.subr.bf16.mxu0 0
  %485 = vmatpush1.bf16.msra.mxu0 0
  %486 = vmatprep.subr.bf16.mxu0 0
  %487 = vmatpush1.bf16.msra.mxu0 0
  %488 = vmatprep.subr.bf16.mxu0 0
  %489 = vmatpush1.bf16.msra.mxu0 0
  %490 = vmatprep.subr.bf16.mxu0 0
  %491 = vmatpush1.bf16.msra.mxu0 0
  %492 = vmatprep.subr.bf16.mxu0 0
  %493 = vmatpush1.bf16.msra.mxu0 0
  %494 = vmatprep.subr.bf16.mxu0 0
  %495 = vmatpush1.bf16.msra.mxu0 0
  %496 = vmatprep.mubr.bf16.mxu0 0
  %497 = vmatmul.mubr.bf16.gmra.mrb[0].mxu0 %v459
  %v498 = vpop.f32.mrb[0].mxu0
  %v499 = vadd.f32 %v297, %v498
  %v500 = vpop.f32.mrb[0].mxu0
  %v501 = vadd.f32 %v299, %v500
  %v502 = vpop.f32.mrb[0].mxu0
  %v503 = vadd.f32 %v301, %v502
  %v504 = vpop.f32.mrb[0].mxu0
  %v505 = vadd.f32 %v303, %v504
  %506 = vmatprep.mubr.bf16.mxu0 0
  %507 = vmatmul.mubr.bf16.gmra.mrb[0].mxu0 %v462
  %v508 = vpop.f32.mrb[0].mxu0
  %v509 = vadd.f32 %v307, %v508
  %v510 = vpop.f32.mrb[0].mxu0
  %v511 = vadd.f32 %v309, %v510
  %v512 = vpop.f32.mrb[0].mxu0
  %v513 = vadd.f32 %v311, %v512
  %v514 = vpop.f32.mrb[0].mxu0
  %v515 = vadd.f32 %v313, %v514
  %516 = vdwg.mxu0
  %517 = vmatprep.subr.bf16.mxu0 %v429
  %518 = vmatpush1.bf16.msra.mxu0 %v428
  %519 = vmatprep.subr.bf16.mxu0 %v433
  %520 = vmatpush1.bf16.msra.mxu0 %v432
  %521 = vmatprep.subr.bf16.mxu0 %v437
  %522 = vmatpush1.bf16.msra.mxu0 %v436
  %523 = vmatprep.subr.bf16.mxu0 %v441
  %524 = vmatpush1.bf16.msra.mxu0 %v440
  %525 = vmatprep.subr.bf16.mxu0 0
  %526 = vmatpush1.bf16.msra.mxu0 0
  %527 = vmatprep.subr.bf16.mxu0 0
  %528 = vmatpush1.bf16.msra.mxu0 0
  %529 = vmatprep.subr.bf16.mxu0 0
  %530 = vmatpush1.bf16.msra.mxu0 0
  %531 = vmatprep.subr.bf16.mxu0 0
  %532 = vmatpush1.bf16.msra.mxu0 0
  %533 = vmatprep.subr.bf16.mxu0 0
  %534 = vmatpush1.bf16.msra.mxu0 0
  %535 = vmatprep.subr.bf16.mxu0 0
  %536 = vmatpush1.bf16.msra.mxu0 0
  %537 = vmatprep.subr.bf16.mxu0 0
  %538 = vmatpush1.bf16.msra.mxu0 0
  %539 = vmatprep.subr.bf16.mxu0 0
  %540 = vmatpush1.bf16.msra.mxu0 0
  %541 = vmatprep.subr.bf16.mxu0 0
  %542 = vmatpush1.bf16.msra.mxu0 0
  %543 = vmatprep.subr.bf16.mxu0 0
  %544 = vmatpush1.bf16.msra.mxu0 0
  %545 = vmatprep.subr.bf16.mxu0 0
  %546 = vmatpush1.bf16.msra.mxu0 0
  %547 = vmatprep.subr.bf16.mxu0 0
  %548 = vmatpush1.bf16.msra.mxu0 0
  %549 = vmatprep.mubr.bf16.mxu0 0
  %550 = vmatmul.mubr.bf16.gmra.mrb[0].mxu0 %v459
  %v551 = vpop.f32.mrb[0].mxu0
  %v552 = vadd.f32 %v350, %v551
  %v553 = vpop.f32.mrb[0].mxu0
  %v554 = vadd.f32 %v352, %v553
  %v555 = vpop.f32.mrb[0].mxu0
  %v556 = vadd.f32 %v354, %v555
  %v557 = vpop.f32.mrb[0].mxu0
  %v558 = vadd.f32 %v356, %v557
  %559 = vmatprep.mubr.bf16.mxu0 0
  %560 = vmatmul.mubr.bf16.gmra.mrb[0].mxu0 %v462
  %v561 = vpop.f32.mrb[0].mxu0
  %v562 = vadd.f32 %v360, %v561
  %v563 = vpop.f32.mrb[0].mxu0
  %v564 = vadd.f32 %v362, %v563
  %v565 = vpop.f32.mrb[0].mxu0
  %v566 = vadd.f32 %v364, %v565
  %v567 = vpop.f32.mrb[0].mxu0
  %v568 = vadd.f32 %v366, %v567
  %569 = vdwg.mxu0
  %s570 = scalar_lea.vmem %s1, 32
  %v571 = vld [vmem:[%s570] sm:$0xf]
  %v572 = vld [vmem:[%s570 + $0x4] sm:$0xf]
  %v573 = vld [vmem:[%s570 + $0x8] sm:$0xf]
  %v574 = vld [vmem:[%s570 + $0xc] sm:$0xf]
  %v579 = vunpack.c.l.b16 %v571
  %v580 = vunpack.c.l.b16 %v572
  %v581 = vunpack.c.l.b16 %v573
  %v582 = vunpack.c.l.b16 %v574
  %v583 = vpack.c.b16 %v580, %v579
  %v584 = vpack.c.b16 %v582, %v581
  %585 = vrot.lane.b32.xlu0 %v162, 119
  %v586 = vpop.permute.xlu0 %585
  %587 = vrot.lane.b32.xlu0 %v163, 119
  %v588 = vpop.permute.xlu0 %587
  %589 = vrot.lane.b32.xlu0 %v164, 119
  %v590 = vpop.permute.xlu0 %589
  %591 = vrot.lane.b32.xlu0 %v165, 119
  %v592 = vpop.permute.xlu0 %591
  %593 = vrot.lane.b32.xlu0 %v166, 119
  %v594 = vpop.permute.xlu0 %593
  %595 = vrot.lane.b32.xlu0 %v167, 119
  %v596 = vpop.permute.xlu0 %595
  %597 = vrot.lane.b32.xlu0 %v168, 119
  %v598 = vpop.permute.xlu0 %597
  %599 = vrot.lane.b32.xlu0 %v169, 119
  %v600 = vpop.permute.xlu0 %599
  %601 = vrot.lane.b32.xlu0 %v170, 119
  %v602 = vpop.permute.xlu0 %601
  %603 = vrot.lane.b32.xlu0 %v171, 119
  %v604 = vpop.permute.xlu0 %603
  %605 = vrot.lane.b32.xlu0 %v172, 119
  %v606 = vpop.permute.xlu0 %605
  %607 = vrot.lane.b32.xlu0 %v173, 119
  %v608 = vpop.permute.xlu0 %607
  %609 = vrot.lane.b32.xlu0 %v174, 119
  %v610 = vpop.permute.xlu0 %609
  %611 = vrot.lane.b32.xlu0 %v175, 119
  %v612 = vpop.permute.xlu0 %611
  %613 = vrot.lane.b32.xlu0 %v176, 119
  %v614 = vpop.permute.xlu0 %613
  %615 = vrot.lane.b32.xlu0 %v177, 119
  %v616 = vpop.permute.xlu0 %615
  %617 = vrot.lane.b32.xlu0 %v178, 119
  %v618 = vpop.permute.xlu0 %617
  %619 = vrot.lane.b32.xlu0 %v179, 119
  %v620 = vpop.permute.xlu0 %619
  %621 = vrot.lane.b32.xlu0 %v180, 119
  %v622 = vpop.permute.xlu0 %621
  %623 = vrot.lane.b32.xlu0 %v181, 119
  %v624 = vpop.permute.xlu0 %623
  %vm625 = vcmask 973824
  %v626 = vsel %vm625, %v586, %v588
  %v627 = vsel %vm625, %v588, %v590
  %v628 = vsel %vm625, %v590, %v592
  %v629 = vsel %vm625, %v592, %v594
  %v630 = vsel %vm625, %v596, %v598
  %v631 = vsel %vm625, %v598, %v600
  %v632 = vsel %vm625, %v600, %v602
  %v633 = vsel %vm625, %v602, %v604
  %v634 = vsel %vm625, %v606, %v608
  %v635 = vsel %vm625, %v608, %v610
  %v636 = vsel %vm625, %v610, %v612
  %v637 = vsel %vm625, %v612, %v614
  %v638 = vsel %vm625, %v616, %v618
  %v639 = vsel %vm625, %v618, %v620
  %v640 = vsel %vm625, %v620, %v622
  %v641 = vsel %vm625, %v622, %v624
  %v659 = vsel %vm255, %v583, 0
  %v662 = vsel %vm255, %v584, 0
  %664 = vmatprep.subr.bf16.mxu0 %v627
  %665 = vmatpush1.bf16.msra.mxu0 %v626
  %666 = vmatprep.subr.bf16.mxu0 %v631
  %667 = vmatpush1.bf16.msra.mxu0 %v630
  %668 = vmatprep.subr.bf16.mxu0 %v635
  %669 = vmatpush1.bf16.msra.mxu0 %v634
  %670 = vmatprep.subr.bf16.mxu0 %v639
  %671 = vmatpush1.bf16.msra.mxu0 %v638
  %672 = vmatprep.subr.bf16.mxu0 0
  %673 = vmatpush1.bf16.msra.mxu0 0
  %674 = vmatprep.subr.bf16.mxu0 0
  %675 = vmatpush1.bf16.msra.mxu0 0
  %676 = vmatprep.subr.bf16.mxu0 0
  %677 = vmatpush1.bf16.msra.mxu0 0
  %678 = vmatprep.subr.bf16.mxu0 0
  %679 = vmatpush1.bf16.msra.mxu0 0
  %680 = vmatprep.subr.bf16.mxu0 0
  %681 = vmatpush1.bf16.msra.mxu0 0
  %682 = vmatprep.subr.bf16.mxu0 0
  %683 = vmatpush1.bf16.msra.mxu0 0
  %684 = vmatprep.subr.bf16.mxu0 0
  %685 = vmatpush1.bf16.msra.mxu0 0
  %686 = vmatprep.subr.bf16.mxu0 0
  %687 = vmatpush1.bf16.msra.mxu0 0
  %688 = vmatprep.subr.bf16.mxu0 0
  %689 = vmatpush1.bf16.msra.mxu0 0
  %690 = vmatprep.subr.bf16.mxu0 0
  %691 = vmatpush1.bf16.msra.mxu0 0
  %692 = vmatprep.subr.bf16.mxu0 0
  %693 = vmatpush1.bf16.msra.mxu0 0
  %694 = vmatprep.subr.bf16.mxu0 0
  %695 = vmatpush1.bf16.msra.mxu0 0
  %696 = vmatprep.mubr.bf16.mxu0 0
  %697 = vmatmul.mubr.bf16.gmra.mrb[0].mxu0 %v659
  %v698 = vpop.f32.mrb[0].mxu0
  %v699 = vadd.f32 0.0, %v698
  %v700 = vpop.f32.mrb[0].mxu0
  %v701 = vadd.f32 0.0, %v700
  %v702 = vpop.f32.mrb[0].mxu0
  %v703 = vadd.f32 0.0, %v702
  %v704 = vpop.f32.mrb[0].mxu0
  %v705 = vadd.f32 0.0, %v704
  %706 = vmatprep.mubr.bf16.mxu0 0
  %707 = vmatmul.mubr.bf16.gmra.mrb[0].mxu0 %v662
  %v708 = vpop.f32.mrb[0].mxu0
  %v709 = vadd.f32 0.0, %v708
  %v710 = vpop.f32.mrb[0].mxu0
  %v711 = vadd.f32 0.0, %v710
  %v712 = vpop.f32.mrb[0].mxu0
  %v713 = vadd.f32 0.0, %v712
  %v714 = vpop.f32.mrb[0].mxu0
  %v715 = vadd.f32 0.0, %v714
  %716 = vdwg.mxu0
  %717 = vmatprep.subr.bf16.mxu0 %v629
  %718 = vmatpush1.bf16.msra.mxu0 %v628
  %719 = vmatprep.subr.bf16.mxu0 %v633
  %720 = vmatpush1.bf16.msra.mxu0 %v632
  %721 = vmatprep.subr.bf16.mxu0 %v637
  %722 = vmatpush1.bf16.msra.mxu0 %v636
  %723 = vmatprep.subr.bf16.mxu0 %v641
  %724 = vmatpush1.bf16.msra.mxu0 %v640
  %725 = vmatprep.subr.bf16.mxu0 0
  %726 = vmatpush1.bf16.msra.mxu0 0
  %727 = vmatprep.subr.bf16.mxu0 0
  %728 = vmatpush1.bf16.msra.mxu0 0
  %729 = vmatprep.subr.bf16.mxu0 0
  %730 = vmatpush1.bf16.msra.mxu0 0
  %731 = vmatprep.subr.bf16.mxu0 0
  %732 = vmatpush1.bf16.msra.mxu0 0
  %733 = vmatprep.subr.bf16.mxu0 0
  %734 = vmatpush1.bf16.msra.mxu0 0
  %735 = vmatprep.subr.bf16.mxu0 0
  %736 = vmatpush1.bf16.msra.mxu0 0
  %737 = vmatprep.subr.bf16.mxu0 0
  %738 = vmatpush1.bf16.msra.mxu0 0
  %739 = vmatprep.subr.bf16.mxu0 0
  %740 = vmatpush1.bf16.msra.mxu0 0
  %741 = vmatprep.subr.bf16.mxu0 0
  %742 = vmatpush1.bf16.msra.mxu0 0
  %743 = vmatprep.subr.bf16.mxu0 0
  %744 = vmatpush1.bf16.msra.mxu0 0
  %745 = vmatprep.subr.bf16.mxu0 0
  %746 = vmatpush1.bf16.msra.mxu0 0
  %747 = vmatprep.subr.bf16.mxu0 0
  %748 = vmatpush1.bf16.msra.mxu0 0
  %749 = vmatprep.mubr.bf16.mxu0 0
  %750 = vmatmul.mubr.bf16.gmra.mrb[0].mxu0 %v659
  %v751 = vpop.f32.mrb[0].mxu0
  %v752 = vadd.f32 0.0, %v751
  %v753 = vpop.f32.mrb[0].mxu0
  %v754 = vadd.f32 0.0, %v753
  %v755 = vpop.f32.mrb[0].mxu0
  %v756 = vadd.f32 0.0, %v755
  %v757 = vpop.f32.mrb[0].mxu0
  %v758 = vadd.f32 0.0, %v757
  %759 = vmatprep.mubr.bf16.mxu0 0
  %760 = vmatmul.mubr.bf16.gmra.mrb[0].mxu0 %v662
  %v761 = vpop.f32.mrb[0].mxu0
  %v762 = vadd.f32 0.0, %v761
  %v763 = vpop.f32.mrb[0].mxu0
  %v764 = vadd.f32 0.0, %v763
  %v765 = vpop.f32.mrb[0].mxu0
  %v766 = vadd.f32 0.0, %v765
  %v767 = vpop.f32.mrb[0].mxu0
  %v768 = vadd.f32 0.0, %v767
  %769 = vdwg.mxu0
  %v770 = vadd.f32 %v499, %v699
  %v771 = vadd.f32 %v501, %v701
  %v772 = vadd.f32 %v552, %v752
  %v773 = vadd.f32 %v554, %v754
  %v774 = vadd.f32 %v503, %v703
  %v775 = vadd.f32 %v505, %v705
  %v776 = vadd.f32 %v556, %v756
  %v777 = vadd.f32 %v558, %v758
  %v778 = vadd.f32 %v509, %v709
  %v779 = vadd.f32 %v511, %v711
  %v780 = vadd.f32 %v562, %v762
  %v781 = vadd.f32 %v564, %v764
  %v782 = vadd.f32 %v513, %v713
  %v783 = vadd.f32 %v515, %v715
  %v784 = vadd.f32 %v566, %v766
  %v785 = vadd.f32 %v568, %v768
  %s786 = scalar_lea.vmem %s1, 48
  %v787 = vld [vmem:[%s786] sm:$0xf]
  %v788 = vld [vmem:[%s786 + $0x4] sm:$0xf]
  %v789 = vld [vmem:[%s786 + $0x8] sm:$0xf]
  %v790 = vld [vmem:[%s786 + $0xc] sm:$0xf]
  %v795 = vunpack.c.l.b16 %v787
  %v796 = vunpack.c.l.b16 %v788
  %v797 = vunpack.c.l.b16 %v789
  %v798 = vunpack.c.l.b16 %v790
  %v799 = vpack.c.b16 %v796, %v795
  %v800 = vpack.c.b16 %v798, %v797
  %801 = vrot.lane.b32.xlu0 %v162, 118
  %v802 = vpop.permute.xlu0 %801
  %803 = vrot.lane.b32.xlu0 %v163, 118
  %v804 = vpop.permute.xlu0 %803
  %805 = vrot.lane.b32.xlu0 %v164, 118
  %v806 = vpop.permute.xlu0 %805
  %807 = vrot.lane.b32.xlu0 %v165, 118
  %v808 = vpop.permute.xlu0 %807
  %809 = vrot.lane.b32.xlu0 %v166, 118
  %v810 = vpop.permute.xlu0 %809
  %811 = vrot.lane.b32.xlu0 %v167, 118
  %v812 = vpop.permute.xlu0 %811
  %813 = vrot.lane.b32.xlu0 %v168, 118
  %v814 = vpop.permute.xlu0 %813
  %815 = vrot.lane.b32.xlu0 %v169, 118
  %v816 = vpop.permute.xlu0 %815
  %817 = vrot.lane.b32.xlu0 %v170, 118
  %v818 = vpop.permute.xlu0 %817
  %819 = vrot.lane.b32.xlu0 %v171, 118
  %v820 = vpop.permute.xlu0 %819
  %821 = vrot.lane.b32.xlu0 %v172, 118
  %v822 = vpop.permute.xlu0 %821
  %823 = vrot.lane.b32.xlu0 %v173, 118
  %v824 = vpop.permute.xlu0 %823
  %825 = vrot.lane.b32.xlu0 %v174, 118
  %v826 = vpop.permute.xlu0 %825
  %827 = vrot.lane.b32.xlu0 %v175, 118
  %v828 = vpop.permute.xlu0 %827
  %829 = vrot.lane.b32.xlu0 %v176, 118
  %v830 = vpop.permute.xlu0 %829
  %831 = vrot.lane.b32.xlu0 %v177, 118
  %v832 = vpop.permute.xlu0 %831
  %833 = vrot.lane.b32.xlu0 %v178, 118
  %v834 = vpop.permute.xlu0 %833
  %835 = vrot.lane.b32.xlu0 %v179, 118
  %v836 = vpop.permute.xlu0 %835
  %837 = vrot.lane.b32.xlu0 %v180, 118
  %v838 = vpop.permute.xlu0 %837
  %839 = vrot.lane.b32.xlu0 %v181, 118
  %v840 = vpop.permute.xlu0 %839
  %vm841 = vcmask 965632
  %v842 = vsel %vm841, %v802, %v804
  %v843 = vsel %vm841, %v804, %v806
  %v844 = vsel %vm841, %v806, %v808
  %v845 = vsel %vm841, %v808, %v810
  %v846 = vsel %vm841, %v812, %v814
  %v847 = vsel %vm841, %v814, %v816
  %v848 = vsel %vm841, %v816, %v818
  %v849 = vsel %vm841, %v818, %v820
  %v850 = vsel %vm841, %v822, %v824
  %v851 = vsel %vm841, %v824, %v826
  %v852 = vsel %vm841, %v826, %v828
  %v853 = vsel %vm841, %v828, %v830
  %v854 = vsel %vm841, %v832, %v834
  %v855 = vsel %vm841, %v834, %v836
  %v856 = vsel %vm841, %v836, %v838
  %v857 = vsel %vm841, %v838, %v840
  %v875 = vsel %vm255, %v799, 0
  %v878 = vsel %vm255, %v800, 0
  %880 = vmatprep.subr.bf16.mxu0 %v843
  %881 = vmatpush1.bf16.msra.mxu0 %v842
  %882 = vmatprep.subr.bf16.mxu0 %v847
  %883 = vmatpush1.bf16.msra.mxu0 %v846
  %884 = vmatprep.subr.bf16.mxu0 %v851
  %885 = vmatpush1.bf16.msra.mxu0 %v850
  %886 = vmatprep.subr.bf16.mxu0 %v855
  %887 = vmatpush1.bf16.msra.mxu0 %v854
  %888 = vmatprep.subr.bf16.mxu0 0
  %889 = vmatpush1.bf16.msra.mxu0 0
  %890 = vmatprep.subr.bf16.mxu0 0
  %891 = vmatpush1.bf16.msra.mxu0 0
  %892 = vmatprep.subr.bf16.mxu0 0
  %893 = vmatpush1.bf16.msra.mxu0 0
  %894 = vmatprep.subr.bf16.mxu0 0
  %895 = vmatpush1.bf16.msra.mxu0 0
  %896 = vmatprep.subr.bf16.mxu0 0
  %897 = vmatpush1.bf16.msra.mxu0 0
  %898 = vmatprep.subr.bf16.mxu0 0
  %899 = vmatpush1.bf16.msra.mxu0 0
  %900 = vmatprep.subr.bf16.mxu0 0
  %901 = vmatpush1.bf16.msra.mxu0 0
  %902 = vmatprep.subr.bf16.mxu0 0
  %903 = vmatpush1.bf16.msra.mxu0 0
  %904 = vmatprep.subr.bf16.mxu0 0
  %905 = vmatpush1.bf16.msra.mxu0 0
  %906 = vmatprep.subr.bf16.mxu0 0
  %907 = vmatpush1.bf16.msra.mxu0 0
  %908 = vmatprep.subr.bf16.mxu0 0
  %909 = vmatpush1.bf16.msra.mxu0 0
  %910 = vmatprep.subr.bf16.mxu0 0
  %911 = vmatpush1.bf16.msra.mxu0 0
  %912 = vmatprep.mubr.bf16.mxu0 0
  %913 = vmatmul.mubr.bf16.gmra.mrb[0].mxu0 %v875
  %v914 = vpop.f32.mrb[0].mxu0
  %v915 = vadd.f32 0.0, %v914
  %v916 = vpop.f32.mrb[0].mxu0
  %v917 = vadd.f32 0.0, %v916
  %v918 = vpop.f32.mrb[0].mxu0
  %v919 = vadd.f32 0.0, %v918
  %v920 = vpop.f32.mrb[0].mxu0
  %v921 = vadd.f32 0.0, %v920
  %922 = vmatprep.mubr.bf16.mxu0 0
  %923 = vmatmul.mubr.bf16.gmra.mrb[0].mxu0 %v878
  %v924 = vpop.f32.mrb[0].mxu0
  %v925 = vadd.f32 0.0, %v924
  %v926 = vpop.f32.mrb[0].mxu0
  %v927 = vadd.f32 0.0, %v926
  %v928 = vpop.f32.mrb[0].mxu0
  %v929 = vadd.f32 0.0, %v928
  %v930 = vpop.f32.mrb[0].mxu0
  %v931 = vadd.f32 0.0, %v930
  %932 = vdwg.mxu0
  %933 = vmatprep.subr.bf16.mxu0 %v845
  %934 = vmatpush1.bf16.msra.mxu0 %v844
  %935 = vmatprep.subr.bf16.mxu0 %v849
  %936 = vmatpush1.bf16.msra.mxu0 %v848
  %937 = vmatprep.subr.bf16.mxu0 %v853
  %938 = vmatpush1.bf16.msra.mxu0 %v852
  %939 = vmatprep.subr.bf16.mxu0 %v857
  %940 = vmatpush1.bf16.msra.mxu0 %v856
  %941 = vmatprep.subr.bf16.mxu0 0
  %942 = vmatpush1.bf16.msra.mxu0 0
  %943 = vmatprep.subr.bf16.mxu0 0
  %944 = vmatpush1.bf16.msra.mxu0 0
  %945 = vmatprep.subr.bf16.mxu0 0
  %946 = vmatpush1.bf16.msra.mxu0 0
  %947 = vmatprep.subr.bf16.mxu0 0
  %948 = vmatpush1.bf16.msra.mxu0 0
  %949 = vmatprep.subr.bf16.mxu0 0
  %950 = vmatpush1.bf16.msra.mxu0 0
  %951 = vmatprep.subr.bf16.mxu0 0
  %952 = vmatpush1.bf16.msra.mxu0 0
  %953 = vmatprep.subr.bf16.mxu0 0
  %954 = vmatpush1.bf16.msra.mxu0 0
  %955 = vmatprep.subr.bf16.mxu0 0
  %956 = vmatpush1.bf16.msra.mxu0 0
  %957 = vmatprep.subr.bf16.mxu0 0
  %958 = vmatpush1.bf16.msra.mxu0 0
  %959 = vmatprep.subr.bf16.mxu0 0
  %960 = vmatpush1.bf16.msra.mxu0 0
  %961 = vmatprep.subr.bf16.mxu0 0
  %962 = vmatpush1.bf16.msra.mxu0 0
  %963 = vmatprep.subr.bf16.mxu0 0
  %964 = vmatpush1.bf16.msra.mxu0 0
  %965 = vmatprep.mubr.bf16.mxu0 0
  %966 = vmatmul.mubr.bf16.gmra.mrb[0].mxu0 %v875
  %v967 = vpop.f32.mrb[0].mxu0
  %v968 = vadd.f32 0.0, %v967
  %v969 = vpop.f32.mrb[0].mxu0
  %v970 = vadd.f32 0.0, %v969
  %v971 = vpop.f32.mrb[0].mxu0
  %v972 = vadd.f32 0.0, %v971
  %v973 = vpop.f32.mrb[0].mxu0
  %v974 = vadd.f32 0.0, %v973
  %975 = vmatprep.mubr.bf16.mxu0 0
  %976 = vmatmul.mubr.bf16.gmra.mrb[0].mxu0 %v878
  %v977 = vpop.f32.mrb[0].mxu0
  %v978 = vadd.f32 0.0, %v977
  %v979 = vpop.f32.mrb[0].mxu0
  %v980 = vadd.f32 0.0, %v979
  %v981 = vpop.f32.mrb[0].mxu0
  %v982 = vadd.f32 0.0, %v981
  %v983 = vpop.f32.mrb[0].mxu0
  %v984 = vadd.f32 0.0, %v983
  %985 = vdwg.mxu0
  %v986 = vadd.f32 %v770, %v915
  %v987 = vadd.f32 %v771, %v917
  %v988 = vadd.f32 %v772, %v968
  %v989 = vadd.f32 %v773, %v970
  %v990 = vadd.f32 %v774, %v919
  %v991 = vadd.f32 %v775, %v921
  %v992 = vadd.f32 %v776, %v972
  %v993 = vadd.f32 %v777, %v974
  %v994 = vadd.f32 %v778, %v925
  %v995 = vadd.f32 %v779, %v927
  %v996 = vadd.f32 %v780, %v978
  %v997 = vadd.f32 %v781, %v980
  %v998 = vadd.f32 %v782, %v929
  %v999 = vadd.f32 %v783, %v931
  %v1000 = vadd.f32 %v784, %v982
  %v1001 = vadd.f32 %v785, %v984
  %v1002 = vld [vmem:[%s2] sm:$0xff]
  %v1003 = vld [vmem:[%s2 + $0x8] sm:$0xff]
  %v1004 = vld [vmem:[%s2 + $0x10] sm:$0xff]
  %v1005 = vld [vmem:[%s2 + $0x18] sm:$0xff]
  %1007 = vset.pattern.permute.xlu0 0
  %1008 = vperm.xlu0 %1007, %v1002
  %v1009 = vpop.permute.xlu0 %1008
  %1012 = vset.pattern.permute.xlu0 0
  %1013 = vperm.xlu0 %1012, %v1003
  %v1014 = vpop.permute.xlu0 %1013
  %1017 = vset.pattern.permute.xlu0 0
  %1018 = vperm.xlu0 %1017, %v1004
  %v1019 = vpop.permute.xlu0 %1018
  %1022 = vset.pattern.permute.xlu0 0
  %1023 = vperm.xlu0 %1022, %v1005
  %v1024 = vpop.permute.xlu0 %1023
  %v1026 = vadd.f32 %v986, %v1009
  %v1027 = vadd.f32 %v987, %v1009
  %v1028 = vadd.f32 %v988, %v1009
  %v1029 = vadd.f32 %v989, %v1009
  %v1030 = vadd.f32 %v990, %v1014
  %v1031 = vadd.f32 %v991, %v1014
  %v1032 = vadd.f32 %v992, %v1014
  %v1033 = vadd.f32 %v993, %v1014
  %v1034 = vadd.f32 %v994, %v1019
  %v1035 = vadd.f32 %v995, %v1019
  %v1036 = vadd.f32 %v996, %v1019
  %v1037 = vadd.f32 %v997, %v1019
  %v1038 = vadd.f32 %v998, %v1024
  %v1039 = vadd.f32 %v999, %v1024
  %v1040 = vadd.f32 %v1000, %v1024
  %v1041 = vadd.f32 %v1001, %v1024
  %v1042 = vmax.f32 %v1026, 0.0
  %v1043 = vmax.f32 %v1027, 0.0
  %v1044 = vmax.f32 %v1028, 0.0
  %v1045 = vmax.f32 %v1029, 0.0
  %v1046 = vmax.f32 %v1030, 0.0
  %v1047 = vmax.f32 %v1031, 0.0
  %v1048 = vmax.f32 %v1032, 0.0
  %v1049 = vmax.f32 %v1033, 0.0
  %v1050 = vmax.f32 %v1034, 0.0
  %v1051 = vmax.f32 %v1035, 0.0
  %v1052 = vmax.f32 %v1036, 0.0
  %v1053 = vmax.f32 %v1037, 0.0
  %v1054 = vmax.f32 %v1038, 0.0
  %v1055 = vmax.f32 %v1039, 0.0
  %v1056 = vmax.f32 %v1040, 0.0
  %v1057 = vmax.f32 %v1041, 0.0
  %v1058 = vpack.c.bf16 %v1046, %v1042
  %v1059 = vpack.c.bf16 %v1047, %v1043
  %v1060 = vpack.c.bf16 %v1048, %v1044
  %v1061 = vpack.c.bf16 %v1049, %v1045
  %v1062 = vpack.c.bf16 %v1054, %v1050
  %v1063 = vpack.c.bf16 %v1055, %v1051
  %v1064 = vpack.c.bf16 %v1056, %v1052
  %v1065 = vpack.c.bf16 %v1057, %v1053
  %v1066 = vld [vmem:[%s3] sm:$0xf]
  %v1067 = vld [vmem:[%s3 + $0x4] sm:$0xf]
  %v1068 = vld [vmem:[%s3 + $0x8] sm:$0xf]
  %v1069 = vld [vmem:[%s3 + $0xc] sm:$0xf]
  %v1070 = vld [vmem:[%s3 + $0x10] sm:$0xf]
  %v1071 = vld [vmem:[%s3 + $0x14] sm:$0xf]
  %v1072 = vld [vmem:[%s3 + $0x18] sm:$0xf]
  %v1073 = vld [vmem:[%s3 + $0x1c] sm:$0xf]
  %s1074 = scalar_lea.vmem %s3, 32
  %v1075 = vld [vmem:[%s1074] sm:$0xf]
  %v1076 = vld [vmem:[%s1074 + $0x4] sm:$0xf]
  %v1077 = vld [vmem:[%s1074 + $0x8] sm:$0xf]
  %v1078 = vld [vmem:[%s1074 + $0xc] sm:$0xf]
  %v1079 = vld [vmem:[%s1074 + $0x10] sm:$0xf]
  %v1080 = vld [vmem:[%s1074 + $0x14] sm:$0xf]
  %v1081 = vld [vmem:[%s1074 + $0x18] sm:$0xf]
  %v1082 = vld [vmem:[%s1074 + $0x1c] sm:$0xf]
  %v1091 = vunpack.c.l.b16 %v1075
  %v1092 = vunpack.c.l.b16 %v1076
  %v1093 = vunpack.c.l.b16 %v1077
  %v1094 = vunpack.c.l.b16 %v1078
  %v1095 = vunpack.c.l.b16 %v1079
  %v1096 = vunpack.c.l.b16 %v1080
  %v1097 = vunpack.c.l.b16 %v1081
  %v1098 = vunpack.c.l.b16 %v1082
  %v1099 = vpack.c.b16 %v1092, %v1091
  %v1100 = vpack.c.b16 %v1094, %v1093
  %v1101 = vpack.c.b16 %v1096, %v1095
  %v1102 = vpack.c.b16 %v1098, %v1097
  %1111 = vrot.lane.b32.xlu0 %v1058, 127
  %v1112 = vpop.permute.xlu0 %1111
  %1113 = vrot.lane.b32.xlu0 %v1059, 127
  %v1114 = vpop.permute.xlu0 %1113
  %1115 = vrot.lane.b32.xlu0 %v1060, 127
  %v1116 = vpop.permute.xlu0 %1115
  %1117 = vrot.lane.b32.xlu0 %v1061, 127
  %v1118 = vpop.permute.xlu0 %1117
  %1119 = vrot.lane.b32.xlu0 %v1062, 127
  %v1120 = vpop.permute.xlu0 %1119
  %1121 = vrot.lane.b32.xlu0 %v1063, 127
  %v1122 = vpop.permute.xlu0 %1121
  %1123 = vrot.lane.b32.xlu0 %v1064, 127
  %v1124 = vpop.permute.xlu0 %1123
  %1125 = vrot.lane.b32.xlu0 %v1065, 127
  %v1126 = vpop.permute.xlu0 %1125
  %v1127 = vsel %vm222, %v1112, %v1114
  %v1128 = vsel %vm222, %v1114, %v1116
  %v1129 = vsel %vm222, %v1116, %v1118
  %v1130 = vsel %vm222, %v1120, %v1122
  %v1131 = vsel %vm222, %v1122, %v1124
  %v1132 = vsel %vm222, %v1124, %v1126
  %vm1139 = vcmask 261120
  %v1141 = vsel %vm1139, %v1099, 0
  %v1144 = vsel %vm1139, %v1100, 0
  %v1147 = vsel %vm1139, %v1101, 0
  %v1150 = vsel %vm1139, %v1102, 0
  %1152 = vmatprep.subr.bf16.mxu0 %v1128
  %1153 = vmatpush1.bf16.msra.mxu0 %v1127
  %1154 = vmatprep.subr.bf16.mxu0 %v1131
  %1155 = vmatpush1.bf16.msra.mxu0 %v1130
  %1156 = vmatprep.subr.bf16.mxu0 0
  %1157 = vmatpush1.bf16.msra.mxu0 0
  %1158 = vmatprep.subr.bf16.mxu0 0
  %1159 = vmatpush1.bf16.msra.mxu0 0
  %1160 = vmatprep.subr.bf16.mxu0 0
  %1161 = vmatpush1.bf16.msra.mxu0 0
  %1162 = vmatprep.subr.bf16.mxu0 0
  %1163 = vmatpush1.bf16.msra.mxu0 0
  %1164 = vmatprep.subr.bf16.mxu0 0
  %1165 = vmatpush1.bf16.msra.mxu0 0
  %1166 = vmatprep.subr.bf16.mxu0 0
  %1167 = vmatpush1.bf16.msra.mxu0 0
  %1168 = vmatprep.subr.bf16.mxu0 0
  %1169 = vmatpush1.bf16.msra.mxu0 0
  %1170 = vmatprep.subr.bf16.mxu0 0
  %1171 = vmatpush1.bf16.msra.mxu0 0
  %1172 = vmatprep.subr.bf16.mxu0 0
  %1173 = vmatpush1.bf16.msra.mxu0 0
  %1174 = vmatprep.subr.bf16.mxu0 0
  %1175 = vmatpush1.bf16.msra.mxu0 0
  %1176 = vmatprep.subr.bf16.mxu0 0
  %1177 = vmatpush1.bf16.msra.mxu0 0
  %1178 = vmatprep.subr.bf16.mxu0 0
  %1179 = vmatpush1.bf16.msra.mxu0 0
  %1180 = vmatprep.subr.bf16.mxu0 0
  %1181 = vmatpush1.bf16.msra.mxu0 0
  %1182 = vmatprep.subr.bf16.mxu0 0
  %1183 = vmatpush1.bf16.msra.mxu0 0
  %1184 = vmatprep.mubr.bf16.mxu0 0
  %1185 = vmatmul.mubr.bf16.gmra.mrb[0].mxu0 %v1141
  %v1186 = vpop.f32.mrb[0].mxu0
  %v1187 = vadd.f32 0.0, %v1186
  %v1188 = vpop.f32.mrb[0].mxu0
  %v1189 = vadd.f32 0.0, %v1188
  %v1190 = vpop.f32.mrb[0].mxu0
  %v1191 = vadd.f32 0.0, %v1190
  %v1192 = vpop.f32.mrb[0].mxu0
  %v1193 = vadd.f32 0.0, %v1192
  %1194 = vmatprep.mubr.bf16.mxu0 0
  %1195 = vmatmul.mubr.bf16.gmra.mrb[0].mxu0 %v1144
  %v1196 = vpop.f32.mrb[0].mxu0
  %v1197 = vadd.f32 0.0, %v1196
  %v1198 = vpop.f32.mrb[0].mxu0
  %v1199 = vadd.f32 0.0, %v1198
  %v1200 = vpop.f32.mrb[0].mxu0
  %v1201 = vadd.f32 0.0, %v1200
  %v1202 = vpop.f32.mrb[0].mxu0
  %v1203 = vadd.f32 0.0, %v1202
  %1204 = vmatprep.mubr.bf16.mxu0 0
  %1205 = vmatmul.mubr.bf16.gmra.mrb[0].mxu0 %v1147
  %v1206 = vpop.f32.mrb[0].mxu0
  %v1207 = vadd.f32 0.0, %v1206
  %v1208 = vpop.f32.mrb[0].mxu0
  %v1209 = vadd.f32 0.0, %v1208
  %v1210 = vpop.f32.mrb[0].mxu0
  %v1211 = vadd.f32 0.0, %v1210
  %v1212 = vpop.f32.mrb[0].mxu0
  %v1213 = vadd.f32 0.0, %v1212
  %1214 = vmatprep.mubr.bf16.mxu0 0
  %1215 = vmatmul.mubr.bf16.gmra.mrb[0].mxu0 %v1150
  %v1216 = vpop.f32.mrb[0].mxu0
  %v1217 = vadd.f32 0.0, %v1216
  %v1218 = vpop.f32.mrb[0].mxu0
  %v1219 = vadd.f32 0.0, %v1218
  %v1220 = vpop.f32.mrb[0].mxu0
  %v1221 = vadd.f32 0.0, %v1220
  %v1222 = vpop.f32.mrb[0].mxu0
  %v1223 = vadd.f32 0.0, %v1222
  %1224 = vdwg.mxu0
  %1225 = vmatprep.subr.bf16.mxu0 0
  %1226 = vmatpush1.bf16.msra.mxu0 %v1129
  %1227 = vmatprep.subr.bf16.mxu0 0
  %1228 = vmatpush1.bf16.msra.mxu0 %v1132
  %1229 = vmatprep.subr.bf16.mxu0 0
  %1230 = vmatpush1.bf16.msra.mxu0 0
  %1231 = vmatprep.subr.bf16.mxu0 0
  %1232 = vmatpush1.bf16.msra.mxu0 0
  %1233 = vmatprep.subr.bf16.mxu0 0
  %1234 = vmatpush1.bf16.msra.mxu0 0
  %1235 = vmatprep.subr.bf16.mxu0 0
  %1236 = vmatpush1.bf16.msra.mxu0 0
  %1237 = vmatprep.subr.bf16.mxu0 0
  %1238 = vmatpush1.bf16.msra.mxu0 0
  %1239 = vmatprep.subr.bf16.mxu0 0
  %1240 = vmatpush1.bf16.msra.mxu0 0
  %1241 = vmatprep.subr.bf16.mxu0 0
  %1242 = vmatpush1.bf16.msra.mxu0 0
  %1243 = vmatprep.subr.bf16.mxu0 0
  %1244 = vmatpush1.bf16.msra.mxu0 0
  %1245 = vmatprep.subr.bf16.mxu0 0
  %1246 = vmatpush1.bf16.msra.mxu0 0
  %1247 = vmatprep.subr.bf16.mxu0 0
  %1248 = vmatpush1.bf16.msra.mxu0 0
  %1249 = vmatprep.subr.bf16.mxu0 0
  %1250 = vmatpush1.bf16.msra.mxu0 0
  %1251 = vmatprep.subr.bf16.mxu0 0
  %1252 = vmatpush1.bf16.msra.mxu0 0
  %1253 = vmatprep.subr.bf16.mxu0 0
  %1254 = vmatpush1.bf16.msra.mxu0 0
  %1255 = vmatprep.subr.bf16.mxu0 0
  %1256 = vmatpush1.bf16.msra.mxu0 0
  %1257 = vmatprep.mubr.bf16.mxu0 0
  %1258 = vmatmul.mubr.bf16.gmra.mrb[0].mxu0 %v1141
  %v1259 = vpop.f32.mrb[0].mxu0
  %v1260 = vadd.f32 0.0, %v1259
  %v1261 = vpop.f32.mrb[0].mxu0
  %v1262 = vpop.f32.mrb[0].mxu0
  %v1263 = vadd.f32 0.0, %v1262
  %v1264 = vpop.f32.mrb[0].mxu0
  %1265 = vmatprep.mubr.bf16.mxu0 0
  %1266 = vmatmul.mubr.bf16.gmra.mrb[0].mxu0 %v1144
  %v1267 = vpop.f32.mrb[0].mxu0
  %v1268 = vadd.f32 0.0, %v1267
  %v1269 = vpop.f32.mrb[0].mxu0
  %v1270 = vpop.f32.mrb[0].mxu0
  %v1271 = vadd.f32 0.0, %v1270
  %v1272 = vpop.f32.mrb[0].mxu0
  %1273 = vmatprep.mubr.bf16.mxu0 0
  %1274 = vmatmul.mubr.bf16.gmra.mrb[0].mxu0 %v1147
  %v1275 = vpop.f32.mrb[0].mxu0
  %v1276 = vadd.f32 0.0, %v1275
  %v1277 = vpop.f32.mrb[0].mxu0
  %v1278 = vpop.f32.mrb[0].mxu0
  %v1279 = vadd.f32 0.0, %v1278
  %v1280 = vpop.f32.mrb[0].mxu0
  %1281 = vmatprep.mubr.bf16.mxu0 0
  %1282 = vmatmul.mubr.bf16.gmra.mrb[0].mxu0 %v1150
  %v1283 = vpop.f32.mrb[0].mxu0
  %v1284 = vadd.f32 0.0, %v1283
  %v1285 = vpop.f32.mrb[0].mxu0
  %v1286 = vpop.f32.mrb[0].mxu0
  %v1287 = vadd.f32 0.0, %v1286
  %v1288 = vpop.f32.mrb[0].mxu0
  %1289 = vdwg.mxu0
  %v1298 = vunpack.c.l.b16 %v1066
  %v1299 = vunpack.c.l.b16 %v1067
  %v1300 = vunpack.c.l.b16 %v1068
  %v1301 = vunpack.c.l.b16 %v1069
  %v1302 = vunpack.c.l.b16 %v1070
  %v1303 = vunpack.c.l.b16 %v1071
  %v1304 = vunpack.c.l.b16 %v1072
  %v1305 = vunpack.c.l.b16 %v1073
  %v1306 = vpack.c.b16 %v1299, %v1298
  %v1307 = vpack.c.b16 %v1301, %v1300
  %v1308 = vpack.c.b16 %v1303, %v1302
  %v1309 = vpack.c.b16 %v1305, %v1304
  %v1311 = vsel %vm1139, %v1306, 0
  %v1314 = vsel %vm1139, %v1307, 0
  %v1317 = vsel %vm1139, %v1308, 0
  %v1320 = vsel %vm1139, %v1309, 0
  %1322 = vmatprep.subr.bf16.mxu0 %v1059
  %1323 = vmatpush1.bf16.msra.mxu0 %v1058
  %1324 = vmatprep.subr.bf16.mxu0 %v1063
  %1325 = vmatpush1.bf16.msra.mxu0 %v1062
  %1326 = vmatprep.subr.bf16.mxu0 0
  %1327 = vmatpush1.bf16.msra.mxu0 0
  %1328 = vmatprep.subr.bf16.mxu0 0
  %1329 = vmatpush1.bf16.msra.mxu0 0
  %1330 = vmatprep.subr.bf16.mxu0 0
  %1331 = vmatpush1.bf16.msra.mxu0 0
  %1332 = vmatprep.subr.bf16.mxu0 0
  %1333 = vmatpush1.bf16.msra.mxu0 0
  %1334 = vmatprep.subr.bf16.mxu0 0
  %1335 = vmatpush1.bf16.msra.mxu0 0
  %1336 = vmatprep.subr.bf16.mxu0 0
  %1337 = vmatpush1.bf16.msra.mxu0 0
  %1338 = vmatprep.subr.bf16.mxu0 0
  %1339 = vmatpush1.bf16.msra.mxu0 0
  %1340 = vmatprep.subr.bf16.mxu0 0
  %1341 = vmatpush1.bf16.msra.mxu0 0
  %1342 = vmatprep.subr.bf16.mxu0 0
  %1343 = vmatpush1.bf16.msra.mxu0 0
  %1344 = vmatprep.subr.bf16.mxu0 0
  %1345 = vmatpush1.bf16.msra.mxu0 0
  %1346 = vmatprep.subr.bf16.mxu0 0
  %1347 = vmatpush1.bf16.msra.mxu0 0
  %1348 = vmatprep.subr.bf16.mxu0 0
  %1349 = vmatpush1.bf16.msra.mxu0 0
  %1350 = vmatprep.subr.bf16.mxu0 0
  %1351 = vmatpush1.bf16.msra.mxu0 0
  %1352 = vmatprep.subr.bf16.mxu0 0
  %1353 = vmatpush1.bf16.msra.mxu0 0
  %1354 = vmatprep.mubr.bf16.mxu0 0
  %1355 = vmatmul.mubr.bf16.gmra.mrb[0].mxu0 %v1311
  %v1356 = vpop.f32.mrb[0].mxu0
  %v1357 = vadd.f32 %v1187, %v1356
  %v1358 = vpop.f32.mrb[0].mxu0
  %v1359 = vadd.f32 %v1189, %v1358
  %v1360 = vpop.f32.mrb[0].mxu0
  %v1361 = vadd.f32 %v1191, %v1360
  %v1362 = vpop.f32.mrb[0].mxu0
  %v1363 = vadd.f32 %v1193, %v1362
  %1364 = vmatprep.mubr.bf16.mxu0 0
  %1365 = vmatmul.mubr.bf16.gmra.mrb[0].mxu0 %v1314
  %v1366 = vpop.f32.mrb[0].mxu0
  %v1367 = vadd.f32 %v1197, %v1366
  %v1368 = vpop.f32.mrb[0].mxu0
  %v1369 = vadd.f32 %v1199, %v1368
  %v1370 = vpop.f32.mrb[0].mxu0
  %v1371 = vadd.f32 %v1201, %v1370
  %v1372 = vpop.f32.mrb[0].mxu0
  %v1373 = vadd.f32 %v1203, %v1372
  %1374 = vmatprep.mubr.bf16.mxu0 0
  %1375 = vmatmul.mubr.bf16.gmra.mrb[0].mxu0 %v1317
  %v1376 = vpop.f32.mrb[0].mxu0
  %v1377 = vadd.f32 %v1207, %v1376
  %v1378 = vpop.f32.mrb[0].mxu0
  %v1379 = vadd.f32 %v1209, %v1378
  %v1380 = vpop.f32.mrb[0].mxu0
  %v1381 = vadd.f32 %v1211, %v1380
  %v1382 = vpop.f32.mrb[0].mxu0
  %v1383 = vadd.f32 %v1213, %v1382
  %1384 = vmatprep.mubr.bf16.mxu0 0
  %1385 = vmatmul.mubr.bf16.gmra.mrb[0].mxu0 %v1320
  %v1386 = vpop.f32.mrb[0].mxu0
  %v1387 = vadd.f32 %v1217, %v1386
  %v1388 = vpop.f32.mrb[0].mxu0
  %v1389 = vadd.f32 %v1219, %v1388
  %v1390 = vpop.f32.mrb[0].mxu0
  %v1391 = vadd.f32 %v1221, %v1390
  %v1392 = vpop.f32.mrb[0].mxu0
  %v1393 = vadd.f32 %v1223, %v1392
  %1394 = vdwg.mxu0
  %1395 = vmatprep.subr.bf16.mxu0 0
  %1396 = vmatpush1.bf16.msra.mxu0 %v1060
  %1397 = vmatprep.subr.bf16.mxu0 0
  %1398 = vmatpush1.bf16.msra.mxu0 %v1064
  %1399 = vmatprep.subr.bf16.mxu0 0
  %1400 = vmatpush1.bf16.msra.mxu0 0
  %1401 = vmatprep.subr.bf16.mxu0 0
  %1402 = vmatpush1.bf16.msra.mxu0 0
  %1403 = vmatprep.subr.bf16.mxu0 0
  %1404 = vmatpush1.bf16.msra.mxu0 0
  %1405 = vmatprep.subr.bf16.mxu0 0
  %1406 = vmatpush1.bf16.msra.mxu0 0
  %1407 = vmatprep.subr.bf16.mxu0 0
  %1408 = vmatpush1.bf16.msra.mxu0 0
  %1409 = vmatprep.subr.bf16.mxu0 0
  %1410 = vmatpush1.bf16.msra.mxu0 0
  %1411 = vmatprep.subr.bf16.mxu0 0
  %1412 = vmatpush1.bf16.msra.mxu0 0
  %1413 = vmatprep.subr.bf16.mxu0 0
  %1414 = vmatpush1.bf16.msra.mxu0 0
  %1415 = vmatprep.subr.bf16.mxu0 0
  %1416 = vmatpush1.bf16.msra.mxu0 0
  %1417 = vmatprep.subr.bf16.mxu0 0
  %1418 = vmatpush1.bf16.msra.mxu0 0
  %1419 = vmatprep.subr.bf16.mxu0 0
  %1420 = vmatpush1.bf16.msra.mxu0 0
  %1421 = vmatprep.subr.bf16.mxu0 0
  %1422 = vmatpush1.bf16.msra.mxu0 0
  %1423 = vmatprep.subr.bf16.mxu0 0
  %1424 = vmatpush1.bf16.msra.mxu0 0
  %1425 = vmatprep.subr.bf16.mxu0 0
  %1426 = vmatpush1.bf16.msra.mxu0 0
  %1427 = vmatprep.mubr.bf16.mxu0 0
  %1428 = vmatmul.mubr.bf16.gmra.mrb[0].mxu0 %v1311
  %v1429 = vpop.f32.mrb[0].mxu0
  %v1430 = vadd.f32 %v1260, %v1429
  %v1431 = vpop.f32.mrb[0].mxu0
  %v1432 = vpop.f32.mrb[0].mxu0
  %v1433 = vadd.f32 %v1263, %v1432
  %v1434 = vpop.f32.mrb[0].mxu0
  %1435 = vmatprep.mubr.bf16.mxu0 0
  %1436 = vmatmul.mubr.bf16.gmra.mrb[0].mxu0 %v1314
  %v1437 = vpop.f32.mrb[0].mxu0
  %v1438 = vadd.f32 %v1268, %v1437
  %v1439 = vpop.f32.mrb[0].mxu0
  %v1440 = vpop.f32.mrb[0].mxu0
  %v1441 = vadd.f32 %v1271, %v1440
  %v1442 = vpop.f32.mrb[0].mxu0
  %1443 = vmatprep.mubr.bf16.mxu0 0
  %1444 = vmatmul.mubr.bf16.gmra.mrb[0].mxu0 %v1317
  %v1445 = vpop.f32.mrb[0].mxu0
  %v1446 = vadd.f32 %v1276, %v1445
  %v1447 = vpop.f32.mrb[0].mxu0
  %v1448 = vpop.f32.mrb[0].mxu0
  %v1449 = vadd.f32 %v1279, %v1448
  %v1450 = vpop.f32.mrb[0].mxu0
  %1451 = vmatprep.mubr.bf16.mxu0 0
  %1452 = vmatmul.mubr.bf16.gmra.mrb[0].mxu0 %v1320
  %v1453 = vpop.f32.mrb[0].mxu0
  %v1454 = vadd.f32 %v1284, %v1453
  %v1455 = vpop.f32.mrb[0].mxu0
  %v1456 = vpop.f32.mrb[0].mxu0
  %v1457 = vadd.f32 %v1287, %v1456
  %v1458 = vpop.f32.mrb[0].mxu0
  %1459 = vdwg.mxu0
  %s1460 = scalar_lea.vmem %s3, 64
  %v1461 = vld [vmem:[%s1460] sm:$0xf]
  %v1462 = vld [vmem:[%s1460 + $0x4] sm:$0xf]
  %v1463 = vld [vmem:[%s1460 + $0x8] sm:$0xf]
  %v1464 = vld [vmem:[%s1460 + $0xc] sm:$0xf]
  %v1465 = vld [vmem:[%s1460 + $0x10] sm:$0xf]
  %v1466 = vld [vmem:[%s1460 + $0x14] sm:$0xf]
  %v1467 = vld [vmem:[%s1460 + $0x18] sm:$0xf]
  %v1468 = vld [vmem:[%s1460 + $0x1c] sm:$0xf]
  %v1477 = vunpack.c.l.b16 %v1461
  %v1478 = vunpack.c.l.b16 %v1462
  %v1479 = vunpack.c.l.b16 %v1463
  %v1480 = vunpack.c.l.b16 %v1464
  %v1481 = vunpack.c.l.b16 %v1465
  %v1482 = vunpack.c.l.b16 %v1466
  %v1483 = vunpack.c.l.b16 %v1467
  %v1484 = vunpack.c.l.b16 %v1468
  %v1485 = vpack.c.b16 %v1478, %v1477
  %v1486 = vpack.c.b16 %v1480, %v1479
  %v1487 = vpack.c.b16 %v1482, %v1481
  %v1488 = vpack.c.b16 %v1484, %v1483
  %1489 = vrot.lane.b32.xlu0 %v1058, 126
  %v1490 = vpop.permute.xlu0 %1489
  %1491 = vrot.lane.b32.xlu0 %v1059, 126
  %v1492 = vpop.permute.xlu0 %1491
  %1493 = vrot.lane.b32.xlu0 %v1060, 126
  %v1494 = vpop.permute.xlu0 %1493
  %1495 = vrot.lane.b32.xlu0 %v1061, 126
  %v1496 = vpop.permute.xlu0 %1495
  %1497 = vrot.lane.b32.xlu0 %v1062, 126
  %v1498 = vpop.permute.xlu0 %1497
  %1499 = vrot.lane.b32.xlu0 %v1063, 126
  %v1500 = vpop.permute.xlu0 %1499
  %1501 = vrot.lane.b32.xlu0 %v1064, 126
  %v1502 = vpop.permute.xlu0 %1501
  %1503 = vrot.lane.b32.xlu0 %v1065, 126
  %v1504 = vpop.permute.xlu0 %1503
  %vm1505 = vcmask 1031168
  %v1506 = vsel %vm1505, %v1490, %v1492
  %v1507 = vsel %vm1505, %v1492, %v1494
  %v1508 = vsel %vm1505, %v1494, %v1496
  %v1509 = vsel %vm1505, %v1498, %v1500
  %v1510 = vsel %vm1505, %v1500, %v1502
  %v1511 = vsel %vm1505, %v1502, %v1504
  %v1519 = vsel %vm1139, %v1485, 0
  %v1522 = vsel %vm1139, %v1486, 0
  %v1525 = vsel %vm1139, %v1487, 0
  %v1528 = vsel %vm1139, %v1488, 0
  %1530 = vmatprep.subr.bf16.mxu0 %v1507
  %1531 = vmatpush1.bf16.msra.mxu0 %v1506
  %1532 = vmatprep.subr.bf16.mxu0 %v1510
  %1533 = vmatpush1.bf16.msra.mxu0 %v1509
  %1534 = vmatprep.subr.bf16.mxu0 0
  %1535 = vmatpush1.bf16.msra.mxu0 0
  %1536 = vmatprep.subr.bf16.mxu0 0
  %1537 = vmatpush1.bf16.msra.mxu0 0
  %1538 = vmatprep.subr.bf16.mxu0 0
  %1539 = vmatpush1.bf16.msra.mxu0 0
  %1540 = vmatprep.subr.bf16.mxu0 0
  %1541 = vmatpush1.bf16.msra.mxu0 0
  %1542 = vmatprep.subr.bf16.mxu0 0
  %1543 = vmatpush1.bf16.msra.mxu0 0
  %1544 = vmatprep.subr.bf16.mxu0 0
  %1545 = vmatpush1.bf16.msra.mxu0 0
  %1546 = vmatprep.subr.bf16.mxu0 0
  %1547 = vmatpush1.bf16.msra.mxu0 0
  %1548 = vmatprep.subr.bf16.mxu0 0
  %1549 = vmatpush1.bf16.msra.mxu0 0
  %1550 = vmatprep.subr.bf16.mxu0 0
  %1551 = vmatpush1.bf16.msra.mxu0 0
  %1552 = vmatprep.subr.bf16.mxu0 0
  %1553 = vmatpush1.bf16.msra.mxu0 0
  %1554 = vmatprep.subr.bf16.mxu0 0
  %1555 = vmatpush1.bf16.msra.mxu0 0
  %1556 = vmatprep.subr.bf16.mxu0 0
  %1557 = vmatpush1.bf16.msra.mxu0 0
  %1558 = vmatprep.subr.bf16.mxu0 0
  %1559 = vmatpush1.bf16.msra.mxu0 0
  %1560 = vmatprep.subr.bf16.mxu0 0
  %1561 = vmatpush1.bf16.msra.mxu0 0
  %1562 = vmatprep.mubr.bf16.mxu0 0
  %1563 = vmatmul.mubr.bf16.gmra.mrb[0].mxu0 %v1519
  %v1564 = vpop.f32.mrb[0].mxu0
  %v1565 = vadd.f32 0.0, %v1564
  %v1566 = vpop.f32.mrb[0].mxu0
  %v1567 = vadd.f32 0.0, %v1566
  %v1568 = vpop.f32.mrb[0].mxu0
  %v1569 = vadd.f32 0.0, %v1568
  %v1570 = vpop.f32.mrb[0].mxu0
  %v1571 = vadd.f32 0.0, %v1570
  %1572 = vmatprep.mubr.bf16.mxu0 0
  %1573 = vmatmul.mubr.bf16.gmra.mrb[0].mxu0 %v1522
  %v1574 = vpop.f32.mrb[0].mxu0
  %v1575 = vadd.f32 0.0, %v1574
  %v1576 = vpop.f32.mrb[0].mxu0
  %v1577 = vadd.f32 0.0, %v1576
  %v1578 = vpop.f32.mrb[0].mxu0
  %v1579 = vadd.f32 0.0, %v1578
  %v1580 = vpop.f32.mrb[0].mxu0
  %v1581 = vadd.f32 0.0, %v1580
  %1582 = vmatprep.mubr.bf16.mxu0 0
  %1583 = vmatmul.mubr.bf16.gmra.mrb[0].mxu0 %v1525
  %v1584 = vpop.f32.mrb[0].mxu0
  %v1585 = vadd.f32 0.0, %v1584
  %v1586 = vpop.f32.mrb[0].mxu0
  %v1587 = vadd.f32 0.0, %v1586
  %v1588 = vpop.f32.mrb[0].mxu0
  %v1589 = vadd.f32 0.0, %v1588
  %v1590 = vpop.f32.mrb[0].mxu0
  %v1591 = vadd.f32 0.0, %v1590
  %1592 = vmatprep.mubr.bf16.mxu0 0
  %1593 = vmatmul.mubr.bf16.gmra.mrb[0].mxu0 %v1528
  %v1594 = vpop.f32.mrb[0].mxu0
  %v1595 = vadd.f32 0.0, %v1594
  %v1596 = vpop.f32.mrb[0].mxu0
  %v1597 = vadd.f32 0.0, %v1596
  %v1598 = vpop.f32.mrb[0].mxu0
  %v1599 = vadd.f32 0.0, %v1598
  %v1600 = vpop.f32.mrb[0].mxu0
  %v1601 = vadd.f32 0.0, %v1600
  %1602 = vdwg.mxu0
  %1603 = vmatprep.subr.bf16.mxu0 0
  %1604 = vmatpush1.bf16.msra.mxu0 %v1508
  %1605 = vmatprep.subr.bf16.mxu0 0
  %1606 = vmatpush1.bf16.msra.mxu0 %v1511
  %1607 = vmatprep.subr.bf16.mxu0 0
  %1608 = vmatpush1.bf16.msra.mxu0 0
  %1609 = vmatprep.subr.bf16.mxu0 0
  %1610 = vmatpush1.bf16.msra.mxu0 0
  %1611 = vmatprep.subr.bf16.mxu0 0
  %1612 = vmatpush1.bf16.msra.mxu0 0
  %1613 = vmatprep.subr.bf16.mxu0 0
  %1614 = vmatpush1.bf16.msra.mxu0 0
  %1615 = vmatprep.subr.bf16.mxu0 0
  %1616 = vmatpush1.bf16.msra.mxu0 0
  %1617 = vmatprep.subr.bf16.mxu0 0
  %1618 = vmatpush1.bf16.msra.mxu0 0
  %1619 = vmatprep.subr.bf16.mxu0 0
  %1620 = vmatpush1.bf16.msra.mxu0 0
  %1621 = vmatprep.subr.bf16.mxu0 0
  %1622 = vmatpush1.bf16.msra.mxu0 0
  %1623 = vmatprep.subr.bf16.mxu0 0
  %1624 = vmatpush1.bf16.msra.mxu0 0
  %1625 = vmatprep.subr.bf16.mxu0 0
  %1626 = vmatpush1.bf16.msra.mxu0 0
  %1627 = vmatprep.subr.bf16.mxu0 0
  %1628 = vmatpush1.bf16.msra.mxu0 0
  %1629 = vmatprep.subr.bf16.mxu0 0
  %1630 = vmatpush1.bf16.msra.mxu0 0
  %1631 = vmatprep.subr.bf16.mxu0 0
  %1632 = vmatpush1.bf16.msra.mxu0 0
  %1633 = vmatprep.subr.bf16.mxu0 0
  %1634 = vmatpush1.bf16.msra.mxu0 0
  %1635 = vmatprep.mubr.bf16.mxu0 0
  %1636 = vmatmul.mubr.bf16.gmra.mrb[0].mxu0 %v1519
  %v1637 = vpop.f32.mrb[0].mxu0
  %v1638 = vadd.f32 0.0, %v1637
  %v1639 = vpop.f32.mrb[0].mxu0
  %v1640 = vpop.f32.mrb[0].mxu0
  %v1641 = vadd.f32 0.0, %v1640
  %v1642 = vpop.f32.mrb[0].mxu0
  %1643 = vmatprep.mubr.bf16.mxu0 0
  %1644 = vmatmul.mubr.bf16.gmra.mrb[0].mxu0 %v1522
  %v1645 = vpop.f32.mrb[0].mxu0
  %v1646 = vadd.f32 0.0, %v1645
  %v1647 = vpop.f32.mrb[0].mxu0
  %v1648 = vpop.f32.mrb[0].mxu0
  %v1649 = vadd.f32 0.0, %v1648
  %v1650 = vpop.f32.mrb[0].mxu0
  %1651 = vmatprep.mubr.bf16.mxu0 0
  %1652 = vmatmul.mubr.bf16.gmra.mrb[0].mxu0 %v1525
  %v1653 = vpop.f32.mrb[0].mxu0
  %v1654 = vadd.f32 0.0, %v1653
  %v1655 = vpop.f32.mrb[0].mxu0
  %v1656 = vpop.f32.mrb[0].mxu0
  %v1657 = vadd.f32 0.0, %v1656
  %v1658 = vpop.f32.mrb[0].mxu0
  %1659 = vmatprep.mubr.bf16.mxu0 0
  %1660 = vmatmul.mubr.bf16.gmra.mrb[0].mxu0 %v1528
  %v1661 = vpop.f32.mrb[0].mxu0
  %v1662 = vadd.f32 0.0, %v1661
  %v1663 = vpop.f32.mrb[0].mxu0
  %v1664 = vpop.f32.mrb[0].mxu0
  %v1665 = vadd.f32 0.0, %v1664
  %v1666 = vpop.f32.mrb[0].mxu0
  %1667 = vdwg.mxu0
  %v1668 = vadd.f32 %v1357, %v1565
  %v1669 = vadd.f32 %v1359, %v1567
  %v1670 = vadd.f32 %v1430, %v1638
  %v1671 = vadd.f32 %v1361, %v1569
  %v1672 = vadd.f32 %v1363, %v1571
  %v1673 = vadd.f32 %v1433, %v1641
  %v1674 = vadd.f32 %v1367, %v1575
  %v1675 = vadd.f32 %v1369, %v1577
  %v1676 = vadd.f32 %v1438, %v1646
  %v1677 = vadd.f32 %v1371, %v1579
  %v1678 = vadd.f32 %v1373, %v1581
  %v1679 = vadd.f32 %v1441, %v1649
  %v1680 = vadd.f32 %v1377, %v1585
  %v1681 = vadd.f32 %v1379, %v1587
  %v1682 = vadd.f32 %v1446, %v1654
  %v1683 = vadd.f32 %v1381, %v1589
  %v1684 = vadd.f32 %v1383, %v1591
  %v1685 = vadd.f32 %v1449, %v1657
  %v1686 = vadd.f32 %v1387, %v1595
  %v1687 = vadd.f32 %v1389, %v1597
  %v1688 = vadd.f32 %v1454, %v1662
  %v1689 = vadd.f32 %v1391, %v1599
  %v1690 = vadd.f32 %v1393, %v1601
  %v1691 = vadd.f32 %v1457, %v1665
  %s1692 = scalar_lea.vmem %s3, 96
  %v1693 = vld [vmem:[%s1692] sm:$0xf]
  %v1694 = vld [vmem:[%s1692 + $0x4] sm:$0xf]
  %v1695 = vld [vmem:[%s1692 + $0x8] sm:$0xf]
  %v1696 = vld [vmem:[%s1692 + $0xc] sm:$0xf]
  %v1697 = vld [vmem:[%s1692 + $0x10] sm:$0xf]
  %v1698 = vld [vmem:[%s1692 + $0x14] sm:$0xf]
  %v1699 = vld [vmem:[%s1692 + $0x18] sm:$0xf]
  %v1700 = vld [vmem:[%s1692 + $0x1c] sm:$0xf]
  %v1709 = vunpack.c.l.b16 %v1693
  %v1710 = vunpack.c.l.b16 %v1694
  %v1711 = vunpack.c.l.b16 %v1695
  %v1712 = vunpack.c.l.b16 %v1696
  %v1713 = vunpack.c.l.b16 %v1697
  %v1714 = vunpack.c.l.b16 %v1698
  %v1715 = vunpack.c.l.b16 %v1699
  %v1716 = vunpack.c.l.b16 %v1700
  %v1717 = vpack.c.b16 %v1710, %v1709
  %v1718 = vpack.c.b16 %v1712, %v1711
  %v1719 = vpack.c.b16 %v1714, %v1713
  %v1720 = vpack.c.b16 %v1716, %v1715
  %1721 = vrot.lane.b32.xlu0 %v1058, 125
  %v1722 = vpop.permute.xlu0 %1721
  %1723 = vrot.lane.b32.xlu0 %v1059, 125
  %v1724 = vpop.permute.xlu0 %1723
  %1725 = vrot.lane.b32.xlu0 %v1060, 125
  %v1726 = vpop.permute.xlu0 %1725
  %1727 = vrot.lane.b32.xlu0 %v1061, 125
  %v1728 = vpop.permute.xlu0 %1727
  %1729 = vrot.lane.b32.xlu0 %v1062, 125
  %v1730 = vpop.permute.xlu0 %1729
  %1731 = vrot.lane.b32.xlu0 %v1063, 125
  %v1732 = vpop.permute.xlu0 %1731
  %1733 = vrot.lane.b32.xlu0 %v1064, 125
  %v1734 = vpop.permute.xlu0 %1733
  %1735 = vrot.lane.b32.xlu0 %v1065, 125
  %v1736 = vpop.permute.xlu0 %1735
  %vm1737 = vcmask 1022976
  %v1738 = vsel %vm1737, %v1722, %v1724
  %v1739 = vsel %vm1737, %v1724, %v1726
  %v1740 = vsel %vm1737, %v1726, %v1728
  %v1741 = vsel %vm1737, %v1730, %v1732
  %v1742 = vsel %vm1737, %v1732, %v1734
  %v1743 = vsel %vm1737, %v1734, %v1736
  %v1751 = vsel %vm1139, %v1717, 0
  %v1754 = vsel %vm1139, %v1718, 0
  %v1757 = vsel %vm1139, %v1719, 0
  %v1760 = vsel %vm1139, %v1720, 0
  %1762 = vmatprep.subr.bf16.mxu0 %v1739
  %1763 = vmatpush1.bf16.msra.mxu0 %v1738
  %1764 = vmatprep.subr.bf16.mxu0 %v1742
  %1765 = vmatpush1.bf16.msra.mxu0 %v1741
  %1766 = vmatprep.subr.bf16.mxu0 0
  %1767 = vmatpush1.bf16.msra.mxu0 0
  %1768 = vmatprep.subr.bf16.mxu0 0
  %1769 = vmatpush1.bf16.msra.mxu0 0
  %1770 = vmatprep.subr.bf16.mxu0 0
  %1771 = vmatpush1.bf16.msra.mxu0 0
  %1772 = vmatprep.subr.bf16.mxu0 0
  %1773 = vmatpush1.bf16.msra.mxu0 0
  %1774 = vmatprep.subr.bf16.mxu0 0
  %1775 = vmatpush1.bf16.msra.mxu0 0
  %1776 = vmatprep.subr.bf16.mxu0 0
  %1777 = vmatpush1.bf16.msra.mxu0 0
  %1778 = vmatprep.subr.bf16.mxu0 0
  %1779 = vmatpush1.bf16.msra.mxu0 0
  %1780 = vmatprep.subr.bf16.mxu0 0
  %1781 = vmatpush1.bf16.msra.mxu0 0
  %1782 = vmatprep.subr.bf16.mxu0 0
  %1783 = vmatpush1.bf16.msra.mxu0 0
  %1784 = vmatprep.subr.bf16.mxu0 0
  %1785 = vmatpush1.bf16.msra.mxu0 0
  %1786 = vmatprep.subr.bf16.mxu0 0
  %1787 = vmatpush1.bf16.msra.mxu0 0
  %1788 = vmatprep.subr.bf16.mxu0 0
  %1789 = vmatpush1.bf16.msra.mxu0 0
  %1790 = vmatprep.subr.bf16.mxu0 0
  %1791 = vmatpush1.bf16.msra.mxu0 0
  %1792 = vmatprep.subr.bf16.mxu0 0
  %1793 = vmatpush1.bf16.msra.mxu0 0
  %1794 = vmatprep.mubr.bf16.mxu0 0
  %1795 = vmatmul.mubr.bf16.gmra.mrb[0].mxu0 %v1751
  %v1796 = vpop.f32.mrb[0].mxu0
  %v1797 = vadd.f32 0.0, %v1796
  %v1798 = vpop.f32.mrb[0].mxu0
  %v1799 = vadd.f32 0.0, %v1798
  %v1800 = vpop.f32.mrb[0].mxu0
  %v1801 = vadd.f32 0.0, %v1800
  %v1802 = vpop.f32.mrb[0].mxu0
  %v1803 = vadd.f32 0.0, %v1802
  %1804 = vmatprep.mubr.bf16.mxu0 0
  %1805 = vmatmul.mubr.bf16.gmra.mrb[0].mxu0 %v1754
  %v1806 = vpop.f32.mrb[0].mxu0
  %v1807 = vadd.f32 0.0, %v1806
  %v1808 = vpop.f32.mrb[0].mxu0
  %v1809 = vadd.f32 0.0, %v1808
  %v1810 = vpop.f32.mrb[0].mxu0
  %v1811 = vadd.f32 0.0, %v1810
  %v1812 = vpop.f32.mrb[0].mxu0
  %v1813 = vadd.f32 0.0, %v1812
  %1814 = vmatprep.mubr.bf16.mxu0 0
  %1815 = vmatmul.mubr.bf16.gmra.mrb[0].mxu0 %v1757
  %v1816 = vpop.f32.mrb[0].mxu0
  %v1817 = vadd.f32 0.0, %v1816
  %v1818 = vpop.f32.mrb[0].mxu0
  %v1819 = vadd.f32 0.0, %v1818
  %v1820 = vpop.f32.mrb[0].mxu0
  %v1821 = vadd.f32 0.0, %v1820
  %v1822 = vpop.f32.mrb[0].mxu0
  %v1823 = vadd.f32 0.0, %v1822
  %1824 = vmatprep.mubr.bf16.mxu0 0
  %1825 = vmatmul.mubr.bf16.gmra.mrb[0].mxu0 %v1760
  %v1826 = vpop.f32.mrb[0].mxu0
  %v1827 = vadd.f32 0.0, %v1826
  %v1828 = vpop.f32.mrb[0].mxu0
  %v1829 = vadd.f32 0.0, %v1828
  %v1830 = vpop.f32.mrb[0].mxu0
  %v1831 = vadd.f32 0.0, %v1830
  %v1832 = vpop.f32.mrb[0].mxu0
  %v1833 = vadd.f32 0.0, %v1832
  %1834 = vdwg.mxu0
  %1835 = vmatprep.subr.bf16.mxu0 0
  %1836 = vmatpush1.bf16.msra.mxu0 %v1740
  %1837 = vmatprep.subr.bf16.mxu0 0
  %1838 = vmatpush1.bf16.msra.mxu0 %v1743
  %1839 = vmatprep.subr.bf16.mxu0 0
  %1840 = vmatpush1.bf16.msra.mxu0 0
  %1841 = vmatprep.subr.bf16.mxu0 0
  %1842 = vmatpush1.bf16.msra.mxu0 0
  %1843 = vmatprep.subr.bf16.mxu0 0
  %1844 = vmatpush1.bf16.msra.mxu0 0
  %1845 = vmatprep.subr.bf16.mxu0 0
  %1846 = vmatpush1.bf16.msra.mxu0 0
  %1847 = vmatprep.subr.bf16.mxu0 0
  %1848 = vmatpush1.bf16.msra.mxu0 0
  %1849 = vmatprep.subr.bf16.mxu0 0
  %1850 = vmatpush1.bf16.msra.mxu0 0
  %1851 = vmatprep.subr.bf16.mxu0 0
  %1852 = vmatpush1.bf16.msra.mxu0 0
  %1853 = vmatprep.subr.bf16.mxu0 0
  %1854 = vmatpush1.bf16.msra.mxu0 0
  %1855 = vmatprep.subr.bf16.mxu0 0
  %1856 = vmatpush1.bf16.msra.mxu0 0
  %1857 = vmatprep.subr.bf16.mxu0 0
  %1858 = vmatpush1.bf16.msra.mxu0 0
  %1859 = vmatprep.subr.bf16.mxu0 0
  %1860 = vmatpush1.bf16.msra.mxu0 0
  %1861 = vmatprep.subr.bf16.mxu0 0
  %1862 = vmatpush1.bf16.msra.mxu0 0
  %1863 = vmatprep.subr.bf16.mxu0 0
  %1864 = vmatpush1.bf16.msra.mxu0 0
  %1865 = vmatprep.subr.bf16.mxu0 0
  %1866 = vmatpush1.bf16.msra.mxu0 0
  %1867 = vmatprep.mubr.bf16.mxu0 0
  %1868 = vmatmul.mubr.bf16.gmra.mrb[0].mxu0 %v1751
  %v1869 = vpop.f32.mrb[0].mxu0
  %v1870 = vadd.f32 0.0, %v1869
  %v1871 = vpop.f32.mrb[0].mxu0
  %v1872 = vpop.f32.mrb[0].mxu0
  %v1873 = vadd.f32 0.0, %v1872
  %v1874 = vpop.f32.mrb[0].mxu0
  %1875 = vmatprep.mubr.bf16.mxu0 0
  %1876 = vmatmul.mubr.bf16.gmra.mrb[0].mxu0 %v1754
  %v1877 = vpop.f32.mrb[0].mxu0
  %v1878 = vadd.f32 0.0, %v1877
  %v1879 = vpop.f32.mrb[0].mxu0
  %v1880 = vpop.f32.mrb[0].mxu0
  %v1881 = vadd.f32 0.0, %v1880
  %v1882 = vpop.f32.mrb[0].mxu0
  %1883 = vmatprep.mubr.bf16.mxu0 0
  %1884 = vmatmul.mubr.bf16.gmra.mrb[0].mxu0 %v1757
  %v1885 = vpop.f32.mrb[0].mxu0
  %v1886 = vadd.f32 0.0, %v1885
  %v1887 = vpop.f32.mrb[0].mxu0
  %v1888 = vpop.f32.mrb[0].mxu0
  %v1889 = vadd.f32 0.0, %v1888
  %v1890 = vpop.f32.mrb[0].mxu0
  %1891 = vmatprep.mubr.bf16.mxu0 0
  %1892 = vmatmul.mubr.bf16.gmra.mrb[0].mxu0 %v1760
  %v1893 = vpop.f32.mrb[0].mxu0
  %v1894 = vadd.f32 0.0, %v1893
  %v1895 = vpop.f32.mrb[0].mxu0
  %v1896 = vpop.f32.mrb[0].mxu0
  %v1897 = vadd.f32 0.0, %v1896
  %v1898 = vpop.f32.mrb[0].mxu0
  %1899 = vdwg.mxu0
  %v1900 = vadd.f32 %v1668, %v1797
  %v1901 = vadd.f32 %v1669, %v1799
  %v1902 = vadd.f32 %v1670, %v1870
  %v1903 = vadd.f32 %v1671, %v1801
  %v1904 = vadd.f32 %v1672, %v1803
  %v1905 = vadd.f32 %v1673, %v1873
  %v1906 = vadd.f32 %v1674, %v1807
  %v1907 = vadd.f32 %v1675, %v1809
  %v1908 = vadd.f32 %v1676, %v1878
  %v1909 = vadd.f32 %v1677, %v1811
  %v1910 = vadd.f32 %v1678, %v1813
  %v1911 = vadd.f32 %v1679, %v1881
  %v1912 = vadd.f32 %v1680, %v1817
  %v1913 = vadd.f32 %v1681, %v1819
  %v1914 = vadd.f32 %v1682, %v1886
  %v1915 = vadd.f32 %v1683, %v1821
  %v1916 = vadd.f32 %v1684, %v1823
  %v1917 = vadd.f32 %v1685, %v1889
  %v1918 = vadd.f32 %v1686, %v1827
  %v1919 = vadd.f32 %v1687, %v1829
  %v1920 = vadd.f32 %v1688, %v1894
  %v1921 = vadd.f32 %v1689, %v1831
  %v1922 = vadd.f32 %v1690, %v1833
  %v1923 = vadd.f32 %v1691, %v1897
  %s1924 = scalar_lea.vmem %s3, 128
  %v1925 = vld [vmem:[%s1924] sm:$0xf]
  %v1926 = vld [vmem:[%s1924 + $0x4] sm:$0xf]
  %v1927 = vld [vmem:[%s1924 + $0x8] sm:$0xf]
  %v1928 = vld [vmem:[%s1924 + $0xc] sm:$0xf]
  %v1929 = vld [vmem:[%s1924 + $0x10] sm:$0xf]
  %v1930 = vld [vmem:[%s1924 + $0x14] sm:$0xf]
  %v1931 = vld [vmem:[%s1924 + $0x18] sm:$0xf]
  %v1932 = vld [vmem:[%s1924 + $0x1c] sm:$0xf]
  %v1941 = vunpack.c.l.b16 %v1925
  %v1942 = vunpack.c.l.b16 %v1926
  %v1943 = vunpack.c.l.b16 %v1927
  %v1944 = vunpack.c.l.b16 %v1928
  %v1945 = vunpack.c.l.b16 %v1929
  %v1946 = vunpack.c.l.b16 %v1930
  %v1947 = vunpack.c.l.b16 %v1931
  %v1948 = vunpack.c.l.b16 %v1932
  %v1949 = vpack.c.b16 %v1942, %v1941
  %v1950 = vpack.c.b16 %v1944, %v1943
  %v1951 = vpack.c.b16 %v1946, %v1945
  %v1952 = vpack.c.b16 %v1948, %v1947
  %1953 = vrot.lane.b32.xlu0 %v1058, 119
  %v1954 = vpop.permute.xlu0 %1953
  %1955 = vrot.lane.b32.xlu0 %v1059, 119
  %v1956 = vpop.permute.xlu0 %1955
  %1957 = vrot.lane.b32.xlu0 %v1060, 119
  %v1958 = vpop.permute.xlu0 %1957
  %1959 = vrot.lane.b32.xlu0 %v1061, 119
  %v1960 = vpop.permute.xlu0 %1959
  %1961 = vrot.lane.b32.xlu0 %v1062, 119
  %v1962 = vpop.permute.xlu0 %1961
  %1963 = vrot.lane.b32.xlu0 %v1063, 119
  %v1964 = vpop.permute.xlu0 %1963
  %1965 = vrot.lane.b32.xlu0 %v1064, 119
  %v1966 = vpop.permute.xlu0 %1965
  %1967 = vrot.lane.b32.xlu0 %v1065, 119
  %v1968 = vpop.permute.xlu0 %1967
  %v1969 = vsel %vm625, %v1954, %v1956
  %v1970 = vsel %vm625, %v1956, %v1958
  %v1971 = vsel %vm625, %v1958, %v1960
  %v1972 = vsel %vm625, %v1962, %v1964
  %v1973 = vsel %vm625, %v1964, %v1966
  %v1974 = vsel %vm625, %v1966, %v1968
  %v1982 = vsel %vm1139, %v1949, 0
  %v1985 = vsel %vm1139, %v1950, 0
  %v1988 = vsel %vm1139, %v1951, 0
  %v1991 = vsel %vm1139, %v1952, 0
  %1993 = vmatprep.subr.bf16.mxu0 %v1970
  %1994 = vmatpush1.bf16.msra.mxu0 %v1969
  %1995 = vmatprep.subr.bf16.mxu0 %v1973
  %1996 = vmatpush1.bf16.msra.mxu0 %v1972
  %1997 = vmatprep.subr.bf16.mxu0 0
  %1998 = vmatpush1.bf16.msra.mxu0 0
  %1999 = vmatprep.subr.bf16.mxu0 0
  %2000 = vmatpush1.bf16.msra.mxu0 0
  %2001 = vmatprep.subr.bf16.mxu0 0
  %2002 = vmatpush1.bf16.msra.mxu0 0
  %2003 = vmatprep.subr.bf16.mxu0 0
  %2004 = vmatpush1.bf16.msra.mxu0 0
  %2005 = vmatprep.subr.bf16.mxu0 0
  %2006 = vmatpush1.bf16.msra.mxu0 0
  %2007 = vmatprep.subr.bf16.mxu0 0
  %2008 = vmatpush1.bf16.msra.mxu0 0
  %2009 = vmatprep.subr.bf16.mxu0 0
  %2010 = vmatpush1.bf16.msra.mxu0 0
  %2011 = vmatprep.subr.bf16.mxu0 0
  %2012 = vmatpush1.bf16.msra.mxu0 0
  %2013 = vmatprep.subr.bf16.mxu0 0
  %2014 = vmatpush1.bf16.msra.mxu0 0
  %2015 = vmatprep.subr.bf16.mxu0 0
  %2016 = vmatpush1.bf16.msra.mxu0 0
  %2017 = vmatprep.subr.bf16.mxu0 0
  %2018 = vmatpush1.bf16.msra.mxu0 0
  %2019 = vmatprep.subr.bf16.mxu0 0
  %2020 = vmatpush1.bf16.msra.mxu0 0
  %2021 = vmatprep.subr.bf16.mxu0 0
  %2022 = vmatpush1.bf16.msra.mxu0 0
  %2023 = vmatprep.subr.bf16.mxu0 0
  %2024 = vmatpush1.bf16.msra.mxu0 0
  %2025 = vmatprep.mubr.bf16.mxu0 0
  %2026 = vmatmul.mubr.bf16.gmra.mrb[0].mxu0 %v1982
  %v2027 = vpop.f32.mrb[0].mxu0
  %v2028 = vadd.f32 0.0, %v2027
  %v2029 = vpop.f32.mrb[0].mxu0
  %v2030 = vadd.f32 0.0, %v2029
  %v2031 = vpop.f32.mrb[0].mxu0
  %v2032 = vadd.f32 0.0, %v2031
  %v2033 = vpop.f32.mrb[0].mxu0
  %v2034 = vadd.f32 0.0, %v2033
  %2035 = vmatprep.mubr.bf16.mxu0 0
  %2036 = vmatmul.mubr.bf16.gmra.mrb[0].mxu0 %v1985
  %v2037 = vpop.f32.mrb[0].mxu0
  %v2038 = vadd.f32 0.0, %v2037
  %v2039 = vpop.f32.mrb[0].mxu0
  %v2040 = vadd.f32 0.0, %v2039
  %v2041 = vpop.f32.mrb[0].mxu0
  %v2042 = vadd.f32 0.0, %v2041
  %v2043 = vpop.f32.mrb[0].mxu0
  %v2044 = vadd.f32 0.0, %v2043
  %2045 = vmatprep.mubr.bf16.mxu0 0
  %2046 = vmatmul.mubr.bf16.gmra.mrb[0].mxu0 %v1988
  %v2047 = vpop.f32.mrb[0].mxu0
  %v2048 = vadd.f32 0.0, %v2047
  %v2049 = vpop.f32.mrb[0].mxu0
  %v2050 = vadd.f32 0.0, %v2049
  %v2051 = vpop.f32.mrb[0].mxu0
  %v2052 = vadd.f32 0.0, %v2051
  %v2053 = vpop.f32.mrb[0].mxu0
  %v2054 = vadd.f32 0.0, %v2053
  %2055 = vmatprep.mubr.bf16.mxu0 0
  %2056 = vmatmul.mubr.bf16.gmra.mrb[0].mxu0 %v1991
  %v2057 = vpop.f32.mrb[0].mxu0
  %v2058 = vadd.f32 0.0, %v2057
  %v2059 = vpop.f32.mrb[0].mxu0
  %v2060 = vadd.f32 0.0, %v2059
  %v2061 = vpop.f32.mrb[0].mxu0
  %v2062 = vadd.f32 0.0, %v2061
  %v2063 = vpop.f32.mrb[0].mxu0
  %v2064 = vadd.f32 0.0, %v2063
  %2065 = vdwg.mxu0
  %2066 = vmatprep.subr.bf16.mxu0 0
  %2067 = vmatpush1.bf16.msra.mxu0 %v1971
  %2068 = vmatprep.subr.bf16.mxu0 0
  %2069 = vmatpush1.bf16.msra.mxu0 %v1974
  %2070 = vmatprep.subr.bf16.mxu0 0
  %2071 = vmatpush1.bf16.msra.mxu0 0
  %2072 = vmatprep.subr.bf16.mxu0 0
  %2073 = vmatpush1.bf16.msra.mxu0 0
  %2074 = vmatprep.subr.bf16.mxu0 0
  %2075 = vmatpush1.bf16.msra.mxu0 0
  %2076 = vmatprep.subr.bf16.mxu0 0
  %2077 = vmatpush1.bf16.msra.mxu0 0
  %2078 = vmatprep.subr.bf16.mxu0 0
  %2079 = vmatpush1.bf16.msra.mxu0 0
  %2080 = vmatprep.subr.bf16.mxu0 0
  %2081 = vmatpush1.bf16.msra.mxu0 0
  %2082 = vmatprep.subr.bf16.mxu0 0
  %2083 = vmatpush1.bf16.msra.mxu0 0
  %2084 = vmatprep.subr.bf16.mxu0 0
  %2085 = vmatpush1.bf16.msra.mxu0 0
  %2086 = vmatprep.subr.bf16.mxu0 0
  %2087 = vmatpush1.bf16.msra.mxu0 0
  %2088 = vmatprep.subr.bf16.mxu0 0
  %2089 = vmatpush1.bf16.msra.mxu0 0
  %2090 = vmatprep.subr.bf16.mxu0 0
  %2091 = vmatpush1.bf16.msra.mxu0 0
  %2092 = vmatprep.subr.bf16.mxu0 0
  %2093 = vmatpush1.bf16.msra.mxu0 0
  %2094 = vmatprep.subr.bf16.mxu0 0
  %2095 = vmatpush1.bf16.msra.mxu0 0
  %2096 = vmatprep.subr.bf16.mxu0 0
  %2097 = vmatpush1.bf16.msra.mxu0 0
  %2098 = vmatprep.mubr.bf16.mxu0 0
  %2099 = vmatmul.mubr.bf16.gmra.mrb[0].mxu0 %v1982
  %v2100 = vpop.f32.mrb[0].mxu0
  %v2101 = vadd.f32 0.0, %v2100
  %v2102 = vpop.f32.mrb[0].mxu0
  %v2103 = vpop.f32.mrb[0].mxu0
  %v2104 = vadd.f32 0.0, %v2103
  %v2105 = vpop.f32.mrb[0].mxu0
  %2106 = vmatprep.mubr.bf16.mxu0 0
  %2107 = vmatmul.mubr.bf16.gmra.mrb[0].mxu0 %v1985
  %v2108 = vpop.f32.mrb[0].mxu0
  %v2109 = vadd.f32 0.0, %v2108
  %v2110 = vpop.f32.mrb[0].mxu0
  %v2111 = vpop.f32.mrb[0].mxu0
  %v2112 = vadd.f32 0.0, %v2111
  %v2113 = vpop.f32.mrb[0].mxu0
  %2114 = vmatprep.mubr.bf16.mxu0 0
  %2115 = vmatmul.mubr.bf16.gmra.mrb[0].mxu0 %v1988
  %v2116 = vpop.f32.mrb[0].mxu0
  %v2117 = vadd.f32 0.0, %v2116
  %v2118 = vpop.f32.mrb[0].mxu0
  %v2119 = vpop.f32.mrb[0].mxu0
  %v2120 = vadd.f32 0.0, %v2119
  %v2121 = vpop.f32.mrb[0].mxu0
  %2122 = vmatprep.mubr.bf16.mxu0 0
  %2123 = vmatmul.mubr.bf16.gmra.mrb[0].mxu0 %v1991
  %v2124 = vpop.f32.mrb[0].mxu0
  %v2125 = vadd.f32 0.0, %v2124
  %v2126 = vpop.f32.mrb[0].mxu0
  %v2127 = vpop.f32.mrb[0].mxu0
  %v2128 = vadd.f32 0.0, %v2127
  %v2129 = vpop.f32.mrb[0].mxu0
  %2130 = vdwg.mxu0
  %v2131 = vadd.f32 %v1900, %v2028
  %v2132 = vadd.f32 %v1901, %v2030
  %v2133 = vadd.f32 %v1902, %v2101
  %v2134 = vadd.f32 %v1903, %v2032
  %v2135 = vadd.f32 %v1904, %v2034
  %v2136 = vadd.f32 %v1905, %v2104
  %v2137 = vadd.f32 %v1906, %v2038
  %v2138 = vadd.f32 %v1907, %v2040
  %v2139 = vadd.f32 %v1908, %v2109
  %v2140 = vadd.f32 %v1909, %v2042
  %v2141 = vadd.f32 %v1910, %v2044
  %v2142 = vadd.f32 %v1911, %v2112
  %v2143 = vadd.f32 %v1912, %v2048
  %v2144 = vadd.f32 %v1913, %v2050
  %v2145 = vadd.f32 %v1914, %v2117
  %v2146 = vadd.f32 %v1915, %v2052
  %v2147 = vadd.f32 %v1916, %v2054
  %v2148 = vadd.f32 %v1917, %v2120
  %v2149 = vadd.f32 %v1918, %v2058
  %v2150 = vadd.f32 %v1919, %v2060
  %v2151 = vadd.f32 %v1920, %v2125
  %v2152 = vadd.f32 %v1921, %v2062
  %v2153 = vadd.f32 %v1922, %v2064
  %v2154 = vadd.f32 %v1923, %v2128
  %s2155 = scalar_lea.vmem %s3, 160
  %v2156 = vld [vmem:[%s2155] sm:$0xf]
  %v2157 = vld [vmem:[%s2155 + $0x4] sm:$0xf]
  %v2158 = vld [vmem:[%s2155 + $0x8] sm:$0xf]
  %v2159 = vld [vmem:[%s2155 + $0xc] sm:$0xf]
  %v2160 = vld [vmem:[%s2155 + $0x10] sm:$0xf]
  %v2161 = vld [vmem:[%s2155 + $0x14] sm:$0xf]
  %v2162 = vld [vmem:[%s2155 + $0x18] sm:$0xf]
  %v2163 = vld [vmem:[%s2155 + $0x1c] sm:$0xf]
  %v2172 = vunpack.c.l.b16 %v2156
  %v2173 = vunpack.c.l.b16 %v2157
  %v2174 = vunpack.c.l.b16 %v2158
  %v2175 = vunpack.c.l.b16 %v2159
  %v2176 = vunpack.c.l.b16 %v2160
  %v2177 = vunpack.c.l.b16 %v2161
  %v2178 = vunpack.c.l.b16 %v2162
  %v2179 = vunpack.c.l.b16 %v2163
  %v2180 = vpack.c.b16 %v2173, %v2172
  %v2181 = vpack.c.b16 %v2175, %v2174
  %v2182 = vpack.c.b16 %v2177, %v2176
  %v2183 = vpack.c.b16 %v2179, %v2178
  %2184 = vrot.lane.b32.xlu0 %v1058, 118
  %v2185 = vpop.permute.xlu0 %2184
  %2186 = vrot.lane.b32.xlu0 %v1059, 118
  %v2187 = vpop.permute.xlu0 %2186
  %2188 = vrot.lane.b32.xlu0 %v1060, 118
  %v2189 = vpop.permute.xlu0 %2188
  %2190 = vrot.lane.b32.xlu0 %v1061, 118
  %v2191 = vpop.permute.xlu0 %2190
  %2192 = vrot.lane.b32.xlu0 %v1062, 118
  %v2193 = vpop.permute.xlu0 %2192
  %2194 = vrot.lane.b32.xlu0 %v1063, 118
  %v2195 = vpop.permute.xlu0 %2194
  %2196 = vrot.lane.b32.xlu0 %v1064, 118
  %v2197 = vpop.permute.xlu0 %2196
  %2198 = vrot.lane.b32.xlu0 %v1065, 118
  %v2199 = vpop.permute.xlu0 %2198
  %v2200 = vsel %vm841, %v2185, %v2187
  %v2201 = vsel %vm841, %v2187, %v2189
  %v2202 = vsel %vm841, %v2189, %v2191
  %v2203 = vsel %vm841, %v2193, %v2195
  %v2204 = vsel %vm841, %v2195, %v2197
  %v2205 = vsel %vm841, %v2197, %v2199
  %v2213 = vsel %vm1139, %v2180, 0
  %v2216 = vsel %vm1139, %v2181, 0
  %v2219 = vsel %vm1139, %v2182, 0
  %v2222 = vsel %vm1139, %v2183, 0
  %2224 = vmatprep.subr.bf16.mxu0 %v2201
  %2225 = vmatpush1.bf16.msra.mxu0 %v2200
  %2226 = vmatprep.subr.bf16.mxu0 %v2204
  %2227 = vmatpush1.bf16.msra.mxu0 %v2203
  %2228 = vmatprep.subr.bf16.mxu0 0
  %2229 = vmatpush1.bf16.msra.mxu0 0
  %2230 = vmatprep.subr.bf16.mxu0 0
  %2231 = vmatpush1.bf16.msra.mxu0 0
  %2232 = vmatprep.subr.bf16.mxu0 0
  %2233 = vmatpush1.bf16.msra.mxu0 0
  %2234 = vmatprep.subr.bf16.mxu0 0
  %2235 = vmatpush1.bf16.msra.mxu0 0
  %2236 = vmatprep.subr.bf16.mxu0 0
  %2237 = vmatpush1.bf16.msra.mxu0 0
  %2238 = vmatprep.subr.bf16.mxu0 0
  %2239 = vmatpush1.bf16.msra.mxu0 0
  %2240 = vmatprep.subr.bf16.mxu0 0
  %2241 = vmatpush1.bf16.msra.mxu0 0
  %2242 = vmatprep.subr.bf16.mxu0 0
  %2243 = vmatpush1.bf16.msra.mxu0 0
  %2244 = vmatprep.subr.bf16.mxu0 0
  %2245 = vmatpush1.bf16.msra.mxu0 0
  %2246 = vmatprep.subr.bf16.mxu0 0
  %2247 = vmatpush1.bf16.msra.mxu0 0
  %2248 = vmatprep.subr.bf16.mxu0 0
  %2249 = vmatpush1.bf16.msra.mxu0 0
  %2250 = vmatprep.subr.bf16.mxu0 0
  %2251 = vmatpush1.bf16.msra.mxu0 0
  %2252 = vmatprep.subr.bf16.mxu0 0
  %2253 = vmatpush1.bf16.msra.mxu0 0
  %2254 = vmatprep.subr.bf16.mxu0 0
  %2255 = vmatpush1.bf16.msra.mxu0 0
  %2256 = vmatprep.mubr.bf16.mxu0 0
  %2257 = vmatmul.mubr.bf16.gmra.mrb[0].mxu0 %v2213
  %v2258 = vpop.f32.mrb[0].mxu0
  %v2259 = vadd.f32 0.0, %v2258
  %v2260 = vpop.f32.mrb[0].mxu0
  %v2261 = vadd.f32 0.0, %v2260
  %v2262 = vpop.f32.mrb[0].mxu0
  %v2263 = vadd.f32 0.0, %v2262
  %v2264 = vpop.f32.mrb[0].mxu0
  %v2265 = vadd.f32 0.0, %v2264
  %2266 = vmatprep.mubr.bf16.mxu0 0
  %2267 = vmatmul.mubr.bf16.gmra.mrb[0].mxu0 %v2216
  %v2268 = vpop.f32.mrb[0].mxu0
  %v2269 = vadd.f32 0.0, %v2268
  %v2270 = vpop.f32.mrb[0].mxu0
  %v2271 = vadd.f32 0.0, %v2270
  %v2272 = vpop.f32.mrb[0].mxu0
  %v2273 = vadd.f32 0.0, %v2272
  %v2274 = vpop.f32.mrb[0].mxu0
  %v2275 = vadd.f32 0.0, %v2274
  %2276 = vmatprep.mubr.bf16.mxu0 0
  %2277 = vmatmul.mubr.bf16.gmra.mrb[0].mxu0 %v2219
  %v2278 = vpop.f32.mrb[0].mxu0
  %v2279 = vadd.f32 0.0, %v2278
  %v2280 = vpop.f32.mrb[0].mxu0
  %v2281 = vadd.f32 0.0, %v2280
  %v2282 = vpop.f32.mrb[0].mxu0
  %v2283 = vadd.f32 0.0, %v2282
  %v2284 = vpop.f32.mrb[0].mxu0
  %v2285 = vadd.f32 0.0, %v2284
  %2286 = vmatprep.mubr.bf16.mxu0 0
  %2287 = vmatmul.mubr.bf16.gmra.mrb[0].mxu0 %v2222
  %v2288 = vpop.f32.mrb[0].mxu0
  %v2289 = vadd.f32 0.0, %v2288
  %v2290 = vpop.f32.mrb[0].mxu0
  %v2291 = vadd.f32 0.0, %v2290
  %v2292 = vpop.f32.mrb[0].mxu0
  %v2293 = vadd.f32 0.0, %v2292
  %v2294 = vpop.f32.mrb[0].mxu0
  %v2295 = vadd.f32 0.0, %v2294
  %2296 = vdwg.mxu0
  %2297 = vmatprep.subr.bf16.mxu0 0
  %2298 = vmatpush1.bf16.msra.mxu0 %v2202
  %2299 = vmatprep.subr.bf16.mxu0 0
  %2300 = vmatpush1.bf16.msra.mxu0 %v2205
  %2301 = vmatprep.subr.bf16.mxu0 0
  %2302 = vmatpush1.bf16.msra.mxu0 0
  %2303 = vmatprep.subr.bf16.mxu0 0
  %2304 = vmatpush1.bf16.msra.mxu0 0
  %2305 = vmatprep.subr.bf16.mxu0 0
  %2306 = vmatpush1.bf16.msra.mxu0 0
  %2307 = vmatprep.subr.bf16.mxu0 0
  %2308 = vmatpush1.bf16.msra.mxu0 0
  %2309 = vmatprep.subr.bf16.mxu0 0
  %2310 = vmatpush1.bf16.msra.mxu0 0
  %2311 = vmatprep.subr.bf16.mxu0 0
  %2312 = vmatpush1.bf16.msra.mxu0 0
  %2313 = vmatprep.subr.bf16.mxu0 0
  %2314 = vmatpush1.bf16.msra.mxu0 0
  %2315 = vmatprep.subr.bf16.mxu0 0
  %2316 = vmatpush1.bf16.msra.mxu0 0
  %2317 = vmatprep.subr.bf16.mxu0 0
  %2318 = vmatpush1.bf16.msra.mxu0 0
  %2319 = vmatprep.subr.bf16.mxu0 0
  %2320 = vmatpush1.bf16.msra.mxu0 0
  %2321 = vmatprep.subr.bf16.mxu0 0
  %2322 = vmatpush1.bf16.msra.mxu0 0
  %2323 = vmatprep.subr.bf16.mxu0 0
  %2324 = vmatpush1.bf16.msra.mxu0 0
  %2325 = vmatprep.subr.bf16.mxu0 0
  %2326 = vmatpush1.bf16.msra.mxu0 0
  %2327 = vmatprep.subr.bf16.mxu0 0
  %2328 = vmatpush1.bf16.msra.mxu0 0
  %2329 = vmatprep.mubr.bf16.mxu0 0
  %2330 = vmatmul.mubr.bf16.gmra.mrb[0].mxu0 %v2213
  %v2331 = vpop.f32.mrb[0].mxu0
  %v2332 = vadd.f32 0.0, %v2331
  %v2333 = vpop.f32.mrb[0].mxu0
  %v2334 = vpop.f32.mrb[0].mxu0
  %v2335 = vadd.f32 0.0, %v2334
  %v2336 = vpop.f32.mrb[0].mxu0
  %2337 = vmatprep.mubr.bf16.mxu0 0
  %2338 = vmatmul.mubr.bf16.gmra.mrb[0].mxu0 %v2216
  %v2339 = vpop.f32.mrb[0].mxu0
  %v2340 = vadd.f32 0.0, %v2339
  %v2341 = vpop.f32.mrb[0].mxu0
  %v2342 = vpop.f32.mrb[0].mxu0
  %v2343 = vadd.f32 0.0, %v2342
  %v2344 = vpop.f32.mrb[0].mxu0
  %2345 = vmatprep.mubr.bf16.mxu0 0
  %2346 = vmatmul.mubr.bf16.gmra.mrb[0].mxu0 %v2219
  %v2347 = vpop.f32.mrb[0].mxu0
  %v2348 = vadd.f32 0.0, %v2347
  %v2349 = vpop.f32.mrb[0].mxu0
  %v2350 = vpop.f32.mrb[0].mxu0
  %v2351 = vadd.f32 0.0, %v2350
  %v2352 = vpop.f32.mrb[0].mxu0
  %2353 = vmatprep.mubr.bf16.mxu0 0
  %2354 = vmatmul.mubr.bf16.gmra.mrb[0].mxu0 %v2222
  %v2355 = vpop.f32.mrb[0].mxu0
  %v2356 = vadd.f32 0.0, %v2355
  %v2357 = vpop.f32.mrb[0].mxu0
  %v2358 = vpop.f32.mrb[0].mxu0
  %v2359 = vadd.f32 0.0, %v2358
  %v2360 = vpop.f32.mrb[0].mxu0
  %2361 = vdwg.mxu0
  %v2362 = vadd.f32 %v2131, %v2259
  %v2363 = vadd.f32 %v2132, %v2261
  %v2364 = vadd.f32 %v2133, %v2332
  %v2365 = vadd.f32 %v2134, %v2263
  %v2366 = vadd.f32 %v2135, %v2265
  %v2367 = vadd.f32 %v2136, %v2335
  %v2368 = vadd.f32 %v2137, %v2269
  %v2369 = vadd.f32 %v2138, %v2271
  %v2370 = vadd.f32 %v2139, %v2340
  %v2371 = vadd.f32 %v2140, %v2273
  %v2372 = vadd.f32 %v2141, %v2275
  %v2373 = vadd.f32 %v2142, %v2343
  %v2374 = vadd.f32 %v2143, %v2279
  %v2375 = vadd.f32 %v2144, %v2281
  %v2376 = vadd.f32 %v2145, %v2348
  %v2377 = vadd.f32 %v2146, %v2283
  %v2378 = vadd.f32 %v2147, %v2285
  %v2379 = vadd.f32 %v2148, %v2351
  %v2380 = vadd.f32 %v2149, %v2289
  %v2381 = vadd.f32 %v2150, %v2291
  %v2382 = vadd.f32 %v2151, %v2356
  %v2383 = vadd.f32 %v2152, %v2293
  %v2384 = vadd.f32 %v2153, %v2295
  %v2385 = vadd.f32 %v2154, %v2359
  %s2386 = scalar_lea.vmem %s3, 192
  %v2387 = vld [vmem:[%s2386] sm:$0xf]
  %v2388 = vld [vmem:[%s2386 + $0x4] sm:$0xf]
  %v2389 = vld [vmem:[%s2386 + $0x8] sm:$0xf]
  %v2390 = vld [vmem:[%s2386 + $0xc] sm:$0xf]
  %v2391 = vld [vmem:[%s2386 + $0x10] sm:$0xf]
  %v2392 = vld [vmem:[%s2386 + $0x14] sm:$0xf]
  %v2393 = vld [vmem:[%s2386 + $0x18] sm:$0xf]
  %v2394 = vld [vmem:[%s2386 + $0x1c] sm:$0xf]
  %v2403 = vunpack.c.l.b16 %v2387
  %v2404 = vunpack.c.l.b16 %v2388
  %v2405 = vunpack.c.l.b16 %v2389
  %v2406 = vunpack.c.l.b16 %v2390
  %v2407 = vunpack.c.l.b16 %v2391
  %v2408 = vunpack.c.l.b16 %v2392
  %v2409 = vunpack.c.l.b16 %v2393
  %v2410 = vunpack.c.l.b16 %v2394
  %v2411 = vpack.c.b16 %v2404, %v2403
  %v2412 = vpack.c.b16 %v2406, %v2405
  %v2413 = vpack.c.b16 %v2408, %v2407
  %v2414 = vpack.c.b16 %v2410, %v2409
  %2415 = vrot.lane.b32.xlu0 %v1058, 117
  %v2416 = vpop.permute.xlu0 %2415
  %2417 = vrot.lane.b32.xlu0 %v1059, 117
  %v2418 = vpop.permute.xlu0 %2417
  %2419 = vrot.lane.b32.xlu0 %v1060, 117
  %v2420 = vpop.permute.xlu0 %2419
  %2421 = vrot.lane.b32.xlu0 %v1061, 117
  %v2422 = vpop.permute.xlu0 %2421
  %2423 = vrot.lane.b32.xlu0 %v1062, 117
  %v2424 = vpop.permute.xlu0 %2423
  %2425 = vrot.lane.b32.xlu0 %v1063, 117
  %v2426 = vpop.permute.xlu0 %2425
  %2427 = vrot.lane.b32.xlu0 %v1064, 117
  %v2428 = vpop.permute.xlu0 %2427
  %2429 = vrot.lane.b32.xlu0 %v1065, 117
  %v2430 = vpop.permute.xlu0 %2429
  %vm2431 = vcmask 957440
  %v2432 = vsel %vm2431, %v2416, %v2418
  %v2433 = vsel %vm2431, %v2418, %v2420
  %v2434 = vsel %vm2431, %v2420, %v2422
  %v2435 = vsel %vm2431, %v2424, %v2426
  %v2436 = vsel %vm2431, %v2426, %v2428
  %v2437 = vsel %vm2431, %v2428, %v2430
  %v2445 = vsel %vm1139, %v2411, 0
  %v2448 = vsel %vm1139, %v2412, 0
  %v2451 = vsel %vm1139, %v2413, 0
  %v2454 = vsel %vm1139, %v2414, 0
  %2456 = vmatprep.subr.bf16.mxu0 %v2433
  %2457 = vmatpush1.bf16.msra.mxu0 %v2432
  %2458 = vmatprep.subr.bf16.mxu0 %v2436
  %2459 = vmatpush1.bf16.msra.mxu0 %v2435
  %2460 = vmatprep.subr.bf16.mxu0 0
  %2461 = vmatpush1.bf16.msra.mxu0 0
  %2462 = vmatprep.subr.bf16.mxu0 0
  %2463 = vmatpush1.bf16.msra.mxu0 0
  %2464 = vmatprep.subr.bf16.mxu0 0
  %2465 = vmatpush1.bf16.msra.mxu0 0
  %2466 = vmatprep.subr.bf16.mxu0 0
  %2467 = vmatpush1.bf16.msra.mxu0 0
  %2468 = vmatprep.subr.bf16.mxu0 0
  %2469 = vmatpush1.bf16.msra.mxu0 0
  %2470 = vmatprep.subr.bf16.mxu0 0
  %2471 = vmatpush1.bf16.msra.mxu0 0
  %2472 = vmatprep.subr.bf16.mxu0 0
  %2473 = vmatpush1.bf16.msra.mxu0 0
  %2474 = vmatprep.subr.bf16.mxu0 0
  %2475 = vmatpush1.bf16.msra.mxu0 0
  %2476 = vmatprep.subr.bf16.mxu0 0
  %2477 = vmatpush1.bf16.msra.mxu0 0
  %2478 = vmatprep.subr.bf16.mxu0 0
  %2479 = vmatpush1.bf16.msra.mxu0 0
  %2480 = vmatprep.subr.bf16.mxu0 0
  %2481 = vmatpush1.bf16.msra.mxu0 0
  %2482 = vmatprep.subr.bf16.mxu0 0
  %2483 = vmatpush1.bf16.msra.mxu0 0
  %2484 = vmatprep.subr.bf16.mxu0 0
  %2485 = vmatpush1.bf16.msra.mxu0 0
  %2486 = vmatprep.subr.bf16.mxu0 0
  %2487 = vmatpush1.bf16.msra.mxu0 0
  %2488 = vmatprep.mubr.bf16.mxu0 0
  %2489 = vmatmul.mubr.bf16.gmra.mrb[0].mxu0 %v2445
  %v2490 = vpop.f32.mrb[0].mxu0
  %v2491 = vadd.f32 0.0, %v2490
  %v2492 = vpop.f32.mrb[0].mxu0
  %v2493 = vadd.f32 0.0, %v2492
  %v2494 = vpop.f32.mrb[0].mxu0
  %v2495 = vadd.f32 0.0, %v2494
  %v2496 = vpop.f32.mrb[0].mxu0
  %v2497 = vadd.f32 0.0, %v2496
  %2498 = vmatprep.mubr.bf16.mxu0 0
  %2499 = vmatmul.mubr.bf16.gmra.mrb[0].mxu0 %v2448
  %v2500 = vpop.f32.mrb[0].mxu0
  %v2501 = vadd.f32 0.0, %v2500
  %v2502 = vpop.f32.mrb[0].mxu0
  %v2503 = vadd.f32 0.0, %v2502
  %v2504 = vpop.f32.mrb[0].mxu0
  %v2505 = vadd.f32 0.0, %v2504
  %v2506 = vpop.f32.mrb[0].mxu0
  %v2507 = vadd.f32 0.0, %v2506
  %2508 = vmatprep.mubr.bf16.mxu0 0
  %2509 = vmatmul.mubr.bf16.gmra.mrb[0].mxu0 %v2451
  %v2510 = vpop.f32.mrb[0].mxu0
  %v2511 = vadd.f32 0.0, %v2510
  %v2512 = vpop.f32.mrb[0].mxu0
  %v2513 = vadd.f32 0.0, %v2512
  %v2514 = vpop.f32.mrb[0].mxu0
  %v2515 = vadd.f32 0.0, %v2514
  %v2516 = vpop.f32.mrb[0].mxu0
  %v2517 = vadd.f32 0.0, %v2516
  %2518 = vmatprep.mubr.bf16.mxu0 0
  %2519 = vmatmul.mubr.bf16.gmra.mrb[0].mxu0 %v2454
  %v2520 = vpop.f32.mrb[0].mxu0
  %v2521 = vadd.f32 0.0, %v2520
  %v2522 = vpop.f32.mrb[0].mxu0
  %v2523 = vadd.f32 0.0, %v2522
  %v2524 = vpop.f32.mrb[0].mxu0
  %v2525 = vadd.f32 0.0, %v2524
  %v2526 = vpop.f32.mrb[0].mxu0
  %v2527 = vadd.f32 0.0, %v2526
  %2528 = vdwg.mxu0
  %2529 = vmatprep.subr.bf16.mxu0 0
  %2530 = vmatpush1.bf16.msra.mxu0 %v2434
  %2531 = vmatprep.subr.bf16.mxu0 0
  %2532 = vmatpush1.bf16.msra.mxu0 %v2437
  %2533 = vmatprep.subr.bf16.mxu0 0
  %2534 = vmatpush1.bf16.msra.mxu0 0
  %2535 = vmatprep.subr.bf16.mxu0 0
  %2536 = vmatpush1.bf16.msra.mxu0 0
  %2537 = vmatprep.subr.bf16.mxu0 0
  %2538 = vmatpush1.bf16.msra.mxu0 0
  %2539 = vmatprep.subr.bf16.mxu0 0
  %2540 = vmatpush1.bf16.msra.mxu0 0
  %2541 = vmatprep.subr.bf16.mxu0 0
  %2542 = vmatpush1.bf16.msra.mxu0 0
  %2543 = vmatprep.subr.bf16.mxu0 0
  %2544 = vmatpush1.bf16.msra.mxu0 0
  %2545 = vmatprep.subr.bf16.mxu0 0
  %2546 = vmatpush1.bf16.msra.mxu0 0
  %2547 = vmatprep.subr.bf16.mxu0 0
  %2548 = vmatpush1.bf16.msra.mxu0 0
  %2549 = vmatprep.subr.bf16.mxu0 0
  %2550 = vmatpush1.bf16.msra.mxu0 0
  %2551 = vmatprep.subr.bf16.mxu0 0
  %2552 = vmatpush1.bf16.msra.mxu0 0
  %2553 = vmatprep.subr.bf16.mxu0 0
  %2554 = vmatpush1.bf16.msra.mxu0 0
  %2555 = vmatprep.subr.bf16.mxu0 0
  %2556 = vmatpush1.bf16.msra.mxu0 0
  %2557 = vmatprep.subr.bf16.mxu0 0
  %2558 = vmatpush1.bf16.msra.mxu0 0
  %2559 = vmatprep.subr.bf16.mxu0 0
  %2560 = vmatpush1.bf16.msra.mxu0 0
  %2561 = vmatprep.mubr.bf16.mxu0 0
  %2562 = vmatmul.mubr.bf16.gmra.mrb[0].mxu0 %v2445
  %v2563 = vpop.f32.mrb[0].mxu0
  %v2564 = vadd.f32 0.0, %v2563
  %v2565 = vpop.f32.mrb[0].mxu0
  %v2566 = vpop.f32.mrb[0].mxu0
  %v2567 = vadd.f32 0.0, %v2566
  %v2568 = vpop.f32.mrb[0].mxu0
  %2569 = vmatprep.mubr.bf16.mxu0 0
  %2570 = vmatmul.mubr.bf16.gmra.mrb[0].mxu0 %v2448
  %v2571 = vpop.f32.mrb[0].mxu0
  %v2572 = vadd.f32 0.0, %v2571
  %v2573 = vpop.f32.mrb[0].mxu0
  %v2574 = vpop.f32.mrb[0].mxu0
  %v2575 = vadd.f32 0.0, %v2574
  %v2576 = vpop.f32.mrb[0].mxu0
  %2577 = vmatprep.mubr.bf16.mxu0 0
  %2578 = vmatmul.mubr.bf16.gmra.mrb[0].mxu0 %v2451
  %v2579 = vpop.f32.mrb[0].mxu0
  %v2580 = vadd.f32 0.0, %v2579
  %v2581 = vpop.f32.mrb[0].mxu0
  %v2582 = vpop.f32.mrb[0].mxu0
  %v2583 = vadd.f32 0.0, %v2582
  %v2584 = vpop.f32.mrb[0].mxu0
  %2585 = vmatprep.mubr.bf16.mxu0 0
  %2586 = vmatmul.mubr.bf16.gmra.mrb[0].mxu0 %v2454
  %v2587 = vpop.f32.mrb[0].mxu0
  %v2588 = vadd.f32 0.0, %v2587
  %v2589 = vpop.f32.mrb[0].mxu0
  %v2590 = vpop.f32.mrb[0].mxu0
  %v2591 = vadd.f32 0.0, %v2590
  %v2592 = vpop.f32.mrb[0].mxu0
  %2593 = vdwg.mxu0
  %v2594 = vadd.f32 %v2362, %v2491
  %v2595 = vadd.f32 %v2363, %v2493
  %v2596 = vadd.f32 %v2364, %v2564
  %v2597 = vadd.f32 %v2365, %v2495
  %v2598 = vadd.f32 %v2366, %v2497
  %v2599 = vadd.f32 %v2367, %v2567
  %v2600 = vadd.f32 %v2368, %v2501
  %v2601 = vadd.f32 %v2369, %v2503
  %v2602 = vadd.f32 %v2370, %v2572
  %v2603 = vadd.f32 %v2371, %v2505
  %v2604 = vadd.f32 %v2372, %v2507
  %v2605 = vadd.f32 %v2373, %v2575
  %v2606 = vadd.f32 %v2374, %v2511
  %v2607 = vadd.f32 %v2375, %v2513
  %v2608 = vadd.f32 %v2376, %v2580
  %v2609 = vadd.f32 %v2377, %v2515
  %v2610 = vadd.f32 %v2378, %v2517
  %v2611 = vadd.f32 %v2379, %v2583
  %v2612 = vadd.f32 %v2380, %v2521
  %v2613 = vadd.f32 %v2381, %v2523
  %v2614 = vadd.f32 %v2382, %v2588
  %v2615 = vadd.f32 %v2383, %v2525
  %v2616 = vadd.f32 %v2384, %v2527
  %v2617 = vadd.f32 %v2385, %v2591
  %s2618 = scalar_lea.vmem %s3, 224
  %v2619 = vld [vmem:[%s2618] sm:$0xf]
  %v2620 = vld [vmem:[%s2618 + $0x4] sm:$0xf]
  %v2621 = vld [vmem:[%s2618 + $0x8] sm:$0xf]
  %v2622 = vld [vmem:[%s2618 + $0xc] sm:$0xf]
  %v2623 = vld [vmem:[%s2618 + $0x10] sm:$0xf]
  %v2624 = vld [vmem:[%s2618 + $0x14] sm:$0xf]
  %v2625 = vld [vmem:[%s2618 + $0x18] sm:$0xf]
  %v2626 = vld [vmem:[%s2618 + $0x1c] sm:$0xf]
  %v2635 = vunpack.c.l.b16 %v2619
  %v2636 = vunpack.c.l.b16 %v2620
  %v2637 = vunpack.c.l.b16 %v2621
  %v2638 = vunpack.c.l.b16 %v2622
  %v2639 = vunpack.c.l.b16 %v2623
  %v2640 = vunpack.c.l.b16 %v2624
  %v2641 = vunpack.c.l.b16 %v2625
  %v2642 = vunpack.c.l.b16 %v2626
  %v2643 = vpack.c.b16 %v2636, %v2635
  %v2644 = vpack.c.b16 %v2638, %v2637
  %v2645 = vpack.c.b16 %v2640, %v2639
  %v2646 = vpack.c.b16 %v2642, %v2641
  %2647 = vrot.lane.b32.xlu0 %v1058, 116
  %v2648 = vpop.permute.xlu0 %2647
  %2649 = vrot.lane.b32.xlu0 %v1059, 116
  %v2650 = vpop.permute.xlu0 %2649
  %2651 = vrot.lane.b32.xlu0 %v1060, 116
  %v2652 = vpop.permute.xlu0 %2651
  %2653 = vrot.lane.b32.xlu0 %v1061, 116
  %v2654 = vpop.permute.xlu0 %2653
  %2655 = vrot.lane.b32.xlu0 %v1062, 116
  %v2656 = vpop.permute.xlu0 %2655
  %2657 = vrot.lane.b32.xlu0 %v1063, 116
  %v2658 = vpop.permute.xlu0 %2657
  %2659 = vrot.lane.b32.xlu0 %v1064, 116
  %v2660 = vpop.permute.xlu0 %2659
  %2661 = vrot.lane.b32.xlu0 %v1065, 116
  %v2662 = vpop.permute.xlu0 %2661
  %vm2663 = vcmask 949248
  %v2664 = vsel %vm2663, %v2648, %v2650
  %v2665 = vsel %vm2663, %v2650, %v2652
  %v2666 = vsel %vm2663, %v2652, %v2654
  %v2667 = vsel %vm2663, %v2656, %v2658
  %v2668 = vsel %vm2663, %v2658, %v2660
  %v2669 = vsel %vm2663, %v2660, %v2662
  %v2677 = vsel %vm1139, %v2643, 0
  %v2680 = vsel %vm1139, %v2644, 0
  %v2683 = vsel %vm1139, %v2645, 0
  %v2686 = vsel %vm1139, %v2646, 0
  %2688 = vmatprep.subr.bf16.mxu0 %v2665
  %2689 = vmatpush1.bf16.msra.mxu0 %v2664
  %2690 = vmatprep.subr.bf16.mxu0 %v2668
  %2691 = vmatpush1.bf16.msra.mxu0 %v2667
  %2692 = vmatprep.subr.bf16.mxu0 0
  %2693 = vmatpush1.bf16.msra.mxu0 0
  %2694 = vmatprep.subr.bf16.mxu0 0
  %2695 = vmatpush1.bf16.msra.mxu0 0
  %2696 = vmatprep.subr.bf16.mxu0 0
  %2697 = vmatpush1.bf16.msra.mxu0 0
  %2698 = vmatprep.subr.bf16.mxu0 0
  %2699 = vmatpush1.bf16.msra.mxu0 0
  %2700 = vmatprep.subr.bf16.mxu0 0
  %2701 = vmatpush1.bf16.msra.mxu0 0
  %2702 = vmatprep.subr.bf16.mxu0 0
  %2703 = vmatpush1.bf16.msra.mxu0 0
  %2704 = vmatprep.subr.bf16.mxu0 0
  %2705 = vmatpush1.bf16.msra.mxu0 0
  %2706 = vmatprep.subr.bf16.mxu0 0
  %2707 = vmatpush1.bf16.msra.mxu0 0
  %2708 = vmatprep.subr.bf16.mxu0 0
  %2709 = vmatpush1.bf16.msra.mxu0 0
  %2710 = vmatprep.subr.bf16.mxu0 0
  %2711 = vmatpush1.bf16.msra.mxu0 0
  %2712 = vmatprep.subr.bf16.mxu0 0
  %2713 = vmatpush1.bf16.msra.mxu0 0
  %2714 = vmatprep.subr.bf16.mxu0 0
  %2715 = vmatpush1.bf16.msra.mxu0 0
  %2716 = vmatprep.subr.bf16.mxu0 0
  %2717 = vmatpush1.bf16.msra.mxu0 0
  %2718 = vmatprep.subr.bf16.mxu0 0
  %2719 = vmatpush1.bf16.msra.mxu0 0
  %2720 = vmatprep.mubr.bf16.mxu0 0
  %2721 = vmatmul.mubr.bf16.gmra.mrb[0].mxu0 %v2677
  %v2722 = vpop.f32.mrb[0].mxu0
  %v2723 = vadd.f32 0.0, %v2722
  %v2724 = vpop.f32.mrb[0].mxu0
  %v2725 = vadd.f32 0.0, %v2724
  %v2726 = vpop.f32.mrb[0].mxu0
  %v2727 = vadd.f32 0.0, %v2726
  %v2728 = vpop.f32.mrb[0].mxu0
  %v2729 = vadd.f32 0.0, %v2728
  %2730 = vmatprep.mubr.bf16.mxu0 0
  %2731 = vmatmul.mubr.bf16.gmra.mrb[0].mxu0 %v2680
  %v2732 = vpop.f32.mrb[0].mxu0
  %v2733 = vadd.f32 0.0, %v2732
  %v2734 = vpop.f32.mrb[0].mxu0
  %v2735 = vadd.f32 0.0, %v2734
  %v2736 = vpop.f32.mrb[0].mxu0
  %v2737 = vadd.f32 0.0, %v2736
  %v2738 = vpop.f32.mrb[0].mxu0
  %v2739 = vadd.f32 0.0, %v2738
  %2740 = vmatprep.mubr.bf16.mxu0 0
  %2741 = vmatmul.mubr.bf16.gmra.mrb[0].mxu0 %v2683
  %v2742 = vpop.f32.mrb[0].mxu0
  %v2743 = vadd.f32 0.0, %v2742
  %v2744 = vpop.f32.mrb[0].mxu0
  %v2745 = vadd.f32 0.0, %v2744
  %v2746 = vpop.f32.mrb[0].mxu0
  %v2747 = vadd.f32 0.0, %v2746
  %v2748 = vpop.f32.mrb[0].mxu0
  %v2749 = vadd.f32 0.0, %v2748
  %2750 = vmatprep.mubr.bf16.mxu0 0
  %2751 = vmatmul.mubr.bf16.gmra.mrb[0].mxu0 %v2686
  %v2752 = vpop.f32.mrb[0].mxu0
  %v2753 = vadd.f32 0.0, %v2752
  %v2754 = vpop.f32.mrb[0].mxu0
  %v2755 = vadd.f32 0.0, %v2754
  %v2756 = vpop.f32.mrb[0].mxu0
  %v2757 = vadd.f32 0.0, %v2756
  %v2758 = vpop.f32.mrb[0].mxu0
  %v2759 = vadd.f32 0.0, %v2758
  %2760 = vdwg.mxu0
  %2761 = vmatprep.subr.bf16.mxu0 0
  %2762 = vmatpush1.bf16.msra.mxu0 %v2666
  %2763 = vmatprep.subr.bf16.mxu0 0
  %2764 = vmatpush1.bf16.msra.mxu0 %v2669
  %2765 = vmatprep.subr.bf16.mxu0 0
  %2766 = vmatpush1.bf16.msra.mxu0 0
  %2767 = vmatprep.subr.bf16.mxu0 0
  %2768 = vmatpush1.bf16.msra.mxu0 0
  %2769 = vmatprep.subr.bf16.mxu0 0
  %2770 = vmatpush1.bf16.msra.mxu0 0
  %2771 = vmatprep.subr.bf16.mxu0 0
  %2772 = vmatpush1.bf16.msra.mxu0 0
  %2773 = vmatprep.subr.bf16.mxu0 0
  %2774 = vmatpush1.bf16.msra.mxu0 0
  %2775 = vmatprep.subr.bf16.mxu0 0
  %2776 = vmatpush1.bf16.msra.mxu0 0
  %2777 = vmatprep.subr.bf16.mxu0 0
  %2778 = vmatpush1.bf16.msra.mxu0 0
  %2779 = vmatprep.subr.bf16.mxu0 0
  %2780 = vmatpush1.bf16.msra.mxu0 0
  %2781 = vmatprep.subr.bf16.mxu0 0
  %2782 = vmatpush1.bf16.msra.mxu0 0
  %2783 = vmatprep.subr.bf16.mxu0 0
  %2784 = vmatpush1.bf16.msra.mxu0 0
  %2785 = vmatprep.subr.bf16.mxu0 0
  %2786 = vmatpush1.bf16.msra.mxu0 0
  %2787 = vmatprep.subr.bf16.mxu0 0
  %2788 = vmatpush1.bf16.msra.mxu0 0
  %2789 = vmatprep.subr.bf16.mxu0 0
  %2790 = vmatpush1.bf16.msra.mxu0 0
  %2791 = vmatprep.subr.bf16.mxu0 0
  %2792 = vmatpush1.bf16.msra.mxu0 0
  %2793 = vmatprep.mubr.bf16.mxu0 0
  %2794 = vmatmul.mubr.bf16.gmra.mrb[0].mxu0 %v2677
  %v2795 = vpop.f32.mrb[0].mxu0
  %v2796 = vadd.f32 0.0, %v2795
  %v2797 = vpop.f32.mrb[0].mxu0
  %v2798 = vpop.f32.mrb[0].mxu0
  %v2799 = vadd.f32 0.0, %v2798
  %v2800 = vpop.f32.mrb[0].mxu0
  %2801 = vmatprep.mubr.bf16.mxu0 0
  %2802 = vmatmul.mubr.bf16.gmra.mrb[0].mxu0 %v2680
  %v2803 = vpop.f32.mrb[0].mxu0
  %v2804 = vadd.f32 0.0, %v2803
  %v2805 = vpop.f32.mrb[0].mxu0
  %v2806 = vpop.f32.mrb[0].mxu0
  %v2807 = vadd.f32 0.0, %v2806
  %v2808 = vpop.f32.mrb[0].mxu0
  %2809 = vmatprep.mubr.bf16.mxu0 0
  %2810 = vmatmul.mubr.bf16.gmra.mrb[0].mxu0 %v2683
  %v2811 = vpop.f32.mrb[0].mxu0
  %v2812 = vadd.f32 0.0, %v2811
  %v2813 = vpop.f32.mrb[0].mxu0
  %v2814 = vpop.f32.mrb[0].mxu0
  %v2815 = vadd.f32 0.0, %v2814
  %v2816 = vpop.f32.mrb[0].mxu0
  %2817 = vmatprep.mubr.bf16.mxu0 0
  %2818 = vmatmul.mubr.bf16.gmra.mrb[0].mxu0 %v2686
  %v2819 = vpop.f32.mrb[0].mxu0
  %v2820 = vadd.f32 0.0, %v2819
  %v2821 = vpop.f32.mrb[0].mxu0
  %v2822 = vpop.f32.mrb[0].mxu0
  %v2823 = vadd.f32 0.0, %v2822
  %v2824 = vpop.f32.mrb[0].mxu0
  %2825 = vdwg.mxu0
  %v2826 = vadd.f32 %v2594, %v2723
  %v2827 = vadd.f32 %v2595, %v2725
  %v2828 = vadd.f32 %v2596, %v2796
  %v2829 = vadd.f32 %v2597, %v2727
  %v2830 = vadd.f32 %v2598, %v2729
  %v2831 = vadd.f32 %v2599, %v2799
  %v2832 = vadd.f32 %v2600, %v2733
  %v2833 = vadd.f32 %v2601, %v2735
  %v2834 = vadd.f32 %v2602, %v2804
  %v2835 = vadd.f32 %v2603, %v2737
  %v2836 = vadd.f32 %v2604, %v2739
  %v2837 = vadd.f32 %v2605, %v2807
  %v2838 = vadd.f32 %v2606, %v2743
  %v2839 = vadd.f32 %v2607, %v2745
  %v2840 = vadd.f32 %v2608, %v2812
  %v2841 = vadd.f32 %v2609, %v2747
  %v2842 = vadd.f32 %v2610, %v2749
  %v2843 = vadd.f32 %v2611, %v2815
  %v2844 = vadd.f32 %v2612, %v2753
  %v2845 = vadd.f32 %v2613, %v2755
  %v2846 = vadd.f32 %v2614, %v2820
  %v2847 = vadd.f32 %v2615, %v2757
  %v2848 = vadd.f32 %v2616, %v2759
  %v2849 = vadd.f32 %v2617, %v2823
  %s2850 = scalar_lea.vmem %s3, 256
  %v2851 = vld [vmem:[%s2850] sm:$0xf]
  %v2852 = vld [vmem:[%s2850 + $0x4] sm:$0xf]
  %v2853 = vld [vmem:[%s2850 + $0x8] sm:$0xf]
  %v2854 = vld [vmem:[%s2850 + $0xc] sm:$0xf]
  %v2855 = vld [vmem:[%s2850 + $0x10] sm:$0xf]
  %v2856 = vld [vmem:[%s2850 + $0x14] sm:$0xf]
  %v2857 = vld [vmem:[%s2850 + $0x18] sm:$0xf]
  %v2858 = vld [vmem:[%s2850 + $0x1c] sm:$0xf]
  %v2867 = vunpack.c.l.b16 %v2851
  %v2868 = vunpack.c.l.b16 %v2852
  %v2869 = vunpack.c.l.b16 %v2853
  %v2870 = vunpack.c.l.b16 %v2854
  %v2871 = vunpack.c.l.b16 %v2855
  %v2872 = vunpack.c.l.b16 %v2856
  %v2873 = vunpack.c.l.b16 %v2857
  %v2874 = vunpack.c.l.b16 %v2858
  %v2875 = vpack.c.b16 %v2868, %v2867
  %v2876 = vpack.c.b16 %v2870, %v2869
  %v2877 = vpack.c.b16 %v2872, %v2871
  %v2878 = vpack.c.b16 %v2874, %v2873
  %2879 = vrot.lane.b32.xlu0 %v1058, 110
  %v2880 = vpop.permute.xlu0 %2879
  %2881 = vrot.lane.b32.xlu0 %v1059, 110
  %v2882 = vpop.permute.xlu0 %2881
  %2883 = vrot.lane.b32.xlu0 %v1060, 110
  %v2884 = vpop.permute.xlu0 %2883
  %2885 = vrot.lane.b32.xlu0 %v1061, 110
  %v2886 = vpop.permute.xlu0 %2885
  %2887 = vrot.lane.b32.xlu0 %v1062, 110
  %v2888 = vpop.permute.xlu0 %2887
  %2889 = vrot.lane.b32.xlu0 %v1063, 110
  %v2890 = vpop.permute.xlu0 %2889
  %2891 = vrot.lane.b32.xlu0 %v1064, 110
  %v2892 = vpop.permute.xlu0 %2891
  %2893 = vrot.lane.b32.xlu0 %v1065, 110
  %v2894 = vpop.permute.xlu0 %2893
  %vm2895 = vcmask 900096
  %v2896 = vsel %vm2895, %v2880, %v2882
  %v2897 = vsel %vm2895, %v2882, %v2884
  %v2898 = vsel %vm2895, %v2884, %v2886
  %v2899 = vsel %vm2895, %v2888, %v2890
  %v2900 = vsel %vm2895, %v2890, %v2892
  %v2901 = vsel %vm2895, %v2892, %v2894
  %v2909 = vsel %vm1139, %v2875, 0
  %v2912 = vsel %vm1139, %v2876, 0
  %v2915 = vsel %vm1139, %v2877, 0
  %v2918 = vsel %vm1139, %v2878, 0
  %2920 = vmatprep.subr.bf16.mxu0 %v2897
  %2921 = vmatpush1.bf16.msra.mxu0 %v2896
  %2922 = vmatprep.subr.bf16.mxu0 %v2900
  %2923 = vmatpush1.bf16.msra.mxu0 %v2899
  %2924 = vmatprep.subr.bf16.mxu0 0
  %2925 = vmatpush1.bf16.msra.mxu0 0
  %2926 = vmatprep.subr.bf16.mxu0 0
  %2927 = vmatpush1.bf16.msra.mxu0 0
  %2928 = vmatprep.subr.bf16.mxu0 0
  %2929 = vmatpush1.bf16.msra.mxu0 0
  %2930 = vmatprep.subr.bf16.mxu0 0
  %2931 = vmatpush1.bf16.msra.mxu0 0
  %2932 = vmatprep.subr.bf16.mxu0 0
  %2933 = vmatpush1.bf16.msra.mxu0 0
  %2934 = vmatprep.subr.bf16.mxu0 0
  %2935 = vmatpush1.bf16.msra.mxu0 0
  %2936 = vmatprep.subr.bf16.mxu0 0
  %2937 = vmatpush1.bf16.msra.mxu0 0
  %2938 = vmatprep.subr.bf16.mxu0 0
  %2939 = vmatpush1.bf16.msra.mxu0 0
  %2940 = vmatprep.subr.bf16.mxu0 0
  %2941 = vmatpush1.bf16.msra.mxu0 0
  %2942 = vmatprep.subr.bf16.mxu0 0
  %2943 = vmatpush1.bf16.msra.mxu0 0
  %2944 = vmatprep.subr.bf16.mxu0 0
  %2945 = vmatpush1.bf16.msra.mxu0 0
  %2946 = vmatprep.subr.bf16.mxu0 0
  %2947 = vmatpush1.bf16.msra.mxu0 0
  %2948 = vmatprep.subr.bf16.mxu0 0
  %2949 = vmatpush1.bf16.msra.mxu0 0
  %2950 = vmatprep.subr.bf16.mxu0 0
  %2951 = vmatpush1.bf16.msra.mxu0 0
  %2952 = vmatprep.mubr.bf16.mxu0 0
  %2953 = vmatmul.mubr.bf16.gmra.mrb[0].mxu0 %v2909
  %v2954 = vpop.f32.mrb[0].mxu0
  %v2955 = vadd.f32 0.0, %v2954
  %v2956 = vpop.f32.mrb[0].mxu0
  %v2957 = vadd.f32 0.0, %v2956
  %v2958 = vpop.f32.mrb[0].mxu0
  %v2959 = vadd.f32 0.0, %v2958
  %v2960 = vpop.f32.mrb[0].mxu0
  %v2961 = vadd.f32 0.0, %v2960
  %2962 = vmatprep.mubr.bf16.mxu0 0
  %2963 = vmatmul.mubr.bf16.gmra.mrb[0].mxu0 %v2912
  %v2964 = vpop.f32.mrb[0].mxu0
  %v2965 = vadd.f32 0.0, %v2964
  %v2966 = vpop.f32.mrb[0].mxu0
  %v2967 = vadd.f32 0.0, %v2966
  %v2968 = vpop.f32.mrb[0].mxu0
  %v2969 = vadd.f32 0.0, %v2968
  %v2970 = vpop.f32.mrb[0].mxu0
  %v2971 = vadd.f32 0.0, %v2970
  %2972 = vmatprep.mubr.bf16.mxu0 0
  %2973 = vmatmul.mubr.bf16.gmra.mrb[0].mxu0 %v2915
  %v2974 = vpop.f32.mrb[0].mxu0
  %v2975 = vadd.f32 0.0, %v2974
  %v2976 = vpop.f32.mrb[0].mxu0
  %v2977 = vadd.f32 0.0, %v2976
  %v2978 = vpop.f32.mrb[0].mxu0
  %v2979 = vadd.f32 0.0, %v2978
  %v2980 = vpop.f32.mrb[0].mxu0
  %v2981 = vadd.f32 0.0, %v2980
  %2982 = vmatprep.mubr.bf16.mxu0 0
  %2983 = vmatmul.mubr.bf16.gmra.mrb[0].mxu0 %v2918
  %v2984 = vpop.f32.mrb[0].mxu0
  %v2985 = vadd.f32 0.0, %v2984
  %v2986 = vpop.f32.mrb[0].mxu0
  %v2987 = vadd.f32 0.0, %v2986
  %v2988 = vpop.f32.mrb[0].mxu0
  %v2989 = vadd.f32 0.0, %v2988
  %v2990 = vpop.f32.mrb[0].mxu0
  %v2991 = vadd.f32 0.0, %v2990
  %2992 = vdwg.mxu0
  %2993 = vmatprep.subr.bf16.mxu0 0
  %2994 = vmatpush1.bf16.msra.mxu0 %v2898
  %2995 = vmatprep.subr.bf16.mxu0 0
  %2996 = vmatpush1.bf16.msra.mxu0 %v2901
  %2997 = vmatprep.subr.bf16.mxu0 0
  %2998 = vmatpush1.bf16.msra.mxu0 0
  %2999 = vmatprep.subr.bf16.mxu0 0
  %3000 = vmatpush1.bf16.msra.mxu0 0
  %3001 = vmatprep.subr.bf16.mxu0 0
  %3002 = vmatpush1.bf16.msra.mxu0 0
  %3003 = vmatprep.subr.bf16.mxu0 0
  %3004 = vmatpush1.bf16.msra.mxu0 0
  %3005 = vmatprep.subr.bf16.mxu0 0
  %3006 = vmatpush1.bf16.msra.mxu0 0
  %3007 = vmatprep.subr.bf16.mxu0 0
  %3008 = vmatpush1.bf16.msra.mxu0 0
  %3009 = vmatprep.subr.bf16.mxu0 0
  %3010 = vmatpush1.bf16.msra.mxu0 0
  %3011 = vmatprep.subr.bf16.mxu0 0
  %3012 = vmatpush1.bf16.msra.mxu0 0
  %3013 = vmatprep.subr.bf16.mxu0 0
  %3014 = vmatpush1.bf16.msra.mxu0 0
  %3015 = vmatprep.subr.bf16.mxu0 0
  %3016 = vmatpush1.bf16.msra.mxu0 0
  %3017 = vmatprep.subr.bf16.mxu0 0
  %3018 = vmatpush1.bf16.msra.mxu0 0
  %3019 = vmatprep.subr.bf16.mxu0 0
  %3020 = vmatpush1.bf16.msra.mxu0 0
  %3021 = vmatprep.subr.bf16.mxu0 0
  %3022 = vmatpush1.bf16.msra.mxu0 0
  %3023 = vmatprep.subr.bf16.mxu0 0
  %3024 = vmatpush1.bf16.msra.mxu0 0
  %3025 = vmatprep.mubr.bf16.mxu0 0
  %3026 = vmatmul.mubr.bf16.gmra.mrb[0].mxu0 %v2909
  %v3027 = vpop.f32.mrb[0].mxu0
  %v3028 = vadd.f32 0.0, %v3027
  %v3029 = vpop.f32.mrb[0].mxu0
  %v3030 = vpop.f32.mrb[0].mxu0
  %v3031 = vadd.f32 0.0, %v3030
  %v3032 = vpop.f32.mrb[0].mxu0
  %3033 = vmatprep.mubr.bf16.mxu0 0
  %3034 = vmatmul.mubr.bf16.gmra.mrb[0].mxu0 %v2912
  %v3035 = vpop.f32.mrb[0].mxu0
  %v3036 = vadd.f32 0.0, %v3035
  %v3037 = vpop.f32.mrb[0].mxu0
  %v3038 = vpop.f32.mrb[0].mxu0
  %v3039 = vadd.f32 0.0, %v3038
  %v3040 = vpop.f32.mrb[0].mxu0
  %3041 = vmatprep.mubr.bf16.mxu0 0
  %3042 = vmatmul.mubr.bf16.gmra.mrb[0].mxu0 %v2915
  %v3043 = vpop.f32.mrb[0].mxu0
  %v3044 = vadd.f32 0.0, %v3043
  %v3045 = vpop.f32.mrb[0].mxu0
  %v3046 = vpop.f32.mrb[0].mxu0
  %v3047 = vadd.f32 0.0, %v3046
  %v3048 = vpop.f32.mrb[0].mxu0
  %3049 = vmatprep.mubr.bf16.mxu0 0
  %3050 = vmatmul.mubr.bf16.gmra.mrb[0].mxu0 %v2918
  %v3051 = vpop.f32.mrb[0].mxu0
  %v3052 = vadd.f32 0.0, %v3051
  %v3053 = vpop.f32.mrb[0].mxu0
  %v3054 = vpop.f32.mrb[0].mxu0
  %v3055 = vadd.f32 0.0, %v3054
  %v3056 = vpop.f32.mrb[0].mxu0
  %3057 = vdwg.mxu0
  %v3058 = vadd.f32 %v2826, %v2955
  %v3059 = vadd.f32 %v2827, %v2957
  %v3060 = vadd.f32 %v2828, %v3028
  %v3061 = vadd.f32 %v2829, %v2959
  %v3062 = vadd.f32 %v2830, %v2961
  %v3063 = vadd.f32 %v2831, %v3031
  %v3064 = vadd.f32 %v2832, %v2965
  %v3065 = vadd.f32 %v2833, %v2967
  %v3066 = vadd.f32 %v2834, %v3036
  %v3067 = vadd.f32 %v2835, %v2969
  %v3068 = vadd.f32 %v2836, %v2971
  %v3069 = vadd.f32 %v2837, %v3039
  %v3070 = vadd.f32 %v2838, %v2975
  %v3071 = vadd.f32 %v2839, %v2977
  %v3072 = vadd.f32 %v2840, %v3044
  %v3073 = vadd.f32 %v2841, %v2979
  %v3074 = vadd.f32 %v2842, %v2981
  %v3075 = vadd.f32 %v2843, %v3047
  %v3076 = vadd.f32 %v2844, %v2985
  %v3077 = vadd.f32 %v2845, %v2987
  %v3078 = vadd.f32 %v2846, %v3052
  %v3079 = vadd.f32 %v2847, %v2989
  %v3080 = vadd.f32 %v2848, %v2991
  %v3081 = vadd.f32 %v2849, %v3055
  %s3082 = scalar_lea.vmem %s3, 288
  %v3083 = vld [vmem:[%s3082] sm:$0xf]
  %v3084 = vld [vmem:[%s3082 + $0x4] sm:$0xf]
  %v3085 = vld [vmem:[%s3082 + $0x8] sm:$0xf]
  %v3086 = vld [vmem:[%s3082 + $0xc] sm:$0xf]
  %v3087 = vld [vmem:[%s3082 + $0x10] sm:$0xf]
  %v3088 = vld [vmem:[%s3082 + $0x14] sm:$0xf]
  %v3089 = vld [vmem:[%s3082 + $0x18] sm:$0xf]
  %v3090 = vld [vmem:[%s3082 + $0x1c] sm:$0xf]
  %v3099 = vunpack.c.l.b16 %v3083
  %v3100 = vunpack.c.l.b16 %v3084
  %v3101 = vunpack.c.l.b16 %v3085
  %v3102 = vunpack.c.l.b16 %v3086
  %v3103 = vunpack.c.l.b16 %v3087
  %v3104 = vunpack.c.l.b16 %v3088
  %v3105 = vunpack.c.l.b16 %v3089
  %v3106 = vunpack.c.l.b16 %v3090
  %v3107 = vpack.c.b16 %v3100, %v3099
  %v3108 = vpack.c.b16 %v3102, %v3101
  %v3109 = vpack.c.b16 %v3104, %v3103
  %v3110 = vpack.c.b16 %v3106, %v3105
  %3111 = vrot.lane.b32.xlu0 %v1058, 109
  %v3112 = vpop.permute.xlu0 %3111
  %3113 = vrot.lane.b32.xlu0 %v1059, 109
  %v3114 = vpop.permute.xlu0 %3113
  %3115 = vrot.lane.b32.xlu0 %v1060, 109
  %v3116 = vpop.permute.xlu0 %3115
  %3117 = vrot.lane.b32.xlu0 %v1061, 109
  %v3118 = vpop.permute.xlu0 %3117
  %3119 = vrot.lane.b32.xlu0 %v1062, 109
  %v3120 = vpop.permute.xlu0 %3119
  %3121 = vrot.lane.b32.xlu0 %v1063, 109
  %v3122 = vpop.permute.xlu0 %3121
  %3123 = vrot.lane.b32.xlu0 %v1064, 109
  %v3124 = vpop.permute.xlu0 %3123
  %3125 = vrot.lane.b32.xlu0 %v1065, 109
  %v3126 = vpop.permute.xlu0 %3125
  %vm3127 = vcmask 891904
  %v3128 = vsel %vm3127, %v3112, %v3114
  %v3129 = vsel %vm3127, %v3114, %v3116
  %v3130 = vsel %vm3127, %v3116, %v3118
  %v3131 = vsel %vm3127, %v3120, %v3122
  %v3132 = vsel %vm3127, %v3122, %v3124
  %v3133 = vsel %vm3127, %v3124, %v3126
  %v3141 = vsel %vm1139, %v3107, 0
  %v3144 = vsel %vm1139, %v3108, 0
  %v3147 = vsel %vm1139, %v3109, 0
  %v3150 = vsel %vm1139, %v3110, 0
  %3152 = vmatprep.subr.bf16.mxu0 %v3129
  %3153 = vmatpush1.bf16.msra.mxu0 %v3128
  %3154 = vmatprep.subr.bf16.mxu0 %v3132
  %3155 = vmatpush1.bf16.msra.mxu0 %v3131
  %3156 = vmatprep.subr.bf16.mxu0 0
  %3157 = vmatpush1.bf16.msra.mxu0 0
  %3158 = vmatprep.subr.bf16.mxu0 0
  %3159 = vmatpush1.bf16.msra.mxu0 0
  %3160 = vmatprep.subr.bf16.mxu0 0
  %3161 = vmatpush1.bf16.msra.mxu0 0
  %3162 = vmatprep.subr.bf16.mxu0 0
  %3163 = vmatpush1.bf16.msra.mxu0 0
  %3164 = vmatprep.subr.bf16.mxu0 0
  %3165 = vmatpush1.bf16.msra.mxu0 0
  %3166 = vmatprep.subr.bf16.mxu0 0
  %3167 = vmatpush1.bf16.msra.mxu0 0
  %3168 = vmatprep.subr.bf16.mxu0 0
  %3169 = vmatpush1.bf16.msra.mxu0 0
  %3170 = vmatprep.subr.bf16.mxu0 0
  %3171 = vmatpush1.bf16.msra.mxu0 0
  %3172 = vmatprep.subr.bf16.mxu0 0
  %3173 = vmatpush1.bf16.msra.mxu0 0
  %3174 = vmatprep.subr.bf16.mxu0 0
  %3175 = vmatpush1.bf16.msra.mxu0 0
  %3176 = vmatprep.subr.bf16.mxu0 0
  %3177 = vmatpush1.bf16.msra.mxu0 0
  %3178 = vmatprep.subr.bf16.mxu0 0
  %3179 = vmatpush1.bf16.msra.mxu0 0
  %3180 = vmatprep.subr.bf16.mxu0 0
  %3181 = vmatpush1.bf16.msra.mxu0 0
  %3182 = vmatprep.subr.bf16.mxu0 0
  %3183 = vmatpush1.bf16.msra.mxu0 0
  %3184 = vmatprep.mubr.bf16.mxu0 0
  %3185 = vmatmul.mubr.bf16.gmra.mrb[0].mxu0 %v3141
  %v3186 = vpop.f32.mrb[0].mxu0
  %v3187 = vadd.f32 0.0, %v3186
  %v3188 = vpop.f32.mrb[0].mxu0
  %v3189 = vadd.f32 0.0, %v3188
  %v3190 = vpop.f32.mrb[0].mxu0
  %v3191 = vadd.f32 0.0, %v3190
  %v3192 = vpop.f32.mrb[0].mxu0
  %v3193 = vadd.f32 0.0, %v3192
  %3194 = vmatprep.mubr.bf16.mxu0 0
  %3195 = vmatmul.mubr.bf16.gmra.mrb[0].mxu0 %v3144
  %v3196 = vpop.f32.mrb[0].mxu0
  %v3197 = vadd.f32 0.0, %v3196
  %v3198 = vpop.f32.mrb[0].mxu0
  %v3199 = vadd.f32 0.0, %v3198
  %v3200 = vpop.f32.mrb[0].mxu0
  %v3201 = vadd.f32 0.0, %v3200
  %v3202 = vpop.f32.mrb[0].mxu0
  %v3203 = vadd.f32 0.0, %v3202
  %3204 = vmatprep.mubr.bf16.mxu0 0
  %3205 = vmatmul.mubr.bf16.gmra.mrb[0].mxu0 %v3147
  %v3206 = vpop.f32.mrb[0].mxu0
  %v3207 = vadd.f32 0.0, %v3206
  %v3208 = vpop.f32.mrb[0].mxu0
  %v3209 = vadd.f32 0.0, %v3208
  %v3210 = vpop.f32.mrb[0].mxu0
  %v3211 = vadd.f32 0.0, %v3210
  %v3212 = vpop.f32.mrb[0].mxu0
  %v3213 = vadd.f32 0.0, %v3212
  %3214 = vmatprep.mubr.bf16.mxu0 0
  %3215 = vmatmul.mubr.bf16.gmra.mrb[0].mxu0 %v3150
  %v3216 = vpop.f32.mrb[0].mxu0
  %v3217 = vadd.f32 0.0, %v3216
  %v3218 = vpop.f32.mrb[0].mxu0
  %v3219 = vadd.f32 0.0, %v3218
  %v3220 = vpop.f32.mrb[0].mxu0
  %v3221 = vadd.f32 0.0, %v3220
  %v3222 = vpop.f32.mrb[0].mxu0
  %v3223 = vadd.f32 0.0, %v3222
  %3224 = vdwg.mxu0
  %3225 = vmatprep.subr.bf16.mxu0 0
  %3226 = vmatpush1.bf16.msra.mxu0 %v3130
  %3227 = vmatprep.subr.bf16.mxu0 0
  %3228 = vmatpush1.bf16.msra.mxu0 %v3133
  %3229 = vmatprep.subr.bf16.mxu0 0
  %3230 = vmatpush1.bf16.msra.mxu0 0
  %3231 = vmatprep.subr.bf16.mxu0 0
  %3232 = vmatpush1.bf16.msra.mxu0 0
  %3233 = vmatprep.subr.bf16.mxu0 0
  %3234 = vmatpush1.bf16.msra.mxu0 0
  %3235 = vmatprep.subr.bf16.mxu0 0
  %3236 = vmatpush1.bf16.msra.mxu0 0
  %3237 = vmatprep.subr.bf16.mxu0 0
  %3238 = vmatpush1.bf16.msra.mxu0 0
  %3239 = vmatprep.subr.bf16.mxu0 0
  %3240 = vmatpush1.bf16.msra.mxu0 0
  %3241 = vmatprep.subr.bf16.mxu0 0
  %3242 = vmatpush1.bf16.msra.mxu0 0
  %3243 = vmatprep.subr.bf16.mxu0 0
  %3244 = vmatpush1.bf16.msra.mxu0 0
  %3245 = vmatprep.subr.bf16.mxu0 0
  %3246 = vmatpush1.bf16.msra.mxu0 0
  %3247 = vmatprep.subr.bf16.mxu0 0
  %3248 = vmatpush1.bf16.msra.mxu0 0
  %3249 = vmatprep.subr.bf16.mxu0 0
  %3250 = vmatpush1.bf16.msra.mxu0 0
  %3251 = vmatprep.subr.bf16.mxu0 0
  %3252 = vmatpush1.bf16.msra.mxu0 0
  %3253 = vmatprep.subr.bf16.mxu0 0
  %3254 = vmatpush1.bf16.msra.mxu0 0
  %3255 = vmatprep.subr.bf16.mxu0 0
  %3256 = vmatpush1.bf16.msra.mxu0 0
  %3257 = vmatprep.mubr.bf16.mxu0 0
  %3258 = vmatmul.mubr.bf16.gmra.mrb[0].mxu0 %v3141
  %v3259 = vpop.f32.mrb[0].mxu0
  %v3260 = vadd.f32 0.0, %v3259
  %v3261 = vpop.f32.mrb[0].mxu0
  %v3262 = vpop.f32.mrb[0].mxu0
  %v3263 = vadd.f32 0.0, %v3262
  %v3264 = vpop.f32.mrb[0].mxu0
  %3265 = vmatprep.mubr.bf16.mxu0 0
  %3266 = vmatmul.mubr.bf16.gmra.mrb[0].mxu0 %v3144
  %v3267 = vpop.f32.mrb[0].mxu0
  %v3268 = vadd.f32 0.0, %v3267
  %v3269 = vpop.f32.mrb[0].mxu0
  %v3270 = vpop.f32.mrb[0].mxu0
  %v3271 = vadd.f32 0.0, %v3270
  %v3272 = vpop.f32.mrb[0].mxu0
  %3273 = vmatprep.mubr.bf16.mxu0 0
  %3274 = vmatmul.mubr.bf16.gmra.mrb[0].mxu0 %v3147
  %v3275 = vpop.f32.mrb[0].mxu0
  %v3276 = vadd.f32 0.0, %v3275
  %v3277 = vpop.f32.mrb[0].mxu0
  %v3278 = vpop.f32.mrb[0].mxu0
  %v3279 = vadd.f32 0.0, %v3278
  %v3280 = vpop.f32.mrb[0].mxu0
  %3281 = vmatprep.mubr.bf16.mxu0 0
  %3282 = vmatmul.mubr.bf16.gmra.mrb[0].mxu0 %v3150
  %v3283 = vpop.f32.mrb[0].mxu0
  %v3284 = vadd.f32 0.0, %v3283
  %v3285 = vpop.f32.mrb[0].mxu0
  %v3286 = vpop.f32.mrb[0].mxu0
  %v3287 = vadd.f32 0.0, %v3286
  %v3288 = vpop.f32.mrb[0].mxu0
  %3289 = vdwg.mxu0
  %v3290 = vadd.f32 %v3058, %v3187
  %v3291 = vadd.f32 %v3059, %v3189
  %v3292 = vadd.f32 %v3060, %v3260
  %v3293 = vadd.f32 %v3061, %v3191
  %v3294 = vadd.f32 %v3062, %v3193
  %v3295 = vadd.f32 %v3063, %v3263
  %v3296 = vadd.f32 %v3064, %v3197
  %v3297 = vadd.f32 %v3065, %v3199
  %v3298 = vadd.f32 %v3066, %v3268
  %v3299 = vadd.f32 %v3067, %v3201
  %v3300 = vadd.f32 %v3068, %v3203
  %v3301 = vadd.f32 %v3069, %v3271
  %v3302 = vadd.f32 %v3070, %v3207
  %v3303 = vadd.f32 %v3071, %v3209
  %v3304 = vadd.f32 %v3072, %v3276
  %v3305 = vadd.f32 %v3073, %v3211
  %v3306 = vadd.f32 %v3074, %v3213
  %v3307 = vadd.f32 %v3075, %v3279
  %v3308 = vadd.f32 %v3076, %v3217
  %v3309 = vadd.f32 %v3077, %v3219
  %v3310 = vadd.f32 %v3078, %v3284
  %v3311 = vadd.f32 %v3079, %v3221
  %v3312 = vadd.f32 %v3080, %v3223
  %v3313 = vadd.f32 %v3081, %v3287
  %s3314 = scalar_lea.vmem %s3, 320
  %v3315 = vld [vmem:[%s3314] sm:$0xf]
  %v3316 = vld [vmem:[%s3314 + $0x4] sm:$0xf]
  %v3317 = vld [vmem:[%s3314 + $0x8] sm:$0xf]
  %v3318 = vld [vmem:[%s3314 + $0xc] sm:$0xf]
  %v3319 = vld [vmem:[%s3314 + $0x10] sm:$0xf]
  %v3320 = vld [vmem:[%s3314 + $0x14] sm:$0xf]
  %v3321 = vld [vmem:[%s3314 + $0x18] sm:$0xf]
  %v3322 = vld [vmem:[%s3314 + $0x1c] sm:$0xf]
  %v3331 = vunpack.c.l.b16 %v3315
  %v3332 = vunpack.c.l.b16 %v3316
  %v3333 = vunpack.c.l.b16 %v3317
  %v3334 = vunpack.c.l.b16 %v3318
  %v3335 = vunpack.c.l.b16 %v3319
  %v3336 = vunpack.c.l.b16 %v3320
  %v3337 = vunpack.c.l.b16 %v3321
  %v3338 = vunpack.c.l.b16 %v3322
  %v3339 = vpack.c.b16 %v3332, %v3331
  %v3340 = vpack.c.b16 %v3334, %v3333
  %v3341 = vpack.c.b16 %v3336, %v3335
  %v3342 = vpack.c.b16 %v3338, %v3337
  %3343 = vrot.lane.b32.xlu0 %v1058, 108
  %v3344 = vpop.permute.xlu0 %3343
  %3345 = vrot.lane.b32.xlu0 %v1059, 108
  %v3346 = vpop.permute.xlu0 %3345
  %3347 = vrot.lane.b32.xlu0 %v1060, 108
  %v3348 = vpop.permute.xlu0 %3347
  %3349 = vrot.lane.b32.xlu0 %v1061, 108
  %v3350 = vpop.permute.xlu0 %3349
  %3351 = vrot.lane.b32.xlu0 %v1062, 108
  %v3352 = vpop.permute.xlu0 %3351
  %3353 = vrot.lane.b32.xlu0 %v1063, 108
  %v3354 = vpop.permute.xlu0 %3353
  %3355 = vrot.lane.b32.xlu0 %v1064, 108
  %v3356 = vpop.permute.xlu0 %3355
  %3357 = vrot.lane.b32.xlu0 %v1065, 108
  %v3358 = vpop.permute.xlu0 %3357
  %vm3359 = vcmask 883712
  %v3360 = vsel %vm3359, %v3344, %v3346
  %v3361 = vsel %vm3359, %v3346, %v3348
  %v3362 = vsel %vm3359, %v3348, %v3350
  %v3363 = vsel %vm3359, %v3352, %v3354
  %v3364 = vsel %vm3359, %v3354, %v3356
  %v3365 = vsel %vm3359, %v3356, %v3358
  %v3373 = vsel %vm1139, %v3339, 0
  %v3376 = vsel %vm1139, %v3340, 0
  %v3379 = vsel %vm1139, %v3341, 0
  %v3382 = vsel %vm1139, %v3342, 0
  %3384 = vmatprep.subr.bf16.mxu0 %v3361
  %3385 = vmatpush1.bf16.msra.mxu0 %v3360
  %3386 = vmatprep.subr.bf16.mxu0 %v3364
  %3387 = vmatpush1.bf16.msra.mxu0 %v3363
  %3388 = vmatprep.subr.bf16.mxu0 0
  %3389 = vmatpush1.bf16.msra.mxu0 0
  %3390 = vmatprep.subr.bf16.mxu0 0
  %3391 = vmatpush1.bf16.msra.mxu0 0
  %3392 = vmatprep.subr.bf16.mxu0 0
  %3393 = vmatpush1.bf16.msra.mxu0 0
  %3394 = vmatprep.subr.bf16.mxu0 0
  %3395 = vmatpush1.bf16.msra.mxu0 0
  %3396 = vmatprep.subr.bf16.mxu0 0
  %3397 = vmatpush1.bf16.msra.mxu0 0
  %3398 = vmatprep.subr.bf16.mxu0 0
  %3399 = vmatpush1.bf16.msra.mxu0 0
  %3400 = vmatprep.subr.bf16.mxu0 0
  %3401 = vmatpush1.bf16.msra.mxu0 0
  %3402 = vmatprep.subr.bf16.mxu0 0
  %3403 = vmatpush1.bf16.msra.mxu0 0
  %3404 = vmatprep.subr.bf16.mxu0 0
  %3405 = vmatpush1.bf16.msra.mxu0 0
  %3406 = vmatprep.subr.bf16.mxu0 0
  %3407 = vmatpush1.bf16.msra.mxu0 0
  %3408 = vmatprep.subr.bf16.mxu0 0
  %3409 = vmatpush1.bf16.msra.mxu0 0
  %3410 = vmatprep.subr.bf16.mxu0 0
  %3411 = vmatpush1.bf16.msra.mxu0 0
  %3412 = vmatprep.subr.bf16.mxu0 0
  %3413 = vmatpush1.bf16.msra.mxu0 0
  %3414 = vmatprep.subr.bf16.mxu0 0
  %3415 = vmatpush1.bf16.msra.mxu0 0
  %3416 = vmatprep.mubr.bf16.mxu0 0
  %3417 = vmatmul.mubr.bf16.gmra.mrb[0].mxu0 %v3373
  %v3418 = vpop.f32.mrb[0].mxu0
  %v3419 = vadd.f32 0.0, %v3418
  %v3420 = vpop.f32.mrb[0].mxu0
  %v3421 = vadd.f32 0.0, %v3420
  %v3422 = vpop.f32.mrb[0].mxu0
  %v3423 = vadd.f32 0.0, %v3422
  %v3424 = vpop.f32.mrb[0].mxu0
  %v3425 = vadd.f32 0.0, %v3424
  %3426 = vmatprep.mubr.bf16.mxu0 0
  %3427 = vmatmul.mubr.bf16.gmra.mrb[0].mxu0 %v3376
  %v3428 = vpop.f32.mrb[0].mxu0
  %v3429 = vadd.f32 0.0, %v3428
  %v3430 = vpop.f32.mrb[0].mxu0
  %v3431 = vadd.f32 0.0, %v3430
  %v3432 = vpop.f32.mrb[0].mxu0
  %v3433 = vadd.f32 0.0, %v3432
  %v3434 = vpop.f32.mrb[0].mxu0
  %v3435 = vadd.f32 0.0, %v3434
  %3436 = vmatprep.mubr.bf16.mxu0 0
  %3437 = vmatmul.mubr.bf16.gmra.mrb[0].mxu0 %v3379
  %v3438 = vpop.f32.mrb[0].mxu0
  %v3439 = vadd.f32 0.0, %v3438
  %v3440 = vpop.f32.mrb[0].mxu0
  %v3441 = vadd.f32 0.0, %v3440
  %v3442 = vpop.f32.mrb[0].mxu0
  %v3443 = vadd.f32 0.0, %v3442
  %v3444 = vpop.f32.mrb[0].mxu0
  %v3445 = vadd.f32 0.0, %v3444
  %3446 = vmatprep.mubr.bf16.mxu0 0
  %3447 = vmatmul.mubr.bf16.gmra.mrb[0].mxu0 %v3382
  %v3448 = vpop.f32.mrb[0].mxu0
  %v3449 = vadd.f32 0.0, %v3448
  %v3450 = vpop.f32.mrb[0].mxu0
  %v3451 = vadd.f32 0.0, %v3450
  %v3452 = vpop.f32.mrb[0].mxu0
  %v3453 = vadd.f32 0.0, %v3452
  %v3454 = vpop.f32.mrb[0].mxu0
  %v3455 = vadd.f32 0.0, %v3454
  %3456 = vdwg.mxu0
  %3457 = vmatprep.subr.bf16.mxu0 0
  %3458 = vmatpush1.bf16.msra.mxu0 %v3362
  %3459 = vmatprep.subr.bf16.mxu0 0
  %3460 = vmatpush1.bf16.msra.mxu0 %v3365
  %3461 = vmatprep.subr.bf16.mxu0 0
  %3462 = vmatpush1.bf16.msra.mxu0 0
  %3463 = vmatprep.subr.bf16.mxu0 0
  %3464 = vmatpush1.bf16.msra.mxu0 0
  %3465 = vmatprep.subr.bf16.mxu0 0
  %3466 = vmatpush1.bf16.msra.mxu0 0
  %3467 = vmatprep.subr.bf16.mxu0 0
  %3468 = vmatpush1.bf16.msra.mxu0 0
  %3469 = vmatprep.subr.bf16.mxu0 0
  %3470 = vmatpush1.bf16.msra.mxu0 0
  %3471 = vmatprep.subr.bf16.mxu0 0
  %3472 = vmatpush1.bf16.msra.mxu0 0
  %3473 = vmatprep.subr.bf16.mxu0 0
  %3474 = vmatpush1.bf16.msra.mxu0 0
  %3475 = vmatprep.subr.bf16.mxu0 0
  %3476 = vmatpush1.bf16.msra.mxu0 0
  %3477 = vmatprep.subr.bf16.mxu0 0
  %3478 = vmatpush1.bf16.msra.mxu0 0
  %3479 = vmatprep.subr.bf16.mxu0 0
  %3480 = vmatpush1.bf16.msra.mxu0 0
  %3481 = vmatprep.subr.bf16.mxu0 0
  %3482 = vmatpush1.bf16.msra.mxu0 0
  %3483 = vmatprep.subr.bf16.mxu0 0
  %3484 = vmatpush1.bf16.msra.mxu0 0
  %3485 = vmatprep.subr.bf16.mxu0 0
  %3486 = vmatpush1.bf16.msra.mxu0 0
  %3487 = vmatprep.subr.bf16.mxu0 0
  %3488 = vmatpush1.bf16.msra.mxu0 0
  %3489 = vmatprep.mubr.bf16.mxu0 0
  %3490 = vmatmul.mubr.bf16.gmra.mrb[0].mxu0 %v3373
  %v3491 = vpop.f32.mrb[0].mxu0
  %v3492 = vadd.f32 0.0, %v3491
  %v3493 = vpop.f32.mrb[0].mxu0
  %v3494 = vpop.f32.mrb[0].mxu0
  %v3495 = vadd.f32 0.0, %v3494
  %v3496 = vpop.f32.mrb[0].mxu0
  %3497 = vmatprep.mubr.bf16.mxu0 0
  %3498 = vmatmul.mubr.bf16.gmra.mrb[0].mxu0 %v3376
  %v3499 = vpop.f32.mrb[0].mxu0
  %v3500 = vadd.f32 0.0, %v3499
  %v3501 = vpop.f32.mrb[0].mxu0
  %v3502 = vpop.f32.mrb[0].mxu0
  %v3503 = vadd.f32 0.0, %v3502
  %v3504 = vpop.f32.mrb[0].mxu0
  %3505 = vmatprep.mubr.bf16.mxu0 0
  %3506 = vmatmul.mubr.bf16.gmra.mrb[0].mxu0 %v3379
  %v3507 = vpop.f32.mrb[0].mxu0
  %v3508 = vadd.f32 0.0, %v3507
  %v3509 = vpop.f32.mrb[0].mxu0
  %v3510 = vpop.f32.mrb[0].mxu0
  %v3511 = vadd.f32 0.0, %v3510
  %v3512 = vpop.f32.mrb[0].mxu0
  %3513 = vmatprep.mubr.bf16.mxu0 0
  %3514 = vmatmul.mubr.bf16.gmra.mrb[0].mxu0 %v3382
  %v3515 = vpop.f32.mrb[0].mxu0
  %v3516 = vadd.f32 0.0, %v3515
  %v3517 = vpop.f32.mrb[0].mxu0
  %v3518 = vpop.f32.mrb[0].mxu0
  %v3519 = vadd.f32 0.0, %v3518
  %v3520 = vpop.f32.mrb[0].mxu0
  %3521 = vdwg.mxu0
  %v3522 = vadd.f32 %v3290, %v3419
  %v3523 = vadd.f32 %v3291, %v3421
  %v3524 = vadd.f32 %v3292, %v3492
  %v3525 = vadd.f32 %v3293, %v3423
  %v3526 = vadd.f32 %v3294, %v3425
  %v3527 = vadd.f32 %v3295, %v3495
  %v3528 = vadd.f32 %v3296, %v3429
  %v3529 = vadd.f32 %v3297, %v3431
  %v3530 = vadd.f32 %v3298, %v3500
  %v3531 = vadd.f32 %v3299, %v3433
  %v3532 = vadd.f32 %v3300, %v3435
  %v3533 = vadd.f32 %v3301, %v3503
  %v3534 = vadd.f32 %v3302, %v3439
  %v3535 = vadd.f32 %v3303, %v3441
  %v3536 = vadd.f32 %v3304, %v3508
  %v3537 = vadd.f32 %v3305, %v3443
  %v3538 = vadd.f32 %v3306, %v3445
  %v3539 = vadd.f32 %v3307, %v3511
  %v3540 = vadd.f32 %v3308, %v3449
  %v3541 = vadd.f32 %v3309, %v3451
  %v3542 = vadd.f32 %v3310, %v3516
  %v3543 = vadd.f32 %v3311, %v3453
  %v3544 = vadd.f32 %v3312, %v3455
  %v3545 = vadd.f32 %v3313, %v3519
  %s3546 = scalar_lea.vmem %s3, 352
  %v3547 = vld [vmem:[%s3546] sm:$0xf]
  %v3548 = vld [vmem:[%s3546 + $0x4] sm:$0xf]
  %v3549 = vld [vmem:[%s3546 + $0x8] sm:$0xf]
  %v3550 = vld [vmem:[%s3546 + $0xc] sm:$0xf]
  %v3551 = vld [vmem:[%s3546 + $0x10] sm:$0xf]
  %v3552 = vld [vmem:[%s3546 + $0x14] sm:$0xf]
  %v3553 = vld [vmem:[%s3546 + $0x18] sm:$0xf]
  %v3554 = vld [vmem:[%s3546 + $0x1c] sm:$0xf]
  %v3563 = vunpack.c.l.b16 %v3547
  %v3564 = vunpack.c.l.b16 %v3548
  %v3565 = vunpack.c.l.b16 %v3549
  %v3566 = vunpack.c.l.b16 %v3550
  %v3567 = vunpack.c.l.b16 %v3551
  %v3568 = vunpack.c.l.b16 %v3552
  %v3569 = vunpack.c.l.b16 %v3553
  %v3570 = vunpack.c.l.b16 %v3554
  %v3571 = vpack.c.b16 %v3564, %v3563
  %v3572 = vpack.c.b16 %v3566, %v3565
  %v3573 = vpack.c.b16 %v3568, %v3567
  %v3574 = vpack.c.b16 %v3570, %v3569
  %3575 = vrot.lane.b32.xlu0 %v1058, 107
  %v3576 = vpop.permute.xlu0 %3575
  %3577 = vrot.lane.b32.xlu0 %v1059, 107
  %v3578 = vpop.permute.xlu0 %3577
  %3579 = vrot.lane.b32.xlu0 %v1060, 107
  %v3580 = vpop.permute.xlu0 %3579
  %3581 = vrot.lane.b32.xlu0 %v1061, 107
  %v3582 = vpop.permute.xlu0 %3581
  %3583 = vrot.lane.b32.xlu0 %v1062, 107
  %v3584 = vpop.permute.xlu0 %3583
  %3585 = vrot.lane.b32.xlu0 %v1063, 107
  %v3586 = vpop.permute.xlu0 %3585
  %3587 = vrot.lane.b32.xlu0 %v1064, 107
  %v3588 = vpop.permute.xlu0 %3587
  %3589 = vrot.lane.b32.xlu0 %v1065, 107
  %v3590 = vpop.permute.xlu0 %3589
  %vm3591 = vcmask 875520
  %v3592 = vsel %vm3591, %v3576, %v3578
  %v3593 = vsel %vm3591, %v3578, %v3580
  %v3594 = vsel %vm3591, %v3580, %v3582
  %v3595 = vsel %vm3591, %v3584, %v3586
  %v3596 = vsel %vm3591, %v3586, %v3588
  %v3597 = vsel %vm3591, %v3588, %v3590
  %v3605 = vsel %vm1139, %v3571, 0
  %v3608 = vsel %vm1139, %v3572, 0
  %v3611 = vsel %vm1139, %v3573, 0
  %v3614 = vsel %vm1139, %v3574, 0
  %3616 = vmatprep.subr.bf16.mxu0 %v3593
  %3617 = vmatpush1.bf16.msra.mxu0 %v3592
  %3618 = vmatprep.subr.bf16.mxu0 %v3596
  %3619 = vmatpush1.bf16.msra.mxu0 %v3595
  %3620 = vmatprep.subr.bf16.mxu0 0
  %3621 = vmatpush1.bf16.msra.mxu0 0
  %3622 = vmatprep.subr.bf16.mxu0 0
  %3623 = vmatpush1.bf16.msra.mxu0 0
  %3624 = vmatprep.subr.bf16.mxu0 0
  %3625 = vmatpush1.bf16.msra.mxu0 0
  %3626 = vmatprep.subr.bf16.mxu0 0
  %3627 = vmatpush1.bf16.msra.mxu0 0
  %3628 = vmatprep.subr.bf16.mxu0 0
  %3629 = vmatpush1.bf16.msra.mxu0 0
  %3630 = vmatprep.subr.bf16.mxu0 0
  %3631 = vmatpush1.bf16.msra.mxu0 0
  %3632 = vmatprep.subr.bf16.mxu0 0
  %3633 = vmatpush1.bf16.msra.mxu0 0
  %3634 = vmatprep.subr.bf16.mxu0 0
  %3635 = vmatpush1.bf16.msra.mxu0 0
  %3636 = vmatprep.subr.bf16.mxu0 0
  %3637 = vmatpush1.bf16.msra.mxu0 0
  %3638 = vmatprep.subr.bf16.mxu0 0
  %3639 = vmatpush1.bf16.msra.mxu0 0
  %3640 = vmatprep.subr.bf16.mxu0 0
  %3641 = vmatpush1.bf16.msra.mxu0 0
  %3642 = vmatprep.subr.bf16.mxu0 0
  %3643 = vmatpush1.bf16.msra.mxu0 0
  %3644 = vmatprep.subr.bf16.mxu0 0
  %3645 = vmatpush1.bf16.msra.mxu0 0
  %3646 = vmatprep.subr.bf16.mxu0 0
  %3647 = vmatpush1.bf16.msra.mxu0 0
  %3648 = vmatprep.mubr.bf16.mxu0 0
  %3649 = vmatmul.mubr.bf16.gmra.mrb[0].mxu0 %v3605
  %v3650 = vpop.f32.mrb[0].mxu0
  %v3651 = vadd.f32 0.0, %v3650
  %v3652 = vpop.f32.mrb[0].mxu0
  %v3653 = vadd.f32 0.0, %v3652
  %v3654 = vpop.f32.mrb[0].mxu0
  %v3655 = vadd.f32 0.0, %v3654
  %v3656 = vpop.f32.mrb[0].mxu0
  %v3657 = vadd.f32 0.0, %v3656
  %3658 = vmatprep.mubr.bf16.mxu0 0
  %3659 = vmatmul.mubr.bf16.gmra.mrb[0].mxu0 %v3608
  %v3660 = vpop.f32.mrb[0].mxu0
  %v3661 = vadd.f32 0.0, %v3660
  %v3662 = vpop.f32.mrb[0].mxu0
  %v3663 = vadd.f32 0.0, %v3662
  %v3664 = vpop.f32.mrb[0].mxu0
  %v3665 = vadd.f32 0.0, %v3664
  %v3666 = vpop.f32.mrb[0].mxu0
  %v3667 = vadd.f32 0.0, %v3666
  %3668 = vmatprep.mubr.bf16.mxu0 0
  %3669 = vmatmul.mubr.bf16.gmra.mrb[0].mxu0 %v3611
  %v3670 = vpop.f32.mrb[0].mxu0
  %v3671 = vadd.f32 0.0, %v3670
  %v3672 = vpop.f32.mrb[0].mxu0
  %v3673 = vadd.f32 0.0, %v3672
  %v3674 = vpop.f32.mrb[0].mxu0
  %v3675 = vadd.f32 0.0, %v3674
  %v3676 = vpop.f32.mrb[0].mxu0
  %v3677 = vadd.f32 0.0, %v3676
  %3678 = vmatprep.mubr.bf16.mxu0 0
  %3679 = vmatmul.mubr.bf16.gmra.mrb[0].mxu0 %v3614
  %v3680 = vpop.f32.mrb[0].mxu0
  %v3681 = vadd.f32 0.0, %v3680
  %v3682 = vpop.f32.mrb[0].mxu0
  %v3683 = vadd.f32 0.0, %v3682
  %v3684 = vpop.f32.mrb[0].mxu0
  %v3685 = vadd.f32 0.0, %v3684
  %v3686 = vpop.f32.mrb[0].mxu0
  %v3687 = vadd.f32 0.0, %v3686
  %3688 = vdwg.mxu0
  %3689 = vmatprep.subr.bf16.mxu0 0
  %3690 = vmatpush1.bf16.msra.mxu0 %v3594
  %3691 = vmatprep.subr.bf16.mxu0 0
  %3692 = vmatpush1.bf16.msra.mxu0 %v3597
  %3693 = vmatprep.subr.bf16.mxu0 0
  %3694 = vmatpush1.bf16.msra.mxu0 0
  %3695 = vmatprep.subr.bf16.mxu0 0
  %3696 = vmatpush1.bf16.msra.mxu0 0
  %3697 = vmatprep.subr.bf16.mxu0 0
  %3698 = vmatpush1.bf16.msra.mxu0 0
  %3699 = vmatprep.subr.bf16.mxu0 0
  %3700 = vmatpush1.bf16.msra.mxu0 0
  %3701 = vmatprep.subr.bf16.mxu0 0
  %3702 = vmatpush1.bf16.msra.mxu0 0
  %3703 = vmatprep.subr.bf16.mxu0 0
  %3704 = vmatpush1.bf16.msra.mxu0 0
  %3705 = vmatprep.subr.bf16.mxu0 0
  %3706 = vmatpush1.bf16.msra.mxu0 0
  %3707 = vmatprep.subr.bf16.mxu0 0
  %3708 = vmatpush1.bf16.msra.mxu0 0
  %3709 = vmatprep.subr.bf16.mxu0 0
  %3710 = vmatpush1.bf16.msra.mxu0 0
  %3711 = vmatprep.subr.bf16.mxu0 0
  %3712 = vmatpush1.bf16.msra.mxu0 0
  %3713 = vmatprep.subr.bf16.mxu0 0
  %3714 = vmatpush1.bf16.msra.mxu0 0
  %3715 = vmatprep.subr.bf16.mxu0 0
  %3716 = vmatpush1.bf16.msra.mxu0 0
  %3717 = vmatprep.subr.bf16.mxu0 0
  %3718 = vmatpush1.bf16.msra.mxu0 0
  %3719 = vmatprep.subr.bf16.mxu0 0
  %3720 = vmatpush1.bf16.msra.mxu0 0
  %3721 = vmatprep.mubr.bf16.mxu0 0
  %3722 = vmatmul.mubr.bf16.gmra.mrb[0].mxu0 %v3605
  %v3723 = vpop.f32.mrb[0].mxu0
  %v3724 = vadd.f32 0.0, %v3723
  %v3725 = vpop.f32.mrb[0].mxu0
  %v3726 = vpop.f32.mrb[0].mxu0
  %v3727 = vadd.f32 0.0, %v3726
  %v3728 = vpop.f32.mrb[0].mxu0
  %3729 = vmatprep.mubr.bf16.mxu0 0
  %3730 = vmatmul.mubr.bf16.gmra.mrb[0].mxu0 %v3608
  %v3731 = vpop.f32.mrb[0].mxu0
  %v3732 = vadd.f32 0.0, %v3731
  %v3733 = vpop.f32.mrb[0].mxu0
  %v3734 = vpop.f32.mrb[0].mxu0
  %v3735 = vadd.f32 0.0, %v3734
  %v3736 = vpop.f32.mrb[0].mxu0
  %3737 = vmatprep.mubr.bf16.mxu0 0
  %3738 = vmatmul.mubr.bf16.gmra.mrb[0].mxu0 %v3611
  %v3739 = vpop.f32.mrb[0].mxu0
  %v3740 = vadd.f32 0.0, %v3739
  %v3741 = vpop.f32.mrb[0].mxu0
  %v3742 = vpop.f32.mrb[0].mxu0
  %v3743 = vadd.f32 0.0, %v3742
  %v3744 = vpop.f32.mrb[0].mxu0
  %3745 = vmatprep.mubr.bf16.mxu0 0
  %3746 = vmatmul.mubr.bf16.gmra.mrb[0].mxu0 %v3614
  %v3747 = vpop.f32.mrb[0].mxu0
  %v3748 = vadd.f32 0.0, %v3747
  %v3749 = vpop.f32.mrb[0].mxu0
  %v3750 = vpop.f32.mrb[0].mxu0
  %v3751 = vadd.f32 0.0, %v3750
  %v3752 = vpop.f32.mrb[0].mxu0
  %3753 = vdwg.mxu0
  %v3754 = vadd.f32 %v3522, %v3651
  %v3755 = vadd.f32 %v3523, %v3653
  %v3756 = vadd.f32 %v3524, %v3724
  %v3757 = vadd.f32 %v3525, %v3655
  %v3758 = vadd.f32 %v3526, %v3657
  %v3759 = vadd.f32 %v3527, %v3727
  %v3760 = vadd.f32 %v3528, %v3661
  %v3761 = vadd.f32 %v3529, %v3663
  %v3762 = vadd.f32 %v3530, %v3732
  %v3763 = vadd.f32 %v3531, %v3665
  %v3764 = vadd.f32 %v3532, %v3667
  %v3765 = vadd.f32 %v3533, %v3735
  %v3766 = vadd.f32 %v3534, %v3671
  %v3767 = vadd.f32 %v3535, %v3673
  %v3768 = vadd.f32 %v3536, %v3740
  %v3769 = vadd.f32 %v3537, %v3675
  %v3770 = vadd.f32 %v3538, %v3677
  %v3771 = vadd.f32 %v3539, %v3743
  %v3772 = vadd.f32 %v3540, %v3681
  %v3773 = vadd.f32 %v3541, %v3683
  %v3774 = vadd.f32 %v3542, %v3748
  %v3775 = vadd.f32 %v3543, %v3685
  %v3776 = vadd.f32 %v3544, %v3687
  %v3777 = vadd.f32 %v3545, %v3751
  %s3778 = scalar_lea.vmem %s3, 384
  %v3779 = vld [vmem:[%s3778] sm:$0xf]
  %v3780 = vld [vmem:[%s3778 + $0x4] sm:$0xf]
  %v3781 = vld [vmem:[%s3778 + $0x8] sm:$0xf]
  %v3782 = vld [vmem:[%s3778 + $0xc] sm:$0xf]
  %v3783 = vld [vmem:[%s3778 + $0x10] sm:$0xf]
  %v3784 = vld [vmem:[%s3778 + $0x14] sm:$0xf]
  %v3785 = vld [vmem:[%s3778 + $0x18] sm:$0xf]
  %v3786 = vld [vmem:[%s3778 + $0x1c] sm:$0xf]
  %v3795 = vunpack.c.l.b16 %v3779
  %v3796 = vunpack.c.l.b16 %v3780
  %v3797 = vunpack.c.l.b16 %v3781
  %v3798 = vunpack.c.l.b16 %v3782
  %v3799 = vunpack.c.l.b16 %v3783
  %v3800 = vunpack.c.l.b16 %v3784
  %v3801 = vunpack.c.l.b16 %v3785
  %v3802 = vunpack.c.l.b16 %v3786
  %v3803 = vpack.c.b16 %v3796, %v3795
  %v3804 = vpack.c.b16 %v3798, %v3797
  %v3805 = vpack.c.b16 %v3800, %v3799
  %v3806 = vpack.c.b16 %v3802, %v3801
  %3807 = vrot.lane.b32.xlu0 %v1058, 101
  %v3808 = vpop.permute.xlu0 %3807
  %3809 = vrot.lane.b32.xlu0 %v1059, 101
  %v3810 = vpop.permute.xlu0 %3809
  %3811 = vrot.lane.b32.xlu0 %v1060, 101
  %v3812 = vpop.permute.xlu0 %3811
  %3813 = vrot.lane.b32.xlu0 %v1061, 101
  %v3814 = vpop.permute.xlu0 %3813
  %3815 = vrot.lane.b32.xlu0 %v1062, 101
  %v3816 = vpop.permute.xlu0 %3815
  %3817 = vrot.lane.b32.xlu0 %v1063, 101
  %v3818 = vpop.permute.xlu0 %3817
  %3819 = vrot.lane.b32.xlu0 %v1064, 101
  %v3820 = vpop.permute.xlu0 %3819
  %3821 = vrot.lane.b32.xlu0 %v1065, 101
  %v3822 = vpop.permute.xlu0 %3821
  %vm3823 = vcmask 826368
  %v3824 = vsel %vm3823, %v3808, %v3810
  %v3825 = vsel %vm3823, %v3810, %v3812
  %v3826 = vsel %vm3823, %v3812, %v3814
  %v3827 = vsel %vm3823, %v3816, %v3818
  %v3828 = vsel %vm3823, %v3818, %v3820
  %v3829 = vsel %vm3823, %v3820, %v3822
  %v3837 = vsel %vm1139, %v3803, 0
  %v3840 = vsel %vm1139, %v3804, 0
  %v3843 = vsel %vm1139, %v3805, 0
  %v3846 = vsel %vm1139, %v3806, 0
  %3848 = vmatprep.subr.bf16.mxu0 %v3825
  %3849 = vmatpush1.bf16.msra.mxu0 %v3824
  %3850 = vmatprep.subr.bf16.mxu0 %v3828
  %3851 = vmatpush1.bf16.msra.mxu0 %v3827
  %3852 = vmatprep.subr.bf16.mxu0 0
  %3853 = vmatpush1.bf16.msra.mxu0 0
  %3854 = vmatprep.subr.bf16.mxu0 0
  %3855 = vmatpush1.bf16.msra.mxu0 0
  %3856 = vmatprep.subr.bf16.mxu0 0
  %3857 = vmatpush1.bf16.msra.mxu0 0
  %3858 = vmatprep.subr.bf16.mxu0 0
  %3859 = vmatpush1.bf16.msra.mxu0 0
  %3860 = vmatprep.subr.bf16.mxu0 0
  %3861 = vmatpush1.bf16.msra.mxu0 0
  %3862 = vmatprep.subr.bf16.mxu0 0
  %3863 = vmatpush1.bf16.msra.mxu0 0
  %3864 = vmatprep.subr.bf16.mxu0 0
  %3865 = vmatpush1.bf16.msra.mxu0 0
  %3866 = vmatprep.subr.bf16.mxu0 0
  %3867 = vmatpush1.bf16.msra.mxu0 0
  %3868 = vmatprep.subr.bf16.mxu0 0
  %3869 = vmatpush1.bf16.msra.mxu0 0
  %3870 = vmatprep.subr.bf16.mxu0 0
  %3871 = vmatpush1.bf16.msra.mxu0 0
  %3872 = vmatprep.subr.bf16.mxu0 0
  %3873 = vmatpush1.bf16.msra.mxu0 0
  %3874 = vmatprep.subr.bf16.mxu0 0
  %3875 = vmatpush1.bf16.msra.mxu0 0
  %3876 = vmatprep.subr.bf16.mxu0 0
  %3877 = vmatpush1.bf16.msra.mxu0 0
  %3878 = vmatprep.subr.bf16.mxu0 0
  %3879 = vmatpush1.bf16.msra.mxu0 0
  %3880 = vmatprep.mubr.bf16.mxu0 0
  %3881 = vmatmul.mubr.bf16.gmra.mrb[0].mxu0 %v3837
  %v3882 = vpop.f32.mrb[0].mxu0
  %v3883 = vadd.f32 0.0, %v3882
  %v3884 = vpop.f32.mrb[0].mxu0
  %v3885 = vadd.f32 0.0, %v3884
  %v3886 = vpop.f32.mrb[0].mxu0
  %v3887 = vadd.f32 0.0, %v3886
  %v3888 = vpop.f32.mrb[0].mxu0
  %v3889 = vadd.f32 0.0, %v3888
  %3890 = vmatprep.mubr.bf16.mxu0 0
  %3891 = vmatmul.mubr.bf16.gmra.mrb[0].mxu0 %v3840
  %v3892 = vpop.f32.mrb[0].mxu0
  %v3893 = vadd.f32 0.0, %v3892
  %v3894 = vpop.f32.mrb[0].mxu0
  %v3895 = vadd.f32 0.0, %v3894
  %v3896 = vpop.f32.mrb[0].mxu0
  %v3897 = vadd.f32 0.0, %v3896
  %v3898 = vpop.f32.mrb[0].mxu0
  %v3899 = vadd.f32 0.0, %v3898
  %3900 = vmatprep.mubr.bf16.mxu0 0
  %3901 = vmatmul.mubr.bf16.gmra.mrb[0].mxu0 %v3843
  %v3902 = vpop.f32.mrb[0].mxu0
  %v3903 = vadd.f32 0.0, %v3902
  %v3904 = vpop.f32.mrb[0].mxu0
  %v3905 = vadd.f32 0.0, %v3904
  %v3906 = vpop.f32.mrb[0].mxu0
  %v3907 = vadd.f32 0.0, %v3906
  %v3908 = vpop.f32.mrb[0].mxu0
  %v3909 = vadd.f32 0.0, %v3908
  %3910 = vmatprep.mubr.bf16.mxu0 0
  %3911 = vmatmul.mubr.bf16.gmra.mrb[0].mxu0 %v3846
  %v3912 = vpop.f32.mrb[0].mxu0
  %v3913 = vadd.f32 0.0, %v3912
  %v3914 = vpop.f32.mrb[0].mxu0
  %v3915 = vadd.f32 0.0, %v3914
  %v3916 = vpop.f32.mrb[0].mxu0
  %v3917 = vadd.f32 0.0, %v3916
  %v3918 = vpop.f32.mrb[0].mxu0
  %v3919 = vadd.f32 0.0, %v3918
  %3920 = vdwg.mxu0
  %3921 = vmatprep.subr.bf16.mxu0 0
  %3922 = vmatpush1.bf16.msra.mxu0 %v3826
  %3923 = vmatprep.subr.bf16.mxu0 0
  %3924 = vmatpush1.bf16.msra.mxu0 %v3829
  %3925 = vmatprep.subr.bf16.mxu0 0
  %3926 = vmatpush1.bf16.msra.mxu0 0
  %3927 = vmatprep.subr.bf16.mxu0 0
  %3928 = vmatpush1.bf16.msra.mxu0 0
  %3929 = vmatprep.subr.bf16.mxu0 0
  %3930 = vmatpush1.bf16.msra.mxu0 0
  %3931 = vmatprep.subr.bf16.mxu0 0
  %3932 = vmatpush1.bf16.msra.mxu0 0
  %3933 = vmatprep.subr.bf16.mxu0 0
  %3934 = vmatpush1.bf16.msra.mxu0 0
  %3935 = vmatprep.subr.bf16.mxu0 0
  %3936 = vmatpush1.bf16.msra.mxu0 0
  %3937 = vmatprep.subr.bf16.mxu0 0
  %3938 = vmatpush1.bf16.msra.mxu0 0
  %3939 = vmatprep.subr.bf16.mxu0 0
  %3940 = vmatpush1.bf16.msra.mxu0 0
  %3941 = vmatprep.subr.bf16.mxu0 0
  %3942 = vmatpush1.bf16.msra.mxu0 0
  %3943 = vmatprep.subr.bf16.mxu0 0
  %3944 = vmatpush1.bf16.msra.mxu0 0
  %3945 = vmatprep.subr.bf16.mxu0 0
  %3946 = vmatpush1.bf16.msra.mxu0 0
  %3947 = vmatprep.subr.bf16.mxu0 0
  %3948 = vmatpush1.bf16.msra.mxu0 0
  %3949 = vmatprep.subr.bf16.mxu0 0
  %3950 = vmatpush1.bf16.msra.mxu0 0
  %3951 = vmatprep.subr.bf16.mxu0 0
  %3952 = vmatpush1.bf16.msra.mxu0 0
  %3953 = vmatprep.mubr.bf16.mxu0 0
  %3954 = vmatmul.mubr.bf16.gmra.mrb[0].mxu0 %v3837
  %v3955 = vpop.f32.mrb[0].mxu0
  %v3956 = vadd.f32 0.0, %v3955
  %v3957 = vpop.f32.mrb[0].mxu0
  %v3958 = vpop.f32.mrb[0].mxu0
  %v3959 = vadd.f32 0.0, %v3958
  %v3960 = vpop.f32.mrb[0].mxu0
  %3961 = vmatprep.mubr.bf16.mxu0 0
  %3962 = vmatmul.mubr.bf16.gmra.mrb[0].mxu0 %v3840
  %v3963 = vpop.f32.mrb[0].mxu0
  %v3964 = vadd.f32 0.0, %v3963
  %v3965 = vpop.f32.mrb[0].mxu0
  %v3966 = vpop.f32.mrb[0].mxu0
  %v3967 = vadd.f32 0.0, %v3966
  %v3968 = vpop.f32.mrb[0].mxu0
  %3969 = vmatprep.mubr.bf16.mxu0 0
  %3970 = vmatmul.mubr.bf16.gmra.mrb[0].mxu0 %v3843
  %v3971 = vpop.f32.mrb[0].mxu0
  %v3972 = vadd.f32 0.0, %v3971
  %v3973 = vpop.f32.mrb[0].mxu0
  %v3974 = vpop.f32.mrb[0].mxu0
  %v3975 = vadd.f32 0.0, %v3974
  %v3976 = vpop.f32.mrb[0].mxu0
  %3977 = vmatprep.mubr.bf16.mxu0 0
  %3978 = vmatmul.mubr.bf16.gmra.mrb[0].mxu0 %v3846
  %v3979 = vpop.f32.mrb[0].mxu0
  %v3980 = vadd.f32 0.0, %v3979
  %v3981 = vpop.f32.mrb[0].mxu0
  %v3982 = vpop.f32.mrb[0].mxu0
  %v3983 = vadd.f32 0.0, %v3982
  %v3984 = vpop.f32.mrb[0].mxu0
  %3985 = vdwg.mxu0
  %v3986 = vadd.f32 %v3754, %v3883
  %v3987 = vadd.f32 %v3755, %v3885
  %v3988 = vadd.f32 %v3756, %v3956
  %v3989 = vadd.f32 %v3757, %v3887
  %v3990 = vadd.f32 %v3758, %v3889
  %v3991 = vadd.f32 %v3759, %v3959
  %v3992 = vadd.f32 %v3760, %v3893
  %v3993 = vadd.f32 %v3761, %v3895
  %v3994 = vadd.f32 %v3762, %v3964
  %v3995 = vadd.f32 %v3763, %v3897
  %v3996 = vadd.f32 %v3764, %v3899
  %v3997 = vadd.f32 %v3765, %v3967
  %v3998 = vadd.f32 %v3766, %v3903
  %v3999 = vadd.f32 %v3767, %v3905
  %v4000 = vadd.f32 %v3768, %v3972
  %v4001 = vadd.f32 %v3769, %v3907
  %v4002 = vadd.f32 %v3770, %v3909
  %v4003 = vadd.f32 %v3771, %v3975
  %v4004 = vadd.f32 %v3772, %v3913
  %v4005 = vadd.f32 %v3773, %v3915
  %v4006 = vadd.f32 %v3774, %v3980
  %v4007 = vadd.f32 %v3775, %v3917
  %v4008 = vadd.f32 %v3776, %v3919
  %v4009 = vadd.f32 %v3777, %v3983
  %s4010 = scalar_lea.vmem %s3, 416
  %v4011 = vld [vmem:[%s4010] sm:$0xf]
  %v4012 = vld [vmem:[%s4010 + $0x4] sm:$0xf]
  %v4013 = vld [vmem:[%s4010 + $0x8] sm:$0xf]
  %v4014 = vld [vmem:[%s4010 + $0xc] sm:$0xf]
  %v4015 = vld [vmem:[%s4010 + $0x10] sm:$0xf]
  %v4016 = vld [vmem:[%s4010 + $0x14] sm:$0xf]
  %v4017 = vld [vmem:[%s4010 + $0x18] sm:$0xf]
  %v4018 = vld [vmem:[%s4010 + $0x1c] sm:$0xf]
  %v4027 = vunpack.c.l.b16 %v4011
  %v4028 = vunpack.c.l.b16 %v4012
  %v4029 = vunpack.c.l.b16 %v4013
  %v4030 = vunpack.c.l.b16 %v4014
  %v4031 = vunpack.c.l.b16 %v4015
  %v4032 = vunpack.c.l.b16 %v4016
  %v4033 = vunpack.c.l.b16 %v4017
  %v4034 = vunpack.c.l.b16 %v4018
  %v4035 = vpack.c.b16 %v4028, %v4027
  %v4036 = vpack.c.b16 %v4030, %v4029
  %v4037 = vpack.c.b16 %v4032, %v4031
  %v4038 = vpack.c.b16 %v4034, %v4033
  %4039 = vrot.lane.b32.xlu0 %v1058, 100
  %v4040 = vpop.permute.xlu0 %4039
  %4041 = vrot.lane.b32.xlu0 %v1059, 100
  %v4042 = vpop.permute.xlu0 %4041
  %4043 = vrot.lane.b32.xlu0 %v1060, 100
  %v4044 = vpop.permute.xlu0 %4043
  %4045 = vrot.lane.b32.xlu0 %v1061, 100
  %v4046 = vpop.permute.xlu0 %4045
  %4047 = vrot.lane.b32.xlu0 %v1062, 100
  %v4048 = vpop.permute.xlu0 %4047
  %4049 = vrot.lane.b32.xlu0 %v1063, 100
  %v4050 = vpop.permute.xlu0 %4049
  %4051 = vrot.lane.b32.xlu0 %v1064, 100
  %v4052 = vpop.permute.xlu0 %4051
  %4053 = vrot.lane.b32.xlu0 %v1065, 100
  %v4054 = vpop.permute.xlu0 %4053
  %vm4055 = vcmask 818176
  %v4056 = vsel %vm4055, %v4040, %v4042
  %v4057 = vsel %vm4055, %v4042, %v4044
  %v4058 = vsel %vm4055, %v4044, %v4046
  %v4059 = vsel %vm4055, %v4048, %v4050
  %v4060 = vsel %vm4055, %v4050, %v4052
  %v4061 = vsel %vm4055, %v4052, %v4054
  %v4069 = vsel %vm1139, %v4035, 0
  %v4072 = vsel %vm1139, %v4036, 0
  %v4075 = vsel %vm1139, %v4037, 0
  %v4078 = vsel %vm1139, %v4038, 0
  %4080 = vmatprep.subr.bf16.mxu0 %v4057
  %4081 = vmatpush1.bf16.msra.mxu0 %v4056
  %4082 = vmatprep.subr.bf16.mxu0 %v4060
  %4083 = vmatpush1.bf16.msra.mxu0 %v4059
  %4084 = vmatprep.subr.bf16.mxu0 0
  %4085 = vmatpush1.bf16.msra.mxu0 0
  %4086 = vmatprep.subr.bf16.mxu0 0
  %4087 = vmatpush1.bf16.msra.mxu0 0
  %4088 = vmatprep.subr.bf16.mxu0 0
  %4089 = vmatpush1.bf16.msra.mxu0 0
  %4090 = vmatprep.subr.bf16.mxu0 0
  %4091 = vmatpush1.bf16.msra.mxu0 0
  %4092 = vmatprep.subr.bf16.mxu0 0
  %4093 = vmatpush1.bf16.msra.mxu0 0
  %4094 = vmatprep.subr.bf16.mxu0 0
  %4095 = vmatpush1.bf16.msra.mxu0 0
  %4096 = vmatprep.subr.bf16.mxu0 0
  %4097 = vmatpush1.bf16.msra.mxu0 0
  %4098 = vmatprep.subr.bf16.mxu0 0
  %4099 = vmatpush1.bf16.msra.mxu0 0
  %4100 = vmatprep.subr.bf16.mxu0 0
  %4101 = vmatpush1.bf16.msra.mxu0 0
  %4102 = vmatprep.subr.bf16.mxu0 0
  %4103 = vmatpush1.bf16.msra.mxu0 0
  %4104 = vmatprep.subr.bf16.mxu0 0
  %4105 = vmatpush1.bf16.msra.mxu0 0
  %4106 = vmatprep.subr.bf16.mxu0 0
  %4107 = vmatpush1.bf16.msra.mxu0 0
  %4108 = vmatprep.subr.bf16.mxu0 0
  %4109 = vmatpush1.bf16.msra.mxu0 0
  %4110 = vmatprep.subr.bf16.mxu0 0
  %4111 = vmatpush1.bf16.msra.mxu0 0
  %4112 = vmatprep.mubr.bf16.mxu0 0
  %4113 = vmatmul.mubr.bf16.gmra.mrb[0].mxu0 %v4069
  %v4114 = vpop.f32.mrb[0].mxu0
  %v4115 = vadd.f32 0.0, %v4114
  %v4116 = vpop.f32.mrb[0].mxu0
  %v4117 = vadd.f32 0.0, %v4116
  %v4118 = vpop.f32.mrb[0].mxu0
  %v4119 = vadd.f32 0.0, %v4118
  %v4120 = vpop.f32.mrb[0].mxu0
  %v4121 = vadd.f32 0.0, %v4120
  %4122 = vmatprep.mubr.bf16.mxu0 0
  %4123 = vmatmul.mubr.bf16.gmra.mrb[0].mxu0 %v4072
  %v4124 = vpop.f32.mrb[0].mxu0
  %v4125 = vadd.f32 0.0, %v4124
  %v4126 = vpop.f32.mrb[0].mxu0
  %v4127 = vadd.f32 0.0, %v4126
  %v4128 = vpop.f32.mrb[0].mxu0
  %v4129 = vadd.f32 0.0, %v4128
  %v4130 = vpop.f32.mrb[0].mxu0
  %v4131 = vadd.f32 0.0, %v4130
  %4132 = vmatprep.mubr.bf16.mxu0 0
  %4133 = vmatmul.mubr.bf16.gmra.mrb[0].mxu0 %v4075
  %v4134 = vpop.f32.mrb[0].mxu0
  %v4135 = vadd.f32 0.0, %v4134
  %v4136 = vpop.f32.mrb[0].mxu0
  %v4137 = vadd.f32 0.0, %v4136
  %v4138 = vpop.f32.mrb[0].mxu0
  %v4139 = vadd.f32 0.0, %v4138
  %v4140 = vpop.f32.mrb[0].mxu0
  %v4141 = vadd.f32 0.0, %v4140
  %4142 = vmatprep.mubr.bf16.mxu0 0
  %4143 = vmatmul.mubr.bf16.gmra.mrb[0].mxu0 %v4078
  %v4144 = vpop.f32.mrb[0].mxu0
  %v4145 = vadd.f32 0.0, %v4144
  %v4146 = vpop.f32.mrb[0].mxu0
  %v4147 = vadd.f32 0.0, %v4146
  %v4148 = vpop.f32.mrb[0].mxu0
  %v4149 = vadd.f32 0.0, %v4148
  %v4150 = vpop.f32.mrb[0].mxu0
  %v4151 = vadd.f32 0.0, %v4150
  %4152 = vdwg.mxu0
  %4153 = vmatprep.subr.bf16.mxu0 0
  %4154 = vmatpush1.bf16.msra.mxu0 %v4058
  %4155 = vmatprep.subr.bf16.mxu0 0
  %4156 = vmatpush1.bf16.msra.mxu0 %v4061
  %4157 = vmatprep.subr.bf16.mxu0 0
  %4158 = vmatpush1.bf16.msra.mxu0 0
  %4159 = vmatprep.subr.bf16.mxu0 0
  %4160 = vmatpush1.bf16.msra.mxu0 0
  %4161 = vmatprep.subr.bf16.mxu0 0
  %4162 = vmatpush1.bf16.msra.mxu0 0
  %4163 = vmatprep.subr.bf16.mxu0 0
  %4164 = vmatpush1.bf16.msra.mxu0 0
  %4165 = vmatprep.subr.bf16.mxu0 0
  %4166 = vmatpush1.bf16.msra.mxu0 0
  %4167 = vmatprep.subr.bf16.mxu0 0
  %4168 = vmatpush1.bf16.msra.mxu0 0
  %4169 = vmatprep.subr.bf16.mxu0 0
  %4170 = vmatpush1.bf16.msra.mxu0 0
  %4171 = vmatprep.subr.bf16.mxu0 0
  %4172 = vmatpush1.bf16.msra.mxu0 0
  %4173 = vmatprep.subr.bf16.mxu0 0
  %4174 = vmatpush1.bf16.msra.mxu0 0
  %4175 = vmatprep.subr.bf16.mxu0 0
  %4176 = vmatpush1.bf16.msra.mxu0 0
  %4177 = vmatprep.subr.bf16.mxu0 0
  %4178 = vmatpush1.bf16.msra.mxu0 0
  %4179 = vmatprep.subr.bf16.mxu0 0
  %4180 = vmatpush1.bf16.msra.mxu0 0
  %4181 = vmatprep.subr.bf16.mxu0 0
  %4182 = vmatpush1.bf16.msra.mxu0 0
  %4183 = vmatprep.subr.bf16.mxu0 0
  %4184 = vmatpush1.bf16.msra.mxu0 0
  %4185 = vmatprep.mubr.bf16.mxu0 0
  %4186 = vmatmul.mubr.bf16.gmra.mrb[0].mxu0 %v4069
  %v4187 = vpop.f32.mrb[0].mxu0
  %v4188 = vadd.f32 0.0, %v4187
  %v4189 = vpop.f32.mrb[0].mxu0
  %v4190 = vpop.f32.mrb[0].mxu0
  %v4191 = vadd.f32 0.0, %v4190
  %v4192 = vpop.f32.mrb[0].mxu0
  %4193 = vmatprep.mubr.bf16.mxu0 0
  %4194 = vmatmul.mubr.bf16.gmra.mrb[0].mxu0 %v4072
  %v4195 = vpop.f32.mrb[0].mxu0
  %v4196 = vadd.f32 0.0, %v4195
  %v4197 = vpop.f32.mrb[0].mxu0
  %v4198 = vpop.f32.mrb[0].mxu0
  %v4199 = vadd.f32 0.0, %v4198
  %v4200 = vpop.f32.mrb[0].mxu0
  %4201 = vmatprep.mubr.bf16.mxu0 0
  %4202 = vmatmul.mubr.bf16.gmra.mrb[0].mxu0 %v4075
  %v4203 = vpop.f32.mrb[0].mxu0
  %v4204 = vadd.f32 0.0, %v4203
  %v4205 = vpop.f32.mrb[0].mxu0
  %v4206 = vpop.f32.mrb[0].mxu0
  %v4207 = vadd.f32 0.0, %v4206
  %v4208 = vpop.f32.mrb[0].mxu0
  %4209 = vmatprep.mubr.bf16.mxu0 0
  %4210 = vmatmul.mubr.bf16.gmra.mrb[0].mxu0 %v4078
  %v4211 = vpop.f32.mrb[0].mxu0
  %v4212 = vadd.f32 0.0, %v4211
  %v4213 = vpop.f32.mrb[0].mxu0
  %v4214 = vpop.f32.mrb[0].mxu0
  %v4215 = vadd.f32 0.0, %v4214
  %v4216 = vpop.f32.mrb[0].mxu0
  %4217 = vdwg.mxu0
  %v4218 = vadd.f32 %v3986, %v4115
  %v4219 = vadd.f32 %v3987, %v4117
  %v4220 = vadd.f32 %v3988, %v4188
  %v4221 = vadd.f32 %v3989, %v4119
  %v4222 = vadd.f32 %v3990, %v4121
  %v4223 = vadd.f32 %v3991, %v4191
  %v4224 = vadd.f32 %v3992, %v4125
  %v4225 = vadd.f32 %v3993, %v4127
  %v4226 = vadd.f32 %v3994, %v4196
  %v4227 = vadd.f32 %v3995, %v4129
  %v4228 = vadd.f32 %v3996, %v4131
  %v4229 = vadd.f32 %v3997, %v4199
  %v4230 = vadd.f32 %v3998, %v4135
  %v4231 = vadd.f32 %v3999, %v4137
  %v4232 = vadd.f32 %v4000, %v4204
  %v4233 = vadd.f32 %v4001, %v4139
  %v4234 = vadd.f32 %v4002, %v4141
  %v4235 = vadd.f32 %v4003, %v4207
  %v4236 = vadd.f32 %v4004, %v4145
  %v4237 = vadd.f32 %v4005, %v4147
  %v4238 = vadd.f32 %v4006, %v4212
  %v4239 = vadd.f32 %v4007, %v4149
  %v4240 = vadd.f32 %v4008, %v4151
  %v4241 = vadd.f32 %v4009, %v4215
  %s4242 = scalar_lea.vmem %s3, 448
  %v4243 = vld [vmem:[%s4242] sm:$0xf]
  %v4244 = vld [vmem:[%s4242 + $0x4] sm:$0xf]
  %v4245 = vld [vmem:[%s4242 + $0x8] sm:$0xf]
  %v4246 = vld [vmem:[%s4242 + $0xc] sm:$0xf]
  %v4247 = vld [vmem:[%s4242 + $0x10] sm:$0xf]
  %v4248 = vld [vmem:[%s4242 + $0x14] sm:$0xf]
  %v4249 = vld [vmem:[%s4242 + $0x18] sm:$0xf]
  %v4250 = vld [vmem:[%s4242 + $0x1c] sm:$0xf]
  %v4259 = vunpack.c.l.b16 %v4243
  %v4260 = vunpack.c.l.b16 %v4244
  %v4261 = vunpack.c.l.b16 %v4245
  %v4262 = vunpack.c.l.b16 %v4246
  %v4263 = vunpack.c.l.b16 %v4247
  %v4264 = vunpack.c.l.b16 %v4248
  %v4265 = vunpack.c.l.b16 %v4249
  %v4266 = vunpack.c.l.b16 %v4250
  %v4267 = vpack.c.b16 %v4260, %v4259
  %v4268 = vpack.c.b16 %v4262, %v4261
  %v4269 = vpack.c.b16 %v4264, %v4263
  %v4270 = vpack.c.b16 %v4266, %v4265
  %4271 = vrot.lane.b32.xlu0 %v1058, 99
  %v4272 = vpop.permute.xlu0 %4271
  %4273 = vrot.lane.b32.xlu0 %v1059, 99
  %v4274 = vpop.permute.xlu0 %4273
  %4275 = vrot.lane.b32.xlu0 %v1060, 99
  %v4276 = vpop.permute.xlu0 %4275
  %4277 = vrot.lane.b32.xlu0 %v1061, 99
  %v4278 = vpop.permute.xlu0 %4277
  %4279 = vrot.lane.b32.xlu0 %v1062, 99
  %v4280 = vpop.permute.xlu0 %4279
  %4281 = vrot.lane.b32.xlu0 %v1063, 99
  %v4282 = vpop.permute.xlu0 %4281
  %4283 = vrot.lane.b32.xlu0 %v1064, 99
  %v4284 = vpop.permute.xlu0 %4283
  %4285 = vrot.lane.b32.xlu0 %v1065, 99
  %v4286 = vpop.permute.xlu0 %4285
  %vm4287 = vcmask 809984
  %v4288 = vsel %vm4287, %v4272, %v4274
  %v4289 = vsel %vm4287, %v4274, %v4276
  %v4290 = vsel %vm4287, %v4276, %v4278
  %v4291 = vsel %vm4287, %v4280, %v4282
  %v4292 = vsel %vm4287, %v4282, %v4284
  %v4293 = vsel %vm4287, %v4284, %v4286
  %v4301 = vsel %vm1139, %v4267, 0
  %v4304 = vsel %vm1139, %v4268, 0
  %v4307 = vsel %vm1139, %v4269, 0
  %v4310 = vsel %vm1139, %v4270, 0
  %4312 = vmatprep.subr.bf16.mxu0 %v4289
  %4313 = vmatpush1.bf16.msra.mxu0 %v4288
  %4314 = vmatprep.subr.bf16.mxu0 %v4292
  %4315 = vmatpush1.bf16.msra.mxu0 %v4291
  %4316 = vmatprep.subr.bf16.mxu0 0
  %4317 = vmatpush1.bf16.msra.mxu0 0
  %4318 = vmatprep.subr.bf16.mxu0 0
  %4319 = vmatpush1.bf16.msra.mxu0 0
  %4320 = vmatprep.subr.bf16.mxu0 0
  %4321 = vmatpush1.bf16.msra.mxu0 0
  %4322 = vmatprep.subr.bf16.mxu0 0
  %4323 = vmatpush1.bf16.msra.mxu0 0
  %4324 = vmatprep.subr.bf16.mxu0 0
  %4325 = vmatpush1.bf16.msra.mxu0 0
  %4326 = vmatprep.subr.bf16.mxu0 0
  %4327 = vmatpush1.bf16.msra.mxu0 0
  %4328 = vmatprep.subr.bf16.mxu0 0
  %4329 = vmatpush1.bf16.msra.mxu0 0
  %4330 = vmatprep.subr.bf16.mxu0 0
  %4331 = vmatpush1.bf16.msra.mxu0 0
  %4332 = vmatprep.subr.bf16.mxu0 0
  %4333 = vmatpush1.bf16.msra.mxu0 0
  %4334 = vmatprep.subr.bf16.mxu0 0
  %4335 = vmatpush1.bf16.msra.mxu0 0
  %4336 = vmatprep.subr.bf16.mxu0 0
  %4337 = vmatpush1.bf16.msra.mxu0 0
  %4338 = vmatprep.subr.bf16.mxu0 0
  %4339 = vmatpush1.bf16.msra.mxu0 0
  %4340 = vmatprep.subr.bf16.mxu0 0
  %4341 = vmatpush1.bf16.msra.mxu0 0
  %4342 = vmatprep.subr.bf16.mxu0 0
  %4343 = vmatpush1.bf16.msra.mxu0 0
  %4344 = vmatprep.mubr.bf16.mxu0 0
  %4345 = vmatmul.mubr.bf16.gmra.mrb[0].mxu0 %v4301
  %v4346 = vpop.f32.mrb[0].mxu0
  %v4347 = vadd.f32 0.0, %v4346
  %v4348 = vpop.f32.mrb[0].mxu0
  %v4349 = vadd.f32 0.0, %v4348
  %v4350 = vpop.f32.mrb[0].mxu0
  %v4351 = vadd.f32 0.0, %v4350
  %v4352 = vpop.f32.mrb[0].mxu0
  %v4353 = vadd.f32 0.0, %v4352
  %4354 = vmatprep.mubr.bf16.mxu0 0
  %4355 = vmatmul.mubr.bf16.gmra.mrb[0].mxu0 %v4304
  %v4356 = vpop.f32.mrb[0].mxu0
  %v4357 = vadd.f32 0.0, %v4356
  %v4358 = vpop.f32.mrb[0].mxu0
  %v4359 = vadd.f32 0.0, %v4358
  %v4360 = vpop.f32.mrb[0].mxu0
  %v4361 = vadd.f32 0.0, %v4360
  %v4362 = vpop.f32.mrb[0].mxu0
  %v4363 = vadd.f32 0.0, %v4362
  %4364 = vmatprep.mubr.bf16.mxu0 0
  %4365 = vmatmul.mubr.bf16.gmra.mrb[0].mxu0 %v4307
  %v4366 = vpop.f32.mrb[0].mxu0
  %v4367 = vadd.f32 0.0, %v4366
  %v4368 = vpop.f32.mrb[0].mxu0
  %v4369 = vadd.f32 0.0, %v4368
  %v4370 = vpop.f32.mrb[0].mxu0
  %v4371 = vadd.f32 0.0, %v4370
  %v4372 = vpop.f32.mrb[0].mxu0
  %v4373 = vadd.f32 0.0, %v4372
  %4374 = vmatprep.mubr.bf16.mxu0 0
  %4375 = vmatmul.mubr.bf16.gmra.mrb[0].mxu0 %v4310
  %v4376 = vpop.f32.mrb[0].mxu0
  %v4377 = vadd.f32 0.0, %v4376
  %v4378 = vpop.f32.mrb[0].mxu0
  %v4379 = vadd.f32 0.0, %v4378
  %v4380 = vpop.f32.mrb[0].mxu0
  %v4381 = vadd.f32 0.0, %v4380
  %v4382 = vpop.f32.mrb[0].mxu0
  %v4383 = vadd.f32 0.0, %v4382
  %4384 = vdwg.mxu0
  %4385 = vmatprep.subr.bf16.mxu0 0
  %4386 = vmatpush1.bf16.msra.mxu0 %v4290
  %4387 = vmatprep.subr.bf16.mxu0 0
  %4388 = vmatpush1.bf16.msra.mxu0 %v4293
  %4389 = vmatprep.subr.bf16.mxu0 0
  %4390 = vmatpush1.bf16.msra.mxu0 0
  %4391 = vmatprep.subr.bf16.mxu0 0
  %4392 = vmatpush1.bf16.msra.mxu0 0
  %4393 = vmatprep.subr.bf16.mxu0 0
  %4394 = vmatpush1.bf16.msra.mxu0 0
  %4395 = vmatprep.subr.bf16.mxu0 0
  %4396 = vmatpush1.bf16.msra.mxu0 0
  %4397 = vmatprep.subr.bf16.mxu0 0
  %4398 = vmatpush1.bf16.msra.mxu0 0
  %4399 = vmatprep.subr.bf16.mxu0 0
  %4400 = vmatpush1.bf16.msra.mxu0 0
  %4401 = vmatprep.subr.bf16.mxu0 0
  %4402 = vmatpush1.bf16.msra.mxu0 0
  %4403 = vmatprep.subr.bf16.mxu0 0
  %4404 = vmatpush1.bf16.msra.mxu0 0
  %4405 = vmatprep.subr.bf16.mxu0 0
  %4406 = vmatpush1.bf16.msra.mxu0 0
  %4407 = vmatprep.subr.bf16.mxu0 0
  %4408 = vmatpush1.bf16.msra.mxu0 0
  %4409 = vmatprep.subr.bf16.mxu0 0
  %4410 = vmatpush1.bf16.msra.mxu0 0
  %4411 = vmatprep.subr.bf16.mxu0 0
  %4412 = vmatpush1.bf16.msra.mxu0 0
  %4413 = vmatprep.subr.bf16.mxu0 0
  %4414 = vmatpush1.bf16.msra.mxu0 0
  %4415 = vmatprep.subr.bf16.mxu0 0
  %4416 = vmatpush1.bf16.msra.mxu0 0
  %4417 = vmatprep.mubr.bf16.mxu0 0
  %4418 = vmatmul.mubr.bf16.gmra.mrb[0].mxu0 %v4301
  %v4419 = vpop.f32.mrb[0].mxu0
  %v4420 = vadd.f32 0.0, %v4419
  %v4421 = vpop.f32.mrb[0].mxu0
  %v4422 = vpop.f32.mrb[0].mxu0
  %v4423 = vadd.f32 0.0, %v4422
  %v4424 = vpop.f32.mrb[0].mxu0
  %4425 = vmatprep.mubr.bf16.mxu0 0
  %4426 = vmatmul.mubr.bf16.gmra.mrb[0].mxu0 %v4304
  %v4427 = vpop.f32.mrb[0].mxu0
  %v4428 = vadd.f32 0.0, %v4427
  %v4429 = vpop.f32.mrb[0].mxu0
  %v4430 = vpop.f32.mrb[0].mxu0
  %v4431 = vadd.f32 0.0, %v4430
  %v4432 = vpop.f32.mrb[0].mxu0
  %4433 = vmatprep.mubr.bf16.mxu0 0
  %4434 = vmatmul.mubr.bf16.gmra.mrb[0].mxu0 %v4307
  %v4435 = vpop.f32.mrb[0].mxu0
  %v4436 = vadd.f32 0.0, %v4435
  %v4437 = vpop.f32.mrb[0].mxu0
  %v4438 = vpop.f32.mrb[0].mxu0
  %v4439 = vadd.f32 0.0, %v4438
  %v4440 = vpop.f32.mrb[0].mxu0
  %4441 = vmatprep.mubr.bf16.mxu0 0
  %4442 = vmatmul.mubr.bf16.gmra.mrb[0].mxu0 %v4310
  %v4443 = vpop.f32.mrb[0].mxu0
  %v4444 = vadd.f32 0.0, %v4443
  %v4445 = vpop.f32.mrb[0].mxu0
  %v4446 = vpop.f32.mrb[0].mxu0
  %v4447 = vadd.f32 0.0, %v4446
  %v4448 = vpop.f32.mrb[0].mxu0
  %4449 = vdwg.mxu0
  %v4450 = vadd.f32 %v4218, %v4347
  %v4451 = vadd.f32 %v4219, %v4349
  %v4452 = vadd.f32 %v4220, %v4420
  %v4453 = vadd.f32 %v4221, %v4351
  %v4454 = vadd.f32 %v4222, %v4353
  %v4455 = vadd.f32 %v4223, %v4423
  %v4456 = vadd.f32 %v4224, %v4357
  %v4457 = vadd.f32 %v4225, %v4359
  %v4458 = vadd.f32 %v4226, %v4428
  %v4459 = vadd.f32 %v4227, %v4361
  %v4460 = vadd.f32 %v4228, %v4363
  %v4461 = vadd.f32 %v4229, %v4431
  %v4462 = vadd.f32 %v4230, %v4367
  %v4463 = vadd.f32 %v4231, %v4369
  %v4464 = vadd.f32 %v4232, %v4436
  %v4465 = vadd.f32 %v4233, %v4371
  %v4466 = vadd.f32 %v4234, %v4373
  %v4467 = vadd.f32 %v4235, %v4439
  %v4468 = vadd.f32 %v4236, %v4377
  %v4469 = vadd.f32 %v4237, %v4379
  %v4470 = vadd.f32 %v4238, %v4444
  %v4471 = vadd.f32 %v4239, %v4381
  %v4472 = vadd.f32 %v4240, %v4383
  %v4473 = vadd.f32 %v4241, %v4447
  %s4474 = scalar_lea.vmem %s3, 480
  %v4475 = vld [vmem:[%s4474] sm:$0xf]
  %v4476 = vld [vmem:[%s4474 + $0x4] sm:$0xf]
  %v4477 = vld [vmem:[%s4474 + $0x8] sm:$0xf]
  %v4478 = vld [vmem:[%s4474 + $0xc] sm:$0xf]
  %v4479 = vld [vmem:[%s4474 + $0x10] sm:$0xf]
  %v4480 = vld [vmem:[%s4474 + $0x14] sm:$0xf]
  %v4481 = vld [vmem:[%s4474 + $0x18] sm:$0xf]
  %v4482 = vld [vmem:[%s4474 + $0x1c] sm:$0xf]
  %v4491 = vunpack.c.l.b16 %v4475
  %v4492 = vunpack.c.l.b16 %v4476
  %v4493 = vunpack.c.l.b16 %v4477
  %v4494 = vunpack.c.l.b16 %v4478
  %v4495 = vunpack.c.l.b16 %v4479
  %v4496 = vunpack.c.l.b16 %v4480
  %v4497 = vunpack.c.l.b16 %v4481
  %v4498 = vunpack.c.l.b16 %v4482
  %v4499 = vpack.c.b16 %v4492, %v4491
  %v4500 = vpack.c.b16 %v4494, %v4493
  %v4501 = vpack.c.b16 %v4496, %v4495
  %v4502 = vpack.c.b16 %v4498, %v4497
  %4503 = vrot.lane.b32.xlu0 %v1058, 98
  %v4504 = vpop.permute.xlu0 %4503
  %4505 = vrot.lane.b32.xlu0 %v1059, 98
  %v4506 = vpop.permute.xlu0 %4505
  %4507 = vrot.lane.b32.xlu0 %v1060, 98
  %v4508 = vpop.permute.xlu0 %4507
  %4509 = vrot.lane.b32.xlu0 %v1061, 98
  %v4510 = vpop.permute.xlu0 %4509
  %4511 = vrot.lane.b32.xlu0 %v1062, 98
  %v4512 = vpop.permute.xlu0 %4511
  %4513 = vrot.lane.b32.xlu0 %v1063, 98
  %v4514 = vpop.permute.xlu0 %4513
  %4515 = vrot.lane.b32.xlu0 %v1064, 98
  %v4516 = vpop.permute.xlu0 %4515
  %4517 = vrot.lane.b32.xlu0 %v1065, 98
  %v4518 = vpop.permute.xlu0 %4517
  %vm4519 = vcmask 801792
  %v4520 = vsel %vm4519, %v4504, %v4506
  %v4521 = vsel %vm4519, %v4506, %v4508
  %v4522 = vsel %vm4519, %v4508, %v4510
  %v4523 = vsel %vm4519, %v4512, %v4514
  %v4524 = vsel %vm4519, %v4514, %v4516
  %v4525 = vsel %vm4519, %v4516, %v4518
  %v4533 = vsel %vm1139, %v4499, 0
  %v4536 = vsel %vm1139, %v4500, 0
  %v4539 = vsel %vm1139, %v4501, 0
  %v4542 = vsel %vm1139, %v4502, 0
  %4544 = vmatprep.subr.bf16.mxu0 %v4521
  %4545 = vmatpush1.bf16.msra.mxu0 %v4520
  %4546 = vmatprep.subr.bf16.mxu0 %v4524
  %4547 = vmatpush1.bf16.msra.mxu0 %v4523
  %4548 = vmatprep.subr.bf16.mxu0 0
  %4549 = vmatpush1.bf16.msra.mxu0 0
  %4550 = vmatprep.subr.bf16.mxu0 0
  %4551 = vmatpush1.bf16.msra.mxu0 0
  %4552 = vmatprep.subr.bf16.mxu0 0
  %4553 = vmatpush1.bf16.msra.mxu0 0
  %4554 = vmatprep.subr.bf16.mxu0 0
  %4555 = vmatpush1.bf16.msra.mxu0 0
  %4556 = vmatprep.subr.bf16.mxu0 0
  %4557 = vmatpush1.bf16.msra.mxu0 0
  %4558 = vmatprep.subr.bf16.mxu0 0
  %4559 = vmatpush1.bf16.msra.mxu0 0
  %4560 = vmatprep.subr.bf16.mxu0 0
  %4561 = vmatpush1.bf16.msra.mxu0 0
  %4562 = vmatprep.subr.bf16.mxu0 0
  %4563 = vmatpush1.bf16.msra.mxu0 0
  %4564 = vmatprep.subr.bf16.mxu0 0
  %4565 = vmatpush1.bf16.msra.mxu0 0
  %4566 = vmatprep.subr.bf16.mxu0 0
  %4567 = vmatpush1.bf16.msra.mxu0 0
  %4568 = vmatprep.subr.bf16.mxu0 0
  %4569 = vmatpush1.bf16.msra.mxu0 0
  %4570 = vmatprep.subr.bf16.mxu0 0
  %4571 = vmatpush1.bf16.msra.mxu0 0
  %4572 = vmatprep.subr.bf16.mxu0 0
  %4573 = vmatpush1.bf16.msra.mxu0 0
  %4574 = vmatprep.subr.bf16.mxu0 0
  %4575 = vmatpush1.bf16.msra.mxu0 0
  %4576 = vmatprep.mubr.bf16.mxu0 0
  %4577 = vmatmul.mubr.bf16.gmra.mrb[0].mxu0 %v4533
  %v4578 = vpop.f32.mrb[0].mxu0
  %v4579 = vadd.f32 0.0, %v4578
  %v4580 = vpop.f32.mrb[0].mxu0
  %v4581 = vadd.f32 0.0, %v4580
  %v4582 = vpop.f32.mrb[0].mxu0
  %v4583 = vadd.f32 0.0, %v4582
  %v4584 = vpop.f32.mrb[0].mxu0
  %v4585 = vadd.f32 0.0, %v4584
  %4586 = vmatprep.mubr.bf16.mxu0 0
  %4587 = vmatmul.mubr.bf16.gmra.mrb[0].mxu0 %v4536
  %v4588 = vpop.f32.mrb[0].mxu0
  %v4589 = vadd.f32 0.0, %v4588
  %v4590 = vpop.f32.mrb[0].mxu0
  %v4591 = vadd.f32 0.0, %v4590
  %v4592 = vpop.f32.mrb[0].mxu0
  %v4593 = vadd.f32 0.0, %v4592
  %v4594 = vpop.f32.mrb[0].mxu0
  %v4595 = vadd.f32 0.0, %v4594
  %4596 = vmatprep.mubr.bf16.mxu0 0
  %4597 = vmatmul.mubr.bf16.gmra.mrb[0].mxu0 %v4539
  %v4598 = vpop.f32.mrb[0].mxu0
  %v4599 = vadd.f32 0.0, %v4598
  %v4600 = vpop.f32.mrb[0].mxu0
  %v4601 = vadd.f32 0.0, %v4600
  %v4602 = vpop.f32.mrb[0].mxu0
  %v4603 = vadd.f32 0.0, %v4602
  %v4604 = vpop.f32.mrb[0].mxu0
  %v4605 = vadd.f32 0.0, %v4604
  %4606 = vmatprep.mubr.bf16.mxu0 0
  %4607 = vmatmul.mubr.bf16.gmra.mrb[0].mxu0 %v4542
  %v4608 = vpop.f32.mrb[0].mxu0
  %v4609 = vadd.f32 0.0, %v4608
  %v4610 = vpop.f32.mrb[0].mxu0
  %v4611 = vadd.f32 0.0, %v4610
  %v4612 = vpop.f32.mrb[0].mxu0
  %v4613 = vadd.f32 0.0, %v4612
  %v4614 = vpop.f32.mrb[0].mxu0
  %v4615 = vadd.f32 0.0, %v4614
  %4616 = vdwg.mxu0
  %4617 = vmatprep.subr.bf16.mxu0 0
  %4618 = vmatpush1.bf16.msra.mxu0 %v4522
  %4619 = vmatprep.subr.bf16.mxu0 0
  %4620 = vmatpush1.bf16.msra.mxu0 %v4525
  %4621 = vmatprep.subr.bf16.mxu0 0
  %4622 = vmatpush1.bf16.msra.mxu0 0
  %4623 = vmatprep.subr.bf16.mxu0 0
  %4624 = vmatpush1.bf16.msra.mxu0 0
  %4625 = vmatprep.subr.bf16.mxu0 0
  %4626 = vmatpush1.bf16.msra.mxu0 0
  %4627 = vmatprep.subr.bf16.mxu0 0
  %4628 = vmatpush1.bf16.msra.mxu0 0
  %4629 = vmatprep.subr.bf16.mxu0 0
  %4630 = vmatpush1.bf16.msra.mxu0 0
  %4631 = vmatprep.subr.bf16.mxu0 0
  %4632 = vmatpush1.bf16.msra.mxu0 0
  %4633 = vmatprep.subr.bf16.mxu0 0
  %4634 = vmatpush1.bf16.msra.mxu0 0
  %4635 = vmatprep.subr.bf16.mxu0 0
  %4636 = vmatpush1.bf16.msra.mxu0 0
  %4637 = vmatprep.subr.bf16.mxu0 0
  %4638 = vmatpush1.bf16.msra.mxu0 0
  %4639 = vmatprep.subr.bf16.mxu0 0
  %4640 = vmatpush1.bf16.msra.mxu0 0
  %4641 = vmatprep.subr.bf16.mxu0 0
  %4642 = vmatpush1.bf16.msra.mxu0 0
  %4643 = vmatprep.subr.bf16.mxu0 0
  %4644 = vmatpush1.bf16.msra.mxu0 0
  %4645 = vmatprep.subr.bf16.mxu0 0
  %4646 = vmatpush1.bf16.msra.mxu0 0
  %4647 = vmatprep.subr.bf16.mxu0 0
  %4648 = vmatpush1.bf16.msra.mxu0 0
  %4649 = vmatprep.mubr.bf16.mxu0 0
  %4650 = vmatmul.mubr.bf16.gmra.mrb[0].mxu0 %v4533
  %v4651 = vpop.f32.mrb[0].mxu0
  %v4652 = vadd.f32 0.0, %v4651
  %v4653 = vpop.f32.mrb[0].mxu0
  %v4654 = vpop.f32.mrb[0].mxu0
  %v4655 = vadd.f32 0.0, %v4654
  %v4656 = vpop.f32.mrb[0].mxu0
  %4657 = vmatprep.mubr.bf16.mxu0 0
  %4658 = vmatmul.mubr.bf16.gmra.mrb[0].mxu0 %v4536
  %v4659 = vpop.f32.mrb[0].mxu0
  %v4660 = vadd.f32 0.0, %v4659
  %v4661 = vpop.f32.mrb[0].mxu0
  %v4662 = vpop.f32.mrb[0].mxu0
  %v4663 = vadd.f32 0.0, %v4662
  %v4664 = vpop.f32.mrb[0].mxu0
  %4665 = vmatprep.mubr.bf16.mxu0 0
  %4666 = vmatmul.mubr.bf16.gmra.mrb[0].mxu0 %v4539
  %v4667 = vpop.f32.mrb[0].mxu0
  %v4668 = vadd.f32 0.0, %v4667
  %v4669 = vpop.f32.mrb[0].mxu0
  %v4670 = vpop.f32.mrb[0].mxu0
  %v4671 = vadd.f32 0.0, %v4670
  %v4672 = vpop.f32.mrb[0].mxu0
  %4673 = vmatprep.mubr.bf16.mxu0 0
  %4674 = vmatmul.mubr.bf16.gmra.mrb[0].mxu0 %v4542
  %v4675 = vpop.f32.mrb[0].mxu0
  %v4676 = vadd.f32 0.0, %v4675
  %v4677 = vpop.f32.mrb[0].mxu0
  %v4678 = vpop.f32.mrb[0].mxu0
  %v4679 = vadd.f32 0.0, %v4678
  %v4680 = vpop.f32.mrb[0].mxu0
  %4681 = vdwg.mxu0
  %v4682 = vadd.f32 %v4450, %v4579
  %v4683 = vadd.f32 %v4451, %v4581
  %v4684 = vadd.f32 %v4452, %v4652
  %v4685 = vadd.f32 %v4453, %v4583
  %v4686 = vadd.f32 %v4454, %v4585
  %v4687 = vadd.f32 %v4455, %v4655
  %v4688 = vadd.f32 %v4456, %v4589
  %v4689 = vadd.f32 %v4457, %v4591
  %v4690 = vadd.f32 %v4458, %v4660
  %v4691 = vadd.f32 %v4459, %v4593
  %v4692 = vadd.f32 %v4460, %v4595
  %v4693 = vadd.f32 %v4461, %v4663
  %v4694 = vadd.f32 %v4462, %v4599
  %v4695 = vadd.f32 %v4463, %v4601
  %v4696 = vadd.f32 %v4464, %v4668
  %v4697 = vadd.f32 %v4465, %v4603
  %v4698 = vadd.f32 %v4466, %v4605
  %v4699 = vadd.f32 %v4467, %v4671
  %v4700 = vadd.f32 %v4468, %v4609
  %v4701 = vadd.f32 %v4469, %v4611
  %v4702 = vadd.f32 %v4470, %v4676
  %v4703 = vadd.f32 %v4471, %v4613
  %v4704 = vadd.f32 %v4472, %v4615
  %v4705 = vadd.f32 %v4473, %v4679
  %v4706 = vld [vmem:[%s4] sm:$0xff]
  %v4707 = vld [vmem:[%s4 + $0x8] sm:$0xff]
  %v4708 = vld [vmem:[%s4 + $0x10] sm:$0xff]
  %v4709 = vld [vmem:[%s4 + $0x18] sm:$0xff]
  %v4710 = vld [vmem:[%s4 + $0x20] sm:$0xff]
  %v4711 = vld [vmem:[%s4 + $0x28] sm:$0xff]
  %v4712 = vld [vmem:[%s4 + $0x30] sm:$0xff]
  %v4713 = vld [vmem:[%s4 + $0x38] sm:$0xff]
  %4715 = vset.pattern.permute.xlu0 0
  %4716 = vperm.xlu0 %4715, %v4706
  %v4717 = vpop.permute.xlu0 %4716
  %4720 = vset.pattern.permute.xlu0 0
  %4721 = vperm.xlu0 %4720, %v4707
  %v4722 = vpop.permute.xlu0 %4721
  %4725 = vset.pattern.permute.xlu0 0
  %4726 = vperm.xlu0 %4725, %v4708
  %v4727 = vpop.permute.xlu0 %4726
  %4730 = vset.pattern.permute.xlu0 0
  %4731 = vperm.xlu0 %4730, %v4709
  %v4732 = vpop.permute.xlu0 %4731
  %4735 = vset.pattern.permute.xlu0 0
  %4736 = vperm.xlu0 %4735, %v4710
  %v4737 = vpop.permute.xlu0 %4736
  %4740 = vset.pattern.permute.xlu0 0
  %4741 = vperm.xlu0 %4740, %v4711
  %v4742 = vpop.permute.xlu0 %4741
  %4745 = vset.pattern.permute.xlu0 0
  %4746 = vperm.xlu0 %4745, %v4712
  %v4747 = vpop.permute.xlu0 %4746
  %4750 = vset.pattern.permute.xlu0 0
  %4751 = vperm.xlu0 %4750, %v4713
  %v4752 = vpop.permute.xlu0 %4751
  %v4754 = vadd.f32 %v4682, %v4717
  %v4755 = vadd.f32 %v4683, %v4717
  %v4756 = vadd.f32 %v4684, %v4717
  %v4757 = vadd.f32 %v4685, %v4722
  %v4758 = vadd.f32 %v4686, %v4722
  %v4759 = vadd.f32 %v4687, %v4722
  %v4760 = vadd.f32 %v4688, %v4727
  %v4761 = vadd.f32 %v4689, %v4727
  %v4762 = vadd.f32 %v4690, %v4727
  %v4763 = vadd.f32 %v4691, %v4732
  %v4764 = vadd.f32 %v4692, %v4732
  %v4765 = vadd.f32 %v4693, %v4732
  %v4766 = vadd.f32 %v4694, %v4737
  %v4767 = vadd.f32 %v4695, %v4737
  %v4768 = vadd.f32 %v4696, %v4737
  %v4769 = vadd.f32 %v4697, %v4742
  %v4770 = vadd.f32 %v4698, %v4742
  %v4771 = vadd.f32 %v4699, %v4742
  %v4772 = vadd.f32 %v4700, %v4747
  %v4773 = vadd.f32 %v4701, %v4747
  %v4774 = vadd.f32 %v4702, %v4747
  %v4775 = vadd.f32 %v4703, %v4752
  %v4776 = vadd.f32 %v4704, %v4752
  %v4777 = vadd.f32 %v4705, %v4752
  %v4778 = vmax.f32 %v4754, 0.0
  %v4779 = vmax.f32 %v4755, 0.0
  %v4780 = vmax.f32 %v4756, 0.0
  %v4781 = vmax.f32 %v4757, 0.0
  %v4782 = vmax.f32 %v4758, 0.0
  %v4783 = vmax.f32 %v4759, 0.0
  %v4784 = vmax.f32 %v4760, 0.0
  %v4785 = vmax.f32 %v4761, 0.0
  %v4786 = vmax.f32 %v4762, 0.0
  %v4787 = vmax.f32 %v4763, 0.0
  %v4788 = vmax.f32 %v4764, 0.0
  %v4789 = vmax.f32 %v4765, 0.0
  %v4790 = vmax.f32 %v4766, 0.0
  %v4791 = vmax.f32 %v4767, 0.0
  %v4792 = vmax.f32 %v4768, 0.0
  %v4793 = vmax.f32 %v4769, 0.0
  %v4794 = vmax.f32 %v4770, 0.0
  %v4795 = vmax.f32 %v4771, 0.0
  %v4796 = vmax.f32 %v4772, 0.0
  %v4797 = vmax.f32 %v4773, 0.0
  %v4798 = vmax.f32 %v4774, 0.0
  %v4799 = vmax.f32 %v4775, 0.0
  %v4800 = vmax.f32 %v4776, 0.0
  %v4801 = vmax.f32 %v4777, 0.0
  %v4802 = vpack.c.bf16 %v4781, %v4778
  %v4803 = vpack.c.bf16 %v4782, %v4779
  %v4804 = vpack.c.bf16 %v4783, %v4780
  %v4805 = vpack.c.bf16 %v4787, %v4784
  %v4806 = vpack.c.bf16 %v4788, %v4785
  %v4807 = vpack.c.bf16 %v4789, %v4786
  %v4808 = vpack.c.bf16 %v4793, %v4790
  %v4809 = vpack.c.bf16 %v4794, %v4791
  %v4810 = vpack.c.bf16 %v4795, %v4792
  %v4811 = vpack.c.bf16 %v4799, %v4796
  %v4812 = vpack.c.bf16 %v4800, %v4797
  %v4813 = vpack.c.bf16 %v4801, %v4798
  %v4814 = vld [vmem:[%s5] sm:$0xf]
  %v4815 = vld [vmem:[%s5 + $0x4] sm:$0xf]
  %v4816 = vld [vmem:[%s5 + $0x8] sm:$0xf]
  %v4817 = vld [vmem:[%s5 + $0xc] sm:$0xf]
  %v4818 = vld [vmem:[%s5 + $0x10] sm:$0xf]
  %v4819 = vld [vmem:[%s5 + $0x14] sm:$0xf]
  %v4820 = vld [vmem:[%s5 + $0x18] sm:$0xf]
  %v4821 = vld [vmem:[%s5 + $0x1c] sm:$0xf]
  %s4822 = scalar_lea.vmem %s5, 32
  %v4823 = vld [vmem:[%s4822] sm:$0xf]
  %v4824 = vld [vmem:[%s4822 + $0x4] sm:$0xf]
  %v4825 = vld [vmem:[%s4822 + $0x8] sm:$0xf]
  %v4826 = vld [vmem:[%s4822 + $0xc] sm:$0xf]
  %v4827 = vld [vmem:[%s4822 + $0x10] sm:$0xf]
  %v4828 = vld [vmem:[%s4822 + $0x14] sm:$0xf]
  %v4829 = vld [vmem:[%s4822 + $0x18] sm:$0xf]
  %v4830 = vld [vmem:[%s4822 + $0x1c] sm:$0xf]
  %v4839 = vunpack.c.l.b16 %v4823
  %v4840 = vunpack.c.l.b16 %v4824
  %v4841 = vunpack.c.l.b16 %v4825
  %v4842 = vunpack.c.l.b16 %v4826
  %v4843 = vunpack.c.l.b16 %v4827
  %v4844 = vunpack.c.l.b16 %v4828
  %v4845 = vunpack.c.l.b16 %v4829
  %v4846 = vunpack.c.l.b16 %v4830
  %v4847 = vpack.c.b16 %v4840, %v4839
  %v4848 = vpack.c.b16 %v4842, %v4841
  %v4849 = vpack.c.b16 %v4844, %v4843
  %v4850 = vpack.c.b16 %v4846, %v4845
  %4863 = vrot.lane.b32.xlu0 %v4802, 126
  %v4864 = vpop.permute.xlu0 %4863
  %4865 = vrot.lane.b32.xlu0 %v4803, 126
  %v4866 = vpop.permute.xlu0 %4865
  %4867 = vrot.lane.b32.xlu0 %v4804, 126
  %v4868 = vpop.permute.xlu0 %4867
  %4869 = vrot.lane.b32.xlu0 %v4805, 126
  %v4870 = vpop.permute.xlu0 %4869
  %4871 = vrot.lane.b32.xlu0 %v4806, 126
  %v4872 = vpop.permute.xlu0 %4871
  %4873 = vrot.lane.b32.xlu0 %v4807, 126
  %v4874 = vpop.permute.xlu0 %4873
  %4875 = vrot.lane.b32.xlu0 %v4808, 126
  %v4876 = vpop.permute.xlu0 %4875
  %4877 = vrot.lane.b32.xlu0 %v4809, 126
  %v4878 = vpop.permute.xlu0 %4877
  %4879 = vrot.lane.b32.xlu0 %v4810, 126
  %v4880 = vpop.permute.xlu0 %4879
  %4881 = vrot.lane.b32.xlu0 %v4811, 126
  %v4882 = vpop.permute.xlu0 %4881
  %4883 = vrot.lane.b32.xlu0 %v4812, 126
  %v4884 = vpop.permute.xlu0 %4883
  %4885 = vrot.lane.b32.xlu0 %v4813, 126
  %v4886 = vpop.permute.xlu0 %4885
  %v4887 = vsel %vm1505, %v4864, %v4866
  %v4888 = vsel %vm1505, %v4866, %v4868
  %v4889 = vsel %vm1505, %v4870, %v4872
  %v4890 = vsel %vm1505, %v4872, %v4874
  %v4891 = vsel %vm1505, %v4876, %v4878
  %v4892 = vsel %vm1505, %v4878, %v4880
  %v4893 = vsel %vm1505, %v4882, %v4884
  %v4894 = vsel %vm1505, %v4884, %v4886
  %v4904 = vsel %vm255, %v4847, 0
  %v4907 = vsel %vm255, %v4848, 0
  %v4910 = vsel %vm255, %v4849, 0
  %v4913 = vsel %vm255, %v4850, 0
  %4915 = vmatprep.subr.bf16.mxu0 %v4888
  %4916 = vmatpush1.bf16.msra.mxu0 %v4887
  %4917 = vmatprep.subr.bf16.mxu0 %v4890
  %4918 = vmatpush1.bf16.msra.mxu0 %v4889
  %4919 = vmatprep.subr.bf16.mxu0 %v4892
  %4920 = vmatpush1.bf16.msra.mxu0 %v4891
  %4921 = vmatprep.subr.bf16.mxu0 %v4894
  %4922 = vmatpush1.bf16.msra.mxu0 %v4893
  %4923 = vmatprep.subr.bf16.mxu0 0
  %4924 = vmatpush1.bf16.msra.mxu0 0
  %4925 = vmatprep.subr.bf16.mxu0 0
  %4926 = vmatpush1.bf16.msra.mxu0 0
  %4927 = vmatprep.subr.bf16.mxu0 0
  %4928 = vmatpush1.bf16.msra.mxu0 0
  %4929 = vmatprep.subr.bf16.mxu0 0
  %4930 = vmatpush1.bf16.msra.mxu0 0
  %4931 = vmatprep.subr.bf16.mxu0 0
  %4932 = vmatpush1.bf16.msra.mxu0 0
  %4933 = vmatprep.subr.bf16.mxu0 0
  %4934 = vmatpush1.bf16.msra.mxu0 0
  %4935 = vmatprep.subr.bf16.mxu0 0
  %4936 = vmatpush1.bf16.msra.mxu0 0
  %4937 = vmatprep.subr.bf16.mxu0 0
  %4938 = vmatpush1.bf16.msra.mxu0 0
  %4939 = vmatprep.subr.bf16.mxu0 0
  %4940 = vmatpush1.bf16.msra.mxu0 0
  %4941 = vmatprep.subr.bf16.mxu0 0
  %4942 = vmatpush1.bf16.msra.mxu0 0
  %4943 = vmatprep.subr.bf16.mxu0 0
  %4944 = vmatpush1.bf16.msra.mxu0 0
  %4945 = vmatprep.subr.bf16.mxu0 0
  %4946 = vmatpush1.bf16.msra.mxu0 0
  %4947 = vmatprep.mubr.bf16.mxu0 0
  %4948 = vmatmul.mubr.bf16.gmra.mrb[0].mxu0 %v4904
  %v4949 = vpop.f32.mrb[0].mxu0
  %v4950 = vadd.f32 0.0, %v4949
  %v4951 = vpop.f32.mrb[0].mxu0
  %v4952 = vpop.f32.mrb[0].mxu0
  %v4953 = vadd.f32 0.0, %v4952
  %v4954 = vpop.f32.mrb[0].mxu0
  %4955 = vmatprep.mubr.bf16.mxu0 0
  %4956 = vmatmul.mubr.bf16.gmra.mrb[0].mxu0 %v4907
  %v4957 = vpop.f32.mrb[0].mxu0
  %v4958 = vadd.f32 0.0, %v4957
  %v4959 = vpop.f32.mrb[0].mxu0
  %v4960 = vpop.f32.mrb[0].mxu0
  %v4961 = vadd.f32 0.0, %v4960
  %v4962 = vpop.f32.mrb[0].mxu0
  %4963 = vmatprep.mubr.bf16.mxu0 0
  %4964 = vmatmul.mubr.bf16.gmra.mrb[0].mxu0 %v4910
  %v4965 = vpop.f32.mrb[0].mxu0
  %v4966 = vadd.f32 0.0, %v4965
  %v4967 = vpop.f32.mrb[0].mxu0
  %v4968 = vpop.f32.mrb[0].mxu0
  %v4969 = vadd.f32 0.0, %v4968
  %v4970 = vpop.f32.mrb[0].mxu0
  %4971 = vmatprep.mubr.bf16.mxu0 0
  %4972 = vmatmul.mubr.bf16.gmra.mrb[0].mxu0 %v4913
  %v4973 = vpop.f32.mrb[0].mxu0
  %v4974 = vadd.f32 0.0, %v4973
  %v4975 = vpop.f32.mrb[0].mxu0
  %v4976 = vpop.f32.mrb[0].mxu0
  %v4977 = vadd.f32 0.0, %v4976
  %v4978 = vpop.f32.mrb[0].mxu0
  %4979 = vdwg.mxu0
  %v4988 = vunpack.c.l.b16 %v4814
  %v4989 = vunpack.c.l.b16 %v4815
  %v4990 = vunpack.c.l.b16 %v4816
  %v4991 = vunpack.c.l.b16 %v4817
  %v4992 = vunpack.c.l.b16 %v4818
  %v4993 = vunpack.c.l.b16 %v4819
  %v4994 = vunpack.c.l.b16 %v4820
  %v4995 = vunpack.c.l.b16 %v4821
  %v4996 = vpack.c.b16 %v4989, %v4988
  %v4997 = vpack.c.b16 %v4991, %v4990
  %v4998 = vpack.c.b16 %v4993, %v4992
  %v4999 = vpack.c.b16 %v4995, %v4994
  %v5001 = vsel %vm255, %v4996, 0
  %v5004 = vsel %vm255, %v4997, 0
  %v5007 = vsel %vm255, %v4998, 0
  %v5010 = vsel %vm255, %v4999, 0
  %5012 = vmatprep.subr.bf16.mxu0 %v4803
  %5013 = vmatpush1.bf16.msra.mxu0 %v4802
  %5014 = vmatprep.subr.bf16.mxu0 %v4806
  %5015 = vmatpush1.bf16.msra.mxu0 %v4805
  %5016 = vmatprep.subr.bf16.mxu0 %v4809
  %5017 = vmatpush1.bf16.msra.mxu0 %v4808
  %5018 = vmatprep.subr.bf16.mxu0 %v4812
  %5019 = vmatpush1.bf16.msra.mxu0 %v4811
  %5020 = vmatprep.subr.bf16.mxu0 0
  %5021 = vmatpush1.bf16.msra.mxu0 0
  %5022 = vmatprep.subr.bf16.mxu0 0
  %5023 = vmatpush1.bf16.msra.mxu0 0
  %5024 = vmatprep.subr.bf16.mxu0 0
  %5025 = vmatpush1.bf16.msra.mxu0 0
  %5026 = vmatprep.subr.bf16.mxu0 0
  %5027 = vmatpush1.bf16.msra.mxu0 0
  %5028 = vmatprep.subr.bf16.mxu0 0
  %5029 = vmatpush1.bf16.msra.mxu0 0
  %5030 = vmatprep.subr.bf16.mxu0 0
  %5031 = vmatpush1.bf16.msra.mxu0 0
  %5032 = vmatprep.subr.bf16.mxu0 0
  %5033 = vmatpush1.bf16.msra.mxu0 0
  %5034 = vmatprep.subr.bf16.mxu0 0
  %5035 = vmatpush1.bf16.msra.mxu0 0
  %5036 = vmatprep.subr.bf16.mxu0 0
  %5037 = vmatpush1.bf16.msra.mxu0 0
  %5038 = vmatprep.subr.bf16.mxu0 0
  %5039 = vmatpush1.bf16.msra.mxu0 0
  %5040 = vmatprep.subr.bf16.mxu0 0
  %5041 = vmatpush1.bf16.msra.mxu0 0
  %5042 = vmatprep.subr.bf16.mxu0 0
  %5043 = vmatpush1.bf16.msra.mxu0 0
  %5044 = vmatprep.mubr.bf16.mxu0 0
  %5045 = vmatmul.mubr.bf16.gmra.mrb[0].mxu0 %v5001
  %v5046 = vpop.f32.mrb[0].mxu0
  %v5047 = vadd.f32 %v4950, %v5046
  %v5048 = vpop.f32.mrb[0].mxu0
  %v5049 = vpop.f32.mrb[0].mxu0
  %v5050 = vadd.f32 %v4953, %v5049
  %v5051 = vpop.f32.mrb[0].mxu0
  %5052 = vmatprep.mubr.bf16.mxu0 0
  %5053 = vmatmul.mubr.bf16.gmra.mrb[0].mxu0 %v5004
  %v5054 = vpop.f32.mrb[0].mxu0
  %v5055 = vadd.f32 %v4958, %v5054
  %v5056 = vpop.f32.mrb[0].mxu0
  %v5057 = vpop.f32.mrb[0].mxu0
  %v5058 = vadd.f32 %v4961, %v5057
  %v5059 = vpop.f32.mrb[0].mxu0
  %5060 = vmatprep.mubr.bf16.mxu0 0
  %5061 = vmatmul.mubr.bf16.gmra.mrb[0].mxu0 %v5007
  %v5062 = vpop.f32.mrb[0].mxu0
  %v5063 = vadd.f32 %v4966, %v5062
  %v5064 = vpop.f32.mrb[0].mxu0
  %v5065 = vpop.f32.mrb[0].mxu0
  %v5066 = vadd.f32 %v4969, %v5065
  %v5067 = vpop.f32.mrb[0].mxu0
  %5068 = vmatprep.mubr.bf16.mxu0 0
  %5069 = vmatmul.mubr.bf16.gmra.mrb[0].mxu0 %v5010
  %v5070 = vpop.f32.mrb[0].mxu0
  %v5071 = vadd.f32 %v4974, %v5070
  %v5072 = vpop.f32.mrb[0].mxu0
  %v5073 = vpop.f32.mrb[0].mxu0
  %v5074 = vadd.f32 %v4977, %v5073
  %v5075 = vpop.f32.mrb[0].mxu0
  %5076 = vdwg.mxu0
  %s5077 = scalar_lea.vmem %s5, 64
  %v5078 = vld [vmem:[%s5077] sm:$0xf]
  %v5079 = vld [vmem:[%s5077 + $0x4] sm:$0xf]
  %v5080 = vld [vmem:[%s5077 + $0x8] sm:$0xf]
  %v5081 = vld [vmem:[%s5077 + $0xc] sm:$0xf]
  %v5082 = vld [vmem:[%s5077 + $0x10] sm:$0xf]
  %v5083 = vld [vmem:[%s5077 + $0x14] sm:$0xf]
  %v5084 = vld [vmem:[%s5077 + $0x18] sm:$0xf]
  %v5085 = vld [vmem:[%s5077 + $0x1c] sm:$0xf]
  %v5094 = vunpack.c.l.b16 %v5078
  %v5095 = vunpack.c.l.b16 %v5079
  %v5096 = vunpack.c.l.b16 %v5080
  %v5097 = vunpack.c.l.b16 %v5081
  %v5098 = vunpack.c.l.b16 %v5082
  %v5099 = vunpack.c.l.b16 %v5083
  %v5100 = vunpack.c.l.b16 %v5084
  %v5101 = vunpack.c.l.b16 %v5085
  %v5102 = vpack.c.b16 %v5095, %v5094
  %v5103 = vpack.c.b16 %v5097, %v5096
  %v5104 = vpack.c.b16 %v5099, %v5098
  %v5105 = vpack.c.b16 %v5101, %v5100
  %5106 = vrot.lane.b32.xlu0 %v4802, 124
  %v5107 = vpop.permute.xlu0 %5106
  %5108 = vrot.lane.b32.xlu0 %v4803, 124
  %v5109 = vpop.permute.xlu0 %5108
  %5110 = vrot.lane.b32.xlu0 %v4804, 124
  %v5111 = vpop.permute.xlu0 %5110
  %5112 = vrot.lane.b32.xlu0 %v4805, 124
  %v5113 = vpop.permute.xlu0 %5112
  %5114 = vrot.lane.b32.xlu0 %v4806, 124
  %v5115 = vpop.permute.xlu0 %5114
  %5116 = vrot.lane.b32.xlu0 %v4807, 124
  %v5117 = vpop.permute.xlu0 %5116
  %5118 = vrot.lane.b32.xlu0 %v4808, 124
  %v5119 = vpop.permute.xlu0 %5118
  %5120 = vrot.lane.b32.xlu0 %v4809, 124
  %v5121 = vpop.permute.xlu0 %5120
  %5122 = vrot.lane.b32.xlu0 %v4810, 124
  %v5123 = vpop.permute.xlu0 %5122
  %5124 = vrot.lane.b32.xlu0 %v4811, 124
  %v5125 = vpop.permute.xlu0 %5124
  %5126 = vrot.lane.b32.xlu0 %v4812, 124
  %v5127 = vpop.permute.xlu0 %5126
  %5128 = vrot.lane.b32.xlu0 %v4813, 124
  %v5129 = vpop.permute.xlu0 %5128
  %vm5130 = vcmask 1014784
  %v5131 = vsel %vm5130, %v5107, %v5109
  %v5132 = vsel %vm5130, %v5109, %v5111
  %v5133 = vsel %vm5130, %v5113, %v5115
  %v5134 = vsel %vm5130, %v5115, %v5117
  %v5135 = vsel %vm5130, %v5119, %v5121
  %v5136 = vsel %vm5130, %v5121, %v5123
  %v5137 = vsel %vm5130, %v5125, %v5127
  %v5138 = vsel %vm5130, %v5127, %v5129
  %v5148 = vsel %vm255, %v5102, 0
  %v5151 = vsel %vm255, %v5103, 0
  %v5154 = vsel %vm255, %v5104, 0
  %v5157 = vsel %vm255, %v5105, 0
  %5159 = vmatprep.subr.bf16.mxu0 %v5132
  %5160 = vmatpush1.bf16.msra.mxu0 %v5131
  %5161 = vmatprep.subr.bf16.mxu0 %v5134
  %5162 = vmatpush1.bf16.msra.mxu0 %v5133
  %5163 = vmatprep.subr.bf16.mxu0 %v5136
  %5164 = vmatpush1.bf16.msra.mxu0 %v5135
  %5165 = vmatprep.subr.bf16.mxu0 %v5138
  %5166 = vmatpush1.bf16.msra.mxu0 %v5137
  %5167 = vmatprep.subr.bf16.mxu0 0
  %5168 = vmatpush1.bf16.msra.mxu0 0
  %5169 = vmatprep.subr.bf16.mxu0 0
  %5170 = vmatpush1.bf16.msra.mxu0 0
  %5171 = vmatprep.subr.bf16.mxu0 0
  %5172 = vmatpush1.bf16.msra.mxu0 0
  %5173 = vmatprep.subr.bf16.mxu0 0
  %5174 = vmatpush1.bf16.msra.mxu0 0
  %5175 = vmatprep.subr.bf16.mxu0 0
  %5176 = vmatpush1.bf16.msra.mxu0 0
  %5177 = vmatprep.subr.bf16.mxu0 0
  %5178 = vmatpush1.bf16.msra.mxu0 0
  %5179 = vmatprep.subr.bf16.mxu0 0
  %5180 = vmatpush1.bf16.msra.mxu0 0
  %5181 = vmatprep.subr.bf16.mxu0 0
  %5182 = vmatpush1.bf16.msra.mxu0 0
  %5183 = vmatprep.subr.bf16.mxu0 0
  %5184 = vmatpush1.bf16.msra.mxu0 0
  %5185 = vmatprep.subr.bf16.mxu0 0
  %5186 = vmatpush1.bf16.msra.mxu0 0
  %5187 = vmatprep.subr.bf16.mxu0 0
  %5188 = vmatpush1.bf16.msra.mxu0 0
  %5189 = vmatprep.subr.bf16.mxu0 0
  %5190 = vmatpush1.bf16.msra.mxu0 0
  %5191 = vmatprep.mubr.bf16.mxu0 0
  %5192 = vmatmul.mubr.bf16.gmra.mrb[0].mxu0 %v5148
  %v5193 = vpop.f32.mrb[0].mxu0
  %v5194 = vadd.f32 0.0, %v5193
  %v5195 = vpop.f32.mrb[0].mxu0
  %v5196 = vpop.f32.mrb[0].mxu0
  %v5197 = vadd.f32 0.0, %v5196
  %v5198 = vpop.f32.mrb[0].mxu0
  %5199 = vmatprep.mubr.bf16.mxu0 0
  %5200 = vmatmul.mubr.bf16.gmra.mrb[0].mxu0 %v5151
  %v5201 = vpop.f32.mrb[0].mxu0
  %v5202 = vadd.f32 0.0, %v5201
  %v5203 = vpop.f32.mrb[0].mxu0
  %v5204 = vpop.f32.mrb[0].mxu0
  %v5205 = vadd.f32 0.0, %v5204
  %v5206 = vpop.f32.mrb[0].mxu0
  %5207 = vmatprep.mubr.bf16.mxu0 0
  %5208 = vmatmul.mubr.bf16.gmra.mrb[0].mxu0 %v5154
  %v5209 = vpop.f32.mrb[0].mxu0
  %v5210 = vadd.f32 0.0, %v5209
  %v5211 = vpop.f32.mrb[0].mxu0
  %v5212 = vpop.f32.mrb[0].mxu0
  %v5213 = vadd.f32 0.0, %v5212
  %v5214 = vpop.f32.mrb[0].mxu0
  %5215 = vmatprep.mubr.bf16.mxu0 0
  %5216 = vmatmul.mubr.bf16.gmra.mrb[0].mxu0 %v5157
  %v5217 = vpop.f32.mrb[0].mxu0
  %v5218 = vadd.f32 0.0, %v5217
  %v5219 = vpop.f32.mrb[0].mxu0
  %v5220 = vpop.f32.mrb[0].mxu0
  %v5221 = vadd.f32 0.0, %v5220
  %v5222 = vpop.f32.mrb[0].mxu0
  %5223 = vdwg.mxu0
  %v5224 = vadd.f32 %v5047, %v5194
  %v5225 = vadd.f32 %v5050, %v5197
  %v5226 = vadd.f32 %v5055, %v5202
  %v5227 = vadd.f32 %v5058, %v5205
  %v5228 = vadd.f32 %v5063, %v5210
  %v5229 = vadd.f32 %v5066, %v5213
  %v5230 = vadd.f32 %v5071, %v5218
  %v5231 = vadd.f32 %v5074, %v5221
  %s5232 = scalar_lea.vmem %s5, 96
  %v5233 = vld [vmem:[%s5232] sm:$0xf]
  %v5234 = vld [vmem:[%s5232 + $0x4] sm:$0xf]
  %v5235 = vld [vmem:[%s5232 + $0x8] sm:$0xf]
  %v5236 = vld [vmem:[%s5232 + $0xc] sm:$0xf]
  %v5237 = vld [vmem:[%s5232 + $0x10] sm:$0xf]
  %v5238 = vld [vmem:[%s5232 + $0x14] sm:$0xf]
  %v5239 = vld [vmem:[%s5232 + $0x18] sm:$0xf]
  %v5240 = vld [vmem:[%s5232 + $0x1c] sm:$0xf]
  %v5249 = vunpack.c.l.b16 %v5233
  %v5250 = vunpack.c.l.b16 %v5234
  %v5251 = vunpack.c.l.b16 %v5235
  %v5252 = vunpack.c.l.b16 %v5236
  %v5253 = vunpack.c.l.b16 %v5237
  %v5254 = vunpack.c.l.b16 %v5238
  %v5255 = vunpack.c.l.b16 %v5239
  %v5256 = vunpack.c.l.b16 %v5240
  %v5257 = vpack.c.b16 %v5250, %v5249
  %v5258 = vpack.c.b16 %v5252, %v5251
  %v5259 = vpack.c.b16 %v5254, %v5253
  %v5260 = vpack.c.b16 %v5256, %v5255
  %5261 = vrot.lane.b32.xlu0 %v4802, 110
  %v5262 = vpop.permute.xlu0 %5261
  %5263 = vrot.lane.b32.xlu0 %v4803, 110
  %v5264 = vpop.permute.xlu0 %5263
  %5265 = vrot.lane.b32.xlu0 %v4804, 110
  %v5266 = vpop.permute.xlu0 %5265
  %5267 = vrot.lane.b32.xlu0 %v4805, 110
  %v5268 = vpop.permute.xlu0 %5267
  %5269 = vrot.lane.b32.xlu0 %v4806, 110
  %v5270 = vpop.permute.xlu0 %5269
  %5271 = vrot.lane.b32.xlu0 %v4807, 110
  %v5272 = vpop.permute.xlu0 %5271
  %5273 = vrot.lane.b32.xlu0 %v4808, 110
  %v5274 = vpop.permute.xlu0 %5273
  %5275 = vrot.lane.b32.xlu0 %v4809, 110
  %v5276 = vpop.permute.xlu0 %5275
  %5277 = vrot.lane.b32.xlu0 %v4810, 110
  %v5278 = vpop.permute.xlu0 %5277
  %5279 = vrot.lane.b32.xlu0 %v4811, 110
  %v5280 = vpop.permute.xlu0 %5279
  %5281 = vrot.lane.b32.xlu0 %v4812, 110
  %v5282 = vpop.permute.xlu0 %5281
  %5283 = vrot.lane.b32.xlu0 %v4813, 110
  %v5284 = vpop.permute.xlu0 %5283
  %v5285 = vsel %vm2895, %v5262, %v5264
  %v5286 = vsel %vm2895, %v5264, %v5266
  %v5287 = vsel %vm2895, %v5268, %v5270
  %v5288 = vsel %vm2895, %v5270, %v5272
  %v5289 = vsel %vm2895, %v5274, %v5276
  %v5290 = vsel %vm2895, %v5276, %v5278
  %v5291 = vsel %vm2895, %v5280, %v5282
  %v5292 = vsel %vm2895, %v5282, %v5284
  %v5302 = vsel %vm255, %v5257, 0
  %v5305 = vsel %vm255, %v5258, 0
  %v5308 = vsel %vm255, %v5259, 0
  %v5311 = vsel %vm255, %v5260, 0
  %5313 = vmatprep.subr.bf16.mxu0 %v5286
  %5314 = vmatpush1.bf16.msra.mxu0 %v5285
  %5315 = vmatprep.subr.bf16.mxu0 %v5288
  %5316 = vmatpush1.bf16.msra.mxu0 %v5287
  %5317 = vmatprep.subr.bf16.mxu0 %v5290
  %5318 = vmatpush1.bf16.msra.mxu0 %v5289
  %5319 = vmatprep.subr.bf16.mxu0 %v5292
  %5320 = vmatpush1.bf16.msra.mxu0 %v5291
  %5321 = vmatprep.subr.bf16.mxu0 0
  %5322 = vmatpush1.bf16.msra.mxu0 0
  %5323 = vmatprep.subr.bf16.mxu0 0
  %5324 = vmatpush1.bf16.msra.mxu0 0
  %5325 = vmatprep.subr.bf16.mxu0 0
  %5326 = vmatpush1.bf16.msra.mxu0 0
  %5327 = vmatprep.subr.bf16.mxu0 0
  %5328 = vmatpush1.bf16.msra.mxu0 0
  %5329 = vmatprep.subr.bf16.mxu0 0
  %5330 = vmatpush1.bf16.msra.mxu0 0
  %5331 = vmatprep.subr.bf16.mxu0 0
  %5332 = vmatpush1.bf16.msra.mxu0 0
  %5333 = vmatprep.subr.bf16.mxu0 0
  %5334 = vmatpush1.bf16.msra.mxu0 0
  %5335 = vmatprep.subr.bf16.mxu0 0
  %5336 = vmatpush1.bf16.msra.mxu0 0
  %5337 = vmatprep.subr.bf16.mxu0 0
  %5338 = vmatpush1.bf16.msra.mxu0 0
  %5339 = vmatprep.subr.bf16.mxu0 0
  %5340 = vmatpush1.bf16.msra.mxu0 0
  %5341 = vmatprep.subr.bf16.mxu0 0
  %5342 = vmatpush1.bf16.msra.mxu0 0
  %5343 = vmatprep.subr.bf16.mxu0 0
  %5344 = vmatpush1.bf16.msra.mxu0 0
  %5345 = vmatprep.mubr.bf16.mxu0 0
  %5346 = vmatmul.mubr.bf16.gmra.mrb[0].mxu0 %v5302
  %v5347 = vpop.f32.mrb[0].mxu0
  %v5348 = vadd.f32 0.0, %v5347
  %v5349 = vpop.f32.mrb[0].mxu0
  %v5350 = vpop.f32.mrb[0].mxu0
  %v5351 = vadd.f32 0.0, %v5350
  %v5352 = vpop.f32.mrb[0].mxu0
  %5353 = vmatprep.mubr.bf16.mxu0 0
  %5354 = vmatmul.mubr.bf16.gmra.mrb[0].mxu0 %v5305
  %v5355 = vpop.f32.mrb[0].mxu0
  %v5356 = vadd.f32 0.0, %v5355
  %v5357 = vpop.f32.mrb[0].mxu0
  %v5358 = vpop.f32.mrb[0].mxu0
  %v5359 = vadd.f32 0.0, %v5358
  %v5360 = vpop.f32.mrb[0].mxu0
  %5361 = vmatprep.mubr.bf16.mxu0 0
  %5362 = vmatmul.mubr.bf16.gmra.mrb[0].mxu0 %v5308
  %v5363 = vpop.f32.mrb[0].mxu0
  %v5364 = vadd.f32 0.0, %v5363
  %v5365 = vpop.f32.mrb[0].mxu0
  %v5366 = vpop.f32.mrb[0].mxu0
  %v5367 = vadd.f32 0.0, %v5366
  %v5368 = vpop.f32.mrb[0].mxu0
  %5369 = vmatprep.mubr.bf16.mxu0 0
  %5370 = vmatmul.mubr.bf16.gmra.mrb[0].mxu0 %v5311
  %v5371 = vpop.f32.mrb[0].mxu0
  %v5372 = vadd.f32 0.0, %v5371
  %v5373 = vpop.f32.mrb[0].mxu0
  %v5374 = vpop.f32.mrb[0].mxu0
  %v5375 = vadd.f32 0.0, %v5374
  %v5376 = vpop.f32.mrb[0].mxu0
  %5377 = vdwg.mxu0
  %v5378 = vadd.f32 %v5224, %v5348
  %v5379 = vadd.f32 %v5225, %v5351
  %v5380 = vadd.f32 %v5226, %v5356
  %v5381 = vadd.f32 %v5227, %v5359
  %v5382 = vadd.f32 %v5228, %v5364
  %v5383 = vadd.f32 %v5229, %v5367
  %v5384 = vadd.f32 %v5230, %v5372
  %v5385 = vadd.f32 %v5231, %v5375
  %s5386 = scalar_lea.vmem %s5, 128
  %v5387 = vld [vmem:[%s5386] sm:$0xf]
  %v5388 = vld [vmem:[%s5386 + $0x4] sm:$0xf]
  %v5389 = vld [vmem:[%s5386 + $0x8] sm:$0xf]
  %v5390 = vld [vmem:[%s5386 + $0xc] sm:$0xf]
  %v5391 = vld [vmem:[%s5386 + $0x10] sm:$0xf]
  %v5392 = vld [vmem:[%s5386 + $0x14] sm:$0xf]
  %v5393 = vld [vmem:[%s5386 + $0x18] sm:$0xf]
  %v5394 = vld [vmem:[%s5386 + $0x1c] sm:$0xf]
  %v5403 = vunpack.c.l.b16 %v5387
  %v5404 = vunpack.c.l.b16 %v5388
  %v5405 = vunpack.c.l.b16 %v5389
  %v5406 = vunpack.c.l.b16 %v5390
  %v5407 = vunpack.c.l.b16 %v5391
  %v5408 = vunpack.c.l.b16 %v5392
  %v5409 = vunpack.c.l.b16 %v5393
  %v5410 = vunpack.c.l.b16 %v5394
  %v5411 = vpack.c.b16 %v5404, %v5403
  %v5412 = vpack.c.b16 %v5406, %v5405
  %v5413 = vpack.c.b16 %v5408, %v5407
  %v5414 = vpack.c.b16 %v5410, %v5409
  %5415 = vrot.lane.b32.xlu0 %v4802, 108
  %v5416 = vpop.permute.xlu0 %5415
  %5417 = vrot.lane.b32.xlu0 %v4803, 108
  %v5418 = vpop.permute.xlu0 %5417
  %5419 = vrot.lane.b32.xlu0 %v4804, 108
  %v5420 = vpop.permute.xlu0 %5419
  %5421 = vrot.lane.b32.xlu0 %v4805, 108
  %v5422 = vpop.permute.xlu0 %5421
  %5423 = vrot.lane.b32.xlu0 %v4806, 108
  %v5424 = vpop.permute.xlu0 %5423
  %5425 = vrot.lane.b32.xlu0 %v4807, 108
  %v5426 = vpop.permute.xlu0 %5425
  %5427 = vrot.lane.b32.xlu0 %v4808, 108
  %v5428 = vpop.permute.xlu0 %5427
  %5429 = vrot.lane.b32.xlu0 %v4809, 108
  %v5430 = vpop.permute.xlu0 %5429
  %5431 = vrot.lane.b32.xlu0 %v4810, 108
  %v5432 = vpop.permute.xlu0 %5431
  %5433 = vrot.lane.b32.xlu0 %v4811, 108
  %v5434 = vpop.permute.xlu0 %5433
  %5435 = vrot.lane.b32.xlu0 %v4812, 108
  %v5436 = vpop.permute.xlu0 %5435
  %5437 = vrot.lane.b32.xlu0 %v4813, 108
  %v5438 = vpop.permute.xlu0 %5437
  %v5439 = vsel %vm3359, %v5416, %v5418
  %v5440 = vsel %vm3359, %v5418, %v5420
  %v5441 = vsel %vm3359, %v5422, %v5424
  %v5442 = vsel %vm3359, %v5424, %v5426
  %v5443 = vsel %vm3359, %v5428, %v5430
  %v5444 = vsel %vm3359, %v5430, %v5432
  %v5445 = vsel %vm3359, %v5434, %v5436
  %v5446 = vsel %vm3359, %v5436, %v5438
  %v5456 = vsel %vm255, %v5411, 0
  %v5459 = vsel %vm255, %v5412, 0
  %v5462 = vsel %vm255, %v5413, 0
  %v5465 = vsel %vm255, %v5414, 0
  %5467 = vmatprep.subr.bf16.mxu0 %v5440
  %5468 = vmatpush1.bf16.msra.mxu0 %v5439
  %5469 = vmatprep.subr.bf16.mxu0 %v5442
  %5470 = vmatpush1.bf16.msra.mxu0 %v5441
  %5471 = vmatprep.subr.bf16.mxu0 %v5444
  %5472 = vmatpush1.bf16.msra.mxu0 %v5443
  %5473 = vmatprep.subr.bf16.mxu0 %v5446
  %5474 = vmatpush1.bf16.msra.mxu0 %v5445
  %5475 = vmatprep.subr.bf16.mxu0 0
  %5476 = vmatpush1.bf16.msra.mxu0 0
  %5477 = vmatprep.subr.bf16.mxu0 0
  %5478 = vmatpush1.bf16.msra.mxu0 0
  %5479 = vmatprep.subr.bf16.mxu0 0
  %5480 = vmatpush1.bf16.msra.mxu0 0
  %5481 = vmatprep.subr.bf16.mxu0 0
  %5482 = vmatpush1.bf16.msra.mxu0 0
  %5483 = vmatprep.subr.bf16.mxu0 0
  %5484 = vmatpush1.bf16.msra.mxu0 0
  %5485 = vmatprep.subr.bf16.mxu0 0
  %5486 = vmatpush1.bf16.msra.mxu0 0
  %5487 = vmatprep.subr.bf16.mxu0 0
  %5488 = vmatpush1.bf16.msra.mxu0 0
  %5489 = vmatprep.subr.bf16.mxu0 0
  %5490 = vmatpush1.bf16.msra.mxu0 0
  %5491 = vmatprep.subr.bf16.mxu0 0
  %5492 = vmatpush1.bf16.msra.mxu0 0
  %5493 = vmatprep.subr.bf16.mxu0 0
  %5494 = vmatpush1.bf16.msra.mxu0 0
  %5495 = vmatprep.subr.bf16.mxu0 0
  %5496 = vmatpush1.bf16.msra.mxu0 0
  %5497 = vmatprep.subr.bf16.mxu0 0
  %5498 = vmatpush1.bf16.msra.mxu0 0
  %5499 = vmatprep.mubr.bf16.mxu0 0
  %5500 = vmatmul.mubr.bf16.gmra.mrb[0].mxu0 %v5456
  %v5501 = vpop.f32.mrb[0].mxu0
  %v5502 = vadd.f32 0.0, %v5501
  %v5503 = vpop.f32.mrb[0].mxu0
  %v5504 = vpop.f32.mrb[0].mxu0
  %v5505 = vadd.f32 0.0, %v5504
  %v5506 = vpop.f32.mrb[0].mxu0
  %5507 = vmatprep.mubr.bf16.mxu0 0
  %5508 = vmatmul.mubr.bf16.gmra.mrb[0].mxu0 %v5459
  %v5509 = vpop.f32.mrb[0].mxu0
  %v5510 = vadd.f32 0.0, %v5509
  %v5511 = vpop.f32.mrb[0].mxu0
  %v5512 = vpop.f32.mrb[0].mxu0
  %v5513 = vadd.f32 0.0, %v5512
  %v5514 = vpop.f32.mrb[0].mxu0
  %5515 = vmatprep.mubr.bf16.mxu0 0
  %5516 = vmatmul.mubr.bf16.gmra.mrb[0].mxu0 %v5462
  %v5517 = vpop.f32.mrb[0].mxu0
  %v5518 = vadd.f32 0.0, %v5517
  %v5519 = vpop.f32.mrb[0].mxu0
  %v5520 = vpop.f32.mrb[0].mxu0
  %v5521 = vadd.f32 0.0, %v5520
  %v5522 = vpop.f32.mrb[0].mxu0
  %5523 = vmatprep.mubr.bf16.mxu0 0
  %5524 = vmatmul.mubr.bf16.gmra.mrb[0].mxu0 %v5465
  %v5525 = vpop.f32.mrb[0].mxu0
  %v5526 = vadd.f32 0.0, %v5525
  %v5527 = vpop.f32.mrb[0].mxu0
  %v5528 = vpop.f32.mrb[0].mxu0
  %v5529 = vadd.f32 0.0, %v5528
  %v5530 = vpop.f32.mrb[0].mxu0
  %5531 = vdwg.mxu0
  %v5532 = vadd.f32 %v5378, %v5502
  %v5533 = vadd.f32 %v5379, %v5505
  %v5534 = vadd.f32 %v5380, %v5510
  %v5535 = vadd.f32 %v5381, %v5513
  %v5536 = vadd.f32 %v5382, %v5518
  %v5537 = vadd.f32 %v5383, %v5521
  %v5538 = vadd.f32 %v5384, %v5526
  %v5539 = vadd.f32 %v5385, %v5529
  %s5540 = scalar_lea.vmem %s5, 160
  %v5541 = vld [vmem:[%s5540] sm:$0xf]
  %v5542 = vld [vmem:[%s5540 + $0x4] sm:$0xf]
  %v5543 = vld [vmem:[%s5540 + $0x8] sm:$0xf]
  %v5544 = vld [vmem:[%s5540 + $0xc] sm:$0xf]
  %v5545 = vld [vmem:[%s5540 + $0x10] sm:$0xf]
  %v5546 = vld [vmem:[%s5540 + $0x14] sm:$0xf]
  %v5547 = vld [vmem:[%s5540 + $0x18] sm:$0xf]
  %v5548 = vld [vmem:[%s5540 + $0x1c] sm:$0xf]
  %v5557 = vunpack.c.l.b16 %v5541
  %v5558 = vunpack.c.l.b16 %v5542
  %v5559 = vunpack.c.l.b16 %v5543
  %v5560 = vunpack.c.l.b16 %v5544
  %v5561 = vunpack.c.l.b16 %v5545
  %v5562 = vunpack.c.l.b16 %v5546
  %v5563 = vunpack.c.l.b16 %v5547
  %v5564 = vunpack.c.l.b16 %v5548
  %v5565 = vpack.c.b16 %v5558, %v5557
  %v5566 = vpack.c.b16 %v5560, %v5559
  %v5567 = vpack.c.b16 %v5562, %v5561
  %v5568 = vpack.c.b16 %v5564, %v5563
  %5569 = vrot.lane.b32.xlu0 %v4802, 106
  %v5570 = vpop.permute.xlu0 %5569
  %5571 = vrot.lane.b32.xlu0 %v4803, 106
  %v5572 = vpop.permute.xlu0 %5571
  %5573 = vrot.lane.b32.xlu0 %v4804, 106
  %v5574 = vpop.permute.xlu0 %5573
  %5575 = vrot.lane.b32.xlu0 %v4805, 106
  %v5576 = vpop.permute.xlu0 %5575
  %5577 = vrot.lane.b32.xlu0 %v4806, 106
  %v5578 = vpop.permute.xlu0 %5577
  %5579 = vrot.lane.b32.xlu0 %v4807, 106
  %v5580 = vpop.permute.xlu0 %5579
  %5581 = vrot.lane.b32.xlu0 %v4808, 106
  %v5582 = vpop.permute.xlu0 %5581
  %5583 = vrot.lane.b32.xlu0 %v4809, 106
  %v5584 = vpop.permute.xlu0 %5583
  %5585 = vrot.lane.b32.xlu0 %v4810, 106
  %v5586 = vpop.permute.xlu0 %5585
  %5587 = vrot.lane.b32.xlu0 %v4811, 106
  %v5588 = vpop.permute.xlu0 %5587
  %5589 = vrot.lane.b32.xlu0 %v4812, 106
  %v5590 = vpop.permute.xlu0 %5589
  %5591 = vrot.lane.b32.xlu0 %v4813, 106
  %v5592 = vpop.permute.xlu0 %5591
  %vm5593 = vcmask 867328
  %v5594 = vsel %vm5593, %v5570, %v5572
  %v5595 = vsel %vm5593, %v5572, %v5574
  %v5596 = vsel %vm5593, %v5576, %v5578
  %v5597 = vsel %vm5593, %v5578, %v5580
  %v5598 = vsel %vm5593, %v5582, %v5584
  %v5599 = vsel %vm5593, %v5584, %v5586
  %v5600 = vsel %vm5593, %v5588, %v5590
  %v5601 = vsel %vm5593, %v5590, %v5592
  %v5611 = vsel %vm255, %v5565, 0
  %v5614 = vsel %vm255, %v5566, 0
  %v5617 = vsel %vm255, %v5567, 0
  %v5620 = vsel %vm255, %v5568, 0
  %5622 = vmatprep.subr.bf16.mxu0 %v5595
  %5623 = vmatpush1.bf16.msra.mxu0 %v5594
  %5624 = vmatprep.subr.bf16.mxu0 %v5597
  %5625 = vmatpush1.bf16.msra.mxu0 %v5596
  %5626 = vmatprep.subr.bf16.mxu0 %v5599
  %5627 = vmatpush1.bf16.msra.mxu0 %v5598
  %5628 = vmatprep.subr.bf16.mxu0 %v5601
  %5629 = vmatpush1.bf16.msra.mxu0 %v5600
  %5630 = vmatprep.subr.bf16.mxu0 0
  %5631 = vmatpush1.bf16.msra.mxu0 0
  %5632 = vmatprep.subr.bf16.mxu0 0
  %5633 = vmatpush1.bf16.msra.mxu0 0
  %5634 = vmatprep.subr.bf16.mxu0 0
  %5635 = vmatpush1.bf16.msra.mxu0 0
  %5636 = vmatprep.subr.bf16.mxu0 0
  %5637 = vmatpush1.bf16.msra.mxu0 0
  %5638 = vmatprep.subr.bf16.mxu0 0
  %5639 = vmatpush1.bf16.msra.mxu0 0
  %5640 = vmatprep.subr.bf16.mxu0 0
  %5641 = vmatpush1.bf16.msra.mxu0 0
  %5642 = vmatprep.subr.bf16.mxu0 0
  %5643 = vmatpush1.bf16.msra.mxu0 0
  %5644 = vmatprep.subr.bf16.mxu0 0
  %5645 = vmatpush1.bf16.msra.mxu0 0
  %5646 = vmatprep.subr.bf16.mxu0 0
  %5647 = vmatpush1.bf16.msra.mxu0 0
  %5648 = vmatprep.subr.bf16.mxu0 0
  %5649 = vmatpush1.bf16.msra.mxu0 0
  %5650 = vmatprep.subr.bf16.mxu0 0
  %5651 = vmatpush1.bf16.msra.mxu0 0
  %5652 = vmatprep.subr.bf16.mxu0 0
  %5653 = vmatpush1.bf16.msra.mxu0 0
  %5654 = vmatprep.mubr.bf16.mxu0 0
  %5655 = vmatmul.mubr.bf16.gmra.mrb[0].mxu0 %v5611
  %v5656 = vpop.f32.mrb[0].mxu0
  %v5657 = vadd.f32 0.0, %v5656
  %v5658 = vpop.f32.mrb[0].mxu0
  %v5659 = vpop.f32.mrb[0].mxu0
  %v5660 = vadd.f32 0.0, %v5659
  %v5661 = vpop.f32.mrb[0].mxu0
  %5662 = vmatprep.mubr.bf16.mxu0 0
  %5663 = vmatmul.mubr.bf16.gmra.mrb[0].mxu0 %v5614
  %v5664 = vpop.f32.mrb[0].mxu0
  %v5665 = vadd.f32 0.0, %v5664
  %v5666 = vpop.f32.mrb[0].mxu0
  %v5667 = vpop.f32.mrb[0].mxu0
  %v5668 = vadd.f32 0.0, %v5667
  %v5669 = vpop.f32.mrb[0].mxu0
  %5670 = vmatprep.mubr.bf16.mxu0 0
  %5671 = vmatmul.mubr.bf16.gmra.mrb[0].mxu0 %v5617
  %v5672 = vpop.f32.mrb[0].mxu0
  %v5673 = vadd.f32 0.0, %v5672
  %v5674 = vpop.f32.mrb[0].mxu0
  %v5675 = vpop.f32.mrb[0].mxu0
  %v5676 = vadd.f32 0.0, %v5675
  %v5677 = vpop.f32.mrb[0].mxu0
  %5678 = vmatprep.mubr.bf16.mxu0 0
  %5679 = vmatmul.mubr.bf16.gmra.mrb[0].mxu0 %v5620
  %v5680 = vpop.f32.mrb[0].mxu0
  %v5681 = vadd.f32 0.0, %v5680
  %v5682 = vpop.f32.mrb[0].mxu0
  %v5683 = vpop.f32.mrb[0].mxu0
  %v5684 = vadd.f32 0.0, %v5683
  %v5685 = vpop.f32.mrb[0].mxu0
  %5686 = vdwg.mxu0
  %v5687 = vadd.f32 %v5532, %v5657
  %v5688 = vadd.f32 %v5533, %v5660
  %v5689 = vadd.f32 %v5534, %v5665
  %v5690 = vadd.f32 %v5535, %v5668
  %v5691 = vadd.f32 %v5536, %v5673
  %v5692 = vadd.f32 %v5537, %v5676
  %v5693 = vadd.f32 %v5538, %v5681
  %v5694 = vadd.f32 %v5539, %v5684
  %s5695 = scalar_lea.vmem %s5, 192
  %v5696 = vld [vmem:[%s5695] sm:$0xf]
  %v5697 = vld [vmem:[%s5695 + $0x4] sm:$0xf]
  %v5698 = vld [vmem:[%s5695 + $0x8] sm:$0xf]
  %v5699 = vld [vmem:[%s5695 + $0xc] sm:$0xf]
  %v5700 = vld [vmem:[%s5695 + $0x10] sm:$0xf]
  %v5701 = vld [vmem:[%s5695 + $0x14] sm:$0xf]
  %v5702 = vld [vmem:[%s5695 + $0x18] sm:$0xf]
  %v5703 = vld [vmem:[%s5695 + $0x1c] sm:$0xf]
  %v5712 = vunpack.c.l.b16 %v5696
  %v5713 = vunpack.c.l.b16 %v5697
  %v5714 = vunpack.c.l.b16 %v5698
  %v5715 = vunpack.c.l.b16 %v5699
  %v5716 = vunpack.c.l.b16 %v5700
  %v5717 = vunpack.c.l.b16 %v5701
  %v5718 = vunpack.c.l.b16 %v5702
  %v5719 = vunpack.c.l.b16 %v5703
  %v5720 = vpack.c.b16 %v5713, %v5712
  %v5721 = vpack.c.b16 %v5715, %v5714
  %v5722 = vpack.c.b16 %v5717, %v5716
  %v5723 = vpack.c.b16 %v5719, %v5718
  %5724 = vrot.lane.b32.xlu0 %v4802, 92
  %v5725 = vpop.permute.xlu0 %5724
  %5726 = vrot.lane.b32.xlu0 %v4803, 92
  %v5727 = vpop.permute.xlu0 %5726
  %5728 = vrot.lane.b32.xlu0 %v4804, 92
  %v5729 = vpop.permute.xlu0 %5728
  %5730 = vrot.lane.b32.xlu0 %v4805, 92
  %v5731 = vpop.permute.xlu0 %5730
  %5732 = vrot.lane.b32.xlu0 %v4806, 92
  %v5733 = vpop.permute.xlu0 %5732
  %5734 = vrot.lane.b32.xlu0 %v4807, 92
  %v5735 = vpop.permute.xlu0 %5734
  %5736 = vrot.lane.b32.xlu0 %v4808, 92
  %v5737 = vpop.permute.xlu0 %5736
  %5738 = vrot.lane.b32.xlu0 %v4809, 92
  %v5739 = vpop.permute.xlu0 %5738
  %5740 = vrot.lane.b32.xlu0 %v4810, 92
  %v5741 = vpop.permute.xlu0 %5740
  %5742 = vrot.lane.b32.xlu0 %v4811, 92
  %v5743 = vpop.permute.xlu0 %5742
  %5744 = vrot.lane.b32.xlu0 %v4812, 92
  %v5745 = vpop.permute.xlu0 %5744
  %5746 = vrot.lane.b32.xlu0 %v4813, 92
  %v5747 = vpop.permute.xlu0 %5746
  %vm5748 = vcmask 752640
  %v5749 = vsel %vm5748, %v5725, %v5727
  %v5750 = vsel %vm5748, %v5727, %v5729
  %v5751 = vsel %vm5748, %v5731, %v5733
  %v5752 = vsel %vm5748, %v5733, %v5735
  %v5753 = vsel %vm5748, %v5737, %v5739
  %v5754 = vsel %vm5748, %v5739, %v5741
  %v5755 = vsel %vm5748, %v5743, %v5745
  %v5756 = vsel %vm5748, %v5745, %v5747
  %v5766 = vsel %vm255, %v5720, 0
  %v5769 = vsel %vm255, %v5721, 0
  %v5772 = vsel %vm255, %v5722, 0
  %v5775 = vsel %vm255, %v5723, 0
  %5777 = vmatprep.subr.bf16.mxu0 %v5750
  %5778 = vmatpush1.bf16.msra.mxu0 %v5749
  %5779 = vmatprep.subr.bf16.mxu0 %v5752
  %5780 = vmatpush1.bf16.msra.mxu0 %v5751
  %5781 = vmatprep.subr.bf16.mxu0 %v5754
  %5782 = vmatpush1.bf16.msra.mxu0 %v5753
  %5783 = vmatprep.subr.bf16.mxu0 %v5756
  %5784 = vmatpush1.bf16.msra.mxu0 %v5755
  %5785 = vmatprep.subr.bf16.mxu0 0
  %5786 = vmatpush1.bf16.msra.mxu0 0
  %5787 = vmatprep.subr.bf16.mxu0 0
  %5788 = vmatpush1.bf16.msra.mxu0 0
  %5789 = vmatprep.subr.bf16.mxu0 0
  %5790 = vmatpush1.bf16.msra.mxu0 0
  %5791 = vmatprep.subr.bf16.mxu0 0
  %5792 = vmatpush1.bf16.msra.mxu0 0
  %5793 = vmatprep.subr.bf16.mxu0 0
  %5794 = vmatpush1.bf16.msra.mxu0 0
  %5795 = vmatprep.subr.bf16.mxu0 0
  %5796 = vmatpush1.bf16.msra.mxu0 0
  %5797 = vmatprep.subr.bf16.mxu0 0
  %5798 = vmatpush1.bf16.msra.mxu0 0
  %5799 = vmatprep.subr.bf16.mxu0 0
  %5800 = vmatpush1.bf16.msra.mxu0 0
  %5801 = vmatprep.subr.bf16.mxu0 0
  %5802 = vmatpush1.bf16.msra.mxu0 0
  %5803 = vmatprep.subr.bf16.mxu0 0
  %5804 = vmatpush1.bf16.msra.mxu0 0
  %5805 = vmatprep.subr.bf16.mxu0 0
  %5806 = vmatpush1.bf16.msra.mxu0 0
  %5807 = vmatprep.subr.bf16.mxu0 0
  %5808 = vmatpush1.bf16.msra.mxu0 0
  %5809 = vmatprep.mubr.bf16.mxu0 0
  %5810 = vmatmul.mubr.bf16.gmra.mrb[0].mxu0 %v5766
  %v5811 = vpop.f32.mrb[0].mxu0
  %v5812 = vadd.f32 0.0, %v5811
  %v5813 = vpop.f32.mrb[0].mxu0
  %v5814 = vpop.f32.mrb[0].mxu0
  %v5815 = vadd.f32 0.0, %v5814
  %v5816 = vpop.f32.mrb[0].mxu0
  %5817 = vmatprep.mubr.bf16.mxu0 0
  %5818 = vmatmul.mubr.bf16.gmra.mrb[0].mxu0 %v5769
  %v5819 = vpop.f32.mrb[0].mxu0
  %v5820 = vadd.f32 0.0, %v5819
  %v5821 = vpop.f32.mrb[0].mxu0
  %v5822 = vpop.f32.mrb[0].mxu0
  %v5823 = vadd.f32 0.0, %v5822
  %v5824 = vpop.f32.mrb[0].mxu0
  %5825 = vmatprep.mubr.bf16.mxu0 0
  %5826 = vmatmul.mubr.bf16.gmra.mrb[0].mxu0 %v5772
  %v5827 = vpop.f32.mrb[0].mxu0
  %v5828 = vadd.f32 0.0, %v5827
  %v5829 = vpop.f32.mrb[0].mxu0
  %v5830 = vpop.f32.mrb[0].mxu0
  %v5831 = vadd.f32 0.0, %v5830
  %v5832 = vpop.f32.mrb[0].mxu0
  %5833 = vmatprep.mubr.bf16.mxu0 0
  %5834 = vmatmul.mubr.bf16.gmra.mrb[0].mxu0 %v5775
  %v5835 = vpop.f32.mrb[0].mxu0
  %v5836 = vadd.f32 0.0, %v5835
  %v5837 = vpop.f32.mrb[0].mxu0
  %v5838 = vpop.f32.mrb[0].mxu0
  %v5839 = vadd.f32 0.0, %v5838
  %v5840 = vpop.f32.mrb[0].mxu0
  %5841 = vdwg.mxu0
  %v5842 = vadd.f32 %v5687, %v5812
  %v5843 = vadd.f32 %v5688, %v5815
  %v5844 = vadd.f32 %v5689, %v5820
  %v5845 = vadd.f32 %v5690, %v5823
  %v5846 = vadd.f32 %v5691, %v5828
  %v5847 = vadd.f32 %v5692, %v5831
  %v5848 = vadd.f32 %v5693, %v5836
  %v5849 = vadd.f32 %v5694, %v5839
  %s5850 = scalar_lea.vmem %s5, 224
  %v5851 = vld [vmem:[%s5850] sm:$0xf]
  %v5852 = vld [vmem:[%s5850 + $0x4] sm:$0xf]
  %v5853 = vld [vmem:[%s5850 + $0x8] sm:$0xf]
  %v5854 = vld [vmem:[%s5850 + $0xc] sm:$0xf]
  %v5855 = vld [vmem:[%s5850 + $0x10] sm:$0xf]
  %v5856 = vld [vmem:[%s5850 + $0x14] sm:$0xf]
  %v5857 = vld [vmem:[%s5850 + $0x18] sm:$0xf]
  %v5858 = vld [vmem:[%s5850 + $0x1c] sm:$0xf]
  %v5867 = vunpack.c.l.b16 %v5851
  %v5868 = vunpack.c.l.b16 %v5852
  %v5869 = vunpack.c.l.b16 %v5853
  %v5870 = vunpack.c.l.b16 %v5854
  %v5871 = vunpack.c.l.b16 %v5855
  %v5872 = vunpack.c.l.b16 %v5856
  %v5873 = vunpack.c.l.b16 %v5857
  %v5874 = vunpack.c.l.b16 %v5858
  %v5875 = vpack.c.b16 %v5868, %v5867
  %v5876 = vpack.c.b16 %v5870, %v5869
  %v5877 = vpack.c.b16 %v5872, %v5871
  %v5878 = vpack.c.b16 %v5874, %v5873
  %5879 = vrot.lane.b32.xlu0 %v4802, 90
  %v5880 = vpop.permute.xlu0 %5879
  %5881 = vrot.lane.b32.xlu0 %v4803, 90
  %v5882 = vpop.permute.xlu0 %5881
  %5883 = vrot.lane.b32.xlu0 %v4804, 90
  %v5884 = vpop.permute.xlu0 %5883
  %5885 = vrot.lane.b32.xlu0 %v4805, 90
  %v5886 = vpop.permute.xlu0 %5885
  %5887 = vrot.lane.b32.xlu0 %v4806, 90
  %v5888 = vpop.permute.xlu0 %5887
  %5889 = vrot.lane.b32.xlu0 %v4807, 90
  %v5890 = vpop.permute.xlu0 %5889
  %5891 = vrot.lane.b32.xlu0 %v4808, 90
  %v5892 = vpop.permute.xlu0 %5891
  %5893 = vrot.lane.b32.xlu0 %v4809, 90
  %v5894 = vpop.permute.xlu0 %5893
  %5895 = vrot.lane.b32.xlu0 %v4810, 90
  %v5896 = vpop.permute.xlu0 %5895
  %5897 = vrot.lane.b32.xlu0 %v4811, 90
  %v5898 = vpop.permute.xlu0 %5897
  %5899 = vrot.lane.b32.xlu0 %v4812, 90
  %v5900 = vpop.permute.xlu0 %5899
  %5901 = vrot.lane.b32.xlu0 %v4813, 90
  %v5902 = vpop.permute.xlu0 %5901
  %vm5903 = vcmask 736256
  %v5904 = vsel %vm5903, %v5880, %v5882
  %v5905 = vsel %vm5903, %v5882, %v5884
  %v5906 = vsel %vm5903, %v5886, %v5888
  %v5907 = vsel %vm5903, %v5888, %v5890
  %v5908 = vsel %vm5903, %v5892, %v5894
  %v5909 = vsel %vm5903, %v5894, %v5896
  %v5910 = vsel %vm5903, %v5898, %v5900
  %v5911 = vsel %vm5903, %v5900, %v5902
  %v5921 = vsel %vm255, %v5875, 0
  %v5924 = vsel %vm255, %v5876, 0
  %v5927 = vsel %vm255, %v5877, 0
  %v5930 = vsel %vm255, %v5878, 0
  %5932 = vmatprep.subr.bf16.mxu0 %v5905
  %5933 = vmatpush1.bf16.msra.mxu0 %v5904
  %5934 = vmatprep.subr.bf16.mxu0 %v5907
  %5935 = vmatpush1.bf16.msra.mxu0 %v5906
  %5936 = vmatprep.subr.bf16.mxu0 %v5909
  %5937 = vmatpush1.bf16.msra.mxu0 %v5908
  %5938 = vmatprep.subr.bf16.mxu0 %v5911
  %5939 = vmatpush1.bf16.msra.mxu0 %v5910
  %5940 = vmatprep.subr.bf16.mxu0 0
  %5941 = vmatpush1.bf16.msra.mxu0 0
  %5942 = vmatprep.subr.bf16.mxu0 0
  %5943 = vmatpush1.bf16.msra.mxu0 0
  %5944 = vmatprep.subr.bf16.mxu0 0
  %5945 = vmatpush1.bf16.msra.mxu0 0
  %5946 = vmatprep.subr.bf16.mxu0 0
  %5947 = vmatpush1.bf16.msra.mxu0 0
  %5948 = vmatprep.subr.bf16.mxu0 0
  %5949 = vmatpush1.bf16.msra.mxu0 0
  %5950 = vmatprep.subr.bf16.mxu0 0
  %5951 = vmatpush1.bf16.msra.mxu0 0
  %5952 = vmatprep.subr.bf16.mxu0 0
  %5953 = vmatpush1.bf16.msra.mxu0 0
  %5954 = vmatprep.subr.bf16.mxu0 0
  %5955 = vmatpush1.bf16.msra.mxu0 0
  %5956 = vmatprep.subr.bf16.mxu0 0
  %5957 = vmatpush1.bf16.msra.mxu0 0
  %5958 = vmatprep.subr.bf16.mxu0 0
  %5959 = vmatpush1.bf16.msra.mxu0 0
  %5960 = vmatprep.subr.bf16.mxu0 0
  %5961 = vmatpush1.bf16.msra.mxu0 0
  %5962 = vmatprep.subr.bf16.mxu0 0
  %5963 = vmatpush1.bf16.msra.mxu0 0
  %5964 = vmatprep.mubr.bf16.mxu0 0
  %5965 = vmatmul.mubr.bf16.gmra.mrb[0].mxu0 %v5921
  %v5966 = vpop.f32.mrb[0].mxu0
  %v5967 = vadd.f32 0.0, %v5966
  %v5968 = vpop.f32.mrb[0].mxu0
  %v5969 = vpop.f32.mrb[0].mxu0
  %v5970 = vadd.f32 0.0, %v5969
  %v5971 = vpop.f32.mrb[0].mxu0
  %5972 = vmatprep.mubr.bf16.mxu0 0
  %5973 = vmatmul.mubr.bf16.gmra.mrb[0].mxu0 %v5924
  %v5974 = vpop.f32.mrb[0].mxu0
  %v5975 = vadd.f32 0.0, %v5974
  %v5976 = vpop.f32.mrb[0].mxu0
  %v5977 = vpop.f32.mrb[0].mxu0
  %v5978 = vadd.f32 0.0, %v5977
  %v5979 = vpop.f32.mrb[0].mxu0
  %5980 = vmatprep.mubr.bf16.mxu0 0
  %5981 = vmatmul.mubr.bf16.gmra.mrb[0].mxu0 %v5927
  %v5982 = vpop.f32.mrb[0].mxu0
  %v5983 = vadd.f32 0.0, %v5982
  %v5984 = vpop.f32.mrb[0].mxu0
  %v5985 = vpop.f32.mrb[0].mxu0
  %v5986 = vadd.f32 0.0, %v5985
  %v5987 = vpop.f32.mrb[0].mxu0
  %5988 = vmatprep.mubr.bf16.mxu0 0
  %5989 = vmatmul.mubr.bf16.gmra.mrb[0].mxu0 %v5930
  %v5990 = vpop.f32.mrb[0].mxu0
  %v5991 = vadd.f32 0.0, %v5990
  %v5992 = vpop.f32.mrb[0].mxu0
  %v5993 = vpop.f32.mrb[0].mxu0
  %v5994 = vadd.f32 0.0, %v5993
  %v5995 = vpop.f32.mrb[0].mxu0
  %5996 = vdwg.mxu0
  %v5997 = vadd.f32 %v5842, %v5967
  %v5998 = vadd.f32 %v5843, %v5970
  %v5999 = vadd.f32 %v5844, %v5975
  %v6000 = vadd.f32 %v5845, %v5978
  %v6001 = vadd.f32 %v5846, %v5983
  %v6002 = vadd.f32 %v5847, %v5986
  %v6003 = vadd.f32 %v5848, %v5991
  %v6004 = vadd.f32 %v5849, %v5994
  %s6005 = scalar_lea.vmem %s5, 256
  %v6006 = vld [vmem:[%s6005] sm:$0xf]
  %v6007 = vld [vmem:[%s6005 + $0x4] sm:$0xf]
  %v6008 = vld [vmem:[%s6005 + $0x8] sm:$0xf]
  %v6009 = vld [vmem:[%s6005 + $0xc] sm:$0xf]
  %v6010 = vld [vmem:[%s6005 + $0x10] sm:$0xf]
  %v6011 = vld [vmem:[%s6005 + $0x14] sm:$0xf]
  %v6012 = vld [vmem:[%s6005 + $0x18] sm:$0xf]
  %v6013 = vld [vmem:[%s6005 + $0x1c] sm:$0xf]
  %v6022 = vunpack.c.l.b16 %v6006
  %v6023 = vunpack.c.l.b16 %v6007
  %v6024 = vunpack.c.l.b16 %v6008
  %v6025 = vunpack.c.l.b16 %v6009
  %v6026 = vunpack.c.l.b16 %v6010
  %v6027 = vunpack.c.l.b16 %v6011
  %v6028 = vunpack.c.l.b16 %v6012
  %v6029 = vunpack.c.l.b16 %v6013
  %v6030 = vpack.c.b16 %v6023, %v6022
  %v6031 = vpack.c.b16 %v6025, %v6024
  %v6032 = vpack.c.b16 %v6027, %v6026
  %v6033 = vpack.c.b16 %v6029, %v6028
  %6034 = vrot.lane.b32.xlu0 %v4802, 88
  %v6035 = vpop.permute.xlu0 %6034
  %6036 = vrot.lane.b32.xlu0 %v4803, 88
  %v6037 = vpop.permute.xlu0 %6036
  %6038 = vrot.lane.b32.xlu0 %v4804, 88
  %v6039 = vpop.permute.xlu0 %6038
  %6040 = vrot.lane.b32.xlu0 %v4805, 88
  %v6041 = vpop.permute.xlu0 %6040
  %6042 = vrot.lane.b32.xlu0 %v4806, 88
  %v6043 = vpop.permute.xlu0 %6042
  %6044 = vrot.lane.b32.xlu0 %v4807, 88
  %v6045 = vpop.permute.xlu0 %6044
  %6046 = vrot.lane.b32.xlu0 %v4808, 88
  %v6047 = vpop.permute.xlu0 %6046
  %6048 = vrot.lane.b32.xlu0 %v4809, 88
  %v6049 = vpop.permute.xlu0 %6048
  %6050 = vrot.lane.b32.xlu0 %v4810, 88
  %v6051 = vpop.permute.xlu0 %6050
  %6052 = vrot.lane.b32.xlu0 %v4811, 88
  %v6053 = vpop.permute.xlu0 %6052
  %6054 = vrot.lane.b32.xlu0 %v4812, 88
  %v6055 = vpop.permute.xlu0 %6054
  %6056 = vrot.lane.b32.xlu0 %v4813, 88
  %v6057 = vpop.permute.xlu0 %6056
  %vm6058 = vcmask 719872
  %v6059 = vsel %vm6058, %v6035, %v6037
  %v6060 = vsel %vm6058, %v6037, %v6039
  %v6061 = vsel %vm6058, %v6041, %v6043
  %v6062 = vsel %vm6058, %v6043, %v6045
  %v6063 = vsel %vm6058, %v6047, %v6049
  %v6064 = vsel %vm6058, %v6049, %v6051
  %v6065 = vsel %vm6058, %v6053, %v6055
  %v6066 = vsel %vm6058, %v6055, %v6057
  %v6076 = vsel %vm255, %v6030, 0
  %v6079 = vsel %vm255, %v6031, 0
  %v6082 = vsel %vm255, %v6032, 0
  %v6085 = vsel %vm255, %v6033, 0
  %6087 = vmatprep.subr.bf16.mxu0 %v6060
  %6088 = vmatpush1.bf16.msra.mxu0 %v6059
  %6089 = vmatprep.subr.bf16.mxu0 %v6062
  %6090 = vmatpush1.bf16.msra.mxu0 %v6061
  %6091 = vmatprep.subr.bf16.mxu0 %v6064
  %6092 = vmatpush1.bf16.msra.mxu0 %v6063
  %6093 = vmatprep.subr.bf16.mxu0 %v6066
  %6094 = vmatpush1.bf16.msra.mxu0 %v6065
  %6095 = vmatprep.subr.bf16.mxu0 0
  %6096 = vmatpush1.bf16.msra.mxu0 0
  %6097 = vmatprep.subr.bf16.mxu0 0
  %6098 = vmatpush1.bf16.msra.mxu0 0
  %6099 = vmatprep.subr.bf16.mxu0 0
  %6100 = vmatpush1.bf16.msra.mxu0 0
  %6101 = vmatprep.subr.bf16.mxu0 0
  %6102 = vmatpush1.bf16.msra.mxu0 0
  %6103 = vmatprep.subr.bf16.mxu0 0
  %6104 = vmatpush1.bf16.msra.mxu0 0
  %6105 = vmatprep.subr.bf16.mxu0 0
  %6106 = vmatpush1.bf16.msra.mxu0 0
  %6107 = vmatprep.subr.bf16.mxu0 0
  %6108 = vmatpush1.bf16.msra.mxu0 0
  %6109 = vmatprep.subr.bf16.mxu0 0
  %6110 = vmatpush1.bf16.msra.mxu0 0
  %6111 = vmatprep.subr.bf16.mxu0 0
  %6112 = vmatpush1.bf16.msra.mxu0 0
  %6113 = vmatprep.subr.bf16.mxu0 0
  %6114 = vmatpush1.bf16.msra.mxu0 0
  %6115 = vmatprep.subr.bf16.mxu0 0
  %6116 = vmatpush1.bf16.msra.mxu0 0
  %6117 = vmatprep.subr.bf16.mxu0 0
  %6118 = vmatpush1.bf16.msra.mxu0 0
  %6119 = vmatprep.mubr.bf16.mxu0 0
  %6120 = vmatmul.mubr.bf16.gmra.mrb[0].mxu0 %v6076
  %v6121 = vpop.f32.mrb[0].mxu0
  %v6122 = vadd.f32 0.0, %v6121
  %v6123 = vpop.f32.mrb[0].mxu0
  %v6124 = vpop.f32.mrb[0].mxu0
  %v6125 = vadd.f32 0.0, %v6124
  %v6126 = vpop.f32.mrb[0].mxu0
  %6127 = vmatprep.mubr.bf16.mxu0 0
  %6128 = vmatmul.mubr.bf16.gmra.mrb[0].mxu0 %v6079
  %v6129 = vpop.f32.mrb[0].mxu0
  %v6130 = vadd.f32 0.0, %v6129
  %v6131 = vpop.f32.mrb[0].mxu0
  %v6132 = vpop.f32.mrb[0].mxu0
  %v6133 = vadd.f32 0.0, %v6132
  %v6134 = vpop.f32.mrb[0].mxu0
  %6135 = vmatprep.mubr.bf16.mxu0 0
  %6136 = vmatmul.mubr.bf16.gmra.mrb[0].mxu0 %v6082
  %v6137 = vpop.f32.mrb[0].mxu0
  %v6138 = vadd.f32 0.0, %v6137
  %v6139 = vpop.f32.mrb[0].mxu0
  %v6140 = vpop.f32.mrb[0].mxu0
  %v6141 = vadd.f32 0.0, %v6140
  %v6142 = vpop.f32.mrb[0].mxu0
  %6143 = vmatprep.mubr.bf16.mxu0 0
  %6144 = vmatmul.mubr.bf16.gmra.mrb[0].mxu0 %v6085
  %v6145 = vpop.f32.mrb[0].mxu0
  %v6146 = vadd.f32 0.0, %v6145
  %v6147 = vpop.f32.mrb[0].mxu0
  %v6148 = vpop.f32.mrb[0].mxu0
  %v6149 = vadd.f32 0.0, %v6148
  %v6150 = vpop.f32.mrb[0].mxu0
  %6151 = vdwg.mxu0
  %v6152 = vadd.f32 %v5997, %v6122
  %v6153 = vadd.f32 %v5998, %v6125
  %v6154 = vadd.f32 %v5999, %v6130
  %v6155 = vadd.f32 %v6000, %v6133
  %v6156 = vadd.f32 %v6001, %v6138
  %v6157 = vadd.f32 %v6002, %v6141
  %v6158 = vadd.f32 %v6003, %v6146
  %v6159 = vadd.f32 %v6004, %v6149
  %v6160 = vld [vmem:[%s6] sm:$0xff]
  %v6161 = vld [vmem:[%s6 + $0x8] sm:$0xff]
  %v6162 = vld [vmem:[%s6 + $0x10] sm:$0xff]
  %v6163 = vld [vmem:[%s6 + $0x18] sm:$0xff]
  %v6164 = vld [vmem:[%s6 + $0x20] sm:$0xff]
  %v6165 = vld [vmem:[%s6 + $0x28] sm:$0xff]
  %v6166 = vld [vmem:[%s6 + $0x30] sm:$0xff]
  %v6167 = vld [vmem:[%s6 + $0x38] sm:$0xff]
  %6169 = vset.pattern.permute.xlu0 0
  %6170 = vperm.xlu0 %6169, %v6160
  %v6171 = vpop.permute.xlu0 %6170
  %6174 = vset.pattern.permute.xlu0 0
  %6175 = vperm.xlu0 %6174, %v6161
  %v6176 = vpop.permute.xlu0 %6175
  %6179 = vset.pattern.permute.xlu0 0
  %6180 = vperm.xlu0 %6179, %v6162
  %v6181 = vpop.permute.xlu0 %6180
  %6184 = vset.pattern.permute.xlu0 0
  %6185 = vperm.xlu0 %6184, %v6163
  %v6186 = vpop.permute.xlu0 %6185
  %6189 = vset.pattern.permute.xlu0 0
  %6190 = vperm.xlu0 %6189, %v6164
  %v6191 = vpop.permute.xlu0 %6190
  %6194 = vset.pattern.permute.xlu0 0
  %6195 = vperm.xlu0 %6194, %v6165
  %v6196 = vpop.permute.xlu0 %6195
  %6199 = vset.pattern.permute.xlu0 0
  %6200 = vperm.xlu0 %6199, %v6166
  %v6201 = vpop.permute.xlu0 %6200
  %6204 = vset.pattern.permute.xlu0 0
  %6205 = vperm.xlu0 %6204, %v6167
  %v6206 = vpop.permute.xlu0 %6205
  %v6208 = vadd.f32 %v6152, %v6171
  %v6209 = vadd.f32 %v6153, %v6176
  %v6210 = vadd.f32 %v6154, %v6181
  %v6211 = vadd.f32 %v6155, %v6186
  %v6212 = vadd.f32 %v6156, %v6191
  %v6213 = vadd.f32 %v6157, %v6196
  %v6214 = vadd.f32 %v6158, %v6201
  %v6215 = vadd.f32 %v6159, %v6206
  %v6216 = vmax.f32 %v6208, 0.0
  %v6217 = vmax.f32 %v6209, 0.0
  %v6218 = vmax.f32 %v6210, 0.0
  %v6219 = vmax.f32 %v6211, 0.0
  %v6220 = vmax.f32 %v6212, 0.0
  %v6221 = vmax.f32 %v6213, 0.0
  %v6222 = vmax.f32 %v6214, 0.0
  %v6223 = vmax.f32 %v6215, 0.0
  %v6224 = vpack.c.bf16 %v6217, %v6216
  %v6225 = vpack.c.bf16 %v6219, %v6218
  %v6226 = vpack.c.bf16 %v6221, %v6220
  %v6227 = vpack.c.bf16 %v6223, %v6222
  %6232 = vrot.lane.b32.xlu0 %v6224, 48
  %v6233 = vpop.permute.xlu0 %6232
  %6234 = vrot.lane.b32.xlu0 %v6225, 48
  %v6235 = vpop.permute.xlu0 %6234
  %6236 = vrot.lane.b32.xlu0 %v6226, 48
  %v6237 = vpop.permute.xlu0 %6236
  %6238 = vrot.lane.b32.xlu0 %v6227, 48
  %v6239 = vpop.permute.xlu0 %6238
  %vm6240 = vcmask 7168
  %v6243 = vsel %vm6240, %v6224, %v6233
  %v6247 = vsel %vm6240, %v6225, %v6235
  %v6251 = vsel %vm6240, %v6226, %v6237
  %v6255 = vsel %vm6240, %v6227, %v6239
  %v6257 = vld [vmem:[%s7] sm:$0xf]
  %v6258 = vld [vmem:[%s7 + $0x4] sm:$0xf]
  %v6259 = vld [vmem:[%s7 + $0x8] sm:$0xf]
  %v6260 = vld [vmem:[%s7 + $0xc] sm:$0xf]
  %v6261 = vld [vmem:[%s7 + $0x10] sm:$0xf]
  %v6262 = vld [vmem:[%s7 + $0x14] sm:$0xf]
  %v6263 = vld [vmem:[%s7 + $0x18] sm:$0xf]
  %v6264 = vld [vmem:[%s7 + $0x1c] sm:$0xf]
  %v6265 = vld [vmem:[%s7 + $0x20] sm:$0xf]
  %v6266 = vld [vmem:[%s7 + $0x24] sm:$0xf]
  %v6267 = vld [vmem:[%s7 + $0x28] sm:$0xf]
  %v6268 = vld [vmem:[%s7 + $0x2c] sm:$0xf]
  %v6269 = vld [vmem:[%s7 + $0x30] sm:$0xf]
  %v6270 = vld [vmem:[%s7 + $0x34] sm:$0xf]
  %v6271 = vld [vmem:[%s7 + $0x38] sm:$0xf]
  %v6272 = vld [vmem:[%s7 + $0x3c] sm:$0xf]
  %v6273 = vld [vmem:[%s7 + $0x40] sm:$0xf]
  %v6274 = vld [vmem:[%s7 + $0x44] sm:$0xf]
  %v6275 = vld [vmem:[%s7 + $0x48] sm:$0xf]
  %v6276 = vld [vmem:[%s7 + $0x4c] sm:$0xf]
  %v6277 = vld [vmem:[%s7 + $0x50] sm:$0xf]
  %v6278 = vld [vmem:[%s7 + $0x54] sm:$0xf]
  %v6279 = vld [vmem:[%s7 + $0x58] sm:$0xf]
  %v6280 = vld [vmem:[%s7 + $0x5c] sm:$0xf]
  %v6281 = vld [vmem:[%s7 + $0x60] sm:$0xf]
  %v6282 = vld [vmem:[%s7 + $0x64] sm:$0xf]
  %v6283 = vld [vmem:[%s7 + $0x68] sm:$0xf]
  %v6284 = vld [vmem:[%s7 + $0x6c] sm:$0xf]
  %v6285 = vld [vmem:[%s7 + $0x70] sm:$0xf]
  %v6286 = vld [vmem:[%s7 + $0x74] sm:$0xf]
  %v6287 = vld [vmem:[%s7 + $0x78] sm:$0xf]
  %v6288 = vld [vmem:[%s7 + $0x7c] sm:$0xf]
  %v6289 = vld [vmem:[%s7 + $0x80] sm:$0xf]
  %v6290 = vld [vmem:[%s7 + $0x84] sm:$0xf]
  %v6291 = vld [vmem:[%s7 + $0x88] sm:$0xf]
  %v6292 = vld [vmem:[%s7 + $0x8c] sm:$0xf]
  %v6293 = vld [vmem:[%s7 + $0x90] sm:$0xf]
  %v6294 = vld [vmem:[%s7 + $0x94] sm:$0xf]
  %v6295 = vld [vmem:[%s7 + $0x98] sm:$0xf]
  %v6296 = vld [vmem:[%s7 + $0x9c] sm:$0xf]
  %v6297 = vld [vmem:[%s7 + $0xa0] sm:$0xf]
  %v6298 = vld [vmem:[%s7 + $0xa4] sm:$0xf]
  %v6299 = vld [vmem:[%s7 + $0xa8] sm:$0xf]
  %v6300 = vld [vmem:[%s7 + $0xac] sm:$0xf]
  %v6301 = vld [vmem:[%s7 + $0xb0] sm:$0xf]
  %v6302 = vld [vmem:[%s7 + $0xb4] sm:$0xf]
  %v6303 = vld [vmem:[%s7 + $0xb8] sm:$0xf]
  %v6304 = vld [vmem:[%s7 + $0xbc] sm:$0xf]
  %v6305 = vld [vmem:[%s7 + $0xc0] sm:$0xf]
  %v6306 = vld [vmem:[%s7 + $0xc4] sm:$0xf]
  %v6307 = vld [vmem:[%s7 + $0xc8] sm:$0xf]
  %v6308 = vld [vmem:[%s7 + $0xcc] sm:$0xf]
  %v6309 = vld [vmem:[%s7 + $0xd0] sm:$0xf]
  %v6310 = vld [vmem:[%s7 + $0xd4] sm:$0xf]
  %v6311 = vld [vmem:[%s7 + $0xd8] sm:$0xf]
  %v6312 = vld [vmem:[%s7 + $0xdc] sm:$0xf]
  %v6313 = vld [vmem:[%s7 + $0xe0] sm:$0xf]
  %v6314 = vld [vmem:[%s7 + $0xe4] sm:$0xf]
  %v6315 = vld [vmem:[%s7 + $0xe8] sm:$0xf]
  %v6316 = vld [vmem:[%s7 + $0xec] sm:$0xf]
  %v6317 = vld [vmem:[%s7 + $0xf0] sm:$0xf]
  %v6318 = vld [vmem:[%s7 + $0xf4] sm:$0xf]
  %v6319 = vld [vmem:[%s7 + $0xf8] sm:$0xf]
  %v6320 = vld [vmem:[%s7 + $0xfc] sm:$0xf]
  %v6321 = vld [vmem:[%s8] sm:$0xff]
  %v6322 = vld [vmem:[%s8 + $0x8] sm:$0xff]
  %v6323 = vld [vmem:[%s8 + $0x10] sm:$0xff]
  %v6324 = vld [vmem:[%s8 + $0x18] sm:$0xff]
  %v6325 = vld [vmem:[%s8 + $0x20] sm:$0xff]
  %v6326 = vld [vmem:[%s8 + $0x28] sm:$0xff]
  %v6327 = vld [vmem:[%s8 + $0x30] sm:$0xff]
  %v6328 = vld [vmem:[%s8 + $0x38] sm:$0xff]
  %v6329 = vld [vmem:[%s8 + $0x40] sm:$0xff]
  %v6330 = vld [vmem:[%s8 + $0x48] sm:$0xff]
  %v6331 = vld [vmem:[%s8 + $0x50] sm:$0xff]
  %v6332 = vld [vmem:[%s8 + $0x58] sm:$0xff]
  %v6333 = vld [vmem:[%s8 + $0x60] sm:$0xff]
  %v6334 = vld [vmem:[%s8 + $0x68] sm:$0xff]
  %v6335 = vld [vmem:[%s8 + $0x70] sm:$0xff]
  %v6336 = vld [vmem:[%s8 + $0x78] sm:$0xff]
  %v6337 = vld [vmem:[%s8 + $0x80] sm:$0xff]
  %v6338 = vld [vmem:[%s8 + $0x88] sm:$0xff]
  %v6339 = vld [vmem:[%s8 + $0x90] sm:$0xff]
  %v6340 = vld [vmem:[%s8 + $0x98] sm:$0xff]
  %v6341 = vld [vmem:[%s8 + $0xa0] sm:$0xff]
  %v6342 = vld [vmem:[%s8 + $0xa8] sm:$0xff]
  %v6343 = vld [vmem:[%s8 + $0xb0] sm:$0xff]
  %v6344 = vld [vmem:[%s8 + $0xb8] sm:$0xff]
  %v6345 = vld [vmem:[%s8 + $0xc0] sm:$0xff]
  %v6346 = vld [vmem:[%s8 + $0xc8] sm:$0xff]
  %v6347 = vld [vmem:[%s8 + $0xd0] sm:$0xff]
  %v6348 = vld [vmem:[%s8 + $0xd8] sm:$0xff]
  %v6349 = vld [vmem:[%s8 + $0xe0] sm:$0xff]
  %v6350 = vld [vmem:[%s8 + $0xe8] sm:$0xff]
  %v6351 = vld [vmem:[%s8 + $0xf0] sm:$0xff]
  %v6352 = vld [vmem:[%s8 + $0xf8] sm:$0xff]
  %v6353 = vld [vmem:[%s8 + $0x100] sm:$0xff]
  %v6354 = vld [vmem:[%s8 + $0x108] sm:$0xff]
  %v6355 = vld [vmem:[%s8 + $0x110] sm:$0xff]
  %v6356 = vld [vmem:[%s8 + $0x118] sm:$0xff]
  %v6357 = vld [vmem:[%s8 + $0x120] sm:$0xff]
  %v6358 = vld [vmem:[%s8 + $0x128] sm:$0xff]
  %v6359 = vld [vmem:[%s8 + $0x130] sm:$0xff]
  %v6360 = vld [vmem:[%s8 + $0x138] sm:$0xff]
  %v6361 = vld [vmem:[%s8 + $0x140] sm:$0xff]
  %v6362 = vld [vmem:[%s8 + $0x148] sm:$0xff]
  %v6363 = vld [vmem:[%s8 + $0x150] sm:$0xff]
  %v6364 = vld [vmem:[%s8 + $0x158] sm:$0xff]
  %v6365 = vld [vmem:[%s8 + $0x160] sm:$0xff]
  %v6366 = vld [vmem:[%s8 + $0x168] sm:$0xff]
  %v6367 = vld [vmem:[%s8 + $0x170] sm:$0xff]
  %v6368 = vld [vmem:[%s8 + $0x178] sm:$0xff]
  %v6369 = vld [vmem:[%s8 + $0x180] sm:$0xff]
  %v6370 = vld [vmem:[%s8 + $0x188] sm:$0xff]
  %v6371 = vld [vmem:[%s8 + $0x190] sm:$0xff]
  %v6372 = vld [vmem:[%s8 + $0x198] sm:$0xff]
  %v6373 = vld [vmem:[%s8 + $0x1a0] sm:$0xff]
  %v6374 = vld [vmem:[%s8 + $0x1a8] sm:$0xff]
  %v6375 = vld [vmem:[%s8 + $0x1b0] sm:$0xff]
  %v6376 = vld [vmem:[%s8 + $0x1b8] sm:$0xff]
  %v6377 = vld [vmem:[%s8 + $0x1c0] sm:$0xff]
  %v6378 = vld [vmem:[%s8 + $0x1c8] sm:$0xff]
  %v6379 = vld [vmem:[%s8 + $0x1d0] sm:$0xff]
  %v6380 = vld [vmem:[%s8 + $0x1d8] sm:$0xff]
  %v6381 = vld [vmem:[%s8 + $0x1e0] sm:$0xff]
  %v6382 = vld [vmem:[%s8 + $0x1e8] sm:$0xff]
  %v6383 = vld [vmem:[%s8 + $0x1f0] sm:$0xff]
  %v6384 = vld [vmem:[%s8 + $0x1f8] sm:$0xff]
  %6386 = vset.pattern.permute.xlu0 0
  %6387 = vperm.xlu0 %6386, %v6321
  %v6388 = vpop.permute.xlu0 %6387
  %6391 = vset.pattern.permute.xlu0 0
  %6392 = vperm.xlu0 %6391, %v6322
  %v6393 = vpop.permute.xlu0 %6392
  %6396 = vset.pattern.permute.xlu0 0
  %6397 = vperm.xlu0 %6396, %v6323
  %v6398 = vpop.permute.xlu0 %6397
  %6401 = vset.pattern.permute.xlu0 0
  %6402 = vperm.xlu0 %6401, %v6324
  %v6403 = vpop.permute.xlu0 %6402
  %6406 = vset.pattern.permute.xlu0 0
  %6407 = vperm.xlu0 %6406, %v6325
  %v6408 = vpop.permute.xlu0 %6407
  %6411 = vset.pattern.permute.xlu0 0
  %6412 = vperm.xlu0 %6411, %v6326
  %v6413 = vpop.permute.xlu0 %6412
  %6416 = vset.pattern.permute.xlu0 0
  %6417 = vperm.xlu0 %6416, %v6327
  %v6418 = vpop.permute.xlu0 %6417
  %6421 = vset.pattern.permute.xlu0 0
  %6422 = vperm.xlu0 %6421, %v6328
  %v6423 = vpop.permute.xlu0 %6422
  %6426 = vset.pattern.permute.xlu0 0
  %6427 = vperm.xlu0 %6426, %v6329
  %v6428 = vpop.permute.xlu0 %6427
  %6431 = vset.pattern.permute.xlu0 0
  %6432 = vperm.xlu0 %6431, %v6330
  %v6433 = vpop.permute.xlu0 %6432
  %6436 = vset.pattern.permute.xlu0 0
  %6437 = vperm.xlu0 %6436, %v6331
  %v6438 = vpop.permute.xlu0 %6437
  %6441 = vset.pattern.permute.xlu0 0
  %6442 = vperm.xlu0 %6441, %v6332
  %v6443 = vpop.permute.xlu0 %6442
  %6446 = vset.pattern.permute.xlu0 0
  %6447 = vperm.xlu0 %6446, %v6333
  %v6448 = vpop.permute.xlu0 %6447
  %6451 = vset.pattern.permute.xlu0 0
  %6452 = vperm.xlu0 %6451, %v6334
  %v6453 = vpop.permute.xlu0 %6452
  %6456 = vset.pattern.permute.xlu0 0
  %6457 = vperm.xlu0 %6456, %v6335
  %v6458 = vpop.permute.xlu0 %6457
  %6461 = vset.pattern.permute.xlu0 0
  %6462 = vperm.xlu0 %6461, %v6336
  %v6463 = vpop.permute.xlu0 %6462
  %6466 = vset.pattern.permute.xlu0 0
  %6467 = vperm.xlu0 %6466, %v6337
  %v6468 = vpop.permute.xlu0 %6467
  %6471 = vset.pattern.permute.xlu0 0
  %6472 = vperm.xlu0 %6471, %v6338
  %v6473 = vpop.permute.xlu0 %6472
  %6476 = vset.pattern.permute.xlu0 0
  %6477 = vperm.xlu0 %6476, %v6339
  %v6478 = vpop.permute.xlu0 %6477
  %6481 = vset.pattern.permute.xlu0 0
  %6482 = vperm.xlu0 %6481, %v6340
  %v6483 = vpop.permute.xlu0 %6482
  %6486 = vset.pattern.permute.xlu0 0
  %6487 = vperm.xlu0 %6486, %v6341
  %v6488 = vpop.permute.xlu0 %6487
  %6491 = vset.pattern.permute.xlu0 0
  %6492 = vperm.xlu0 %6491, %v6342
  %v6493 = vpop.permute.xlu0 %6492
  %6496 = vset.pattern.permute.xlu0 0
  %6497 = vperm.xlu0 %6496, %v6343
  %v6498 = vpop.permute.xlu0 %6497
  %6501 = vset.pattern.permute.xlu0 0
  %6502 = vperm.xlu0 %6501, %v6344
  %v6503 = vpop.permute.xlu0 %6502
  %6506 = vset.pattern.permute.xlu0 0
  %6507 = vperm.xlu0 %6506, %v6345
  %v6508 = vpop.permute.xlu0 %6507
  %6511 = vset.pattern.permute.xlu0 0
  %6512 = vperm.xlu0 %6511, %v6346
  %v6513 = vpop.permute.xlu0 %6512
  %6516 = vset.pattern.permute.xlu0 0
  %6517 = vperm.xlu0 %6516, %v6347
  %v6518 = vpop.permute.xlu0 %6517
  %6521 = vset.pattern.permute.xlu0 0
  %6522 = vperm.xlu0 %6521, %v6348
  %v6523 = vpop.permute.xlu0 %6522
  %6526 = vset.pattern.permute.xlu0 0
  %6527 = vperm.xlu0 %6526, %v6349
  %v6528 = vpop.permute.xlu0 %6527
  %6531 = vset.pattern.permute.xlu0 0
  %6532 = vperm.xlu0 %6531, %v6350
  %v6533 = vpop.permute.xlu0 %6532
  %6536 = vset.pattern.permute.xlu0 0
  %6537 = vperm.xlu0 %6536, %v6351
  %v6538 = vpop.permute.xlu0 %6537
  %6541 = vset.pattern.permute.xlu0 0
  %6542 = vperm.xlu0 %6541, %v6352
  %v6543 = vpop.permute.xlu0 %6542
  %6546 = vset.pattern.permute.xlu0 0
  %6547 = vperm.xlu0 %6546, %v6353
  %v6548 = vpop.permute.xlu0 %6547
  %6551 = vset.pattern.permute.xlu0 0
  %6552 = vperm.xlu0 %6551, %v6354
  %v6553 = vpop.permute.xlu0 %6552
  %6556 = vset.pattern.permute.xlu0 0
  %6557 = vperm.xlu0 %6556, %v6355
  %v6558 = vpop.permute.xlu0 %6557
  %6561 = vset.pattern.permute.xlu0 0
  %6562 = vperm.xlu0 %6561, %v6356
  %v6563 = vpop.permute.xlu0 %6562
  %6566 = vset.pattern.permute.xlu0 0
  %6567 = vperm.xlu0 %6566, %v6357
  %v6568 = vpop.permute.xlu0 %6567
  %6571 = vset.pattern.permute.xlu0 0
  %6572 = vperm.xlu0 %6571, %v6358
  %v6573 = vpop.permute.xlu0 %6572
  %6576 = vset.pattern.permute.xlu0 0
  %6577 = vperm.xlu0 %6576, %v6359
  %v6578 = vpop.permute.xlu0 %6577
  %6581 = vset.pattern.permute.xlu0 0
  %6582 = vperm.xlu0 %6581, %v6360
  %v6583 = vpop.permute.xlu0 %6582
  %6586 = vset.pattern.permute.xlu0 0
  %6587 = vperm.xlu0 %6586, %v6361
  %v6588 = vpop.permute.xlu0 %6587
  %6591 = vset.pattern.permute.xlu0 0
  %6592 = vperm.xlu0 %6591, %v6362
  %v6593 = vpop.permute.xlu0 %6592
  %6596 = vset.pattern.permute.xlu0 0
  %6597 = vperm.xlu0 %6596, %v6363
  %v6598 = vpop.permute.xlu0 %6597
  %6601 = vset.pattern.permute.xlu0 0
  %6602 = vperm.xlu0 %6601, %v6364
  %v6603 = vpop.permute.xlu0 %6602
  %6606 = vset.pattern.permute.xlu0 0
  %6607 = vperm.xlu0 %6606, %v6365
  %v6608 = vpop.permute.xlu0 %6607
  %6611 = vset.pattern.permute.xlu0 0
  %6612 = vperm.xlu0 %6611, %v6366
  %v6613 = vpop.permute.xlu0 %6612
  %6616 = vset.pattern.permute.xlu0 0
  %6617 = vperm.xlu0 %6616, %v6367
  %v6618 = vpop.permute.xlu0 %6617
  %6621 = vset.pattern.permute.xlu0 0
  %6622 = vperm.xlu0 %6621, %v6368
  %v6623 = vpop.permute.xlu0 %6622
  %6626 = vset.pattern.permute.xlu0 0
  %6627 = vperm.xlu0 %6626, %v6369
  %v6628 = vpop.permute.xlu0 %6627
  %6631 = vset.pattern.permute.xlu0 0
  %6632 = vperm.xlu0 %6631, %v6370
  %v6633 = vpop.permute.xlu0 %6632
  %6636 = vset.pattern.permute.xlu0 0
  %6637 = vperm.xlu0 %6636, %v6371
  %v6638 = vpop.permute.xlu0 %6637
  %6641 = vset.pattern.permute.xlu0 0
  %6642 = vperm.xlu0 %6641, %v6372
  %v6643 = vpop.permute.xlu0 %6642
  %6646 = vset.pattern.permute.xlu0 0
  %6647 = vperm.xlu0 %6646, %v6373
  %v6648 = vpop.permute.xlu0 %6647
  %6651 = vset.pattern.permute.xlu0 0
  %6652 = vperm.xlu0 %6651, %v6374
  %v6653 = vpop.permute.xlu0 %6652
  %6656 = vset.pattern.permute.xlu0 0
  %6657 = vperm.xlu0 %6656, %v6375
  %v6658 = vpop.permute.xlu0 %6657
  %6661 = vset.pattern.permute.xlu0 0
  %6662 = vperm.xlu0 %6661, %v6376
  %v6663 = vpop.permute.xlu0 %6662
  %6666 = vset.pattern.permute.xlu0 0
  %6667 = vperm.xlu0 %6666, %v6377
  %v6668 = vpop.permute.xlu0 %6667
  %6671 = vset.pattern.permute.xlu0 0
  %6672 = vperm.xlu0 %6671, %v6378
  %v6673 = vpop.permute.xlu0 %6672
  %6676 = vset.pattern.permute.xlu0 0
  %6677 = vperm.xlu0 %6676, %v6379
  %v6678 = vpop.permute.xlu0 %6677
  %6681 = vset.pattern.permute.xlu0 0
  %6682 = vperm.xlu0 %6681, %v6380
  %v6683 = vpop.permute.xlu0 %6682
  %6686 = vset.pattern.permute.xlu0 0
  %6687 = vperm.xlu0 %6686, %v6381
  %v6688 = vpop.permute.xlu0 %6687
  %6691 = vset.pattern.permute.xlu0 0
  %6692 = vperm.xlu0 %6691, %v6382
  %v6693 = vpop.permute.xlu0 %6692
  %6696 = vset.pattern.permute.xlu0 0
  %6697 = vperm.xlu0 %6696, %v6383
  %v6698 = vpop.permute.xlu0 %6697
  %6701 = vset.pattern.permute.xlu0 0
  %6702 = vperm.xlu0 %6701, %v6384
  %v6703 = vpop.permute.xlu0 %6702
  %v6769 = vunpack.c.l.b16 %v6257
  %v6770 = vunpack.c.l.b16 %v6258
  %v6771 = vunpack.c.l.b16 %v6259
  %v6772 = vunpack.c.l.b16 %v6260
  %v6773 = vunpack.c.l.b16 %v6261
  %v6774 = vunpack.c.l.b16 %v6262
  %v6775 = vunpack.c.l.b16 %v6263
  %v6776 = vunpack.c.l.b16 %v6264
  %v6777 = vunpack.c.l.b16 %v6265
  %v6778 = vunpack.c.l.b16 %v6266
  %v6779 = vunpack.c.l.b16 %v6267
  %v6780 = vunpack.c.l.b16 %v6268
  %v6781 = vunpack.c.l.b16 %v6269
  %v6782 = vunpack.c.l.b16 %v6270
  %v6783 = vunpack.c.l.b16 %v6271
  %v6784 = vunpack.c.l.b16 %v6272
  %v6785 = vunpack.c.l.b16 %v6273
  %v6786 = vunpack.c.l.b16 %v6274
  %v6787 = vunpack.c.l.b16 %v6275
  %v6788 = vunpack.c.l.b16 %v6276
  %v6789 = vunpack.c.l.b16 %v6277
  %v6790 = vunpack.c.l.b16 %v6278
  %v6791 = vunpack.c.l.b16 %v6279
  %v6792 = vunpack.c.l.b16 %v6280
  %v6793 = vunpack.c.l.b16 %v6281
  %v6794 = vunpack.c.l.b16 %v6282
  %v6795 = vunpack.c.l.b16 %v6283
  %v6796 = vunpack.c.l.b16 %v6284
  %v6797 = vunpack.c.l.b16 %v6285
  %v6798 = vunpack.c.l.b16 %v6286
  %v6799 = vunpack.c.l.b16 %v6287
  %v6800 = vunpack.c.l.b16 %v6288
  %v6801 = vunpack.c.l.b16 %v6289
  %v6802 = vunpack.c.l.b16 %v6290
  %v6803 = vunpack.c.l.b16 %v6291
  %v6804 = vunpack.c.l.b16 %v6292
  %v6805 = vunpack.c.l.b16 %v6293
  %v6806 = vunpack.c.l.b16 %v6294
  %v6807 = vunpack.c.l.b16 %v6295
  %v6808 = vunpack.c.l.b16 %v6296
  %v6809 = vunpack.c.l.b16 %v6297
  %v6810 = vunpack.c.l.b16 %v6298
  %v6811 = vunpack.c.l.b16 %v6299
  %v6812 = vunpack.c.l.b16 %v6300
  %v6813 = vunpack.c.l.b16 %v6301
  %v6814 = vunpack.c.l.b16 %v6302
  %v6815 = vunpack.c.l.b16 %v6303
  %v6816 = vunpack.c.l.b16 %v6304
  %v6817 = vunpack.c.l.b16 %v6305
  %v6818 = vunpack.c.l.b16 %v6306
  %v6819 = vunpack.c.l.b16 %v6307
  %v6820 = vunpack.c.l.b16 %v6308
  %v6821 = vunpack.c.l.b16 %v6309
  %v6822 = vunpack.c.l.b16 %v6310
  %v6823 = vunpack.c.l.b16 %v6311
  %v6824 = vunpack.c.l.b16 %v6312
  %v6825 = vunpack.c.l.b16 %v6313
  %v6826 = vunpack.c.l.b16 %v6314
  %v6827 = vunpack.c.l.b16 %v6315
  %v6828 = vunpack.c.l.b16 %v6316
  %v6829 = vunpack.c.l.b16 %v6317
  %v6830 = vunpack.c.l.b16 %v6318
  %v6831 = vunpack.c.l.b16 %v6319
  %v6832 = vunpack.c.l.b16 %v6320
  %v6833 = vpack.c.b16 %v6770, %v6769
  %v6834 = vpack.c.b16 %v6772, %v6771
  %v6835 = vpack.c.b16 %v6774, %v6773
  %v6836 = vpack.c.b16 %v6776, %v6775
  %v6837 = vpack.c.b16 %v6778, %v6777
  %v6838 = vpack.c.b16 %v6780, %v6779
  %v6839 = vpack.c.b16 %v6782, %v6781
  %v6840 = vpack.c.b16 %v6784, %v6783
  %v6841 = vpack.c.b16 %v6786, %v6785
  %v6842 = vpack.c.b16 %v6788, %v6787
  %v6843 = vpack.c.b16 %v6790, %v6789
  %v6844 = vpack.c.b16 %v6792, %v6791
  %v6845 = vpack.c.b16 %v6794, %v6793
  %v6846 = vpack.c.b16 %v6796, %v6795
  %v6847 = vpack.c.b16 %v6798, %v6797
  %v6848 = vpack.c.b16 %v6800, %v6799
  %v6849 = vpack.c.b16 %v6802, %v6801
  %v6850 = vpack.c.b16 %v6804, %v6803
  %v6851 = vpack.c.b16 %v6806, %v6805
  %v6852 = vpack.c.b16 %v6808, %v6807
  %v6853 = vpack.c.b16 %v6810, %v6809
  %v6854 = vpack.c.b16 %v6812, %v6811
  %v6855 = vpack.c.b16 %v6814, %v6813
  %v6856 = vpack.c.b16 %v6816, %v6815
  %v6857 = vpack.c.b16 %v6818, %v6817
  %v6858 = vpack.c.b16 %v6820, %v6819
  %v6859 = vpack.c.b16 %v6822, %v6821
  %v6860 = vpack.c.b16 %v6824, %v6823
  %v6861 = vpack.c.b16 %v6826, %v6825
  %v6862 = vpack.c.b16 %v6828, %v6827
  %v6863 = vpack.c.b16 %v6830, %v6829
  %v6864 = vpack.c.b16 %v6832, %v6831
  %v6866 = vsel %vm255, %v6833, 0
  %v6869 = vsel %vm255, %v6834, 0
  %v6872 = vsel %vm255, %v6835, 0
  %v6875 = vsel %vm255, %v6836, 0
  %v6878 = vsel %vm255, %v6837, 0
  %v6881 = vsel %vm255, %v6838, 0
  %v6884 = vsel %vm255, %v6839, 0
  %v6887 = vsel %vm255, %v6840, 0
  %v6890 = vsel %vm255, %v6841, 0
  %v6893 = vsel %vm255, %v6842, 0
  %v6896 = vsel %vm255, %v6843, 0
  %v6899 = vsel %vm255, %v6844, 0
  %v6902 = vsel %vm255, %v6845, 0
  %v6905 = vsel %vm255, %v6846, 0
  %v6908 = vsel %vm255, %v6847, 0
  %v6911 = vsel %vm255, %v6848, 0
  %v6914 = vsel %vm255, %v6849, 0
  %v6917 = vsel %vm255, %v6850, 0
  %v6920 = vsel %vm255, %v6851, 0
  %v6923 = vsel %vm255, %v6852, 0
  %v6926 = vsel %vm255, %v6853, 0
  %v6929 = vsel %vm255, %v6854, 0
  %v6932 = vsel %vm255, %v6855, 0
  %v6935 = vsel %vm255, %v6856, 0
  %v6938 = vsel %vm255, %v6857, 0
  %v6941 = vsel %vm255, %v6858, 0
  %v6944 = vsel %vm255, %v6859, 0
  %v6947 = vsel %vm255, %v6860, 0
  %v6950 = vsel %vm255, %v6861, 0
  %v6953 = vsel %vm255, %v6862, 0
  %v6956 = vsel %vm255, %v6863, 0
  %v6959 = vsel %vm255, %v6864, 0
  %6961 = vmatprep.subr.bf16.mxu0 0
  %6962 = vmatpush1.bf16.msra.mxu0 %v6243
  %6963 = vmatprep.subr.bf16.mxu0 0
  %6964 = vmatpush1.bf16.msra.mxu0 %v6247
  %6965 = vmatprep.subr.bf16.mxu0 0
  %6966 = vmatpush1.bf16.msra.mxu0 %v6251
  %6967 = vmatprep.subr.bf16.mxu0 0
  %6968 = vmatpush1.bf16.msra.mxu0 %v6255
  %6969 = vmatprep.subr.bf16.mxu0 0
  %6970 = vmatpush1.bf16.msra.mxu0 0
  %6971 = vmatprep.subr.bf16.mxu0 0
  %6972 = vmatpush1.bf16.msra.mxu0 0
  %6973 = vmatprep.subr.bf16.mxu0 0
  %6974 = vmatpush1.bf16.msra.mxu0 0
  %6975 = vmatprep.subr.bf16.mxu0 0
  %6976 = vmatpush1.bf16.msra.mxu0 0
  %6977 = vmatprep.subr.bf16.mxu0 0
  %6978 = vmatpush1.bf16.msra.mxu0 0
  %6979 = vmatprep.subr.bf16.mxu0 0
  %6980 = vmatpush1.bf16.msra.mxu0 0
  %6981 = vmatprep.subr.bf16.mxu0 0
  %6982 = vmatpush1.bf16.msra.mxu0 0
  %6983 = vmatprep.subr.bf16.mxu0 0
  %6984 = vmatpush1.bf16.msra.mxu0 0
  %6985 = vmatprep.subr.bf16.mxu0 0
  %6986 = vmatpush1.bf16.msra.mxu0 0
  %6987 = vmatprep.subr.bf16.mxu0 0
  %6988 = vmatpush1.bf16.msra.mxu0 0
  %6989 = vmatprep.subr.bf16.mxu0 0
  %6990 = vmatpush1.bf16.msra.mxu0 0
  %6991 = vmatprep.subr.bf16.mxu0 0
  %6992 = vmatpush1.bf16.msra.mxu0 0
  %6993 = vmatprep.mubr.bf16.mxu0 0
  %6994 = vmatmul.mubr.bf16.gmra.mrb[0].mxu0 %v6866
  %v6995 = vpop.f32.mrb[0].mxu0
  %v6996 = vadd.f32 %v6388, %v6995
  %v6997 = vpop.f32.mrb[0].mxu0
  %v6998 = vpop.f32.mrb[0].mxu0
  %v6999 = vadd.f32 %v6393, %v6998
  %v7000 = vpop.f32.mrb[0].mxu0
  %7001 = vmatprep.mubr.bf16.mxu0 0
  %7002 = vmatmul.mubr.bf16.gmra.mrb[0].mxu0 %v6869
  %v7003 = vpop.f32.mrb[0].mxu0
  %v7004 = vadd.f32 %v6398, %v7003
  %v7005 = vpop.f32.mrb[0].mxu0
  %v7006 = vpop.f32.mrb[0].mxu0
  %v7007 = vadd.f32 %v6403, %v7006
  %v7008 = vpop.f32.mrb[0].mxu0
  %7009 = vmatprep.mubr.bf16.mxu0 0
  %7010 = vmatmul.mubr.bf16.gmra.mrb[0].mxu0 %v6872
  %v7011 = vpop.f32.mrb[0].mxu0
  %v7012 = vadd.f32 %v6408, %v7011
  %v7013 = vpop.f32.mrb[0].mxu0
  %v7014 = vpop.f32.mrb[0].mxu0
  %v7015 = vadd.f32 %v6413, %v7014
  %v7016 = vpop.f32.mrb[0].mxu0
  %7017 = vmatprep.mubr.bf16.mxu0 0
  %7018 = vmatmul.mubr.bf16.gmra.mrb[0].mxu0 %v6875
  %v7019 = vpop.f32.mrb[0].mxu0
  %v7020 = vadd.f32 %v6418, %v7019
  %v7021 = vpop.f32.mrb[0].mxu0
  %v7022 = vpop.f32.mrb[0].mxu0
  %v7023 = vadd.f32 %v6423, %v7022
  %v7024 = vpop.f32.mrb[0].mxu0
  %7025 = vmatprep.mubr.bf16.mxu0 0
  %7026 = vmatmul.mubr.bf16.gmra.mrb[0].mxu0 %v6878
  %v7027 = vpop.f32.mrb[0].mxu0
  %v7028 = vadd.f32 %v6428, %v7027
  %v7029 = vpop.f32.mrb[0].mxu0
  %v7030 = vpop.f32.mrb[0].mxu0
  %v7031 = vadd.f32 %v6433, %v7030
  %v7032 = vpop.f32.mrb[0].mxu0
  %7033 = vmatprep.mubr.bf16.mxu0 0
  %7034 = vmatmul.mubr.bf16.gmra.mrb[0].mxu0 %v6881
  %v7035 = vpop.f32.mrb[0].mxu0
  %v7036 = vadd.f32 %v6438, %v7035
  %v7037 = vpop.f32.mrb[0].mxu0
  %v7038 = vpop.f32.mrb[0].mxu0
  %v7039 = vadd.f32 %v6443, %v7038
  %v7040 = vpop.f32.mrb[0].mxu0
  %7041 = vmatprep.mubr.bf16.mxu0 0
  %7042 = vmatmul.mubr.bf16.gmra.mrb[0].mxu0 %v6884
  %v7043 = vpop.f32.mrb[0].mxu0
  %v7044 = vadd.f32 %v6448, %v7043
  %v7045 = vpop.f32.mrb[0].mxu0
  %v7046 = vpop.f32.mrb[0].mxu0
  %v7047 = vadd.f32 %v6453, %v7046
  %v7048 = vpop.f32.mrb[0].mxu0
  %7049 = vmatprep.mubr.bf16.mxu0 0
  %7050 = vmatmul.mubr.bf16.gmra.mrb[0].mxu0 %v6887
  %v7051 = vpop.f32.mrb[0].mxu0
  %v7052 = vadd.f32 %v6458, %v7051
  %v7053 = vpop.f32.mrb[0].mxu0
  %v7054 = vpop.f32.mrb[0].mxu0
  %v7055 = vadd.f32 %v6463, %v7054
  %v7056 = vpop.f32.mrb[0].mxu0
  %7057 = vmatprep.mubr.bf16.mxu0 0
  %7058 = vmatmul.mubr.bf16.gmra.mrb[0].mxu0 %v6890
  %v7059 = vpop.f32.mrb[0].mxu0
  %v7060 = vadd.f32 %v6468, %v7059
  %v7061 = vpop.f32.mrb[0].mxu0
  %v7062 = vpop.f32.mrb[0].mxu0
  %v7063 = vadd.f32 %v6473, %v7062
  %v7064 = vpop.f32.mrb[0].mxu0
  %7065 = vmatprep.mubr.bf16.mxu0 0
  %7066 = vmatmul.mubr.bf16.gmra.mrb[0].mxu0 %v6893
  %v7067 = vpop.f32.mrb[0].mxu0
  %v7068 = vadd.f32 %v6478, %v7067
  %v7069 = vpop.f32.mrb[0].mxu0
  %v7070 = vpop.f32.mrb[0].mxu0
  %v7071 = vadd.f32 %v6483, %v7070
  %v7072 = vpop.f32.mrb[0].mxu0
  %7073 = vmatprep.mubr.bf16.mxu0 0
  %7074 = vmatmul.mubr.bf16.gmra.mrb[0].mxu0 %v6896
  %v7075 = vpop.f32.mrb[0].mxu0
  %v7076 = vadd.f32 %v6488, %v7075
  %v7077 = vpop.f32.mrb[0].mxu0
  %v7078 = vpop.f32.mrb[0].mxu0
  %v7079 = vadd.f32 %v6493, %v7078
  %v7080 = vpop.f32.mrb[0].mxu0
  %7081 = vmatprep.mubr.bf16.mxu0 0
  %7082 = vmatmul.mubr.bf16.gmra.mrb[0].mxu0 %v6899
  %v7083 = vpop.f32.mrb[0].mxu0
  %v7084 = vadd.f32 %v6498, %v7083
  %v7085 = vpop.f32.mrb[0].mxu0
  %v7086 = vpop.f32.mrb[0].mxu0
  %v7087 = vadd.f32 %v6503, %v7086
  %v7088 = vpop.f32.mrb[0].mxu0
  %7089 = vmatprep.mubr.bf16.mxu0 0
  %7090 = vmatmul.mubr.bf16.gmra.mrb[0].mxu0 %v6902
  %v7091 = vpop.f32.mrb[0].mxu0
  %v7092 = vadd.f32 %v6508, %v7091
  %v7093 = vpop.f32.mrb[0].mxu0
  %v7094 = vpop.f32.mrb[0].mxu0
  %v7095 = vadd.f32 %v6513, %v7094
  %v7096 = vpop.f32.mrb[0].mxu0
  %7097 = vmatprep.mubr.bf16.mxu0 0
  %7098 = vmatmul.mubr.bf16.gmra.mrb[0].mxu0 %v6905
  %v7099 = vpop.f32.mrb[0].mxu0
  %v7100 = vadd.f32 %v6518, %v7099
  %v7101 = vpop.f32.mrb[0].mxu0
  %v7102 = vpop.f32.mrb[0].mxu0
  %v7103 = vadd.f32 %v6523, %v7102
  %v7104 = vpop.f32.mrb[0].mxu0
  %7105 = vmatprep.mubr.bf16.mxu0 0
  %7106 = vmatmul.mubr.bf16.gmra.mrb[0].mxu0 %v6908
  %v7107 = vpop.f32.mrb[0].mxu0
  %v7108 = vadd.f32 %v6528, %v7107
  %v7109 = vpop.f32.mrb[0].mxu0
  %v7110 = vpop.f32.mrb[0].mxu0
  %v7111 = vadd.f32 %v6533, %v7110
  %v7112 = vpop.f32.mrb[0].mxu0
  %7113 = vmatprep.mubr.bf16.mxu0 0
  %7114 = vmatmul.mubr.bf16.gmra.mrb[0].mxu0 %v6911
  %v7115 = vpop.f32.mrb[0].mxu0
  %v7116 = vadd.f32 %v6538, %v7115
  %v7117 = vpop.f32.mrb[0].mxu0
  %v7118 = vpop.f32.mrb[0].mxu0
  %v7119 = vadd.f32 %v6543, %v7118
  %v7120 = vpop.f32.mrb[0].mxu0
  %7121 = vmatprep.mubr.bf16.mxu0 0
  %7122 = vmatmul.mubr.bf16.gmra.mrb[0].mxu0 %v6914
  %v7123 = vpop.f32.mrb[0].mxu0
  %v7124 = vadd.f32 %v6548, %v7123
  %v7125 = vpop.f32.mrb[0].mxu0
  %v7126 = vpop.f32.mrb[0].mxu0
  %v7127 = vadd.f32 %v6553, %v7126
  %v7128 = vpop.f32.mrb[0].mxu0
  %7129 = vmatprep.mubr.bf16.mxu0 0
  %7130 = vmatmul.mubr.bf16.gmra.mrb[0].mxu0 %v6917
  %v7131 = vpop.f32.mrb[0].mxu0
  %v7132 = vadd.f32 %v6558, %v7131
  %v7133 = vpop.f32.mrb[0].mxu0
  %v7134 = vpop.f32.mrb[0].mxu0
  %v7135 = vadd.f32 %v6563, %v7134
  %v7136 = vpop.f32.mrb[0].mxu0
  %7137 = vmatprep.mubr.bf16.mxu0 0
  %7138 = vmatmul.mubr.bf16.gmra.mrb[0].mxu0 %v6920
  %v7139 = vpop.f32.mrb[0].mxu0
  %v7140 = vadd.f32 %v6568, %v7139
  %v7141 = vpop.f32.mrb[0].mxu0
  %v7142 = vpop.f32.mrb[0].mxu0
  %v7143 = vadd.f32 %v6573, %v7142
  %v7144 = vpop.f32.mrb[0].mxu0
  %7145 = vmatprep.mubr.bf16.mxu0 0
  %7146 = vmatmul.mubr.bf16.gmra.mrb[0].mxu0 %v6923
  %v7147 = vpop.f32.mrb[0].mxu0
  %v7148 = vadd.f32 %v6578, %v7147
  %v7149 = vpop.f32.mrb[0].mxu0
  %v7150 = vpop.f32.mrb[0].mxu0
  %v7151 = vadd.f32 %v6583, %v7150
  %v7152 = vpop.f32.mrb[0].mxu0
  %7153 = vmatprep.mubr.bf16.mxu0 0
  %7154 = vmatmul.mubr.bf16.gmra.mrb[0].mxu0 %v6926
  %v7155 = vpop.f32.mrb[0].mxu0
  %v7156 = vadd.f32 %v6588, %v7155
  %v7157 = vpop.f32.mrb[0].mxu0
  %v7158 = vpop.f32.mrb[0].mxu0
  %v7159 = vadd.f32 %v6593, %v7158
  %v7160 = vpop.f32.mrb[0].mxu0
  %7161 = vmatprep.mubr.bf16.mxu0 0
  %7162 = vmatmul.mubr.bf16.gmra.mrb[0].mxu0 %v6929
  %v7163 = vpop.f32.mrb[0].mxu0
  %v7164 = vadd.f32 %v6598, %v7163
  %v7165 = vpop.f32.mrb[0].mxu0
  %v7166 = vpop.f32.mrb[0].mxu0
  %v7167 = vadd.f32 %v6603, %v7166
  %v7168 = vpop.f32.mrb[0].mxu0
  %7169 = vmatprep.mubr.bf16.mxu0 0
  %7170 = vmatmul.mubr.bf16.gmra.mrb[0].mxu0 %v6932
  %v7171 = vpop.f32.mrb[0].mxu0
  %v7172 = vadd.f32 %v6608, %v7171
  %v7173 = vpop.f32.mrb[0].mxu0
  %v7174 = vpop.f32.mrb[0].mxu0
  %v7175 = vadd.f32 %v6613, %v7174
  %v7176 = vpop.f32.mrb[0].mxu0
  %7177 = vmatprep.mubr.bf16.mxu0 0
  %7178 = vmatmul.mubr.bf16.gmra.mrb[0].mxu0 %v6935
  %v7179 = vpop.f32.mrb[0].mxu0
  %v7180 = vadd.f32 %v6618, %v7179
  %v7181 = vpop.f32.mrb[0].mxu0
  %v7182 = vpop.f32.mrb[0].mxu0
  %v7183 = vadd.f32 %v6623, %v7182
  %v7184 = vpop.f32.mrb[0].mxu0
  %7185 = vmatprep.mubr.bf16.mxu0 0
  %7186 = vmatmul.mubr.bf16.gmra.mrb[0].mxu0 %v6938
  %v7187 = vpop.f32.mrb[0].mxu0
  %v7188 = vadd.f32 %v6628, %v7187
  %v7189 = vpop.f32.mrb[0].mxu0
  %v7190 = vpop.f32.mrb[0].mxu0
  %v7191 = vadd.f32 %v6633, %v7190
  %v7192 = vpop.f32.mrb[0].mxu0
  %7193 = vmatprep.mubr.bf16.mxu0 0
  %7194 = vmatmul.mubr.bf16.gmra.mrb[0].mxu0 %v6941
  %v7195 = vpop.f32.mrb[0].mxu0
  %v7196 = vadd.f32 %v6638, %v7195
  %v7197 = vpop.f32.mrb[0].mxu0
  %v7198 = vpop.f32.mrb[0].mxu0
  %v7199 = vadd.f32 %v6643, %v7198
  %v7200 = vpop.f32.mrb[0].mxu0
  %7201 = vmatprep.mubr.bf16.mxu0 0
  %7202 = vmatmul.mubr.bf16.gmra.mrb[0].mxu0 %v6944
  %v7203 = vpop.f32.mrb[0].mxu0
  %v7204 = vadd.f32 %v6648, %v7203
  %v7205 = vpop.f32.mrb[0].mxu0
  %v7206 = vpop.f32.mrb[0].mxu0
  %v7207 = vadd.f32 %v6653, %v7206
  %v7208 = vpop.f32.mrb[0].mxu0
  %7209 = vmatprep.mubr.bf16.mxu0 0
  %7210 = vmatmul.mubr.bf16.gmra.mrb[0].mxu0 %v6947
  %v7211 = vpop.f32.mrb[0].mxu0
  %v7212 = vadd.f32 %v6658, %v7211
  %v7213 = vpop.f32.mrb[0].mxu0
  %v7214 = vpop.f32.mrb[0].mxu0
  %v7215 = vadd.f32 %v6663, %v7214
  %v7216 = vpop.f32.mrb[0].mxu0
  %7217 = vmatprep.mubr.bf16.mxu0 0
  %7218 = vmatmul.mubr.bf16.gmra.mrb[0].mxu0 %v6950
  %v7219 = vpop.f32.mrb[0].mxu0
  %v7220 = vadd.f32 %v6668, %v7219
  %v7221 = vpop.f32.mrb[0].mxu0
  %v7222 = vpop.f32.mrb[0].mxu0
  %v7223 = vadd.f32 %v6673, %v7222
  %v7224 = vpop.f32.mrb[0].mxu0
  %7225 = vmatprep.mubr.bf16.mxu0 0
  %7226 = vmatmul.mubr.bf16.gmra.mrb[0].mxu0 %v6953
  %v7227 = vpop.f32.mrb[0].mxu0
  %v7228 = vadd.f32 %v6678, %v7227
  %v7229 = vpop.f32.mrb[0].mxu0
  %v7230 = vpop.f32.mrb[0].mxu0
  %v7231 = vadd.f32 %v6683, %v7230
  %v7232 = vpop.f32.mrb[0].mxu0
  %7233 = vmatprep.mubr.bf16.mxu0 0
  %7234 = vmatmul.mubr.bf16.gmra.mrb[0].mxu0 %v6956
  %v7235 = vpop.f32.mrb[0].mxu0
  %v7236 = vadd.f32 %v6688, %v7235
  %v7237 = vpop.f32.mrb[0].mxu0
  %v7238 = vpop.f32.mrb[0].mxu0
  %v7239 = vadd.f32 %v6693, %v7238
  %v7240 = vpop.f32.mrb[0].mxu0
  %7241 = vmatprep.mubr.bf16.mxu0 0
  %7242 = vmatmul.mubr.bf16.gmra.mrb[0].mxu0 %v6959
  %v7243 = vpop.f32.mrb[0].mxu0
  %v7244 = vadd.f32 %v6698, %v7243
  %v7245 = vpop.f32.mrb[0].mxu0
  %v7246 = vpop.f32.mrb[0].mxu0
  %v7247 = vadd.f32 %v6703, %v7246
  %v7248 = vpop.f32.mrb[0].mxu0
  %7249 = vdwg.mxu0
  %v7250 = vmax.f32 %v6996, 0.0
  %v7251 = vmax.f32 %v6999, 0.0
  %v7252 = vmax.f32 %v7004, 0.0
  %v7253 = vmax.f32 %v7007, 0.0
  %v7254 = vmax.f32 %v7012, 0.0
  %v7255 = vmax.f32 %v7015, 0.0
  %v7256 = vmax.f32 %v7020, 0.0
  %v7257 = vmax.f32 %v7023, 0.0
  %v7258 = vmax.f32 %v7028, 0.0
  %v7259 = vmax.f32 %v7031, 0.0
  %v7260 = vmax.f32 %v7036, 0.0
  %v7261 = vmax.f32 %v7039, 0.0
  %v7262 = vmax.f32 %v7044, 0.0
  %v7263 = vmax.f32 %v7047, 0.0
  %v7264 = vmax.f32 %v7052, 0.0
  %v7265 = vmax.f32 %v7055, 0.0
  %v7266 = vmax.f32 %v7060, 0.0
  %v7267 = vmax.f32 %v7063, 0.0
  %v7268 = vmax.f32 %v7068, 0.0
  %v7269 = vmax.f32 %v7071, 0.0
  %v7270 = vmax.f32 %v7076, 0.0
  %v7271 = vmax.f32 %v7079, 0.0
  %v7272 = vmax.f32 %v7084, 0.0
  %v7273 = vmax.f32 %v7087, 0.0
  %v7274 = vmax.f32 %v7092, 0.0
  %v7275 = vmax.f32 %v7095, 0.0
  %v7276 = vmax.f32 %v7100, 0.0
  %v7277 = vmax.f32 %v7103, 0.0
  %v7278 = vmax.f32 %v7108, 0.0
  %v7279 = vmax.f32 %v7111, 0.0
  %v7280 = vmax.f32 %v7116, 0.0
  %v7281 = vmax.f32 %v7119, 0.0
  %v7282 = vmax.f32 %v7124, 0.0
  %v7283 = vmax.f32 %v7127, 0.0
  %v7284 = vmax.f32 %v7132, 0.0
  %v7285 = vmax.f32 %v7135, 0.0
  %v7286 = vmax.f32 %v7140, 0.0
  %v7287 = vmax.f32 %v7143, 0.0
  %v7288 = vmax.f32 %v7148, 0.0
  %v7289 = vmax.f32 %v7151, 0.0
  %v7290 = vmax.f32 %v7156, 0.0
  %v7291 = vmax.f32 %v7159, 0.0
  %v7292 = vmax.f32 %v7164, 0.0
  %v7293 = vmax.f32 %v7167, 0.0
  %v7294 = vmax.f32 %v7172, 0.0
  %v7295 = vmax.f32 %v7175, 0.0
  %v7296 = vmax.f32 %v7180, 0.0
  %v7297 = vmax.f32 %v7183, 0.0
  %v7298 = vmax.f32 %v7188, 0.0
  %v7299 = vmax.f32 %v7191, 0.0
  %v7300 = vmax.f32 %v7196, 0.0
  %v7301 = vmax.f32 %v7199, 0.0
  %v7302 = vmax.f32 %v7204, 0.0
  %v7303 = vmax.f32 %v7207, 0.0
  %v7304 = vmax.f32 %v7212, 0.0
  %v7305 = vmax.f32 %v7215, 0.0
  %v7306 = vmax.f32 %v7220, 0.0
  %v7307 = vmax.f32 %v7223, 0.0
  %v7308 = vmax.f32 %v7228, 0.0
  %v7309 = vmax.f32 %v7231, 0.0
  %v7310 = vmax.f32 %v7236, 0.0
  %v7311 = vmax.f32 %v7239, 0.0
  %v7312 = vmax.f32 %v7244, 0.0
  %v7313 = vmax.f32 %v7247, 0.0
  %v7314 = vpack.c.bf16 %v7251, %v7250
  %v7315 = vpack.c.bf16 %v7253, %v7252
  %v7316 = vpack.c.bf16 %v7255, %v7254
  %v7317 = vpack.c.bf16 %v7257, %v7256
  %v7318 = vpack.c.bf16 %v7259, %v7258
  %v7319 = vpack.c.bf16 %v7261, %v7260
  %v7320 = vpack.c.bf16 %v7263, %v7262
  %v7321 = vpack.c.bf16 %v7265, %v7264
  %v7322 = vpack.c.bf16 %v7267, %v7266
  %v7323 = vpack.c.bf16 %v7269, %v7268
  %v7324 = vpack.c.bf16 %v7271, %v7270
  %v7325 = vpack.c.bf16 %v7273, %v7272
  %v7326 = vpack.c.bf16 %v7275, %v7274
  %v7327 = vpack.c.bf16 %v7277, %v7276
  %v7328 = vpack.c.bf16 %v7279, %v7278
  %v7329 = vpack.c.bf16 %v7281, %v7280
  %v7330 = vpack.c.bf16 %v7283, %v7282
  %v7331 = vpack.c.bf16 %v7285, %v7284
  %v7332 = vpack.c.bf16 %v7287, %v7286
  %v7333 = vpack.c.bf16 %v7289, %v7288
  %v7334 = vpack.c.bf16 %v7291, %v7290
  %v7335 = vpack.c.bf16 %v7293, %v7292
  %v7336 = vpack.c.bf16 %v7295, %v7294
  %v7337 = vpack.c.bf16 %v7297, %v7296
  %v7338 = vpack.c.bf16 %v7299, %v7298
  %v7339 = vpack.c.bf16 %v7301, %v7300
  %v7340 = vpack.c.bf16 %v7303, %v7302
  %v7341 = vpack.c.bf16 %v7305, %v7304
  %v7342 = vpack.c.bf16 %v7307, %v7306
  %v7343 = vpack.c.bf16 %v7309, %v7308
  %v7344 = vpack.c.bf16 %v7311, %v7310
  %v7345 = vpack.c.bf16 %v7313, %v7312
  %vm7346 = vcmask 15360
  %v7349 = vsel %vm7346, %v7314, 0
  %v7352 = vsel %vm7346, %v7315, 0
  %v7355 = vsel %vm7346, %v7316, 0
  %v7358 = vsel %vm7346, %v7317, 0
  %v7361 = vsel %vm7346, %v7318, 0
  %v7364 = vsel %vm7346, %v7319, 0
  %v7367 = vsel %vm7346, %v7320, 0
  %v7370 = vsel %vm7346, %v7321, 0
  %v7373 = vsel %vm7346, %v7322, 0
  %v7376 = vsel %vm7346, %v7323, 0
  %v7379 = vsel %vm7346, %v7324, 0
  %v7382 = vsel %vm7346, %v7325, 0
  %v7385 = vsel %vm7346, %v7326, 0
  %v7388 = vsel %vm7346, %v7327, 0
  %v7391 = vsel %vm7346, %v7328, 0
  %v7394 = vsel %vm7346, %v7329, 0
  %v7397 = vsel %vm7346, %v7330, 0
  %v7400 = vsel %vm7346, %v7331, 0
  %v7403 = vsel %vm7346, %v7332, 0
  %v7406 = vsel %vm7346, %v7333, 0
  %v7409 = vsel %vm7346, %v7334, 0
  %v7412 = vsel %vm7346, %v7335, 0
  %v7415 = vsel %vm7346, %v7336, 0
  %v7418 = vsel %vm7346, %v7337, 0
  %v7421 = vsel %vm7346, %v7338, 0
  %v7424 = vsel %vm7346, %v7339, 0
  %v7427 = vsel %vm7346, %v7340, 0
  %v7430 = vsel %vm7346, %v7341, 0
  %v7433 = vsel %vm7346, %v7342, 0
  %v7436 = vsel %vm7346, %v7343, 0
  %v7439 = vsel %vm7346, %v7344, 0
  %v7442 = vsel %vm7346, %v7345, 0
  %v7444 = vld [vmem:[%s9] sm:$0xff]
  %v7445 = vld [vmem:[%s9 + $0x8] sm:$0xff]
  %v7446 = vld [vmem:[%s10] sm:$0xff]
  %7448 = vset.pattern.permute.xlu0 0
  %7449 = vperm.xlu0 %7448, %v7446
  %v7450 = vpop.permute.xlu0 %7449
  %v7454 = vunpack.c.l.b16 %v7444
  %v7455 = vunpack.c.h.b16 %v7444
  %v7456 = vunpack.c.l.b16 %v7445
  %v7457 = vunpack.c.h.b16 %v7445
  %v7458 = vpack.c.b16 %v7454, %v7454
  %v7459 = vpack.c.b16 %v7455, %v7455
  %v7460 = vpack.c.b16 %v7456, %v7456
  %v7461 = vpack.c.b16 %v7457, %v7457
  %7466 = vmatprep.subr.bf16.mxu0 0
  %7467 = vmatpush1.bf16.msra.mxu0 %v7349
  %7468 = vmatprep.subr.bf16.mxu0 0
  %7469 = vmatpush1.bf16.msra.mxu0 %v7352
  %7470 = vmatprep.subr.bf16.mxu0 0
  %7471 = vmatpush1.bf16.msra.mxu0 %v7355
  %7472 = vmatprep.subr.bf16.mxu0 0
  %7473 = vmatpush1.bf16.msra.mxu0 %v7358
  %7474 = vmatprep.subr.bf16.mxu0 0
  %7475 = vmatpush1.bf16.msra.mxu0 %v7361
  %7476 = vmatprep.subr.bf16.mxu0 0
  %7477 = vmatpush1.bf16.msra.mxu0 %v7364
  %7478 = vmatprep.subr.bf16.mxu0 0
  %7479 = vmatpush1.bf16.msra.mxu0 %v7367
  %7480 = vmatprep.subr.bf16.mxu0 0
  %7481 = vmatpush1.bf16.msra.mxu0 %v7370
  %7482 = vmatprep.subr.bf16.mxu0 0
  %7483 = vmatpush1.bf16.msra.mxu0 %v7373
  %7484 = vmatprep.subr.bf16.mxu0 0
  %7485 = vmatpush1.bf16.msra.mxu0 %v7376
  %7486 = vmatprep.subr.bf16.mxu0 0
  %7487 = vmatpush1.bf16.msra.mxu0 %v7379
  %7488 = vmatprep.subr.bf16.mxu0 0
  %7489 = vmatpush1.bf16.msra.mxu0 %v7382
  %7490 = vmatprep.subr.bf16.mxu0 0
  %7491 = vmatpush1.bf16.msra.mxu0 %v7385
  %7492 = vmatprep.subr.bf16.mxu0 0
  %7493 = vmatpush1.bf16.msra.mxu0 %v7388
  %7494 = vmatprep.subr.bf16.mxu0 0
  %7495 = vmatpush1.bf16.msra.mxu0 %v7391
  %7496 = vmatprep.subr.bf16.mxu0 0
  %7497 = vmatpush1.bf16.msra.mxu0 %v7394
  %7498 = vmatprep.mubr.bf16.mxu0 %v7459
  %7499 = vmatmul.mubr.bf16.gmra.mrb[0].mxu0 %v7458
  %v7500 = vpop.f32.mrb[0].mxu0
  %v7501 = vadd.f32 %v7450, %v7500
  %v7502 = vpop.f32.mrb[0].mxu0
  %v7503 = vpop.f32.mrb[0].mxu0
  %v7504 = vpop.f32.mrb[0].mxu0
  %7505 = vdwg.mxu0
  %7506 = vmatprep.subr.bf16.mxu0 0
  %7507 = vmatpush1.bf16.msra.mxu0 %v7397
  %7508 = vmatprep.subr.bf16.mxu0 0
  %7509 = vmatpush1.bf16.msra.mxu0 %v7400
  %7510 = vmatprep.subr.bf16.mxu0 0
  %7511 = vmatpush1.bf16.msra.mxu0 %v7403
  %7512 = vmatprep.subr.bf16.mxu0 0
  %7513 = vmatpush1.bf16.msra.mxu0 %v7406
  %7514 = vmatprep.subr.bf16.mxu0 0
  %7515 = vmatpush1.bf16.msra.mxu0 %v7409
  %7516 = vmatprep.subr.bf16.mxu0 0
  %7517 = vmatpush1.bf16.msra.mxu0 %v7412
  %7518 = vmatprep.subr.bf16.mxu0 0
  %7519 = vmatpush1.bf16.msra.mxu0 %v7415
  %7520 = vmatprep.subr.bf16.mxu0 0
  %7521 = vmatpush1.bf16.msra.mxu0 %v7418
  %7522 = vmatprep.subr.bf16.mxu0 0
  %7523 = vmatpush1.bf16.msra.mxu0 %v7421
  %7524 = vmatprep.subr.bf16.mxu0 0
  %7525 = vmatpush1.bf16.msra.mxu0 %v7424
  %7526 = vmatprep.subr.bf16.mxu0 0
  %7527 = vmatpush1.bf16.msra.mxu0 %v7427
  %7528 = vmatprep.subr.bf16.mxu0 0
  %7529 = vmatpush1.bf16.msra.mxu0 %v7430
  %7530 = vmatprep.subr.bf16.mxu0 0
  %7531 = vmatpush1.bf16.msra.mxu0 %v7433
  %7532 = vmatprep.subr.bf16.mxu0 0
  %7533 = vmatpush1.bf16.msra.mxu0 %v7436
  %7534 = vmatprep.subr.bf16.mxu0 0
  %7535 = vmatpush1.bf16.msra.mxu0 %v7439
  %7536 = vmatprep.subr.bf16.mxu0 0
  %7537 = vmatpush1.bf16.msra.mxu0 %v7442
  %7538 = vmatprep.mubr.bf16.mxu0 %v7461
  %7539 = vmatmul.mubr.bf16.gmra.mrb[0].mxu0 %v7460
  %v7540 = vpop.f32.mrb[0].mxu0
  %v7541 = vadd.f32 %v7501, %v7540
  %v7542 = vpop.f32.mrb[0].mxu0
  %v7543 = vpop.f32.mrb[0].mxu0
  %v7544 = vpop.f32.mrb[0].mxu0
  %7545 = vdwg.mxu0
  %7546 = vst [vmem:[%s11] sm:$0xff] %v7541
  // Predicated region
  $region46: #{dqn_forward.1} parent=0 // pred_check
    _
  $region47: #{dqn_forward.1} parent=0 // pred_check_branch
    %7548 = sbr.rel (0) target = $region49
  $region48: #{dqn_forward.1} parent=0 // pred_region
    _
  $region49: #{dqn_forward.1} parent=0 // pred_fallthru
    _
  // Predicated region
  $region50: #{dqn_forward.1} parent=0 // pred_check
    _
  $region51: #{dqn_forward.1} parent=0 // pred_check_branch
    %7550 = sbr.rel (0) target = $region53
  $region52: #{dqn_forward.1} parent=0 // pred_region
    _
  $region53: #{dqn_forward.1} parent=0 // pred_fallthru
    _

</llo_original>
